<compile_context>
chip_gen: v7x
topology: tpu7x:2x2x1
jax: 0.10.0
libtpu: 0.0.40
codegen_flags: <defaults>
</compile_context>

<pallas_src>
import functools

import jax
import jax.numpy as jnp
from jax.experimental import pallas as pl
from jax.experimental.pallas import tpu as pltpu

MASK_CHECKERBOARD = 0
MASK_CHANNEL_WISE = 1

_TAPS = tuple((di, dj) for di in (-1, 0, 1) for dj in (-1, 0, 1))
# Well below v7x's 64 MiB/core VMEM; the per-step working set here is tiny.
_VMEM_LIMIT = 48 * 1024 * 1024


def _compiler_params():
    return pltpu.CompilerParams(
        dimension_semantics=("parallel",),
        vmem_limit_bytes=_VMEM_LIMIT,
    )


# ----------------------------------------------------------------------------
# Fused kernel: whole st-net + coupling transform for TB images per grid step
# ----------------------------------------------------------------------------
def _coupling_kernel(*refs, H, W, TB, nb, checkerboard, reverse):
    HW = H * W
    N = TB * HW

    it = iter(refs)
    x_st_ref = next(it)
    x_ch_ref = x_st_ref if checkerboard else next(it)
    sldj_ref = next(it)
    tmask_ref = next(it)                       # (9, 1, N) tap validity masks
    bmask_ref = next(it) if checkerboard else None
    in_scale_ref = next(it)
    in_shift_ref = next(it)
    w_in_ref = next(it)
    b_in_ref = next(it)
    w_isk_ref = next(it)
    b_isk_ref = next(it)
    n1s_ref = next(it)
    n1t_ref = next(it)
    w1_ref = next(it)
    n2s_ref = next(it)
    n2t_ref = next(it)
    w2_ref = next(it)
    b2_ref = next(it)
    wsk_ref = next(it)
    bsk_ref = next(it)
    os_ref = next(it)
    ot_ref = next(it)
    ws_ref = next(it)
    bs_ref = next(it)
    wt_ref = next(it)
    bt_ref = next(it)
    rw_ref = next(it)
    xo_ref = next(it)
    sldjo_ref = next(it)
    stk_ref = next(it)                         # (K_max, N) f32 tap-stack scratch

    def conv3x3(act, w, rows):
        """3x3 'same' conv of TB whole images, channels-first, ONE MXU dot.

        act : (rows, N) f32, post-activation.  Zero padding is emulated by the
              per-tap border-validity masks (applied AFTER the nonlinearity,
              exactly like F.conv2d(padding=1)); the same masks also zero any
              cross-image wrap introduced by the lane roll.
        w   : (Cout, 9*rows) bf16, tap-major packing.
        """
        for t, (di, dj) in enumerate(_TAPS):
            off = di * W + dj
            if off == 0:
                stk_ref[t * rows:(t + 1) * rows, :] = act
            else:
                stk_ref[t * rows:(t + 1) * rows, :] = (
                    pltpu.roll(act, shift=(-off) % N, axis=1) * tmask_ref[t])
        stacked = stk_ref[0:9 * rows, :].astype(jnp.bfloat16)
        return jnp.dot(w, stacked, preferred_element_type=jnp.float32)

    # ---------------- in stage ----------------
    x_st = x_st_ref[...]
    if checkerboard:
        x_st = x_st * bmask_ref[...]                        # x * b
    pre = x_st * in_scale_ref[...] + in_shift_ref[...]      # eval-BN (x2 folded)
    cst = pre.shape[0]
    # in_conv consumes relu(cat(h, -h)); one roll per tap feeds both branches.
    for t, (di, dj) in enumerate(_TAPS):
        off = di * W + dj
        if off == 0:
            rm = pre
        else:
            rm = pltpu.roll(pre, shift=(-off) % N, axis=1) * tmask_ref[t]
        hp = jnp.maximum(rm, 0.0)                           # relu(+h)
        hn = hp - rm                                        # relu(-h)
        base = t * 2 * cst
        stk_ref[base:base + cst, :] = hp
        stk_ref[base + cst:base + 2 * cst, :] = hn
    stacked = stk_ref[0:18 * cst, :].astype(jnp.bfloat16)
    h = (jnp.dot(w_in_ref[...], stacked, preferred_element_type=jnp.float32)
         + b_in_ref[...])
    xs = (jnp.dot(w_isk_ref[...], h.astype(jnp.bfloat16),
                  preferred_element_type=jnp.float32) + b_isk_ref[...])

    # ---------------- residual blocks ----------------
    mid = h.shape[0]
    for b in range(nb):
        a1 = jnp.maximum(h * n1s_ref[b] + n1t_ref[b], 0.0)
        r = conv3x3(a1, w1_ref[b], mid)                     # conv1 (bias=False)
        a2 = jnp.maximum(r * n2s_ref[b] + n2t_ref[b], 0.0)
        r = conv3x3(a2, w2_ref[b], mid) + b2_ref[b]         # conv2 (bias=True)
        h = h + r                                           # residual add
        xs = xs + (jnp.dot(wsk_ref[b], h.astype(jnp.bfloat16),
                           preferred_element_type=jnp.float32) + bsk_ref[b])

    # ---------------- out conv + coupling epilogue ----------------
    a = jnp.maximum(xs * os_ref[...] + ot_ref[...], 0.0).astype(jnp.bfloat16)
    s_raw = (jnp.dot(ws_ref[...], a, preferred_element_type=jnp.float32)
             + bs_ref[...])
    t_shift = (jnp.dot(wt_ref[...], a, preferred_element_type=jnp.float32)
               + bt_ref[...])
    s = rw_ref[...] * jnp.tanh(s_raw)                       # rescale(tanh(s))
    if checkerboard:
        one_minus_b = 1.0 - bmask_ref[...]
        s = s * one_minus_b
        t_shift = t_shift * one_minus_b
    x_ch = x_ch_ref[...]
    if reverse:
        xo_ref[...] = x_ch * jnp.exp(-s) - t_shift
        sldjo_ref[...] = sldj_ref[...]
    else:
        xo_ref[...] = (x_ch + t_shift) * jnp.exp(s)
        for tb in range(TB):
            sldjo_ref[tb] = sldj_ref[tb] + jnp.sum(s[:, tb * HW:(tb + 1) * HW])


# ----------------------------------------------------------------------------
# pallas_call wrapper
# ----------------------------------------------------------------------------
def _run_coupling(P, x_st, x_ch, sldj, bmask, tmask, *, H, W, TB,
                  checkerboard, reverse):
    cst, total = x_st.shape
    HW = H * W
    B = total // HW
    N = TB * HW
    mid = P["w_isk"].shape[0]
    nb = P["w1"].shape[0]
    cs = P["rescale_w"].shape[0]
    k_max = max(9 * 2 * cst, 9 * mid)

    def full_spec(arr):
        nd = arr.ndim
        return pl.BlockSpec(arr.shape, lambda i, nd=nd: (0,) * nd)

    def act_spec(c):
        return pl.BlockSpec((c, N), lambda i: (0, i))

    sldj_spec = pl.BlockSpec((TB, 1, 1), lambda i: (i, 0, 0))

    in_specs = [act_spec(cst)]
    args = [x_st]
    if not checkerboard:
        in_specs.append(act_spec(cs))
        args.append(x_ch)
    in_specs.append(sldj_spec)
    args.append(sldj.reshape(B, 1, 1))
    in_specs.append(full_spec(tmask))
    args.append(tmask)
    if checkerboard:
        in_specs.append(full_spec(bmask))
        args.append(bmask)
    weight_names = ("in_scale", "in_shift", "w_in", "b_in", "w_isk", "b_isk",
                    "n1_scale", "n1_shift", "w1", "n2_scale", "n2_shift", "w2",
                    "b2", "wsk", "bsk", "out_scale", "out_shift",
                    "ws", "bs", "wt", "bt", "rescale_w")
    for name in weight_names:
        in_specs.append(full_spec(P[name]))
        args.append(P[name])

    kern = functools.partial(_coupling_kernel, H=H, W=W, TB=TB, nb=nb,
                             checkerboard=checkerboard, reverse=reverse)
    xo, sldj_out = pl.pallas_call(
        kern,
        grid=(B // TB,),
        in_specs=in_specs,
        out_specs=(act_spec(cs), sldj_spec),
        out_shape=(jax.ShapeDtypeStruct((cs, B * HW), jnp.float32),
                   jax.ShapeDtypeStruct((B, 1, 1), jnp.float32)),
        scratch_shapes=[pltpu.VMEM((k_max, N), jnp.float32)],
        compiler_params=_compiler_params(),
    )(*args)
    return xo, sldj_out.reshape(B)


# ----------------------------------------------------------------------------
# Host-side masks, batch-tile heuristic and parameter init (synthetic)
# ----------------------------------------------------------------------------
def checkerboard_mask(height, width, reverse=False):
    ii = jnp.arange(height)[:, None]
    jj = jnp.arange(width)[None, :]
    mask = ((ii % 2 + jj) % 2).astype(jnp.float32)
    if reverse:
        mask = 1.0 - mask
    return mask.reshape(1, height * width)          # (1, HW)


def conv_tap_masks(height, width):
    """Per-tap validity masks (emulate zero padding of a 3x3 'same' conv)."""
    ii, jj = jnp.meshgrid(jnp.arange(height), jnp.arange(width), indexing="ij")
    masks = []
    for di, dj in _TAPS:
        ok = ((ii + di >= 0) & (ii + di < height) &
              (jj + dj >= 0) & (jj + dj < width))
        masks.append(ok.astype(jnp.float32).reshape(1, height * width))
    return jnp.stack(masks, axis=0)                 # (9, 1, HW)


def _pick_tb(batch, hw, mid, budget_bytes=8 << 20):
    """Batch-tile size: largest divisor that fits the VMEM budget, while
    keeping >=2 grid steps so both TensorCores get work on v7x."""
    per_img = hw * 4 * (9 * mid + 8 * mid + 64)
    tb = 1
    for cand in (8, 4, 2, 1):
        if batch % cand == 0 and cand * per_img <= budget_bytes:
            tb = cand
            break
    while tb > 1 and batch // tb < 2:
        tb //= 2
    return tb


def _fold_bn(bn, extra=1.0, eps=1e-5):
    inv = bn["gamma"] / jnp.sqrt(bn["var"] + eps)
    scale = (inv * extra).reshape(-1, 1).astype(jnp.float32)
    shift = ((bn["beta"] - bn["mean"] * inv) * extra).reshape(-1, 1)
    return scale, shift.astype(jnp.float32)


def init_params(key, in_ch, mid_ch, num_blocks, double_after_norm):
    assert num_blocks >= 1
    keys = iter(jax.random.split(key, 1024))

    def nrm(shape, scale=0.1):
        return scale * jax.random.normal(next(keys), shape, jnp.float32)

    def bn(ch):
        return dict(
            gamma=1.0 + 0.05 * jax.random.normal(next(keys), (ch,), jnp.float32),
            beta=nrm((ch,), 0.05),
            mean=nrm((ch,), 0.05),
            var=1.0 + 0.05 * jax.random.uniform(next(keys), (ch,), jnp.float32),
        )

    ex = 2.0 if double_after_norm else 1.0
    in_scale, in_shift = _fold_bn(bn(in_ch), extra=ex)
    params = dict(
        in_scale=in_scale, in_shift=in_shift,
        # 3x3 in_conv over cat(relu(h), relu(-h)), tap-major packing:
        # columns [t*2C : t*2C+C] act on relu(+h), the next C on relu(-h).
        w_in=nrm((mid_ch, 9 * 2 * in_ch)).astype(jnp.bfloat16),
        b_in=nrm((mid_ch, 1)),
        w_isk=nrm((mid_ch, mid_ch)).astype(jnp.bfloat16),
        b_isk=nrm((mid_ch, 1)),
        # out_conv split into separate s / t halves (was st.chunk(2, dim=1))
        ws=nrm((in_ch, mid_ch)).astype(jnp.bfloat16), bs=nrm((in_ch, 1)),
        wt=nrm((in_ch, mid_ch)).astype(jnp.bfloat16), bt=nrm((in_ch, 1)),
        # weight_norm(Rescale): effective per-channel weight (~1 at init)
        rescale_w=1.0 + nrm((in_ch, 1), 0.05),
    )
    n1s, n1t, w1 = [], [], []
    n2s, n2t, w2, b2 = [], [], [], []
    wsk, bsk = [], []
    for _ in range(num_blocks):
        s1, t1 = _fold_bn(bn(mid_ch))
        s2, t2 = _fold_bn(bn(mid_ch))
        n1s.append(s1); n1t.append(t1)
        w1.append(nrm((mid_ch, 9 * mid_ch)))
        n2s.append(s2); n2t.append(t2)
        w2.append(nrm((mid_ch, 9 * mid_ch)))
        b2.append(nrm((mid_ch, 1)))              # block conv1 has bias=False
        wsk.append(nrm((mid_ch, mid_ch)))
        bsk.append(nrm((mid_ch, 1)))
    params.update(
        n1_scale=jnp.stack(n1s), n1_shift=jnp.stack(n1t),
        w1=jnp.stack(w1).astype(jnp.bfloat16),
        n2_scale=jnp.stack(n2s), n2_shift=jnp.stack(n2t),
        w2=jnp.stack(w2).astype(jnp.bfloat16),
        b2=jnp.stack(b2),
        wsk=jnp.stack(wsk).astype(jnp.bfloat16),
        bsk=jnp.stack(bsk),
    )
    params["out_scale"], params["out_shift"] = _fold_bn(bn(mid_ch))
    return params


# ----------------------------------------------------------------------------
# CouplingLayer forward (jitted per static config)
# ----------------------------------------------------------------------------
@functools.partial(jax.jit, static_argnames=("mask_type", "reverse_mask", "reverse"))
def coupling_forward(params, x_nchw, sldj, *, mask_type, reverse_mask, reverse):
    B, C, H, W = x_nchw.shape
    HW = H * W
    checkerboard = (mask_type == MASK_CHECKERBOARD)
    mid = params["w_isk"].shape[0]
    TB = _pick_tb(B, HW, mid)

    # channels-first, pixels (and the TB batch tile) on the lane axis
    x_cn = (jnp.transpose(x_nchw, (1, 0, 2, 3))
            .reshape(C, B * HW).astype(jnp.float32))
    tmask = jnp.tile(conv_tap_masks(H, W), (1, 1, TB))

    if checkerboard:
        bmask = jnp.tile(checkerboard_mask(H, W, reverse_mask), (1, TB))
        x_st, x_ch, x_id = x_cn, None, None
    else:
        bmask = None
        half = C // 2
        if reverse_mask:
            x_id, x_ch = x_cn[:half], x_cn[half:]
        else:
            x_ch, x_id = x_cn[:half], x_cn[half:]
        x_st = x_id

    xo, sldj_out = _run_coupling(params, x_st, x_ch, sldj, bmask, tmask,
                                 H=H, W=W, TB=TB,
                                 checkerboard=checkerboard, reverse=reverse)

    if checkerboard:
        x_new_cn = xo
    elif reverse_mask:
        x_new_cn = jnp.concatenate([x_id, xo], axis=0)
    else:
        x_new_cn = jnp.concatenate([xo, x_id], axis=0)
    x_out = jnp.transpose(x_new_cn.reshape(C, B, H, W), (1, 0, 2, 3))
    return x_out, sldj_out


class CouplingLayerPallas:
    def __init__(self, in_channels, mid_channels, num_blocks, mask_type,
                 reverse_mask, key):
        self.mask_type = mask_type
        self.reverse_mask = reverse_mask
        st_in = in_channels // 2 if mask_type == MASK_CHANNEL_WISE else in_channels
        self.params = init_params(
            key, st_in, mid_channels, num_blocks,
            double_after_norm=(mask_type == MASK_CHECKERBOARD))

    def __call__(self, x_nchw, sldj=None, reverse=True):
        if sldj is None:
            sldj = jnp.zeros((x_nchw.shape[0],), jnp.float32)
        return coupling_forward(self.params, x_nchw, sldj,
                                mask_type=self.mask_type,
                                reverse_mask=self.reverse_mask,
                                reverse=reverse)


# ----------------------------------------------------------------------------
if __name__ == "__main__":
    key = jax.random.PRNGKey(0)
    k_x, k_x4, k_p1, k_p2 = jax.random.split(key, 4)

    B, C, H, W = 2, 4, 16, 16
    x = jax.random.normal(k_x, (B, C, H, W), jnp.float32)
    sldj = jnp.zeros((B,), jnp.float32)

    # checkerboard coupling, both directions (reverse=True is the torch default)
    layer_cb = CouplingLayerPallas(C, 32, 2, MASK_CHECKERBOARD,
                                   reverse_mask=False, key=k_p1)
    x_rev, sldj_rev = layer_cb(x, sldj, reverse=True)
    x_fwd, sldj_fwd = layer_cb(x, sldj, reverse=False)
    x_cb_rt, _ = layer_cb(x_fwd, sldj, reverse=True)        # round trip

    # channel-wise coupling at B=4 (exercises the TB=2 batched lane tile)
    B4 = 4
    x4 = jax.random.normal(k_x4, (B4, C, H, W), jnp.float32)
    sldj4 = jnp.zeros((B4,), jnp.float32)
    layer_cw = CouplingLayerPallas(C, 32, 2, MASK_CHANNEL_WISE,
                                   reverse_mask=True, key=k_p2)
    x_cw_r, sldj_cw_r = layer_cw(x4, sldj4, reverse=True)
    x_cw_f, sldj_cw_f = layer_cw(x4, sldj4, reverse=False)
    x_cw_rt, _ = layer_cw(x_cw_f, sldj4, reverse=True)      # round trip

    jax.block_until_ready((x_rev, sldj_rev, x_fwd, sldj_fwd, x_cb_rt,
                           x_cw_r, sldj_cw_r, x_cw_f, sldj_cw_f, x_cw_rt))

    assert x_rev.shape == (B, C, H, W) and x_fwd.shape == (B, C, H, W)
    assert x_cw_r.shape == (B4, C, H, W) and x_cw_f.shape == (B4, C, H, W)
    assert sldj_fwd.shape == (B,) and sldj_cw_f.shape == (B4,)
    for a in (x_rev, x_fwd, x_cb_rt, x_cw_r, x_cw_f, x_cw_rt,
              sldj_rev, sldj_fwd, sldj_cw_r, sldj_cw_f):
        assert bool(jnp.all(jnp.isfinite(a)))
    # reverse pass must leave sldj untouched
    assert bool(jnp.all(sldj_rev == sldj))
    assert bool(jnp.all(sldj_cw_r == sldj4))
    # forward followed by reverse must reconstruct x (s/t are recomputed from
    # the untouched partition, so the round trip is tight)
    assert bool(jnp.allclose(x_cb_rt, x, atol=1e-3, rtol=1e-3))
    assert bool(jnp.allclose(x_cw_rt, x4, atol=1e-3, rtol=1e-3))
    # checkerboard identity positions (b == 1) must pass through unchanged
    bm = checkerboard_mask(H, W, False).reshape(H, W)
    assert bool(jnp.allclose(jnp.where(bm[None, None] == 1.0, x_fwd, 0.0),
                             jnp.where(bm[None, None] == 1.0, x, 0.0),
                             atol=1e-5))
    print("KERNEL_OK")
</pallas_src>

<mosaic_0001>
module attributes {stable_mosaic.version = 11 : i64} {
  func.func @_coupling_kernel(%arg0: i32, %arg1: memref<4x256xf32, #tpu.memory_space<vmem>>, %arg2: memref<1x1x1xf32, #tpu.memory_space<vmem>>, %arg3: memref<9x1x256xf32, #tpu.memory_space<vmem>>, %arg4: memref<1x256xf32, #tpu.memory_space<vmem>>, %arg5: memref<4x1xf32, #tpu.memory_space<vmem>>, %arg6: memref<4x1xf32, #tpu.memory_space<vmem>>, %arg7: memref<32x72xbf16, #tpu.memory_space<vmem>>, %arg8: memref<32x1xf32, #tpu.memory_space<vmem>>, %arg9: memref<32x32xbf16, #tpu.memory_space<vmem>>, %arg10: memref<32x1xf32, #tpu.memory_space<vmem>>, %arg11: memref<2x32x1xf32, #tpu.memory_space<vmem>>, %arg12: memref<2x32x1xf32, #tpu.memory_space<vmem>>, %arg13: memref<2x32x288xbf16, #tpu.memory_space<vmem>>, %arg14: memref<2x32x1xf32, #tpu.memory_space<vmem>>, %arg15: memref<2x32x1xf32, #tpu.memory_space<vmem>>, %arg16: memref<2x32x288xbf16, #tpu.memory_space<vmem>>, %arg17: memref<2x32x1xf32, #tpu.memory_space<vmem>>, %arg18: memref<2x32x32xbf16, #tpu.memory_space<vmem>>, %arg19: memref<2x32x1xf32, #tpu.memory_space<vmem>>, %arg20: memref<32x1xf32, #tpu.memory_space<vmem>>, %arg21: memref<32x1xf32, #tpu.memory_space<vmem>>, %arg22: memref<4x32xbf16, #tpu.memory_space<vmem>>, %arg23: memref<4x1xf32, #tpu.memory_space<vmem>>, %arg24: memref<4x32xbf16, #tpu.memory_space<vmem>>, %arg25: memref<4x1xf32, #tpu.memory_space<vmem>>, %arg26: memref<4x1xf32, #tpu.memory_space<vmem>>, %arg27: memref<4x256xf32, #tpu.memory_space<vmem>>, %arg28: memref<1x1x1xf32, #tpu.memory_space<vmem>>, %arg29: memref<288x256xf32, #tpu.memory_space<vmem>>) attributes {dimension_semantics = [#tpu.dimension_semantics<parallel>], iteration_bounds = array<i64: 2>, scalar_prefetch = 0 : i64, scratch_operands = 1 : i64, tpu.core_type = #tpu.core_type<tc>, window_params = [{transform_indices = @transform_0, window_bounds = array<i64: 4, 256>}, {transform_indices = @transform_1, window_bounds = array<i64: 1, 1, 1>}, {pipeline_mode = #tpu.pipeline_mode<synchronous>, transform_indices = @transform_2, window_bounds = array<i64: 9, 1, 256>}, {pipeline_mode = #tpu.pipeline_mode<synchronous>, transform_indices = @transform_3, window_bounds = array<i64: 1, 256>}, {pipeline_mode = #tpu.pipeline_mode<synchronous>, transform_indices = @transform_4, window_bounds = array<i64: 4, 1>}, {pipeline_mode = #tpu.pipeline_mode<synchronous>, transform_indices = @transform_5, window_bounds = array<i64: 4, 1>}, {pipeline_mode = #tpu.pipeline_mode<synchronous>, transform_indices = @transform_6, window_bounds = array<i64: 32, 72>}, {pipeline_mode = #tpu.pipeline_mode<synchronous>, transform_indices = @transform_7, window_bounds = array<i64: 32, 1>}, {pipeline_mode = #tpu.pipeline_mode<synchronous>, transform_indices = @transform_8, window_bounds = array<i64: 32, 32>}, {pipeline_mode = #tpu.pipeline_mode<synchronous>, transform_indices = @transform_9, window_bounds = array<i64: 32, 1>}, {pipeline_mode = #tpu.pipeline_mode<synchronous>, transform_indices = @transform_10, window_bounds = array<i64: 2, 32, 1>}, {pipeline_mode = #tpu.pipeline_mode<synchronous>, transform_indices = @transform_11, window_bounds = array<i64: 2, 32, 1>}, {pipeline_mode = #tpu.pipeline_mode<synchronous>, transform_indices = @transform_12, window_bounds = array<i64: 2, 32, 288>}, {pipeline_mode = #tpu.pipeline_mode<synchronous>, transform_indices = @transform_13, window_bounds = array<i64: 2, 32, 1>}, {pipeline_mode = #tpu.pipeline_mode<synchronous>, transform_indices = @transform_14, window_bounds = array<i64: 2, 32, 1>}, {pipeline_mode = #tpu.pipeline_mode<synchronous>, transform_indices = @transform_15, window_bounds = array<i64: 2, 32, 288>}, {pipeline_mode = #tpu.pipeline_mode<synchronous>, transform_indices = @transform_16, window_bounds = array<i64: 2, 32, 1>}, {pipeline_mode = #tpu.pipeline_mode<synchronous>, transform_indices = @transform_17, window_bounds = array<i64: 2, 32, 32>}, {pipeline_mode = #tpu.pipeline_mode<synchronous>, transform_indices = @transform_18, window_bounds = array<i64: 2, 32, 1>}, {pipeline_mode = #tpu.pipeline_mode<synchronous>, transform_indices = @transform_19, window_bounds = array<i64: 32, 1>}, {pipeline_mode = #tpu.pipeline_mode<synchronous>, transform_indices = @transform_20, window_bounds = array<i64: 32, 1>}, {pipeline_mode = #tpu.pipeline_mode<synchronous>, transform_indices = @transform_21, window_bounds = array<i64: 4, 32>}, {pipeline_mode = #tpu.pipeline_mode<synchronous>, transform_indices = @transform_22, window_bounds = array<i64: 4, 1>}, {pipeline_mode = #tpu.pipeline_mode<synchronous>, transform_indices = @transform_23, window_bounds = array<i64: 4, 32>}, {pipeline_mode = #tpu.pipeline_mode<synchronous>, transform_indices = @transform_24, window_bounds = array<i64: 4, 1>}, {pipeline_mode = #tpu.pipeline_mode<synchronous>, transform_indices = @transform_25, window_bounds = array<i64: 4, 1>}, {transform_indices = @transform_26, window_bounds = array<i64: 4, 256>}, {transform_indices = @transform_27, window_bounds = array<i64: 1, 1, 1>}]} {
    %c0 = arith.constant 0 : index
    %c0_0 = arith.constant 0 : index
    %0 = vector.load %arg1[%c0, %c0_0] : memref<4x256xf32, #tpu.memory_space<vmem>>, vector<4x256xf32>
    %c0_1 = arith.constant 0 : index
    %c0_2 = arith.constant 0 : index
    %1 = vector.load %arg4[%c0_1, %c0_2] : memref<1x256xf32, #tpu.memory_space<vmem>>, vector<1x256xf32>
    %2 = vector.broadcast %1 : vector<1x256xf32> to vector<4x256xf32>
    %3 = arith.mulf %0, %2 : vector<4x256xf32>
    %c0_3 = arith.constant 0 : index
    %c0_4 = arith.constant 0 : index
    %4 = vector.load %arg5[%c0_3, %c0_4] : memref<4x1xf32, #tpu.memory_space<vmem>>, vector<4x1xf32>
    %5 = vector.broadcast %4 : vector<4x1xf32> to vector<4x256xf32>
    %6 = arith.mulf %3, %5 : vector<4x256xf32>
    %c0_5 = arith.constant 0 : index
    %c0_6 = arith.constant 0 : index
    %7 = vector.load %arg6[%c0_5, %c0_6] : memref<4x1xf32, #tpu.memory_space<vmem>>, vector<4x1xf32>
    %8 = vector.broadcast %7 : vector<4x1xf32> to vector<4x256xf32>
    %9 = arith.addf %6, %8 : vector<4x256xf32>
    %c17_i32 = arith.constant 17 : i32
    %10 = tpu.dynamic_rotate %9 by %c17_i32 dim 1 : vector<4x256xf32>, i32 -> vector<4x256xf32>
    %c0_7 = arith.constant 0 : index
    %c0_8 = arith.constant 0 : index
    %c0_9 = arith.constant 0 : index
    %11 = vector.load %arg3[%c0_7, %c0_8, %c0_9] : memref<9x1x256xf32, #tpu.memory_space<vmem>>, vector<1x1x256xf32>
    %12 = vector.shape_cast %11 : vector<1x1x256xf32> to vector<1x256xf32>
    %13 = vector.broadcast %12 : vector<1x256xf32> to vector<4x256xf32>
    %14 = arith.mulf %10, %13 : vector<4x256xf32>
    %cst = arith.constant 0.000000e+00 : f32
    %15 = vector.broadcast %cst : f32 to vector<4x256xf32>
    %16 = arith.maximumf %14, %15 : vector<4x256xf32>
    %17 = arith.subf %16, %14 : vector<4x256xf32>
    %c0_10 = arith.constant 0 : index
    %c0_11 = arith.constant 0 : index
    %18 = vector.load %arg29[%c0_10, %c0_11] : memref<288x256xf32, #tpu.memory_space<vmem>>, vector<4x256xf32>
    tpu.vector_store %arg29[%c0_10, %c0_11], %16 {strides = array<i32>} : memref<288x256xf32, #tpu.memory_space<vmem>>, vector<4x256xf32>,
    %c4 = arith.constant 4 : index
    %c0_12 = arith.constant 0 : index
    %19 = vector.load %arg29[%c4, %c0_12] : memref<288x256xf32, #tpu.memory_space<vmem>>, vector<4x256xf32>
    tpu.vector_store %arg29[%c4, %c0_12], %17 {strides = array<i32>} : memref<288x256xf32, #tpu.memory_space<vmem>>, vector<4x256xf32>,
    %c16_i32 = arith.constant 16 : i32
    %20 = tpu.dynamic_rotate %9 by %c16_i32 dim 1 : vector<4x256xf32>, i32 -> vector<4x256xf32>
    %c1 = arith.constant 1 : index
    %c0_13 = arith.constant 0 : index
    %c0_14 = arith.constant 0 : index
    %21 = vector.load %arg3[%c1, %c0_13, %c0_14] : memref<9x1x256xf32, #tpu.memory_space<vmem>>, vector<1x1x256xf32>
    %22 = vector.shape_cast %21 : vector<1x1x256xf32> to vector<1x256xf32>
    %23 = vector.broadcast %22 : vector<1x256xf32> to vector<4x256xf32>
    %24 = arith.mulf %20, %23 : vector<4x256xf32>
    %cst_15 = arith.constant 0.000000e+00 : f32
    %25 = vector.broadcast %cst_15 : f32 to vector<4x256xf32>
    %26 = arith.maximumf %24, %25 : vector<4x256xf32>
    %27 = arith.subf %26, %24 : vector<4x256xf32>
    %c8 = arith.constant 8 : index
    %c0_16 = arith.constant 0 : index
    %28 = vector.load %arg29[%c8, %c0_16] : memref<288x256xf32, #tpu.memory_space<vmem>>, vector<4x256xf32>
    tpu.vector_store %arg29[%c8, %c0_16], %26 {strides = array<i32>} : memref<288x256xf32, #tpu.memory_space<vmem>>, vector<4x256xf32>,
    %c12 = arith.constant 12 : index
    %c0_17 = arith.constant 0 : index
    %29 = vector.load %arg29[%c12, %c0_17] : memref<288x256xf32, #tpu.memory_space<vmem>>, vector<4x256xf32>
    tpu.vector_store %arg29[%c12, %c0_17], %27 {strides = array<i32>} : memref<288x256xf32, #tpu.memory_space<vmem>>, vector<4x256xf32>,
    %c15_i32 = arith.constant 15 : i32
    %30 = tpu.dynamic_rotate %9 by %c15_i32 dim 1 : vector<4x256xf32>, i32 -> vector<4x256xf32>
    %c2 = arith.constant 2 : index
    %c0_18 = arith.constant 0 : index
    %c0_19 = arith.constant 0 : index
    %31 = vector.load %arg3[%c2, %c0_18, %c0_19] : memref<9x1x256xf32, #tpu.memory_space<vmem>>, vector<1x1x256xf32>
    %32 = vector.shape_cast %31 : vector<1x1x256xf32> to vector<1x256xf32>
    %33 = vector.broadcast %32 : vector<1x256xf32> to vector<4x256xf32>
    %34 = arith.mulf %30, %33 : vector<4x256xf32>
    %cst_20 = arith.constant 0.000000e+00 : f32
    %35 = vector.broadcast %cst_20 : f32 to vector<4x256xf32>
    %36 = arith.maximumf %34, %35 : vector<4x256xf32>
    %37 = arith.subf %36, %34 : vector<4x256xf32>
    %c16 = arith.constant 16 : index
    %c0_21 = arith.constant 0 : index
    %38 = vector.load %arg29[%c16, %c0_21] : memref<288x256xf32, #tpu.memory_space<vmem>>, vector<4x256xf32>
    tpu.vector_store %arg29[%c16, %c0_21], %36 {strides = array<i32>} : memref<288x256xf32, #tpu.memory_space<vmem>>, vector<4x256xf32>,
    %c20 = arith.constant 20 : index
    %c0_22 = arith.constant 0 : index
    %39 = vector.load %arg29[%c20, %c0_22] : memref<288x256xf32, #tpu.memory_space<vmem>>, vector<4x256xf32>
    tpu.vector_store %arg29[%c20, %c0_22], %37 {strides = array<i32>} : memref<288x256xf32, #tpu.memory_space<vmem>>, vector<4x256xf32>,
    %c1_i32 = arith.constant 1 : i32
    %40 = tpu.dynamic_rotate %9 by %c1_i32 dim 1 : vector<4x256xf32>, i32 -> vector<4x256xf32>
    %c3 = arith.constant 3 : index
    %c0_23 = arith.constant 0 : index
    %c0_24 = arith.constant 0 : index
    %41 = vector.load %arg3[%c3, %c0_23, %c0_24] : memref<9x1x256xf32, #tpu.memory_space<vmem>>, vector<1x1x256xf32>
    %42 = vector.shape_cast %41 : vector<1x1x256xf32> to vector<1x256xf32>
    %43 = vector.broadcast %42 : vector<1x256xf32> to vector<4x256xf32>
    %44 = arith.mulf %40, %43 : vector<4x256xf32>
    %cst_25 = arith.constant 0.000000e+00 : f32
    %45 = vector.broadcast %cst_25 : f32 to vector<4x256xf32>
    %46 = arith.maximumf %44, %45 : vector<4x256xf32>
    %47 = arith.subf %46, %44 : vector<4x256xf32>
    %c24 = arith.constant 24 : index
    %c0_26 = arith.constant 0 : index
    %48 = vector.load %arg29[%c24, %c0_26] : memref<288x256xf32, #tpu.memory_space<vmem>>, vector<4x256xf32>
    tpu.vector_store %arg29[%c24, %c0_26], %46 {strides = array<i32>} : memref<288x256xf32, #tpu.memory_space<vmem>>, vector<4x256xf32>,
    %c28 = arith.constant 28 : index
    %c0_27 = arith.constant 0 : index
    %49 = vector.load %arg29[%c28, %c0_27] : memref<288x256xf32, #tpu.memory_space<vmem>>, vector<4x256xf32>
    tpu.vector_store %arg29[%c28, %c0_27], %47 {strides = array<i32>} : memref<288x256xf32, #tpu.memory_space<vmem>>, vector<4x256xf32>,
    %cst_28 = arith.constant 0.000000e+00 : f32
    %50 = vector.broadcast %cst_28 : f32 to vector<4x256xf32>
    %51 = arith.maximumf %9, %50 : vector<4x256xf32>
    %52 = arith.subf %51, %9 : vector<4x256xf32>
    %c32 = arith.constant 32 : index
    %c0_29 = arith.constant 0 : index
    %53 = vector.load %arg29[%c32, %c0_29] : memref<288x256xf32, #tpu.memory_space<vmem>>, vector<4x256xf32>
    tpu.vector_store %arg29[%c32, %c0_29], %51 {strides = array<i32>} : memref<288x256xf32, #tpu.memory_space<vmem>>, vector<4x256xf32>,
    %c36 = arith.constant 36 : index
    %c0_30 = arith.constant 0 : index
    %54 = vector.load %arg29[%c36, %c0_30] : memref<288x256xf32, #tpu.memory_space<vmem>>, vector<4x256xf32>
    tpu.vector_store %arg29[%c36, %c0_30], %52 {strides = array<i32>} : memref<288x256xf32, #tpu.memory_space<vmem>>, vector<4x256xf32>,
    %c255_i32 = arith.constant 255 : i32
    %55 = tpu.dynamic_rotate %9 by %c255_i32 dim 1 : vector<4x256xf32>, i32 -> vector<4x256xf32>
    %c5 = arith.constant 5 : index
    %c0_31 = arith.constant 0 : index
    %c0_32 = arith.constant 0 : index
    %56 = vector.load %arg3[%c5, %c0_31, %c0_32] : memref<9x1x256xf32, #tpu.memory_space<vmem>>, vector<1x1x256xf32>
    %57 = vector.shape_cast %56 : vector<1x1x256xf32> to vector<1x256xf32>
    %58 = vector.broadcast %57 : vector<1x256xf32> to vector<4x256xf32>
    %59 = arith.mulf %55, %58 : vector<4x256xf32>
    %cst_33 = arith.constant 0.000000e+00 : f32
    %60 = vector.broadcast %cst_33 : f32 to vector<4x256xf32>
    %61 = arith.maximumf %59, %60 : vector<4x256xf32>
    %62 = arith.subf %61, %59 : vector<4x256xf32>
    %c40 = arith.constant 40 : index
    %c0_34 = arith.constant 0 : index
    %63 = vector.load %arg29[%c40, %c0_34] : memref<288x256xf32, #tpu.memory_space<vmem>>, vector<4x256xf32>
    tpu.vector_store %arg29[%c40, %c0_34], %61 {strides = array<i32>} : memref<288x256xf32, #tpu.memory_space<vmem>>, vector<4x256xf32>,
    %c44 = arith.constant 44 : index
    %c0_35 = arith.constant 0 : index
    %64 = vector.load %arg29[%c44, %c0_35] : memref<288x256xf32, #tpu.memory_space<vmem>>, vector<4x256xf32>
    tpu.vector_store %arg29[%c44, %c0_35], %62 {strides = array<i32>} : memref<288x256xf32, #tpu.memory_space<vmem>>, vector<4x256xf32>,
    %c241_i32 = arith.constant 241 : i32
    %65 = tpu.dynamic_rotate %9 by %c241_i32 dim 1 : vector<4x256xf32>, i32 -> vector<4x256xf32>
    %c6 = arith.constant 6 : index
    %c0_36 = arith.constant 0 : index
    %c0_37 = arith.constant 0 : index
    %66 = vector.load %arg3[%c6, %c0_36, %c0_37] : memref<9x1x256xf32, #tpu.memory_space<vmem>>, vector<1x1x256xf32>
    %67 = vector.shape_cast %66 : vector<1x1x256xf32> to vector<1x256xf32>
    %68 = vector.broadcast %67 : vector<1x256xf32> to vector<4x256xf32>
    %69 = arith.mulf %65, %68 : vector<4x256xf32>
    %cst_38 = arith.constant 0.000000e+00 : f32
    %70 = vector.broadcast %cst_38 : f32 to vector<4x256xf32>
    %71 = arith.maximumf %69, %70 : vector<4x256xf32>
    %72 = arith.subf %71, %69 : vector<4x256xf32>
    %c48 = arith.constant 48 : index
    %c0_39 = arith.constant 0 : index
    %73 = vector.load %arg29[%c48, %c0_39] : memref<288x256xf32, #tpu.memory_space<vmem>>, vector<4x256xf32>
    tpu.vector_store %arg29[%c48, %c0_39], %71 {strides = array<i32>} : memref<288x256xf32, #tpu.memory_space<vmem>>, vector<4x256xf32>,
    %c52 = arith.constant 52 : index
    %c0_40 = arith.constant 0 : index
    %74 = vector.load %arg29[%c52, %c0_40] : memref<288x256xf32, #tpu.memory_space<vmem>>, vector<4x256xf32>
    tpu.vector_store %arg29[%c52, %c0_40], %72 {strides = array<i32>} : memref<288x256xf32, #tpu.memory_space<vmem>>, vector<4x256xf32>,
    %c240_i32 = arith.constant 240 : i32
    %75 = tpu.dynamic_rotate %9 by %c240_i32 dim 1 : vector<4x256xf32>, i32 -> vector<4x256xf32>
    %c7 = arith.constant 7 : index
    %c0_41 = arith.constant 0 : index
    %c0_42 = arith.constant 0 : index
    %76 = vector.load %arg3[%c7, %c0_41, %c0_42] : memref<9x1x256xf32, #tpu.memory_space<vmem>>, vector<1x1x256xf32>
    %77 = vector.shape_cast %76 : vector<1x1x256xf32> to vector<1x256xf32>
    %78 = vector.broadcast %77 : vector<1x256xf32> to vector<4x256xf32>
    %79 = arith.mulf %75, %78 : vector<4x256xf32>
    %cst_43 = arith.constant 0.000000e+00 : f32
    %80 = vector.broadcast %cst_43 : f32 to vector<4x256xf32>
    %81 = arith.maximumf %79, %80 : vector<4x256xf32>
    %82 = arith.subf %81, %79 : vector<4x256xf32>
    %c56 = arith.constant 56 : index
    %c0_44 = arith.constant 0 : index
    %83 = vector.load %arg29[%c56, %c0_44] : memref<288x256xf32, #tpu.memory_space<vmem>>, vector<4x256xf32>
    tpu.vector_store %arg29[%c56, %c0_44], %81 {strides = array<i32>} : memref<288x256xf32, #tpu.memory_space<vmem>>, vector<4x256xf32>,
    %c60 = arith.constant 60 : index
    %c0_45 = arith.constant 0 : index
    %84 = vector.load %arg29[%c60, %c0_45] : memref<288x256xf32, #tpu.memory_space<vmem>>, vector<4x256xf32>
    tpu.vector_store %arg29[%c60, %c0_45], %82 {strides = array<i32>} : memref<288x256xf32, #tpu.memory_space<vmem>>, vector<4x256xf32>,
    %c239_i32 = arith.constant 239 : i32
    %85 = tpu.dynamic_rotate %9 by %c239_i32 dim 1 : vector<4x256xf32>, i32 -> vector<4x256xf32>
    %c8_46 = arith.constant 8 : index
    %c0_47 = arith.constant 0 : index
    %c0_48 = arith.constant 0 : index
    %86 = vector.load %arg3[%c8_46, %c0_47, %c0_48] : memref<9x1x256xf32, #tpu.memory_space<vmem>>, vector<1x1x256xf32>
    %87 = vector.shape_cast %86 : vector<1x1x256xf32> to vector<1x256xf32>
    %88 = vector.broadcast %87 : vector<1x256xf32> to vector<4x256xf32>
    %89 = arith.mulf %85, %88 : vector<4x256xf32>
    %cst_49 = arith.constant 0.000000e+00 : f32
    %90 = vector.broadcast %cst_49 : f32 to vector<4x256xf32>
    %91 = arith.maximumf %89, %90 : vector<4x256xf32>
    %92 = arith.subf %91, %89 : vector<4x256xf32>
    %c64 = arith.constant 64 : index
    %c0_50 = arith.constant 0 : index
    %93 = vector.load %arg29[%c64, %c0_50] : memref<288x256xf32, #tpu.memory_space<vmem>>, vector<4x256xf32>
    tpu.vector_store %arg29[%c64, %c0_50], %91 {strides = array<i32>} : memref<288x256xf32, #tpu.memory_space<vmem>>, vector<4x256xf32>,
    %c68 = arith.constant 68 : index
    %c0_51 = arith.constant 0 : index
    %94 = vector.load %arg29[%c68, %c0_51] : memref<288x256xf32, #tpu.memory_space<vmem>>, vector<4x256xf32>
    tpu.vector_store %arg29[%c68, %c0_51], %92 {strides = array<i32>} : memref<288x256xf32, #tpu.memory_space<vmem>>, vector<4x256xf32>,
    %c0_52 = arith.constant 0 : index
    %c0_53 = arith.constant 0 : index
    %95 = vector.load %arg29[%c0_52, %c0_53] : memref<288x256xf32, #tpu.memory_space<vmem>>, vector<72x256xf32>
    %96 = arith.truncf %95 : vector<72x256xf32> to vector<72x256xbf16>
    %c0_54 = arith.constant 0 : index
    %c0_55 = arith.constant 0 : index
    %97 = vector.load %arg7[%c0_54, %c0_55] : memref<32x72xbf16, #tpu.memory_space<vmem>>, vector<32x72xbf16>
    %cst_56 = arith.constant dense<0.000000e+00> : vector<32x256xf32>
    %98 = tpu.matmul %97, %96, %cst_56 {dimension_numbers = #tpu.dot_dimension_numbers<[1], [0], [0], [1], [0, 0, 1, 1], [], []>} : vector<32x72xbf16>, vector<72x256xbf16>, vector<32x256xf32> -> vector<32x256xf32>
    %c0_57 = arith.constant 0 : index
    %c0_58 = arith.constant 0 : index
    %99 = vector.load %arg8[%c0_57, %c0_58] : memref<32x1xf32, #tpu.memory_space<vmem>>, vector<32x1xf32>
    %100 = vector.broadcast %99 : vector<32x1xf32> to vector<32x256xf32>
    %101 = arith.addf %98, %100 : vector<32x256xf32>
    %c0_59 = arith.constant 0 : index
    %c0_60 = arith.constant 0 : index
    %102 = vector.load %arg9[%c0_59, %c0_60] : memref<32x32xbf16, #tpu.memory_space<vmem>>, vector<32x32xbf16>
    %103 = arith.truncf %101 : vector<32x256xf32> to vector<32x256xbf16>
    %cst_61 = arith.constant dense<0.000000e+00> : vector<32x256xf32>
    %104 = tpu.matmul %102, %103, %cst_61 {dimension_numbers = #tpu.dot_dimension_numbers<[1], [0], [0], [1], [0, 0, 1, 1], [], []>} : vector<32x32xbf16>, vector<32x256xbf16>, vector<32x256xf32> -> vector<32x256xf32>
    %c0_62 = arith.constant 0 : index
    %c0_63 = arith.constant 0 : index
    %105 = vector.load %arg10[%c0_62, %c0_63] : memref<32x1xf32, #tpu.memory_space<vmem>>, vector<32x1xf32>
    %106 = vector.broadcast %105 : vector<32x1xf32> to vector<32x256xf32>
    %107 = arith.addf %104, %106 : vector<32x256xf32>
    %c0_64 = arith.constant 0 : index
    %c0_65 = arith.constant 0 : index
    %c0_66 = arith.constant 0 : index
    %108 = vector.load %arg11[%c0_64, %c0_65, %c0_66] : memref<2x32x1xf32, #tpu.memory_space<vmem>>, vector<1x32x1xf32>
    %109 = vector.shape_cast %108 : vector<1x32x1xf32> to vector<32x1xf32>
    %110 = vector.broadcast %109 : vector<32x1xf32> to vector<32x256xf32>
    %111 = arith.mulf %101, %110 : vector<32x256xf32>
    %c0_67 = arith.constant 0 : index
    %c0_68 = arith.constant 0 : index
    %c0_69 = arith.constant 0 : index
    %112 = vector.load %arg12[%c0_67, %c0_68, %c0_69] : memref<2x32x1xf32, #tpu.memory_space<vmem>>, vector<1x32x1xf32>
    %113 = vector.shape_cast %112 : vector<1x32x1xf32> to vector<32x1xf32>
    %114 = vector.broadcast %113 : vector<32x1xf32> to vector<32x256xf32>
    %115 = arith.addf %111, %114 : vector<32x256xf32>
    %cst_70 = arith.constant 0.000000e+00 : f32
    %116 = vector.broadcast %cst_70 : f32 to vector<32x256xf32>
    %117 = arith.maximumf %115, %116 : vector<32x256xf32>
    %c0_71 = arith.constant 0 : index
    %c0_72 = arith.constant 0 : index
    %c0_73 = arith.constant 0 : index
    %118 = vector.load %arg13[%c0_71, %c0_72, %c0_73] : memref<2x32x288xbf16, #tpu.memory_space<vmem>>, vector<1x32x288xbf16>
    %119 = vector.shape_cast %118 : vector<1x32x288xbf16> to vector<32x288xbf16>
    %c17_i32_74 = arith.constant 17 : i32
    %120 = tpu.dynamic_rotate %117 by %c17_i32_74 dim 1 : vector<32x256xf32>, i32 -> vector<32x256xf32>
    %c0_75 = arith.constant 0 : index
    %c0_76 = arith.constant 0 : index
    %c0_77 = arith.constant 0 : index
    %121 = vector.load %arg3[%c0_75, %c0_76, %c0_77] : memref<9x1x256xf32, #tpu.memory_space<vmem>>, vector<1x1x256xf32>
    %122 = vector.shape_cast %121 : vector<1x1x256xf32> to vector<1x256xf32>
    %123 = vector.broadcast %122 : vector<1x256xf32> to vector<32x256xf32>
    %124 = arith.mulf %120, %123 : vector<32x256xf32>
    %c0_78 = arith.constant 0 : index
    %c0_79 = arith.constant 0 : index
    %125 = vector.load %arg29[%c0_78, %c0_79] : memref<288x256xf32, #tpu.memory_space<vmem>>, vector<32x256xf32>
    tpu.vector_store %arg29[%c0_78, %c0_79], %124 {strides = array<i32>} : memref<288x256xf32, #tpu.memory_space<vmem>>, vector<32x256xf32>,
    %c16_i32_80 = arith.constant 16 : i32
    %126 = tpu.dynamic_rotate %117 by %c16_i32_80 dim 1 : vector<32x256xf32>, i32 -> vector<32x256xf32>
    %c1_81 = arith.constant 1 : index
    %c0_82 = arith.constant 0 : index
    %c0_83 = arith.constant 0 : index
    %127 = vector.load %arg3[%c1_81, %c0_82, %c0_83] : memref<9x1x256xf32, #tpu.memory_space<vmem>>, vector<1x1x256xf32>
    %128 = vector.shape_cast %127 : vector<1x1x256xf32> to vector<1x256xf32>
    %129 = vector.broadcast %128 : vector<1x256xf32> to vector<32x256xf32>
    %130 = arith.mulf %126, %129 : vector<32x256xf32>
    %c32_84 = arith.constant 32 : index
    %c0_85 = arith.constant 0 : index
    %131 = vector.load %arg29[%c32_84, %c0_85] : memref<288x256xf32, #tpu.memory_space<vmem>>, vector<32x256xf32>
    tpu.vector_store %arg29[%c32_84, %c0_85], %130 {strides = array<i32>} : memref<288x256xf32, #tpu.memory_space<vmem>>, vector<32x256xf32>,
    %c15_i32_86 = arith.constant 15 : i32
    %132 = tpu.dynamic_rotate %117 by %c15_i32_86 dim 1 : vector<32x256xf32>, i32 -> vector<32x256xf32>
    %c2_87 = arith.constant 2 : index
    %c0_88 = arith.constant 0 : index
    %c0_89 = arith.constant 0 : index
    %133 = vector.load %arg3[%c2_87, %c0_88, %c0_89] : memref<9x1x256xf32, #tpu.memory_space<vmem>>, vector<1x1x256xf32>
    %134 = vector.shape_cast %133 : vector<1x1x256xf32> to vector<1x256xf32>
    %135 = vector.broadcast %134 : vector<1x256xf32> to vector<32x256xf32>
    %136 = arith.mulf %132, %135 : vector<32x256xf32>
    %c64_90 = arith.constant 64 : index
    %c0_91 = arith.constant 0 : index
    %137 = vector.load %arg29[%c64_90, %c0_91] : memref<288x256xf32, #tpu.memory_space<vmem>>, vector<32x256xf32>
    tpu.vector_store %arg29[%c64_90, %c0_91], %136 {strides = array<i32>} : memref<288x256xf32, #tpu.memory_space<vmem>>, vector<32x256xf32>,
    %c1_i32_92 = arith.constant 1 : i32
    %138 = tpu.dynamic_rotate %117 by %c1_i32_92 dim 1 : vector<32x256xf32>, i32 -> vector<32x256xf32>
    %c3_93 = arith.constant 3 : index
    %c0_94 = arith.constant 0 : index
    %c0_95 = arith.constant 0 : index
    %139 = vector.load %arg3[%c3_93, %c0_94, %c0_95] : memref<9x1x256xf32, #tpu.memory_space<vmem>>, vector<1x1x256xf32>
    %140 = vector.shape_cast %139 : vector<1x1x256xf32> to vector<1x256xf32>
    %141 = vector.broadcast %140 : vector<1x256xf32> to vector<32x256xf32>
    %142 = arith.mulf %138, %141 : vector<32x256xf32>
    %c96 = arith.constant 96 : index
    %c0_96 = arith.constant 0 : index
    %143 = vector.load %arg29[%c96, %c0_96] : memref<288x256xf32, #tpu.memory_space<vmem>>, vector<32x256xf32>
    tpu.vector_store %arg29[%c96, %c0_96], %142 {strides = array<i32>} : memref<288x256xf32, #tpu.memory_space<vmem>>, vector<32x256xf32>,
    %c128 = arith.constant 128 : index
    %c0_97 = arith.constant 0 : index
    %144 = vector.load %arg29[%c128, %c0_97] : memref<288x256xf32, #tpu.memory_space<vmem>>, vector<32x256xf32>
    tpu.vector_store %arg29[%c128, %c0_97], %117 {strides = array<i32>} : memref<288x256xf32, #tpu.memory_space<vmem>>, vector<32x256xf32>,
    %c255_i32_98 = arith.constant 255 : i32
    %145 = tpu.dynamic_rotate %117 by %c255_i32_98 dim 1 : vector<32x256xf32>, i32 -> vector<32x256xf32>
    %c5_99 = arith.constant 5 : index
    %c0_100 = arith.constant 0 : index
    %c0_101 = arith.constant 0 : index
    %146 = vector.load %arg3[%c5_99, %c0_100, %c0_101] : memref<9x1x256xf32, #tpu.memory_space<vmem>>, vector<1x1x256xf32>
    %147 = vector.shape_cast %146 : vector<1x1x256xf32> to vector<1x256xf32>
    %148 = vector.broadcast %147 : vector<1x256xf32> to vector<32x256xf32>
    %149 = arith.mulf %145, %148 : vector<32x256xf32>
    %c160 = arith.constant 160 : index
    %c0_102 = arith.constant 0 : index
    %150 = vector.load %arg29[%c160, %c0_102] : memref<288x256xf32, #tpu.memory_space<vmem>>, vector<32x256xf32>
    tpu.vector_store %arg29[%c160, %c0_102], %149 {strides = array<i32>} : memref<288x256xf32, #tpu.memory_space<vmem>>, vector<32x256xf32>,
    %c241_i32_103 = arith.constant 241 : i32
    %151 = tpu.dynamic_rotate %117 by %c241_i32_103 dim 1 : vector<32x256xf32>, i32 -> vector<32x256xf32>
    %c6_104 = arith.constant 6 : index
    %c0_105 = arith.constant 0 : index
    %c0_106 = arith.constant 0 : index
    %152 = vector.load %arg3[%c6_104, %c0_105, %c0_106] : memref<9x1x256xf32, #tpu.memory_space<vmem>>, vector<1x1x256xf32>
    %153 = vector.shape_cast %152 : vector<1x1x256xf32> to vector<1x256xf32>
    %154 = vector.broadcast %153 : vector<1x256xf32> to vector<32x256xf32>
    %155 = arith.mulf %151, %154 : vector<32x256xf32>
    %c192 = arith.constant 192 : index
    %c0_107 = arith.constant 0 : index
    %156 = vector.load %arg29[%c192, %c0_107] : memref<288x256xf32, #tpu.memory_space<vmem>>, vector<32x256xf32>
    tpu.vector_store %arg29[%c192, %c0_107], %155 {strides = array<i32>} : memref<288x256xf32, #tpu.memory_space<vmem>>, vector<32x256xf32>,
    %c240_i32_108 = arith.constant 240 : i32
    %157 = tpu.dynamic_rotate %117 by %c240_i32_108 dim 1 : vector<32x256xf32>, i32 -> vector<32x256xf32>
    %c7_109 = arith.constant 7 : index
    %c0_110 = arith.constant 0 : index
    %c0_111 = arith.constant 0 : index
    %158 = vector.load %arg3[%c7_109, %c0_110, %c0_111] : memref<9x1x256xf32, #tpu.memory_space<vmem>>, vector<1x1x256xf32>
    %159 = vector.shape_cast %158 : vector<1x1x256xf32> to vector<1x256xf32>
    %160 = vector.broadcast %159 : vector<1x256xf32> to vector<32x256xf32>
    %161 = arith.mulf %157, %160 : vector<32x256xf32>
    %c224 = arith.constant 224 : index
    %c0_112 = arith.constant 0 : index
    %162 = vector.load %arg29[%c224, %c0_112] : memref<288x256xf32, #tpu.memory_space<vmem>>, vector<32x256xf32>
    tpu.vector_store %arg29[%c224, %c0_112], %161 {strides = array<i32>} : memref<288x256xf32, #tpu.memory_space<vmem>>, vector<32x256xf32>,
    %c239_i32_113 = arith.constant 239 : i32
    %163 = tpu.dynamic_rotate %117 by %c239_i32_113 dim 1 : vector<32x256xf32>, i32 -> vector<32x256xf32>
    %c8_114 = arith.constant 8 : index
    %c0_115 = arith.constant 0 : index
    %c0_116 = arith.constant 0 : index
    %164 = vector.load %arg3[%c8_114, %c0_115, %c0_116] : memref<9x1x256xf32, #tpu.memory_space<vmem>>, vector<1x1x256xf32>
    %165 = vector.shape_cast %164 : vector<1x1x256xf32> to vector<1x256xf32>
    %166 = vector.broadcast %165 : vector<1x256xf32> to vector<32x256xf32>
    %167 = arith.mulf %163, %166 : vector<32x256xf32>
    %c256 = arith.constant 256 : index
    %c0_117 = arith.constant 0 : index
    %168 = vector.load %arg29[%c256, %c0_117] : memref<288x256xf32, #tpu.memory_space<vmem>>, vector<32x256xf32>
    tpu.vector_store %arg29[%c256, %c0_117], %167 {strides = array<i32>} : memref<288x256xf32, #tpu.memory_space<vmem>>, vector<32x256xf32>,
    %c0_118 = arith.constant 0 : index
    %c0_119 = arith.constant 0 : index
    %169 = vector.load %arg29[%c0_118, %c0_119] : memref<288x256xf32, #tpu.memory_space<vmem>>, vector<288x256xf32>
    %170 = arith.truncf %169 : vector<288x256xf32> to vector<288x256xbf16>
    %cst_120 = arith.constant dense<0.000000e+00> : vector<32x256xf32>
    %171 = tpu.matmul %119, %170, %cst_120 {dimension_numbers = #tpu.dot_dimension_numbers<[1], [0], [0], [1], [0, 0, 1, 1], [], []>} : vector<32x288xbf16>, vector<288x256xbf16>, vector<32x256xf32> -> vector<32x256xf32>
    %c0_121 = arith.constant 0 : index
    %c0_122 = arith.constant 0 : index
    %c0_123 = arith.constant 0 : index
    %172 = vector.load %arg14[%c0_121, %c0_122, %c0_123] : memref<2x32x1xf32, #tpu.memory_space<vmem>>, vector<1x32x1xf32>
    %173 = vector.shape_cast %172 : vector<1x32x1xf32> to vector<32x1xf32>
    %174 = vector.broadcast %173 : vector<32x1xf32> to vector<32x256xf32>
    %175 = arith.mulf %171, %174 : vector<32x256xf32>
    %c0_124 = arith.constant 0 : index
    %c0_125 = arith.constant 0 : index
    %c0_126 = arith.constant 0 : index
    %176 = vector.load %arg15[%c0_124, %c0_125, %c0_126] : memref<2x32x1xf32, #tpu.memory_space<vmem>>, vector<1x32x1xf32>
    %177 = vector.shape_cast %176 : vector<1x32x1xf32> to vector<32x1xf32>
    %178 = vector.broadcast %177 : vector<32x1xf32> to vector<32x256xf32>
    %179 = arith.addf %175, %178 : vector<32x256xf32>
    %cst_127 = arith.constant 0.000000e+00 : f32
    %180 = vector.broadcast %cst_127 : f32 to vector<32x256xf32>
    %181 = arith.maximumf %179, %180 : vector<32x256xf32>
    %c0_128 = arith.constant 0 : index
    %c0_129 = arith.constant 0 : index
    %c0_130 = arith.constant 0 : index
    %182 = vector.load %arg16[%c0_128, %c0_129, %c0_130] : memref<2x32x288xbf16, #tpu.memory_space<vmem>>, vector<1x32x288xbf16>
    %183 = vector.shape_cast %182 : vector<1x32x288xbf16> to vector<32x288xbf16>
    %c17_i32_131 = arith.constant 17 : i32
    %184 = tpu.dynamic_rotate %181 by %c17_i32_131 dim 1 : vector<32x256xf32>, i32 -> vector<32x256xf32>
    %c0_132 = arith.constant 0 : index
    %c0_133 = arith.constant 0 : index
    %c0_134 = arith.constant 0 : index
    %185 = vector.load %arg3[%c0_132, %c0_133, %c0_134] : memref<9x1x256xf32, #tpu.memory_space<vmem>>, vector<1x1x256xf32>
    %186 = vector.shape_cast %185 : vector<1x1x256xf32> to vector<1x256xf32>
    %187 = vector.broadcast %186 : vector<1x256xf32> to vector<32x256xf32>
    %188 = arith.mulf %184, %187 : vector<32x256xf32>
    %c0_135 = arith.constant 0 : index
    %c0_136 = arith.constant 0 : index
    %189 = vector.load %arg29[%c0_135, %c0_136] : memref<288x256xf32, #tpu.memory_space<vmem>>, vector<32x256xf32>
    tpu.vector_store %arg29[%c0_135, %c0_136], %188 {strides = array<i32>} : memref<288x256xf32, #tpu.memory_space<vmem>>, vector<32x256xf32>,
    %c16_i32_137 = arith.constant 16 : i32
    %190 = tpu.dynamic_rotate %181 by %c16_i32_137 dim 1 : vector<32x256xf32>, i32 -> vector<32x256xf32>
    %c1_138 = arith.constant 1 : index
    %c0_139 = arith.constant 0 : index
    %c0_140 = arith.constant 0 : index
    %191 = vector.load %arg3[%c1_138, %c0_139, %c0_140] : memref<9x1x256xf32, #tpu.memory_space<vmem>>, vector<1x1x256xf32>
    %192 = vector.shape_cast %191 : vector<1x1x256xf32> to vector<1x256xf32>
    %193 = vector.broadcast %192 : vector<1x256xf32> to vector<32x256xf32>
    %194 = arith.mulf %190, %193 : vector<32x256xf32>
    %c32_141 = arith.constant 32 : index
    %c0_142 = arith.constant 0 : index
    %195 = vector.load %arg29[%c32_141, %c0_142] : memref<288x256xf32, #tpu.memory_space<vmem>>, vector<32x256xf32>
    tpu.vector_store %arg29[%c32_141, %c0_142], %194 {strides = array<i32>} : memref<288x256xf32, #tpu.memory_space<vmem>>, vector<32x256xf32>,
    %c15_i32_143 = arith.constant 15 : i32
    %196 = tpu.dynamic_rotate %181 by %c15_i32_143 dim 1 : vector<32x256xf32>, i32 -> vector<32x256xf32>
    %c2_144 = arith.constant 2 : index
    %c0_145 = arith.constant 0 : index
    %c0_146 = arith.constant 0 : index
    %197 = vector.load %arg3[%c2_144, %c0_145, %c0_146] : memref<9x1x256xf32, #tpu.memory_space<vmem>>, vector<1x1x256xf32>
    %198 = vector.shape_cast %197 : vector<1x1x256xf32> to vector<1x256xf32>
    %199 = vector.broadcast %198 : vector<1x256xf32> to vector<32x256xf32>
    %200 = arith.mulf %196, %199 : vector<32x256xf32>
    %c64_147 = arith.constant 64 : index
    %c0_148 = arith.constant 0 : index
    %201 = vector.load %arg29[%c64_147, %c0_148] : memref<288x256xf32, #tpu.memory_space<vmem>>, vector<32x256xf32>
    tpu.vector_store %arg29[%c64_147, %c0_148], %200 {strides = array<i32>} : memref<288x256xf32, #tpu.memory_space<vmem>>, vector<32x256xf32>,
    %c1_i32_149 = arith.constant 1 : i32
    %202 = tpu.dynamic_rotate %181 by %c1_i32_149 dim 1 : vector<32x256xf32>, i32 -> vector<32x256xf32>
    %c3_150 = arith.constant 3 : index
    %c0_151 = arith.constant 0 : index
    %c0_152 = arith.constant 0 : index
    %203 = vector.load %arg3[%c3_150, %c0_151, %c0_152] : memref<9x1x256xf32, #tpu.memory_space<vmem>>, vector<1x1x256xf32>
    %204 = vector.shape_cast %203 : vector<1x1x256xf32> to vector<1x256xf32>
    %205 = vector.broadcast %204 : vector<1x256xf32> to vector<32x256xf32>
    %206 = arith.mulf %202, %205 : vector<32x256xf32>
    %c96_153 = arith.constant 96 : index
    %c0_154 = arith.constant 0 : index
    %207 = vector.load %arg29[%c96_153, %c0_154] : memref<288x256xf32, #tpu.memory_space<vmem>>, vector<32x256xf32>
    tpu.vector_store %arg29[%c96_153, %c0_154], %206 {strides = array<i32>} : memref<288x256xf32, #tpu.memory_space<vmem>>, vector<32x256xf32>,
    %c128_155 = arith.constant 128 : index
    %c0_156 = arith.constant 0 : index
    %208 = vector.load %arg29[%c128_155, %c0_156] : memref<288x256xf32, #tpu.memory_space<vmem>>, vector<32x256xf32>
    tpu.vector_store %arg29[%c128_155, %c0_156], %181 {strides = array<i32>} : memref<288x256xf32, #tpu.memory_space<vmem>>, vector<32x256xf32>,
    %c255_i32_157 = arith.constant 255 : i32
    %209 = tpu.dynamic_rotate %181 by %c255_i32_157 dim 1 : vector<32x256xf32>, i32 -> vector<32x256xf32>
    %c5_158 = arith.constant 5 : index
    %c0_159 = arith.constant 0 : index
    %c0_160 = arith.constant 0 : index
    %210 = vector.load %arg3[%c5_158, %c0_159, %c0_160] : memref<9x1x256xf32, #tpu.memory_space<vmem>>, vector<1x1x256xf32>
    %211 = vector.shape_cast %210 : vector<1x1x256xf32> to vector<1x256xf32>
    %212 = vector.broadcast %211 : vector<1x256xf32> to vector<32x256xf32>
    %213 = arith.mulf %209, %212 : vector<32x256xf32>
    %c160_161 = arith.constant 160 : index
    %c0_162 = arith.constant 0 : index
    %214 = vector.load %arg29[%c160_161, %c0_162] : memref<288x256xf32, #tpu.memory_space<vmem>>, vector<32x256xf32>
    tpu.vector_store %arg29[%c160_161, %c0_162], %213 {strides = array<i32>} : memref<288x256xf32, #tpu.memory_space<vmem>>, vector<32x256xf32>,
    %c241_i32_163 = arith.constant 241 : i32
    %215 = tpu.dynamic_rotate %181 by %c241_i32_163 dim 1 : vector<32x256xf32>, i32 -> vector<32x256xf32>
    %c6_164 = arith.constant 6 : index
    %c0_165 = arith.constant 0 : index
    %c0_166 = arith.constant 0 : index
    %216 = vector.load %arg3[%c6_164, %c0_165, %c0_166] : memref<9x1x256xf32, #tpu.memory_space<vmem>>, vector<1x1x256xf32>
    %217 = vector.shape_cast %216 : vector<1x1x256xf32> to vector<1x256xf32>
    %218 = vector.broadcast %217 : vector<1x256xf32> to vector<32x256xf32>
    %219 = arith.mulf %215, %218 : vector<32x256xf32>
    %c192_167 = arith.constant 192 : index
    %c0_168 = arith.constant 0 : index
    %220 = vector.load %arg29[%c192_167, %c0_168] : memref<288x256xf32, #tpu.memory_space<vmem>>, vector<32x256xf32>
    tpu.vector_store %arg29[%c192_167, %c0_168], %219 {strides = array<i32>} : memref<288x256xf32, #tpu.memory_space<vmem>>, vector<32x256xf32>,
    %c240_i32_169 = arith.constant 240 : i32
    %221 = tpu.dynamic_rotate %181 by %c240_i32_169 dim 1 : vector<32x256xf32>, i32 -> vector<32x256xf32>
    %c7_170 = arith.constant 7 : index
    %c0_171 = arith.constant 0 : index
    %c0_172 = arith.constant 0 : index
    %222 = vector.load %arg3[%c7_170, %c0_171, %c0_172] : memref<9x1x256xf32, #tpu.memory_space<vmem>>, vector<1x1x256xf32>
    %223 = vector.shape_cast %222 : vector<1x1x256xf32> to vector<1x256xf32>
    %224 = vector.broadcast %223 : vector<1x256xf32> to vector<32x256xf32>
    %225 = arith.mulf %221, %224 : vector<32x256xf32>
    %c224_173 = arith.constant 224 : index
    %c0_174 = arith.constant 0 : index
    %226 = vector.load %arg29[%c224_173, %c0_174] : memref<288x256xf32, #tpu.memory_space<vmem>>, vector<32x256xf32>
    tpu.vector_store %arg29[%c224_173, %c0_174], %225 {strides = array<i32>} : memref<288x256xf32, #tpu.memory_space<vmem>>, vector<32x256xf32>,
    %c239_i32_175 = arith.constant 239 : i32
    %227 = tpu.dynamic_rotate %181 by %c239_i32_175 dim 1 : vector<32x256xf32>, i32 -> vector<32x256xf32>
    %c8_176 = arith.constant 8 : index
    %c0_177 = arith.constant 0 : index
    %c0_178 = arith.constant 0 : index
    %228 = vector.load %arg3[%c8_176, %c0_177, %c0_178] : memref<9x1x256xf32, #tpu.memory_space<vmem>>, vector<1x1x256xf32>
    %229 = vector.shape_cast %228 : vector<1x1x256xf32> to vector<1x256xf32>
    %230 = vector.broadcast %229 : vector<1x256xf32> to vector<32x256xf32>
    %231 = arith.mulf %227, %230 : vector<32x256xf32>
    %c256_179 = arith.constant 256 : index
    %c0_180 = arith.constant 0 : index
    %232 = vector.load %arg29[%c256_179, %c0_180] : memref<288x256xf32, #tpu.memory_space<vmem>>, vector<32x256xf32>
    tpu.vector_store %arg29[%c256_179, %c0_180], %231 {strides = array<i32>} : memref<288x256xf32, #tpu.memory_space<vmem>>, vector<32x256xf32>,
    %c0_181 = arith.constant 0 : index
    %c0_182 = arith.constant 0 : index
    %233 = vector.load %arg29[%c0_181, %c0_182] : memref<288x256xf32, #tpu.memory_space<vmem>>, vector<288x256xf32>
    %234 = arith.truncf %233 : vector<288x256xf32> to vector<288x256xbf16>
    %cst_183 = arith.constant dense<0.000000e+00> : vector<32x256xf32>
    %235 = tpu.matmul %183, %234, %cst_183 {dimension_numbers = #tpu.dot_dimension_numbers<[1], [0], [0], [1], [0, 0, 1, 1], [], []>} : vector<32x288xbf16>, vector<288x256xbf16>, vector<32x256xf32> -> vector<32x256xf32>
    %c0_184 = arith.constant 0 : index
    %c0_185 = arith.constant 0 : index
    %c0_186 = arith.constant 0 : index
    %236 = vector.load %arg17[%c0_184, %c0_185, %c0_186] : memref<2x32x1xf32, #tpu.memory_space<vmem>>, vector<1x32x1xf32>
    %237 = vector.shape_cast %236 : vector<1x32x1xf32> to vector<32x1xf32>
    %238 = vector.broadcast %237 : vector<32x1xf32> to vector<32x256xf32>
    %239 = arith.addf %235, %238 : vector<32x256xf32>
    %240 = arith.addf %101, %239 : vector<32x256xf32>
    %c0_187 = arith.constant 0 : index
    %c0_188 = arith.constant 0 : index
    %c0_189 = arith.constant 0 : index
    %241 = vector.load %arg18[%c0_187, %c0_188, %c0_189] : memref<2x32x32xbf16, #tpu.memory_space<vmem>>, vector<1x32x32xbf16>
    %242 = vector.shape_cast %241 : vector<1x32x32xbf16> to vector<32x32xbf16>
    %243 = arith.truncf %240 : vector<32x256xf32> to vector<32x256xbf16>
    %cst_190 = arith.constant dense<0.000000e+00> : vector<32x256xf32>
    %244 = tpu.matmul %242, %243, %cst_190 {dimension_numbers = #tpu.dot_dimension_numbers<[1], [0], [0], [1], [0, 0, 1, 1], [], []>} : vector<32x32xbf16>, vector<32x256xbf16>, vector<32x256xf32> -> vector<32x256xf32>
    %c0_191 = arith.constant 0 : index
    %c0_192 = arith.constant 0 : index
    %c0_193 = arith.constant 0 : index
    %245 = vector.load %arg19[%c0_191, %c0_192, %c0_193] : memref<2x32x1xf32, #tpu.memory_space<vmem>>, vector<1x32x1xf32>
    %246 = vector.shape_cast %245 : vector<1x32x1xf32> to vector<32x1xf32>
    %247 = vector.broadcast %246 : vector<32x1xf32> to vector<32x256xf32>
    %248 = arith.addf %244, %247 : vector<32x256xf32>
    %249 = arith.addf %107, %248 : vector<32x256xf32>
    %c1_194 = arith.constant 1 : index
    %c0_195 = arith.constant 0 : index
    %c0_196 = arith.constant 0 : index
    %250 = vector.load %arg11[%c1_194, %c0_195, %c0_196] : memref<2x32x1xf32, #tpu.memory_space<vmem>>, vector<1x32x1xf32>
    %251 = vector.shape_cast %250 : vector<1x32x1xf32> to vector<32x1xf32>
    %252 = vector.broadcast %251 : vector<32x1xf32> to vector<32x256xf32>
    %253 = arith.mulf %240, %252 : vector<32x256xf32>
    %c1_197 = arith.constant 1 : index
    %c0_198 = arith.constant 0 : index
    %c0_199 = arith.constant 0 : index
    %254 = vector.load %arg12[%c1_197, %c0_198, %c0_199] : memref<2x32x1xf32, #tpu.memory_space<vmem>>, vector<1x32x1xf32>
    %255 = vector.shape_cast %254 : vector<1x32x1xf32> to vector<32x1xf32>
    %256 = vector.broadcast %255 : vector<32x1xf32> to vector<32x256xf32>
    %257 = arith.addf %253, %256 : vector<32x256xf32>
    %cst_200 = arith.constant 0.000000e+00 : f32
    %258 = vector.broadcast %cst_200 : f32 to vector<32x256xf32>
    %259 = arith.maximumf %257, %258 : vector<32x256xf32>
    %c1_201 = arith.constant 1 : index
    %c0_202 = arith.constant 0 : index
    %c0_203 = arith.constant 0 : index
    %260 = vector.load %arg13[%c1_201, %c0_202, %c0_203] : memref<2x32x288xbf16, #tpu.memory_space<vmem>>, vector<1x32x288xbf16>
    %261 = vector.shape_cast %260 : vector<1x32x288xbf16> to vector<32x288xbf16>
    %c17_i32_204 = arith.constant 17 : i32
    %262 = tpu.dynamic_rotate %259 by %c17_i32_204 dim 1 : vector<32x256xf32>, i32 -> vector<32x256xf32>
    %c0_205 = arith.constant 0 : index
    %c0_206 = arith.constant 0 : index
    %c0_207 = arith.constant 0 : index
    %263 = vector.load %arg3[%c0_205, %c0_206, %c0_207] : memref<9x1x256xf32, #tpu.memory_space<vmem>>, vector<1x1x256xf32>
    %264 = vector.shape_cast %263 : vector<1x1x256xf32> to vector<1x256xf32>
    %265 = vector.broadcast %264 : vector<1x256xf32> to vector<32x256xf32>
    %266 = arith.mulf %262, %265 : vector<32x256xf32>
    %c0_208 = arith.constant 0 : index
    %c0_209 = arith.constant 0 : index
    %267 = vector.load %arg29[%c0_208, %c0_209] : memref<288x256xf32, #tpu.memory_space<vmem>>, vector<32x256xf32>
    tpu.vector_store %arg29[%c0_208, %c0_209], %266 {strides = array<i32>} : memref<288x256xf32, #tpu.memory_space<vmem>>, vector<32x256xf32>,
    %c16_i32_210 = arith.constant 16 : i32
    %268 = tpu.dynamic_rotate %259 by %c16_i32_210 dim 1 : vector<32x256xf32>, i32 -> vector<32x256xf32>
    %c1_211 = arith.constant 1 : index
    %c0_212 = arith.constant 0 : index
    %c0_213 = arith.constant 0 : index
    %269 = vector.load %arg3[%c1_211, %c0_212, %c0_213] : memref<9x1x256xf32, #tpu.memory_space<vmem>>, vector<1x1x256xf32>
    %270 = vector.shape_cast %269 : vector<1x1x256xf32> to vector<1x256xf32>
    %271 = vector.broadcast %270 : vector<1x256xf32> to vector<32x256xf32>
    %272 = arith.mulf %268, %271 : vector<32x256xf32>
    %c32_214 = arith.constant 32 : index
    %c0_215 = arith.constant 0 : index
    %273 = vector.load %arg29[%c32_214, %c0_215] : memref<288x256xf32, #tpu.memory_space<vmem>>, vector<32x256xf32>
    tpu.vector_store %arg29[%c32_214, %c0_215], %272 {strides = array<i32>} : memref<288x256xf32, #tpu.memory_space<vmem>>, vector<32x256xf32>,
    %c15_i32_216 = arith.constant 15 : i32
    %274 = tpu.dynamic_rotate %259 by %c15_i32_216 dim 1 : vector<32x256xf32>, i32 -> vector<32x256xf32>
    %c2_217 = arith.constant 2 : index
    %c0_218 = arith.constant 0 : index
    %c0_219 = arith.constant 0 : index
    %275 = vector.load %arg3[%c2_217, %c0_218, %c0_219] : memref<9x1x256xf32, #tpu.memory_space<vmem>>, vector<1x1x256xf32>
    %276 = vector.shape_cast %275 : vector<1x1x256xf32> to vector<1x256xf32>
    %277 = vector.broadcast %276 : vector<1x256xf32> to vector<32x256xf32>
    %278 = arith.mulf %274, %277 : vector<32x256xf32>
    %c64_220 = arith.constant 64 : index
    %c0_221 = arith.constant 0 : index
    %279 = vector.load %arg29[%c64_220, %c0_221] : memref<288x256xf32, #tpu.memory_space<vmem>>, vector<32x256xf32>
    tpu.vector_store %arg29[%c64_220, %c0_221], %278 {strides = array<i32>} : memref<288x256xf32, #tpu.memory_space<vmem>>, vector<32x256xf32>,
    %c1_i32_222 = arith.constant 1 : i32
    %280 = tpu.dynamic_rotate %259 by %c1_i32_222 dim 1 : vector<32x256xf32>, i32 -> vector<32x256xf32>
    %c3_223 = arith.constant 3 : index
    %c0_224 = arith.constant 0 : index
    %c0_225 = arith.constant 0 : index
    %281 = vector.load %arg3[%c3_223, %c0_224, %c0_225] : memref<9x1x256xf32, #tpu.memory_space<vmem>>, vector<1x1x256xf32>
    %282 = vector.shape_cast %281 : vector<1x1x256xf32> to vector<1x256xf32>
    %283 = vector.broadcast %282 : vector<1x256xf32> to vector<32x256xf32>
    %284 = arith.mulf %280, %283 : vector<32x256xf32>
    %c96_226 = arith.constant 96 : index
    %c0_227 = arith.constant 0 : index
    %285 = vector.load %arg29[%c96_226, %c0_227] : memref<288x256xf32, #tpu.memory_space<vmem>>, vector<32x256xf32>
    tpu.vector_store %arg29[%c96_226, %c0_227], %284 {strides = array<i32>} : memref<288x256xf32, #tpu.memory_space<vmem>>, vector<32x256xf32>,
    %c128_228 = arith.constant 128 : index
    %c0_229 = arith.constant 0 : index
    %286 = vector.load %arg29[%c128_228, %c0_229] : memref<288x256xf32, #tpu.memory_space<vmem>>, vector<32x256xf32>
    tpu.vector_store %arg29[%c128_228, %c0_229], %259 {strides = array<i32>} : memref<288x256xf32, #tpu.memory_space<vmem>>, vector<32x256xf32>,
    %c255_i32_230 = arith.constant 255 : i32
    %287 = tpu.dynamic_rotate %259 by %c255_i32_230 dim 1 : vector<32x256xf32>, i32 -> vector<32x256xf32>
    %c5_231 = arith.constant 5 : index
    %c0_232 = arith.constant 0 : index
    %c0_233 = arith.constant 0 : index
    %288 = vector.load %arg3[%c5_231, %c0_232, %c0_233] : memref<9x1x256xf32, #tpu.memory_space<vmem>>, vector<1x1x256xf32>
    %289 = vector.shape_cast %288 : vector<1x1x256xf32> to vector<1x256xf32>
    %290 = vector.broadcast %289 : vector<1x256xf32> to vector<32x256xf32>
    %291 = arith.mulf %287, %290 : vector<32x256xf32>
    %c160_234 = arith.constant 160 : index
    %c0_235 = arith.constant 0 : index
    %292 = vector.load %arg29[%c160_234, %c0_235] : memref<288x256xf32, #tpu.memory_space<vmem>>, vector<32x256xf32>
    tpu.vector_store %arg29[%c160_234, %c0_235], %291 {strides = array<i32>} : memref<288x256xf32, #tpu.memory_space<vmem>>, vector<32x256xf32>,
    %c241_i32_236 = arith.constant 241 : i32
    %293 = tpu.dynamic_rotate %259 by %c241_i32_236 dim 1 : vector<32x256xf32>, i32 -> vector<32x256xf32>
    %c6_237 = arith.constant 6 : index
    %c0_238 = arith.constant 0 : index
    %c0_239 = arith.constant 0 : index
    %294 = vector.load %arg3[%c6_237, %c0_238, %c0_239] : memref<9x1x256xf32, #tpu.memory_space<vmem>>, vector<1x1x256xf32>
    %295 = vector.shape_cast %294 : vector<1x1x256xf32> to vector<1x256xf32>
    %296 = vector.broadcast %295 : vector<1x256xf32> to vector<32x256xf32>
    %297 = arith.mulf %293, %296 : vector<32x256xf32>
    %c192_240 = arith.constant 192 : index
    %c0_241 = arith.constant 0 : index
    %298 = vector.load %arg29[%c192_240, %c0_241] : memref<288x256xf32, #tpu.memory_space<vmem>>, vector<32x256xf32>
    tpu.vector_store %arg29[%c192_240, %c0_241], %297 {strides = array<i32>} : memref<288x256xf32, #tpu.memory_space<vmem>>, vector<32x256xf32>,
    %c240_i32_242 = arith.constant 240 : i32
    %299 = tpu.dynamic_rotate %259 by %c240_i32_242 dim 1 : vector<32x256xf32>, i32 -> vector<32x256xf32>
    %c7_243 = arith.constant 7 : index
    %c0_244 = arith.constant 0 : index
    %c0_245 = arith.constant 0 : index
    %300 = vector.load %arg3[%c7_243, %c0_244, %c0_245] : memref<9x1x256xf32, #tpu.memory_space<vmem>>, vector<1x1x256xf32>
    %301 = vector.shape_cast %300 : vector<1x1x256xf32> to vector<1x256xf32>
    %302 = vector.broadcast %301 : vector<1x256xf32> to vector<32x256xf32>
    %303 = arith.mulf %299, %302 : vector<32x256xf32>
    %c224_246 = arith.constant 224 : index
    %c0_247 = arith.constant 0 : index
    %304 = vector.load %arg29[%c224_246, %c0_247] : memref<288x256xf32, #tpu.memory_space<vmem>>, vector<32x256xf32>
    tpu.vector_store %arg29[%c224_246, %c0_247], %303 {strides = array<i32>} : memref<288x256xf32, #tpu.memory_space<vmem>>, vector<32x256xf32>,
    %c239_i32_248 = arith.constant 239 : i32
    %305 = tpu.dynamic_rotate %259 by %c239_i32_248 dim 1 : vector<32x256xf32>, i32 -> vector<32x256xf32>
    %c8_249 = arith.constant 8 : index
    %c0_250 = arith.constant 0 : index
    %c0_251 = arith.constant 0 : index
    %306 = vector.load %arg3[%c8_249, %c0_250, %c0_251] : memref<9x1x256xf32, #tpu.memory_space<vmem>>, vector<1x1x256xf32>
    %307 = vector.shape_cast %306 : vector<1x1x256xf32> to vector<1x256xf32>
    %308 = vector.broadcast %307 : vector<1x256xf32> to vector<32x256xf32>
    %309 = arith.mulf %305, %308 : vector<32x256xf32>
    %c256_252 = arith.constant 256 : index
    %c0_253 = arith.constant 0 : index
    %310 = vector.load %arg29[%c256_252, %c0_253] : memref<288x256xf32, #tpu.memory_space<vmem>>, vector<32x256xf32>
    tpu.vector_store %arg29[%c256_252, %c0_253], %309 {strides = array<i32>} : memref<288x256xf32, #tpu.memory_space<vmem>>, vector<32x256xf32>,
    %c0_254 = arith.constant 0 : index
    %c0_255 = arith.constant 0 : index
    %311 = vector.load %arg29[%c0_254, %c0_255] : memref<288x256xf32, #tpu.memory_space<vmem>>, vector<288x256xf32>
    %312 = arith.truncf %311 : vector<288x256xf32> to vector<288x256xbf16>
    %cst_256 = arith.constant dense<0.000000e+00> : vector<32x256xf32>
    %313 = tpu.matmul %261, %312, %cst_256 {dimension_numbers = #tpu.dot_dimension_numbers<[1], [0], [0], [1], [0, 0, 1, 1], [], []>} : vector<32x288xbf16>, vector<288x256xbf16>, vector<32x256xf32> -> vector<32x256xf32>
    %c1_257 = arith.constant 1 : index
    %c0_258 = arith.constant 0 : index
    %c0_259 = arith.constant 0 : index
    %314 = vector.load %arg14[%c1_257, %c0_258, %c0_259] : memref<2x32x1xf32, #tpu.memory_space<vmem>>, vector<1x32x1xf32>
    %315 = vector.shape_cast %314 : vector<1x32x1xf32> to vector<32x1xf32>
    %316 = vector.broadcast %315 : vector<32x1xf32> to vector<32x256xf32>
    %317 = arith.mulf %313, %316 : vector<32x256xf32>
    %c1_260 = arith.constant 1 : index
    %c0_261 = arith.constant 0 : index
    %c0_262 = arith.constant 0 : index
    %318 = vector.load %arg15[%c1_260, %c0_261, %c0_262] : memref<2x32x1xf32, #tpu.memory_space<vmem>>, vector<1x32x1xf32>
    %319 = vector.shape_cast %318 : vector<1x32x1xf32> to vector<32x1xf32>
    %320 = vector.broadcast %319 : vector<32x1xf32> to vector<32x256xf32>
    %321 = arith.addf %317, %320 : vector<32x256xf32>
    %cst_263 = arith.constant 0.000000e+00 : f32
    %322 = vector.broadcast %cst_263 : f32 to vector<32x256xf32>
    %323 = arith.maximumf %321, %322 : vector<32x256xf32>
    %c1_264 = arith.constant 1 : index
    %c0_265 = arith.constant 0 : index
    %c0_266 = arith.constant 0 : index
    %324 = vector.load %arg16[%c1_264, %c0_265, %c0_266] : memref<2x32x288xbf16, #tpu.memory_space<vmem>>, vector<1x32x288xbf16>
    %325 = vector.shape_cast %324 : vector<1x32x288xbf16> to vector<32x288xbf16>
    %c17_i32_267 = arith.constant 17 : i32
    %326 = tpu.dynamic_rotate %323 by %c17_i32_267 dim 1 : vector<32x256xf32>, i32 -> vector<32x256xf32>
    %c0_268 = arith.constant 0 : index
    %c0_269 = arith.constant 0 : index
    %c0_270 = arith.constant 0 : index
    %327 = vector.load %arg3[%c0_268, %c0_269, %c0_270] : memref<9x1x256xf32, #tpu.memory_space<vmem>>, vector<1x1x256xf32>
    %328 = vector.shape_cast %327 : vector<1x1x256xf32> to vector<1x256xf32>
    %329 = vector.broadcast %328 : vector<1x256xf32> to vector<32x256xf32>
    %330 = arith.mulf %326, %329 : vector<32x256xf32>
    %c0_271 = arith.constant 0 : index
    %c0_272 = arith.constant 0 : index
    %331 = vector.load %arg29[%c0_271, %c0_272] : memref<288x256xf32, #tpu.memory_space<vmem>>, vector<32x256xf32>
    tpu.vector_store %arg29[%c0_271, %c0_272], %330 {strides = array<i32>} : memref<288x256xf32, #tpu.memory_space<vmem>>, vector<32x256xf32>,
    %c16_i32_273 = arith.constant 16 : i32
    %332 = tpu.dynamic_rotate %323 by %c16_i32_273 dim 1 : vector<32x256xf32>, i32 -> vector<32x256xf32>
    %c1_274 = arith.constant 1 : index
    %c0_275 = arith.constant 0 : index
    %c0_276 = arith.constant 0 : index
    %333 = vector.load %arg3[%c1_274, %c0_275, %c0_276] : memref<9x1x256xf32, #tpu.memory_space<vmem>>, vector<1x1x256xf32>
    %334 = vector.shape_cast %333 : vector<1x1x256xf32> to vector<1x256xf32>
    %335 = vector.broadcast %334 : vector<1x256xf32> to vector<32x256xf32>
    %336 = arith.mulf %332, %335 : vector<32x256xf32>
    %c32_277 = arith.constant 32 : index
    %c0_278 = arith.constant 0 : index
    %337 = vector.load %arg29[%c32_277, %c0_278] : memref<288x256xf32, #tpu.memory_space<vmem>>, vector<32x256xf32>
    tpu.vector_store %arg29[%c32_277, %c0_278], %336 {strides = array<i32>} : memref<288x256xf32, #tpu.memory_space<vmem>>, vector<32x256xf32>,
    %c15_i32_279 = arith.constant 15 : i32
    %338 = tpu.dynamic_rotate %323 by %c15_i32_279 dim 1 : vector<32x256xf32>, i32 -> vector<32x256xf32>
    %c2_280 = arith.constant 2 : index
    %c0_281 = arith.constant 0 : index
    %c0_282 = arith.constant 0 : index
    %339 = vector.load %arg3[%c2_280, %c0_281, %c0_282] : memref<9x1x256xf32, #tpu.memory_space<vmem>>, vector<1x1x256xf32>
    %340 = vector.shape_cast %339 : vector<1x1x256xf32> to vector<1x256xf32>
    %341 = vector.broadcast %340 : vector<1x256xf32> to vector<32x256xf32>
    %342 = arith.mulf %338, %341 : vector<32x256xf32>
    %c64_283 = arith.constant 64 : index
    %c0_284 = arith.constant 0 : index
    %343 = vector.load %arg29[%c64_283, %c0_284] : memref<288x256xf32, #tpu.memory_space<vmem>>, vector<32x256xf32>
    tpu.vector_store %arg29[%c64_283, %c0_284], %342 {strides = array<i32>} : memref<288x256xf32, #tpu.memory_space<vmem>>, vector<32x256xf32>,
    %c1_i32_285 = arith.constant 1 : i32
    %344 = tpu.dynamic_rotate %323 by %c1_i32_285 dim 1 : vector<32x256xf32>, i32 -> vector<32x256xf32>
    %c3_286 = arith.constant 3 : index
    %c0_287 = arith.constant 0 : index
    %c0_288 = arith.constant 0 : index
    %345 = vector.load %arg3[%c3_286, %c0_287, %c0_288] : memref<9x1x256xf32, #tpu.memory_space<vmem>>, vector<1x1x256xf32>
    %346 = vector.shape_cast %345 : vector<1x1x256xf32> to vector<1x256xf32>
    %347 = vector.broadcast %346 : vector<1x256xf32> to vector<32x256xf32>
    %348 = arith.mulf %344, %347 : vector<32x256xf32>
    %c96_289 = arith.constant 96 : index
    %c0_290 = arith.constant 0 : index
    %349 = vector.load %arg29[%c96_289, %c0_290] : memref<288x256xf32, #tpu.memory_space<vmem>>, vector<32x256xf32>
    tpu.vector_store %arg29[%c96_289, %c0_290], %348 {strides = array<i32>} : memref<288x256xf32, #tpu.memory_space<vmem>>, vector<32x256xf32>,
    %c128_291 = arith.constant 128 : index
    %c0_292 = arith.constant 0 : index
    %350 = vector.load %arg29[%c128_291, %c0_292] : memref<288x256xf32, #tpu.memory_space<vmem>>, vector<32x256xf32>
    tpu.vector_store %arg29[%c128_291, %c0_292], %323 {strides = array<i32>} : memref<288x256xf32, #tpu.memory_space<vmem>>, vector<32x256xf32>,
    %c255_i32_293 = arith.constant 255 : i32
    %351 = tpu.dynamic_rotate %323 by %c255_i32_293 dim 1 : vector<32x256xf32>, i32 -> vector<32x256xf32>
    %c5_294 = arith.constant 5 : index
    %c0_295 = arith.constant 0 : index
    %c0_296 = arith.constant 0 : index
    %352 = vector.load %arg3[%c5_294, %c0_295, %c0_296] : memref<9x1x256xf32, #tpu.memory_space<vmem>>, vector<1x1x256xf32>
    %353 = vector.shape_cast %352 : vector<1x1x256xf32> to vector<1x256xf32>
    %354 = vector.broadcast %353 : vector<1x256xf32> to vector<32x256xf32>
    %355 = arith.mulf %351, %354 : vector<32x256xf32>
    %c160_297 = arith.constant 160 : index
    %c0_298 = arith.constant 0 : index
    %356 = vector.load %arg29[%c160_297, %c0_298] : memref<288x256xf32, #tpu.memory_space<vmem>>, vector<32x256xf32>
    tpu.vector_store %arg29[%c160_297, %c0_298], %355 {strides = array<i32>} : memref<288x256xf32, #tpu.memory_space<vmem>>, vector<32x256xf32>,
    %c241_i32_299 = arith.constant 241 : i32
    %357 = tpu.dynamic_rotate %323 by %c241_i32_299 dim 1 : vector<32x256xf32>, i32 -> vector<32x256xf32>
    %c6_300 = arith.constant 6 : index
    %c0_301 = arith.constant 0 : index
    %c0_302 = arith.constant 0 : index
    %358 = vector.load %arg3[%c6_300, %c0_301, %c0_302] : memref<9x1x256xf32, #tpu.memory_space<vmem>>, vector<1x1x256xf32>
    %359 = vector.shape_cast %358 : vector<1x1x256xf32> to vector<1x256xf32>
    %360 = vector.broadcast %359 : vector<1x256xf32> to vector<32x256xf32>
    %361 = arith.mulf %357, %360 : vector<32x256xf32>
    %c192_303 = arith.constant 192 : index
    %c0_304 = arith.constant 0 : index
    %362 = vector.load %arg29[%c192_303, %c0_304] : memref<288x256xf32, #tpu.memory_space<vmem>>, vector<32x256xf32>
    tpu.vector_store %arg29[%c192_303, %c0_304], %361 {strides = array<i32>} : memref<288x256xf32, #tpu.memory_space<vmem>>, vector<32x256xf32>,
    %c240_i32_305 = arith.constant 240 : i32
    %363 = tpu.dynamic_rotate %323 by %c240_i32_305 dim 1 : vector<32x256xf32>, i32 -> vector<32x256xf32>
    %c7_306 = arith.constant 7 : index
    %c0_307 = arith.constant 0 : index
    %c0_308 = arith.constant 0 : index
    %364 = vector.load %arg3[%c7_306, %c0_307, %c0_308] : memref<9x1x256xf32, #tpu.memory_space<vmem>>, vector<1x1x256xf32>
    %365 = vector.shape_cast %364 : vector<1x1x256xf32> to vector<1x256xf32>
    %366 = vector.broadcast %365 : vector<1x256xf32> to vector<32x256xf32>
    %367 = arith.mulf %363, %366 : vector<32x256xf32>
    %c224_309 = arith.constant 224 : index
    %c0_310 = arith.constant 0 : index
    %368 = vector.load %arg29[%c224_309, %c0_310] : memref<288x256xf32, #tpu.memory_space<vmem>>, vector<32x256xf32>
    tpu.vector_store %arg29[%c224_309, %c0_310], %367 {strides = array<i32>} : memref<288x256xf32, #tpu.memory_space<vmem>>, vector<32x256xf32>,
    %c239_i32_311 = arith.constant 239 : i32
    %369 = tpu.dynamic_rotate %323 by %c239_i32_311 dim 1 : vector<32x256xf32>, i32 -> vector<32x256xf32>
    %c8_312 = arith.constant 8 : index
    %c0_313 = arith.constant 0 : index
    %c0_314 = arith.constant 0 : index
    %370 = vector.load %arg3[%c8_312, %c0_313, %c0_314] : memref<9x1x256xf32, #tpu.memory_space<vmem>>, vector<1x1x256xf32>
    %371 = vector.shape_cast %370 : vector<1x1x256xf32> to vector<1x256xf32>
    %372 = vector.broadcast %371 : vector<1x256xf32> to vector<32x256xf32>
    %373 = arith.mulf %369, %372 : vector<32x256xf32>
    %c256_315 = arith.constant 256 : index
    %c0_316 = arith.constant 0 : index
    %374 = vector.load %arg29[%c256_315, %c0_316] : memref<288x256xf32, #tpu.memory_space<vmem>>, vector<32x256xf32>
    tpu.vector_store %arg29[%c256_315, %c0_316], %373 {strides = array<i32>} : memref<288x256xf32, #tpu.memory_space<vmem>>, vector<32x256xf32>,
    %c0_317 = arith.constant 0 : index
    %c0_318 = arith.constant 0 : index
    %375 = vector.load %arg29[%c0_317, %c0_318] : memref<288x256xf32, #tpu.memory_space<vmem>>, vector<288x256xf32>
    %376 = arith.truncf %375 : vector<288x256xf32> to vector<288x256xbf16>
    %cst_319 = arith.constant dense<0.000000e+00> : vector<32x256xf32>
    %377 = tpu.matmul %325, %376, %cst_319 {dimension_numbers = #tpu.dot_dimension_numbers<[1], [0], [0], [1], [0, 0, 1, 1], [], []>} : vector<32x288xbf16>, vector<288x256xbf16>, vector<32x256xf32> -> vector<32x256xf32>
    %c1_320 = arith.constant 1 : index
    %c0_321 = arith.constant 0 : index
    %c0_322 = arith.constant 0 : index
    %378 = vector.load %arg17[%c1_320, %c0_321, %c0_322] : memref<2x32x1xf32, #tpu.memory_space<vmem>>, vector<1x32x1xf32>
    %379 = vector.shape_cast %378 : vector<1x32x1xf32> to vector<32x1xf32>
    %380 = vector.broadcast %379 : vector<32x1xf32> to vector<32x256xf32>
    %381 = arith.addf %377, %380 : vector<32x256xf32>
    %382 = arith.addf %240, %381 : vector<32x256xf32>
    %c1_323 = arith.constant 1 : index
    %c0_324 = arith.constant 0 : index
    %c0_325 = arith.constant 0 : index
    %383 = vector.load %arg18[%c1_323, %c0_324, %c0_325] : memref<2x32x32xbf16, #tpu.memory_space<vmem>>, vector<1x32x32xbf16>
    %384 = vector.shape_cast %383 : vector<1x32x32xbf16> to vector<32x32xbf16>
    %385 = arith.truncf %382 : vector<32x256xf32> to vector<32x256xbf16>
    %cst_326 = arith.constant dense<0.000000e+00> : vector<32x256xf32>
    %386 = tpu.matmul %384, %385, %cst_326 {dimension_numbers = #tpu.dot_dimension_numbers<[1], [0], [0], [1], [0, 0, 1, 1], [], []>} : vector<32x32xbf16>, vector<32x256xbf16>, vector<32x256xf32> -> vector<32x256xf32>
    %c1_327 = arith.constant 1 : index
    %c0_328 = arith.constant 0 : index
    %c0_329 = arith.constant 0 : index
    %387 = vector.load %arg19[%c1_327, %c0_328, %c0_329] : memref<2x32x1xf32, #tpu.memory_space<vmem>>, vector<1x32x1xf32>
    %388 = vector.shape_cast %387 : vector<1x32x1xf32> to vector<32x1xf32>
    %389 = vector.broadcast %388 : vector<32x1xf32> to vector<32x256xf32>
    %390 = arith.addf %386, %389 : vector<32x256xf32>
    %391 = arith.addf %249, %390 : vector<32x256xf32>
    %c0_330 = arith.constant 0 : index
    %c0_331 = arith.constant 0 : index
    %392 = vector.load %arg20[%c0_330, %c0_331] : memref<32x1xf32, #tpu.memory_space<vmem>>, vector<32x1xf32>
    %393 = vector.broadcast %392 : vector<32x1xf32> to vector<32x256xf32>
    %394 = arith.mulf %391, %393 : vector<32x256xf32>
    %c0_332 = arith.constant 0 : index
    %c0_333 = arith.constant 0 : index
    %395 = vector.load %arg21[%c0_332, %c0_333] : memref<32x1xf32, #tpu.memory_space<vmem>>, vector<32x1xf32>
    %396 = vector.broadcast %395 : vector<32x1xf32> to vector<32x256xf32>
    %397 = arith.addf %394, %396 : vector<32x256xf32>
    %cst_334 = arith.constant 0.000000e+00 : f32
    %398 = vector.broadcast %cst_334 : f32 to vector<32x256xf32>
    %399 = arith.maximumf %397, %398 : vector<32x256xf32>
    %400 = arith.truncf %399 : vector<32x256xf32> to vector<32x256xbf16>
    %c0_335 = arith.constant 0 : index
    %c0_336 = arith.constant 0 : index
    %401 = vector.load %arg22[%c0_335, %c0_336] : memref<4x32xbf16, #tpu.memory_space<vmem>>, vector<4x32xbf16>
    %cst_337 = arith.constant dense<0.000000e+00> : vector<4x256xf32>
    %402 = tpu.matmul %401, %400, %cst_337 {dimension_numbers = #tpu.dot_dimension_numbers<[1], [0], [0], [1], [0, 0, 1, 1], [], []>} : vector<4x32xbf16>, vector<32x256xbf16>, vector<4x256xf32> -> vector<4x256xf32>
    %c0_338 = arith.constant 0 : index
    %c0_339 = arith.constant 0 : index
    %403 = vector.load %arg23[%c0_338, %c0_339] : memref<4x1xf32, #tpu.memory_space<vmem>>, vector<4x1xf32>
    %404 = vector.broadcast %403 : vector<4x1xf32> to vector<4x256xf32>
    %405 = arith.addf %402, %404 : vector<4x256xf32>
    %c0_340 = arith.constant 0 : index
    %c0_341 = arith.constant 0 : index
    %406 = vector.load %arg24[%c0_340, %c0_341] : memref<4x32xbf16, #tpu.memory_space<vmem>>, vector<4x32xbf16>
    %cst_342 = arith.constant dense<0.000000e+00> : vector<4x256xf32>
    %407 = tpu.matmul %406, %400, %cst_342 {dimension_numbers = #tpu.dot_dimension_numbers<[1], [0], [0], [1], [0, 0, 1, 1], [], []>} : vector<4x32xbf16>, vector<32x256xbf16>, vector<4x256xf32> -> vector<4x256xf32>
    %c0_343 = arith.constant 0 : index
    %c0_344 = arith.constant 0 : index
    %408 = vector.load %arg25[%c0_343, %c0_344] : memref<4x1xf32, #tpu.memory_space<vmem>>, vector<4x1xf32>
    %409 = vector.broadcast %408 : vector<4x1xf32> to vector<4x256xf32>
    %410 = arith.addf %407, %409 : vector<4x256xf32>
    %c0_345 = arith.constant 0 : index
    %c0_346 = arith.constant 0 : index
    %411 = vector.load %arg26[%c0_345, %c0_346] : memref<4x1xf32, #tpu.memory_space<vmem>>, vector<4x1xf32>
    %412 = math.tanh %405 : vector<4x256xf32>
    %413 = vector.broadcast %411 : vector<4x1xf32> to vector<4x256xf32>
    %414 = arith.mulf %413, %412 : vector<4x256xf32>
    %c0_347 = arith.constant 0 : index
    %c0_348 = arith.constant 0 : index
    %415 = vector.load %arg4[%c0_347, %c0_348] : memref<1x256xf32, #tpu.memory_space<vmem>>, vector<1x256xf32>
    %cst_349 = arith.constant 1.000000e+00 : f32
    %416 = vector.broadcast %cst_349 : f32 to vector<1x256xf32>
    %417 = arith.subf %416, %415 : vector<1x256xf32>
    %418 = vector.broadcast %417 : vector<1x256xf32> to vector<4x256xf32>
    %419 = arith.mulf %414, %418 : vector<4x256xf32>
    %420 = vector.broadcast %417 : vector<1x256xf32> to vector<4x256xf32>
    %421 = arith.mulf %410, %420 : vector<4x256xf32>
    %c0_350 = arith.constant 0 : index
    %c0_351 = arith.constant 0 : index
    %422 = vector.load %arg1[%c0_350, %c0_351] : memref<4x256xf32, #tpu.memory_space<vmem>>, vector<4x256xf32>
    %cst_352 = arith.constant 0.000000e+00 : f32
    %423 = vector.broadcast %cst_352 : f32 to vector<4x256xf32>
    %424 = arith.subf %423, %419 : vector<4x256xf32>
    %425 = math.exp %424 : vector<4x256xf32>
    %426 = arith.mulf %422, %425 : vector<4x256xf32>
    %427 = arith.subf %426, %421 : vector<4x256xf32>
    %c0_353 = arith.constant 0 : index
    %c0_354 = arith.constant 0 : index
    %428 = vector.load %arg27[%c0_353, %c0_354] : memref<4x256xf32, #tpu.memory_space<vmem>>, vector<4x256xf32>
    tpu.vector_store %arg27[%c0_353, %c0_354], %427 {strides = array<i32>} : memref<4x256xf32, #tpu.memory_space<vmem>>, vector<4x256xf32>,
    %c0_355 = arith.constant 0 : index
    %c0_356 = arith.constant 0 : index
    %c0_357 = arith.constant 0 : index
    %429 = vector.load %arg2[%c0_355, %c0_356, %c0_357] : memref<1x1x1xf32, #tpu.memory_space<vmem>>, vector<1x1x1xf32>
    %c0_358 = arith.constant 0 : index
    %c0_359 = arith.constant 0 : index
    %c0_360 = arith.constant 0 : index
    %430 = vector.load %arg28[%c0_358, %c0_359, %c0_360] : memref<1x1x1xf32, #tpu.memory_space<vmem>>, vector<1x1x1xf32>
    tpu.vector_store %arg28[%c0_358, %c0_359, %c0_360], %429 {strides = array<i32>} : memref<1x1x1xf32, #tpu.memory_space<vmem>>, vector<1x1x1xf32>,
    return
  }
  func.func @transform_0(%arg0: i32) -> (i32, i32) {
    %c0_i32 = arith.constant 0 : i32
    %c0_i32_0 = arith.constant 0 : i32
    return %c0_i32, %arg0 : i32, i32
  }
  func.func @transform_1(%arg0: i32) -> (i32, i32, i32) {
    %c0_i32 = arith.constant 0 : i32
    %c0_i32_0 = arith.constant 0 : i32
    %c0_i32_1 = arith.constant 0 : i32
    return %arg0, %c0_i32, %c0_i32_0 : i32, i32, i32
  }
  func.func @transform_2(%arg0: i32) -> (i32, i32, i32) {
    %c0_i32 = arith.constant 0 : i32
    %c0_i32_0 = arith.constant 0 : i32
    %c0_i32_1 = arith.constant 0 : i32
    %c0_i32_2 = arith.constant 0 : i32
    return %c0_i32, %c0_i32_0, %c0_i32_1 : i32, i32, i32
  }
  func.func @transform_3(%arg0: i32) -> (i32, i32) {
    %c0_i32 = arith.constant 0 : i32
    %c0_i32_0 = arith.constant 0 : i32
    %c0_i32_1 = arith.constant 0 : i32
    return %c0_i32, %c0_i32_0 : i32, i32
  }
  func.func @transform_4(%arg0: i32) -> (i32, i32) {
    %c0_i32 = arith.constant 0 : i32
    %c0_i32_0 = arith.constant 0 : i32
    %c0_i32_1 = arith.constant 0 : i32
    return %c0_i32, %c0_i32_0 : i32, i32
  }
  func.func @transform_5(%arg0: i32) -> (i32, i32) {
    %c0_i32 = arith.constant 0 : i32
    %c0_i32_0 = arith.constant 0 : i32
    %c0_i32_1 = arith.constant 0 : i32
    return %c0_i32, %c0_i32_0 : i32, i32
  }
  func.func @transform_6(%arg0: i32) -> (i32, i32) {
    %c0_i32 = arith.constant 0 : i32
    %c0_i32_0 = arith.constant 0 : i32
    %c0_i32_1 = arith.constant 0 : i32
    return %c0_i32, %c0_i32_0 : i32, i32
  }
  func.func @transform_7(%arg0: i32) -> (i32, i32) {
    %c0_i32 = arith.constant 0 : i32
    %c0_i32_0 = arith.constant 0 : i32
    %c0_i32_1 = arith.constant 0 : i32
    return %c0_i32, %c0_i32_0 : i32, i32
  }
  func.func @transform_8(%arg0: i32) -> (i32, i32) {
    %c0_i32 = arith.constant 0 : i32
    %c0_i32_0 = arith.constant 0 : i32
    %c0_i32_1 = arith.constant 0 : i32
    return %c0_i32, %c0_i32_0 : i32, i32
  }
  func.func @transform_9(%arg0: i32) -> (i32, i32) {
    %c0_i32 = arith.constant 0 : i32
    %c0_i32_0 = arith.constant 0 : i32
    %c0_i32_1 = arith.constant 0 : i32
    return %c0_i32, %c0_i32_0 : i32, i32
  }
  func.func @transform_10(%arg0: i32) -> (i32, i32, i32) {
    %c0_i32 = arith.constant 0 : i32
    %c0_i32_0 = arith.constant 0 : i32
    %c0_i32_1 = arith.constant 0 : i32
    %c0_i32_2 = arith.constant 0 : i32
    return %c0_i32, %c0_i32_0, %c0_i32_1 : i32, i32, i32
  }
  func.func @transform_11(%arg0: i32) -> (i32, i32, i32) {
    %c0_i32 = arith.constant 0 : i32
    %c0_i32_0 = arith.constant 0 : i32
    %c0_i32_1 = arith.constant 0 : i32
    %c0_i32_2 = arith.constant 0 : i32
    return %c0_i32, %c0_i32_0, %c0_i32_1 : i32, i32, i32
  }
  func.func @transform_12(%arg0: i32) -> (i32, i32, i32) {
    %c0_i32 = arith.constant 0 : i32
    %c0_i32_0 = arith.constant 0 : i32
    %c0_i32_1 = arith.constant 0 : i32
    %c0_i32_2 = arith.constant 0 : i32
    return %c0_i32, %c0_i32_0, %c0_i32_1 : i32, i32, i32
  }
  func.func @transform_13(%arg0: i32) -> (i32, i32, i32) {
    %c0_i32 = arith.constant 0 : i32
    %c0_i32_0 = arith.constant 0 : i32
    %c0_i32_1 = arith.constant 0 : i32
    %c0_i32_2 = arith.constant 0 : i32
    return %c0_i32, %c0_i32_0, %c0_i32_1 : i32, i32, i32
  }
  func.func @transform_14(%arg0: i32) -> (i32, i32, i32) {
    %c0_i32 = arith.constant 0 : i32
    %c0_i32_0 = arith.constant 0 : i32
    %c0_i32_1 = arith.constant 0 : i32
    %c0_i32_2 = arith.constant 0 : i32
    return %c0_i32, %c0_i32_0, %c0_i32_1 : i32, i32, i32
  }
  func.func @transform_15(%arg0: i32) -> (i32, i32, i32) {
    %c0_i32 = arith.constant 0 : i32
    %c0_i32_0 = arith.constant 0 : i32
    %c0_i32_1 = arith.constant 0 : i32
    %c0_i32_2 = arith.constant 0 : i32
    return %c0_i32, %c0_i32_0, %c0_i32_1 : i32, i32, i32
  }
  func.func @transform_16(%arg0: i32) -> (i32, i32, i32) {
    %c0_i32 = arith.constant 0 : i32
    %c0_i32_0 = arith.constant 0 : i32
    %c0_i32_1 = arith.constant 0 : i32
    %c0_i32_2 = arith.constant 0 : i32
    return %c0_i32, %c0_i32_0, %c0_i32_1 : i32, i32, i32
  }
  func.func @transform_17(%arg0: i32) -> (i32, i32, i32) {
    %c0_i32 = arith.constant 0 : i32
    %c0_i32_0 = arith.constant 0 : i32
    %c0_i32_1 = arith.constant 0 : i32
    %c0_i32_2 = arith.constant 0 : i32
    return %c0_i32, %c0_i32_0, %c0_i32_1 : i32, i32, i32
  }
  func.func @transform_18(%arg0: i32) -> (i32, i32, i32) {
    %c0_i32 = arith.constant 0 : i32
    %c0_i32_0 = arith.constant 0 : i32
    %c0_i32_1 = arith.constant 0 : i32
    %c0_i32_2 = arith.constant 0 : i32
    return %c0_i32, %c0_i32_0, %c0_i32_1 : i32, i32, i32
  }
  func.func @transform_19(%arg0: i32) -> (i32, i32) {
    %c0_i32 = arith.constant 0 : i32
    %c0_i32_0 = arith.constant 0 : i32
    %c0_i32_1 = arith.constant 0 : i32
    return %c0_i32, %c0_i32_0 : i32, i32
  }
  func.func @transform_20(%arg0: i32) -> (i32, i32) {
    %c0_i32 = arith.constant 0 : i32
    %c0_i32_0 = arith.constant 0 : i32
    %c0_i32_1 = arith.constant 0 : i32
    return %c0_i32, %c0_i32_0 : i32, i32
  }
  func.func @transform_21(%arg0: i32) -> (i32, i32) {
    %c0_i32 = arith.constant 0 : i32
    %c0_i32_0 = arith.constant 0 : i32
    %c0_i32_1 = arith.constant 0 : i32
    return %c0_i32, %c0_i32_0 : i32, i32
  }
  func.func @transform_22(%arg0: i32) -> (i32, i32) {
    %c0_i32 = arith.constant 0 : i32
    %c0_i32_0 = arith.constant 0 : i32
    %c0_i32_1 = arith.constant 0 : i32
    return %c0_i32, %c0_i32_0 : i32, i32
  }
  func.func @transform_23(%arg0: i32) -> (i32, i32) {
    %c0_i32 = arith.constant 0 : i32
    %c0_i32_0 = arith.constant 0 : i32
    %c0_i32_1 = arith.constant 0 : i32
    return %c0_i32, %c0_i32_0 : i32, i32
  }
  func.func @transform_24(%arg0: i32) -> (i32, i32) {
    %c0_i32 = arith.constant 0 : i32
    %c0_i32_0 = arith.constant 0 : i32
    %c0_i32_1 = arith.constant 0 : i32
    return %c0_i32, %c0_i32_0 : i32, i32
  }
  func.func @transform_25(%arg0: i32) -> (i32, i32) {
    %c0_i32 = arith.constant 0 : i32
    %c0_i32_0 = arith.constant 0 : i32
    %c0_i32_1 = arith.constant 0 : i32
    return %c0_i32, %c0_i32_0 : i32, i32
  }
  func.func @transform_26(%arg0: i32) -> (i32, i32) {
    %c0_i32 = arith.constant 0 : i32
    %c0_i32_0 = arith.constant 0 : i32
    return %c0_i32, %arg0 : i32, i32
  }
  func.func @transform_27(%arg0: i32) -> (i32, i32, i32) {
    %c0_i32 = arith.constant 0 : i32
    %c0_i32_0 = arith.constant 0 : i32
    %c0_i32_1 = arith.constant 0 : i32
    return %arg0, %c0_i32, %c0_i32_0 : i32, i32, i32
  }
}

</mosaic_0001>

<llo_original>
// kernel: coupling_forward.1
$region0: #{coupling_forward.1}
  #allocation0 [shape = 'u32[]', space=smem, size = 0x4, offset = 0x4, fixed_abs, tag = 'smem constant byte address 0x4 - core index']
  #allocation1 [shape = 'u32[144,128]{1,0:T(1,128)}', space=vmem, size = 0x12000, scoped, tag = 'internal scratch']
  #allocation2 [shape = 'f32[288,256]{1,0:T(8,128)}', space=vmem, size = 0x48000, scoped, tag = 'scratch operand']
  %s0 = inlined_call_operand.vmem [shape: f32[4,512], index: 0, kind: input, shape index: {}]
  %s1 = inlined_call_operand.vmem [shape: f32[2,1,1], index: 1, kind: input, shape index: {}]
  %s2 = inlined_call_operand.vmem [shape: f32[9,1,256], index: 2, kind: input, shape index: {}]
  %s3 = inlined_call_operand.vmem [shape: f32[1,256], index: 3, kind: input, shape index: {}]
  %s4 = inlined_call_operand.vmem [shape: f32[4,1], index: 4, kind: input, shape index: {}]
  %s5 = inlined_call_operand.vmem [shape: f32[4,1], index: 5, kind: input, shape index: {}]
  %s6 = inlined_call_operand.vmem [shape: bf16[32,72], index: 6, kind: input, shape index: {}]
  %s7 = inlined_call_operand.vmem [shape: f32[32,1], index: 7, kind: input, shape index: {}]
  %s8 = inlined_call_operand.vmem [shape: bf16[32,32], index: 8, kind: input, shape index: {}]
  %s9 = inlined_call_operand.vmem [shape: f32[32,1], index: 9, kind: input, shape index: {}]
  %s10 = inlined_call_operand.vmem [shape: f32[2,32,1], index: 10, kind: input, shape index: {}]
  %s11 = inlined_call_operand.vmem [shape: f32[2,32,1], index: 11, kind: input, shape index: {}]
  %s12 = inlined_call_operand.vmem [shape: bf16[2,32,288], index: 12, kind: input, shape index: {}]
  %s13 = inlined_call_operand.vmem [shape: f32[2,32,1], index: 13, kind: input, shape index: {}]
  %s14 = inlined_call_operand.vmem [shape: f32[2,32,1], index: 14, kind: input, shape index: {}]
  %s15 = inlined_call_operand.vmem [shape: bf16[2,32,288], index: 15, kind: input, shape index: {}]
  %s16 = inlined_call_operand.vmem [shape: f32[2,32,1], index: 16, kind: input, shape index: {}]
  %s17 = inlined_call_operand.vmem [shape: bf16[2,32,32], index: 17, kind: input, shape index: {}]
  %s18 = inlined_call_operand.vmem [shape: f32[2,32,1], index: 18, kind: input, shape index: {}]
  %s19 = inlined_call_operand.vmem [shape: f32[32,1], index: 19, kind: input, shape index: {}]
  %s20 = inlined_call_operand.vmem [shape: f32[32,1], index: 20, kind: input, shape index: {}]
  %s21 = inlined_call_operand.vmem [shape: bf16[4,32], index: 21, kind: input, shape index: {}]
  %s22 = inlined_call_operand.vmem [shape: f32[4,1], index: 22, kind: input, shape index: {}]
  %s23 = inlined_call_operand.vmem [shape: bf16[4,32], index: 23, kind: input, shape index: {}]
  %s24 = inlined_call_operand.vmem [shape: f32[4,1], index: 24, kind: input, shape index: {}]
  %s25 = inlined_call_operand.vmem [shape: f32[4,1], index: 25, kind: input, shape index: {}]
  %s26 = inlined_call_operand.vmem [shape: f32[4,512], index: 26, kind: output, shape index: {0}]
  %s27 = inlined_call_operand.vmem [shape: f32[2,1,1], index: 27, kind: output, shape index: {1}]
  %28 = xla_tuple %s26, %s27
  %s29 = sld [smem:[#allocation0]]
  $region145: #{coupling_forward.1} parent=0
    _
  %s31 = ssub.s32 1, %s29
  %s32 = scalar_select 0, %s31, %s29
  loop: start=0, step=1, limit=4
  $region2: #{coupling_forward.1} parent=0 // loop_pre_header
    _
  $region3: #{coupling_forward.1} parent=0 // loop_header
    %s34 = sphi 0, %s38
    %p35 = scmp.ge.s32.totalorder %s34, 4
    %s44 = sphi 0, %s46
    %s47 = sphi 0, %s44
    %s48 = sphi 0, %s47
    %s64 = sphi 0, %s48
    %s70 = sphi 0, %s72
    %s73 = sphi 0, %s70
    %s74 = sphi 0, %s73
    %s90 = sphi 0, %s74
    %s94 = sphi 0, %s94
    %s96 = sphi 0, %s94
    %s97 = sphi 0, %s96
    %s111 = sphi 0, %s97
    %s115 = sphi 0, %s115
    %s117 = sphi 0, %s115
    %s118 = sphi 0, %s117
    %s132 = sphi 0, %s118
    %s136 = sphi 0, %s136
    %s138 = sphi 0, %s136
    %s139 = sphi 0, %s138
    %s153 = sphi 0, %s139
    %s157 = sphi 0, %s157
    %s159 = sphi 0, %s157
    %s160 = sphi 0, %s159
    %s174 = sphi 0, %s160
    %s178 = sphi 0, %s178
    %s180 = sphi 0, %s178
    %s181 = sphi 0, %s180
    %s195 = sphi 0, %s181
    %s199 = sphi 0, %s199
    %s201 = sphi 0, %s199
    %s202 = sphi 0, %s201
    %s216 = sphi 0, %s202
    %s220 = sphi 0, %s220
    %s222 = sphi 0, %s220
    %s223 = sphi 0, %s222
    %s237 = sphi 0, %s223
    %s241 = sphi 0, %s241
    %s243 = sphi 0, %s241
    %s244 = sphi 0, %s243
    %s258 = sphi 0, %s244
    %s262 = sphi 0, %s262
    %s264 = sphi 0, %s262
    %s265 = sphi 0, %s264
    %s279 = sphi 0, %s265
    %s283 = sphi 0, %s283
    %s285 = sphi 0, %s283
    %s286 = sphi 0, %s285
    %s300 = sphi 0, %s286
    %s304 = sphi 0, %s304
    %s306 = sphi 0, %s304
    %s307 = sphi 0, %s306
    %s321 = sphi 0, %s307
    %s325 = sphi 0, %s325
    %s327 = sphi 0, %s325
    %s328 = sphi 0, %s327
    %s342 = sphi 0, %s328
    %s346 = sphi 0, %s346
    %s348 = sphi 0, %s346
    %s349 = sphi 0, %s348
    %s363 = sphi 0, %s349
    %s367 = sphi 0, %s367
    %s369 = sphi 0, %s367
    %s370 = sphi 0, %s369
    %s384 = sphi 0, %s370
    %s388 = sphi 0, %s388
    %s390 = sphi 0, %s388
    %s391 = sphi 0, %s390
    %s405 = sphi 0, %s391
    %s409 = sphi 0, %s409
    %s411 = sphi 0, %s409
    %s412 = sphi 0, %s411
    %s426 = sphi 0, %s412
    %s430 = sphi 0, %s430
    %s432 = sphi 0, %s430
    %s433 = sphi 0, %s432
    %s447 = sphi 0, %s433
    %s451 = sphi 0, %s451
    %s453 = sphi 0, %s451
    %s454 = sphi 0, %s453
    %s468 = sphi 0, %s454
    %s472 = sphi 0, %s472
    %s474 = sphi 0, %s472
    %s475 = sphi 0, %s474
    %s489 = sphi 0, %s475
    %s493 = sphi 0, %s493
    %s495 = sphi 0, %s493
    %s496 = sphi 0, %s495
    %s510 = sphi 0, %s496
    %s514 = sphi 0, %s514
    %s516 = sphi 0, %s514
    %s517 = sphi 0, %s516
    %s531 = sphi 0, %s517
    %s535 = sphi 0, %s535
    %s537 = sphi 0, %s535
    %s538 = sphi 0, %s537
    %s552 = sphi 0, %s538
    %s556 = sphi 0, %s556
    %s558 = sphi 0, %s556
    %s559 = sphi 0, %s558
    %s573 = sphi 0, %s559
    %s577 = sphi 0, %s577
    %s579 = sphi 0, %s577
    %s580 = sphi 0, %s579
    %s594 = sphi 0, %s580
    %s600 = sphi 0, %s602
    %s603 = sphi 0, %s600
    %s604 = sphi 0, %s603
    %s620 = sphi 0, %s604
    %s626 = sphi 0, %s628
    %s629 = sphi 0, %s626
    %s630 = sphi 0, %s629
    %s646 = sphi 0, %s630
  $region4: #{coupling_forward.1} parent=0 // loop_header_branch
    %37 = sbr.rel (%p35) target = $region8
  $region5: #{coupling_forward.1} parent=0 // loop_body
    %s39 = ssub.s32 %s34, 1
    %s40 = ssub.s32 %s34, 2
    %s41 = sadd.s32 %s34, 1
    %s42 = ssub.s32 %s34, %s41
    %p43 = scmp.eq.s32.totalorder %s42, 0
    %s45 = sadd.s32 %s44, 1
    %s46 = scalar_select %p43, %s44, %s45
    %p49 = pneg %p43
    %p50 = scmp.eq.s32.totalorder %s34, 1
    %p51 = por %p49, %p50
    %p52 = scmp.ne.s32.totalorder %s44, %s47
    %p53 = scmp.eq.s32.totalorder %s34, 0
    %p54 = por %p52, %p53
    %p55 = scmp.ne.s32.totalorder %s44, %s47
    %p56 = scmp.eq.s32.totalorder %s39, 1
    %p57 = por %p55, %p56
    %p58 = scmp.ne.s32.totalorder %s47, %s48
    %p59 = scmp.eq.s32.totalorder %s39, 0
    %p60 = por %p58, %p59
    %p61 = scmp.ne.s32.totalorder %s47, %s48
    %p62 = scmp.eq.s32.totalorder %s40, 1
    %p63 = por %p61, %p62
    %p65 = scmp.ne.s32.totalorder %s48, %s64
    %p66 = scmp.eq.s32.totalorder %s40, 0
    %p67 = por %p65, %p66
    %s68 = ssub.s32 %s34, %s41
    %p69 = scmp.eq.s32.totalorder %s68, 0
    %s71 = sadd.s32 %s70, 1
    %s72 = scalar_select %p69, %s70, %s71
    %p75 = pneg %p69
    %p76 = scmp.eq.s32.totalorder %s34, 1
    %p77 = por %p75, %p76
    %p78 = scmp.ne.s32.totalorder %s70, %s73
    %p79 = scmp.eq.s32.totalorder %s34, 0
    %p80 = por %p78, %p79
    %p81 = scmp.ne.s32.totalorder %s70, %s73
    %p82 = scmp.eq.s32.totalorder %s39, 1
    %p83 = por %p81, %p82
    %p84 = scmp.ne.s32.totalorder %s73, %s74
    %p85 = scmp.eq.s32.totalorder %s39, 0
    %p86 = por %p84, %p85
    %p87 = scmp.ne.s32.totalorder %s73, %s74
    %p88 = scmp.eq.s32.totalorder %s40, 1
    %p89 = por %p87, %p88
    %p91 = scmp.ne.s32.totalorder %s74, %s90
    %p92 = scmp.eq.s32.totalorder %s40, 0
    %p93 = por %p91, %p92
    %s95 = sadd.s32 %s94, 1
    %p98 = scmp.eq.s32.totalorder %s34, 1
    %p99 = scmp.ne.s32.totalorder %s94, %s96
    %p100 = scmp.eq.s32.totalorder %s34, 0
    %p101 = por %p99, %p100
    %p102 = scmp.ne.s32.totalorder %s94, %s96
    %p103 = scmp.eq.s32.totalorder %s39, 1
    %p104 = por %p102, %p103
    %p105 = scmp.ne.s32.totalorder %s96, %s97
    %p106 = scmp.eq.s32.totalorder %s39, 0
    %p107 = por %p105, %p106
    %p108 = scmp.ne.s32.totalorder %s96, %s97
    %p109 = scmp.eq.s32.totalorder %s40, 1
    %p110 = por %p108, %p109
    %p112 = scmp.ne.s32.totalorder %s97, %s111
    %p113 = scmp.eq.s32.totalorder %s40, 0
    %p114 = por %p112, %p113
    %s116 = sadd.s32 %s115, 1
    %p119 = scmp.eq.s32.totalorder %s34, 1
    %p120 = scmp.ne.s32.totalorder %s115, %s117
    %p121 = scmp.eq.s32.totalorder %s34, 0
    %p122 = por %p120, %p121
    %p123 = scmp.ne.s32.totalorder %s115, %s117
    %p124 = scmp.eq.s32.totalorder %s39, 1
    %p125 = por %p123, %p124
    %p126 = scmp.ne.s32.totalorder %s117, %s118
    %p127 = scmp.eq.s32.totalorder %s39, 0
    %p128 = por %p126, %p127
    %p129 = scmp.ne.s32.totalorder %s117, %s118
    %p130 = scmp.eq.s32.totalorder %s40, 1
    %p131 = por %p129, %p130
    %p133 = scmp.ne.s32.totalorder %s118, %s132
    %p134 = scmp.eq.s32.totalorder %s40, 0
    %p135 = por %p133, %p134
    %s137 = sadd.s32 %s136, 1
    %p140 = scmp.eq.s32.totalorder %s34, 1
    %p141 = scmp.ne.s32.totalorder %s136, %s138
    %p142 = scmp.eq.s32.totalorder %s34, 0
    %p143 = por %p141, %p142
    %p144 = scmp.ne.s32.totalorder %s136, %s138
    %p145 = scmp.eq.s32.totalorder %s39, 1
    %p146 = por %p144, %p145
    %p147 = scmp.ne.s32.totalorder %s138, %s139
    %p148 = scmp.eq.s32.totalorder %s39, 0
    %p149 = por %p147, %p148
    %p150 = scmp.ne.s32.totalorder %s138, %s139
    %p151 = scmp.eq.s32.totalorder %s40, 1
    %p152 = por %p150, %p151
    %p154 = scmp.ne.s32.totalorder %s139, %s153
    %p155 = scmp.eq.s32.totalorder %s40, 0
    %p156 = por %p154, %p155
    %s158 = sadd.s32 %s157, 1
    %p161 = scmp.eq.s32.totalorder %s34, 1
    %p162 = scmp.ne.s32.totalorder %s157, %s159
    %p163 = scmp.eq.s32.totalorder %s34, 0
    %p164 = por %p162, %p163
    %p165 = scmp.ne.s32.totalorder %s157, %s159
    %p166 = scmp.eq.s32.totalorder %s39, 1
    %p167 = por %p165, %p166
    %p168 = scmp.ne.s32.totalorder %s159, %s160
    %p169 = scmp.eq.s32.totalorder %s39, 0
    %p170 = por %p168, %p169
    %p171 = scmp.ne.s32.totalorder %s159, %s160
    %p172 = scmp.eq.s32.totalorder %s40, 1
    %p173 = por %p171, %p172
    %p175 = scmp.ne.s32.totalorder %s160, %s174
    %p176 = scmp.eq.s32.totalorder %s40, 0
    %p177 = por %p175, %p176
    %s179 = sadd.s32 %s178, 1
    %p182 = scmp.eq.s32.totalorder %s34, 1
    %p183 = scmp.ne.s32.totalorder %s178, %s180
    %p184 = scmp.eq.s32.totalorder %s34, 0
    %p185 = por %p183, %p184
    %p186 = scmp.ne.s32.totalorder %s178, %s180
    %p187 = scmp.eq.s32.totalorder %s39, 1
    %p188 = por %p186, %p187
    %p189 = scmp.ne.s32.totalorder %s180, %s181
    %p190 = scmp.eq.s32.totalorder %s39, 0
    %p191 = por %p189, %p190
    %p192 = scmp.ne.s32.totalorder %s180, %s181
    %p193 = scmp.eq.s32.totalorder %s40, 1
    %p194 = por %p192, %p193
    %p196 = scmp.ne.s32.totalorder %s181, %s195
    %p197 = scmp.eq.s32.totalorder %s40, 0
    %p198 = por %p196, %p197
    %s200 = sadd.s32 %s199, 1
    %p203 = scmp.eq.s32.totalorder %s34, 1
    %p204 = scmp.ne.s32.totalorder %s199, %s201
    %p205 = scmp.eq.s32.totalorder %s34, 0
    %p206 = por %p204, %p205
    %p207 = scmp.ne.s32.totalorder %s199, %s201
    %p208 = scmp.eq.s32.totalorder %s39, 1
    %p209 = por %p207, %p208
    %p210 = scmp.ne.s32.totalorder %s201, %s202
    %p211 = scmp.eq.s32.totalorder %s39, 0
    %p212 = por %p210, %p211
    %p213 = scmp.ne.s32.totalorder %s201, %s202
    %p214 = scmp.eq.s32.totalorder %s40, 1
    %p215 = por %p213, %p214
    %p217 = scmp.ne.s32.totalorder %s202, %s216
    %p218 = scmp.eq.s32.totalorder %s40, 0
    %p219 = por %p217, %p218
    %s221 = sadd.s32 %s220, 1
    %p224 = scmp.eq.s32.totalorder %s34, 1
    %p225 = scmp.ne.s32.totalorder %s220, %s222
    %p226 = scmp.eq.s32.totalorder %s34, 0
    %p227 = por %p225, %p226
    %p228 = scmp.ne.s32.totalorder %s220, %s222
    %p229 = scmp.eq.s32.totalorder %s39, 1
    %p230 = por %p228, %p229
    %p231 = scmp.ne.s32.totalorder %s222, %s223
    %p232 = scmp.eq.s32.totalorder %s39, 0
    %p233 = por %p231, %p232
    %p234 = scmp.ne.s32.totalorder %s222, %s223
    %p235 = scmp.eq.s32.totalorder %s40, 1
    %p236 = por %p234, %p235
    %p238 = scmp.ne.s32.totalorder %s223, %s237
    %p239 = scmp.eq.s32.totalorder %s40, 0
    %p240 = por %p238, %p239
    %s242 = sadd.s32 %s241, 1
    %p245 = scmp.eq.s32.totalorder %s34, 1
    %p246 = scmp.ne.s32.totalorder %s241, %s243
    %p247 = scmp.eq.s32.totalorder %s34, 0
    %p248 = por %p246, %p247
    %p249 = scmp.ne.s32.totalorder %s241, %s243
    %p250 = scmp.eq.s32.totalorder %s39, 1
    %p251 = por %p249, %p250
    %p252 = scmp.ne.s32.totalorder %s243, %s244
    %p253 = scmp.eq.s32.totalorder %s39, 0
    %p254 = por %p252, %p253
    %p255 = scmp.ne.s32.totalorder %s243, %s244
    %p256 = scmp.eq.s32.totalorder %s40, 1
    %p257 = por %p255, %p256
    %p259 = scmp.ne.s32.totalorder %s244, %s258
    %p260 = scmp.eq.s32.totalorder %s40, 0
    %p261 = por %p259, %p260
    %s263 = sadd.s32 %s262, 1
    %p266 = scmp.eq.s32.totalorder %s34, 1
    %p267 = scmp.ne.s32.totalorder %s262, %s264
    %p268 = scmp.eq.s32.totalorder %s34, 0
    %p269 = por %p267, %p268
    %p270 = scmp.ne.s32.totalorder %s262, %s264
    %p271 = scmp.eq.s32.totalorder %s39, 1
    %p272 = por %p270, %p271
    %p273 = scmp.ne.s32.totalorder %s264, %s265
    %p274 = scmp.eq.s32.totalorder %s39, 0
    %p275 = por %p273, %p274
    %p276 = scmp.ne.s32.totalorder %s264, %s265
    %p277 = scmp.eq.s32.totalorder %s40, 1
    %p278 = por %p276, %p277
    %p280 = scmp.ne.s32.totalorder %s265, %s279
    %p281 = scmp.eq.s32.totalorder %s40, 0
    %p282 = por %p280, %p281
    %s284 = sadd.s32 %s283, 1
    %p287 = scmp.eq.s32.totalorder %s34, 1
    %p288 = scmp.ne.s32.totalorder %s283, %s285
    %p289 = scmp.eq.s32.totalorder %s34, 0
    %p290 = por %p288, %p289
    %p291 = scmp.ne.s32.totalorder %s283, %s285
    %p292 = scmp.eq.s32.totalorder %s39, 1
    %p293 = por %p291, %p292
    %p294 = scmp.ne.s32.totalorder %s285, %s286
    %p295 = scmp.eq.s32.totalorder %s39, 0
    %p296 = por %p294, %p295
    %p297 = scmp.ne.s32.totalorder %s285, %s286
    %p298 = scmp.eq.s32.totalorder %s40, 1
    %p299 = por %p297, %p298
    %p301 = scmp.ne.s32.totalorder %s286, %s300
    %p302 = scmp.eq.s32.totalorder %s40, 0
    %p303 = por %p301, %p302
    %s305 = sadd.s32 %s304, 1
    %p308 = scmp.eq.s32.totalorder %s34, 1
    %p309 = scmp.ne.s32.totalorder %s304, %s306
    %p310 = scmp.eq.s32.totalorder %s34, 0
    %p311 = por %p309, %p310
    %p312 = scmp.ne.s32.totalorder %s304, %s306
    %p313 = scmp.eq.s32.totalorder %s39, 1
    %p314 = por %p312, %p313
    %p315 = scmp.ne.s32.totalorder %s306, %s307
    %p316 = scmp.eq.s32.totalorder %s39, 0
    %p317 = por %p315, %p316
    %p318 = scmp.ne.s32.totalorder %s306, %s307
    %p319 = scmp.eq.s32.totalorder %s40, 1
    %p320 = por %p318, %p319
    %p322 = scmp.ne.s32.totalorder %s307, %s321
    %p323 = scmp.eq.s32.totalorder %s40, 0
    %p324 = por %p322, %p323
    %s326 = sadd.s32 %s325, 1
    %p329 = scmp.eq.s32.totalorder %s34, 1
    %p330 = scmp.ne.s32.totalorder %s325, %s327
    %p331 = scmp.eq.s32.totalorder %s34, 0
    %p332 = por %p330, %p331
    %p333 = scmp.ne.s32.totalorder %s325, %s327
    %p334 = scmp.eq.s32.totalorder %s39, 1
    %p335 = por %p333, %p334
    %p336 = scmp.ne.s32.totalorder %s327, %s328
    %p337 = scmp.eq.s32.totalorder %s39, 0
    %p338 = por %p336, %p337
    %p339 = scmp.ne.s32.totalorder %s327, %s328
    %p340 = scmp.eq.s32.totalorder %s40, 1
    %p341 = por %p339, %p340
    %p343 = scmp.ne.s32.totalorder %s328, %s342
    %p344 = scmp.eq.s32.totalorder %s40, 0
    %p345 = por %p343, %p344
    %s347 = sadd.s32 %s346, 1
    %p350 = scmp.eq.s32.totalorder %s34, 1
    %p351 = scmp.ne.s32.totalorder %s346, %s348
    %p352 = scmp.eq.s32.totalorder %s34, 0
    %p353 = por %p351, %p352
    %p354 = scmp.ne.s32.totalorder %s346, %s348
    %p355 = scmp.eq.s32.totalorder %s39, 1
    %p356 = por %p354, %p355
    %p357 = scmp.ne.s32.totalorder %s348, %s349
    %p358 = scmp.eq.s32.totalorder %s39, 0
    %p359 = por %p357, %p358
    %p360 = scmp.ne.s32.totalorder %s348, %s349
    %p361 = scmp.eq.s32.totalorder %s40, 1
    %p362 = por %p360, %p361
    %p364 = scmp.ne.s32.totalorder %s349, %s363
    %p365 = scmp.eq.s32.totalorder %s40, 0
    %p366 = por %p364, %p365
    %s368 = sadd.s32 %s367, 1
    %p371 = scmp.eq.s32.totalorder %s34, 1
    %p372 = scmp.ne.s32.totalorder %s367, %s369
    %p373 = scmp.eq.s32.totalorder %s34, 0
    %p374 = por %p372, %p373
    %p375 = scmp.ne.s32.totalorder %s367, %s369
    %p376 = scmp.eq.s32.totalorder %s39, 1
    %p377 = por %p375, %p376
    %p378 = scmp.ne.s32.totalorder %s369, %s370
    %p379 = scmp.eq.s32.totalorder %s39, 0
    %p380 = por %p378, %p379
    %p381 = scmp.ne.s32.totalorder %s369, %s370
    %p382 = scmp.eq.s32.totalorder %s40, 1
    %p383 = por %p381, %p382
    %p385 = scmp.ne.s32.totalorder %s370, %s384
    %p386 = scmp.eq.s32.totalorder %s40, 0
    %p387 = por %p385, %p386
    %s389 = sadd.s32 %s388, 1
    %p392 = scmp.eq.s32.totalorder %s34, 1
    %p393 = scmp.ne.s32.totalorder %s388, %s390
    %p394 = scmp.eq.s32.totalorder %s34, 0
    %p395 = por %p393, %p394
    %p396 = scmp.ne.s32.totalorder %s388, %s390
    %p397 = scmp.eq.s32.totalorder %s39, 1
    %p398 = por %p396, %p397
    %p399 = scmp.ne.s32.totalorder %s390, %s391
    %p400 = scmp.eq.s32.totalorder %s39, 0
    %p401 = por %p399, %p400
    %p402 = scmp.ne.s32.totalorder %s390, %s391
    %p403 = scmp.eq.s32.totalorder %s40, 1
    %p404 = por %p402, %p403
    %p406 = scmp.ne.s32.totalorder %s391, %s405
    %p407 = scmp.eq.s32.totalorder %s40, 0
    %p408 = por %p406, %p407
    %s410 = sadd.s32 %s409, 1
    %p413 = scmp.eq.s32.totalorder %s34, 1
    %p414 = scmp.ne.s32.totalorder %s409, %s411
    %p415 = scmp.eq.s32.totalorder %s34, 0
    %p416 = por %p414, %p415
    %p417 = scmp.ne.s32.totalorder %s409, %s411
    %p418 = scmp.eq.s32.totalorder %s39, 1
    %p419 = por %p417, %p418
    %p420 = scmp.ne.s32.totalorder %s411, %s412
    %p421 = scmp.eq.s32.totalorder %s39, 0
    %p422 = por %p420, %p421
    %p423 = scmp.ne.s32.totalorder %s411, %s412
    %p424 = scmp.eq.s32.totalorder %s40, 1
    %p425 = por %p423, %p424
    %p427 = scmp.ne.s32.totalorder %s412, %s426
    %p428 = scmp.eq.s32.totalorder %s40, 0
    %p429 = por %p427, %p428
    %s431 = sadd.s32 %s430, 1
    %p434 = scmp.eq.s32.totalorder %s34, 1
    %p435 = scmp.ne.s32.totalorder %s430, %s432
    %p436 = scmp.eq.s32.totalorder %s34, 0
    %p437 = por %p435, %p436
    %p438 = scmp.ne.s32.totalorder %s430, %s432
    %p439 = scmp.eq.s32.totalorder %s39, 1
    %p440 = por %p438, %p439
    %p441 = scmp.ne.s32.totalorder %s432, %s433
    %p442 = scmp.eq.s32.totalorder %s39, 0
    %p443 = por %p441, %p442
    %p444 = scmp.ne.s32.totalorder %s432, %s433
    %p445 = scmp.eq.s32.totalorder %s40, 1
    %p446 = por %p444, %p445
    %p448 = scmp.ne.s32.totalorder %s433, %s447
    %p449 = scmp.eq.s32.totalorder %s40, 0
    %p450 = por %p448, %p449
    %s452 = sadd.s32 %s451, 1
    %p455 = scmp.eq.s32.totalorder %s34, 1
    %p456 = scmp.ne.s32.totalorder %s451, %s453
    %p457 = scmp.eq.s32.totalorder %s34, 0
    %p458 = por %p456, %p457
    %p459 = scmp.ne.s32.totalorder %s451, %s453
    %p460 = scmp.eq.s32.totalorder %s39, 1
    %p461 = por %p459, %p460
    %p462 = scmp.ne.s32.totalorder %s453, %s454
    %p463 = scmp.eq.s32.totalorder %s39, 0
    %p464 = por %p462, %p463
    %p465 = scmp.ne.s32.totalorder %s453, %s454
    %p466 = scmp.eq.s32.totalorder %s40, 1
    %p467 = por %p465, %p466
    %p469 = scmp.ne.s32.totalorder %s454, %s468
    %p470 = scmp.eq.s32.totalorder %s40, 0
    %p471 = por %p469, %p470
    %s473 = sadd.s32 %s472, 1
    %p476 = scmp.eq.s32.totalorder %s34, 1
    %p477 = scmp.ne.s32.totalorder %s472, %s474
    %p478 = scmp.eq.s32.totalorder %s34, 0
    %p479 = por %p477, %p478
    %p480 = scmp.ne.s32.totalorder %s472, %s474
    %p481 = scmp.eq.s32.totalorder %s39, 1
    %p482 = por %p480, %p481
    %p483 = scmp.ne.s32.totalorder %s474, %s475
    %p484 = scmp.eq.s32.totalorder %s39, 0
    %p485 = por %p483, %p484
    %p486 = scmp.ne.s32.totalorder %s474, %s475
    %p487 = scmp.eq.s32.totalorder %s40, 1
    %p488 = por %p486, %p487
    %p490 = scmp.ne.s32.totalorder %s475, %s489
    %p491 = scmp.eq.s32.totalorder %s40, 0
    %p492 = por %p490, %p491
    %s494 = sadd.s32 %s493, 1
    %p497 = scmp.eq.s32.totalorder %s34, 1
    %p498 = scmp.ne.s32.totalorder %s493, %s495
    %p499 = scmp.eq.s32.totalorder %s34, 0
    %p500 = por %p498, %p499
    %p501 = scmp.ne.s32.totalorder %s493, %s495
    %p502 = scmp.eq.s32.totalorder %s39, 1
    %p503 = por %p501, %p502
    %p504 = scmp.ne.s32.totalorder %s495, %s496
    %p505 = scmp.eq.s32.totalorder %s39, 0
    %p506 = por %p504, %p505
    %p507 = scmp.ne.s32.totalorder %s495, %s496
    %p508 = scmp.eq.s32.totalorder %s40, 1
    %p509 = por %p507, %p508
    %p511 = scmp.ne.s32.totalorder %s496, %s510
    %p512 = scmp.eq.s32.totalorder %s40, 0
    %p513 = por %p511, %p512
    %s515 = sadd.s32 %s514, 1
    %p518 = scmp.eq.s32.totalorder %s34, 1
    %p519 = scmp.ne.s32.totalorder %s514, %s516
    %p520 = scmp.eq.s32.totalorder %s34, 0
    %p521 = por %p519, %p520
    %p522 = scmp.ne.s32.totalorder %s514, %s516
    %p523 = scmp.eq.s32.totalorder %s39, 1
    %p524 = por %p522, %p523
    %p525 = scmp.ne.s32.totalorder %s516, %s517
    %p526 = scmp.eq.s32.totalorder %s39, 0
    %p527 = por %p525, %p526
    %p528 = scmp.ne.s32.totalorder %s516, %s517
    %p529 = scmp.eq.s32.totalorder %s40, 1
    %p530 = por %p528, %p529
    %p532 = scmp.ne.s32.totalorder %s517, %s531
    %p533 = scmp.eq.s32.totalorder %s40, 0
    %p534 = por %p532, %p533
    %s536 = sadd.s32 %s535, 1
    %p539 = scmp.eq.s32.totalorder %s34, 1
    %p540 = scmp.ne.s32.totalorder %s535, %s537
    %p541 = scmp.eq.s32.totalorder %s34, 0
    %p542 = por %p540, %p541
    %p543 = scmp.ne.s32.totalorder %s535, %s537
    %p544 = scmp.eq.s32.totalorder %s39, 1
    %p545 = por %p543, %p544
    %p546 = scmp.ne.s32.totalorder %s537, %s538
    %p547 = scmp.eq.s32.totalorder %s39, 0
    %p548 = por %p546, %p547
    %p549 = scmp.ne.s32.totalorder %s537, %s538
    %p550 = scmp.eq.s32.totalorder %s40, 1
    %p551 = por %p549, %p550
    %p553 = scmp.ne.s32.totalorder %s538, %s552
    %p554 = scmp.eq.s32.totalorder %s40, 0
    %p555 = por %p553, %p554
    %s557 = sadd.s32 %s556, 1
    %p560 = scmp.eq.s32.totalorder %s34, 1
    %p561 = scmp.ne.s32.totalorder %s556, %s558
    %p562 = scmp.eq.s32.totalorder %s34, 0
    %p563 = por %p561, %p562
    %p564 = scmp.ne.s32.totalorder %s556, %s558
    %p565 = scmp.eq.s32.totalorder %s39, 1
    %p566 = por %p564, %p565
    %p567 = scmp.ne.s32.totalorder %s558, %s559
    %p568 = scmp.eq.s32.totalorder %s39, 0
    %p569 = por %p567, %p568
    %p570 = scmp.ne.s32.totalorder %s558, %s559
    %p571 = scmp.eq.s32.totalorder %s40, 1
    %p572 = por %p570, %p571
    %p574 = scmp.ne.s32.totalorder %s559, %s573
    %p575 = scmp.eq.s32.totalorder %s40, 0
    %p576 = por %p574, %p575
    %s578 = sadd.s32 %s577, 1
    %p581 = scmp.eq.s32.totalorder %s34, 1
    %p582 = scmp.ne.s32.totalorder %s577, %s579
    %p583 = scmp.eq.s32.totalorder %s34, 0
    %p584 = por %p582, %p583
    %p585 = scmp.ne.s32.totalorder %s577, %s579
    %p586 = scmp.eq.s32.totalorder %s39, 1
    %p587 = por %p585, %p586
    %p588 = scmp.ne.s32.totalorder %s579, %s580
    %p589 = scmp.eq.s32.totalorder %s39, 0
    %p590 = por %p588, %p589
    %p591 = scmp.ne.s32.totalorder %s579, %s580
    %p592 = scmp.eq.s32.totalorder %s40, 1
    %p593 = por %p591, %p592
    %p595 = scmp.ne.s32.totalorder %s580, %s594
    %p596 = scmp.eq.s32.totalorder %s40, 0
    %p597 = por %p595, %p596
    %s598 = ssub.s32 %s34, %s41
    %p599 = scmp.eq.s32.totalorder %s598, 0
    %s601 = sadd.s32 %s600, 1
    %s602 = scalar_select %p599, %s600, %s601
    %p605 = pneg %p599
    %p606 = scmp.eq.s32.totalorder %s34, 1
    %p607 = por %p605, %p606
    %p608 = scmp.ne.s32.totalorder %s600, %s603
    %p609 = scmp.eq.s32.totalorder %s34, 0
    %p610 = por %p608, %p609
    %p611 = scmp.ne.s32.totalorder %s600, %s603
    %p612 = scmp.eq.s32.totalorder %s39, 1
    %p613 = por %p611, %p612
    %p614 = scmp.ne.s32.totalorder %s603, %s604
    %p615 = scmp.eq.s32.totalorder %s39, 0
    %p616 = por %p614, %p615
    %p617 = scmp.ne.s32.totalorder %s603, %s604
    %p618 = scmp.eq.s32.totalorder %s40, 1
    %p619 = por %p617, %p618
    %p621 = scmp.ne.s32.totalorder %s604, %s620
    %p622 = scmp.eq.s32.totalorder %s40, 0
    %p623 = por %p621, %p622
    %s624 = ssub.s32 %s34, %s41
    %p625 = scmp.eq.s32.totalorder %s624, 0
    %s627 = sadd.s32 %s626, 1
    %s628 = scalar_select %p625, %s626, %s627
    %p631 = pneg %p625
    %p632 = scmp.eq.s32.totalorder %s34, 1
    %p633 = por %p631, %p632
    %p634 = scmp.ne.s32.totalorder %s626, %s629
    %p635 = scmp.eq.s32.totalorder %s34, 0
    %p636 = por %p634, %p635
    %p637 = scmp.ne.s32.totalorder %s626, %s629
    %p638 = scmp.eq.s32.totalorder %s39, 1
    %p639 = por %p637, %p638
    %p640 = scmp.ne.s32.totalorder %s629, %s630
    %p641 = scmp.eq.s32.totalorder %s39, 0
    %p642 = por %p640, %p641
    %p643 = scmp.ne.s32.totalorder %s629, %s630
    %p644 = scmp.eq.s32.totalorder %s40, 1
    %p645 = por %p643, %p644
    %p647 = scmp.ne.s32.totalorder %s630, %s646
    %p648 = scmp.eq.s32.totalorder %s40, 0
    %p649 = por %p647, %p648
    %p650 = scmp.le.s32.totalorder 1, %s34
    %p651 = scmp.lt.s32.totalorder %s34, 3
    %p652 = pnand %p650, %p651
    %p653 = pneg %p652
    // Predicated region
    $region9: #{coupling_forward.1} parent=5 // pred_check
      _
    $region10: #{coupling_forward.1} parent=5 // pred_check_branch
      %655 = sbr.rel (%p652) target = $region12
    $region11: #{coupling_forward.1} parent=5 // pred_region
      %s656 = ssub.s32 %s34, 1
      // Predicated region
      $region13: #{coupling_forward.1} parent=11 // pred_check
        %p657 = pneg %p107
      $region14: #{coupling_forward.1} parent=11 // pred_check_branch
        %659 = sbr.rel (%p657) target = $region16
      $region15: #{coupling_forward.1} parent=11 // pred_region
        _
      $region16: #{coupling_forward.1} parent=11 // pred_fallthru
        _
      // Predicated region
      $region17: #{coupling_forward.1} parent=11 // pred_check
        %p660 = pneg %p128
      $region18: #{coupling_forward.1} parent=11 // pred_check_branch
        %662 = sbr.rel (%p660) target = $region20
      $region19: #{coupling_forward.1} parent=11 // pred_region
        _
      $region20: #{coupling_forward.1} parent=11 // pred_fallthru
        _
      // Predicated region
      $region21: #{coupling_forward.1} parent=11 // pred_check
        %p663 = pneg %p149
      $region22: #{coupling_forward.1} parent=11 // pred_check_branch
        %665 = sbr.rel (%p663) target = $region24
      $region23: #{coupling_forward.1} parent=11 // pred_region
        _
      $region24: #{coupling_forward.1} parent=11 // pred_fallthru
        _
      // Predicated region
      $region25: #{coupling_forward.1} parent=11 // pred_check
        %p666 = pneg %p170
      $region26: #{coupling_forward.1} parent=11 // pred_check_branch
        %668 = sbr.rel (%p666) target = $region28
      $region27: #{coupling_forward.1} parent=11 // pred_region
        _
      $region28: #{coupling_forward.1} parent=11 // pred_fallthru
        _
      // Predicated region
      $region29: #{coupling_forward.1} parent=11 // pred_check
        %p669 = pneg %p191
      $region30: #{coupling_forward.1} parent=11 // pred_check_branch
        %671 = sbr.rel (%p669) target = $region32
      $region31: #{coupling_forward.1} parent=11 // pred_region
        _
      $region32: #{coupling_forward.1} parent=11 // pred_fallthru
        _
      // Predicated region
      $region33: #{coupling_forward.1} parent=11 // pred_check
        %p672 = pneg %p212
      $region34: #{coupling_forward.1} parent=11 // pred_check_branch
        %674 = sbr.rel (%p672) target = $region36
      $region35: #{coupling_forward.1} parent=11 // pred_region
        _
      $region36: #{coupling_forward.1} parent=11 // pred_fallthru
        _
      // Predicated region
      $region37: #{coupling_forward.1} parent=11 // pred_check
        %p675 = pneg %p233
      $region38: #{coupling_forward.1} parent=11 // pred_check_branch
        %677 = sbr.rel (%p675) target = $region40
      $region39: #{coupling_forward.1} parent=11 // pred_region
        _
      $region40: #{coupling_forward.1} parent=11 // pred_fallthru
        _
      // Predicated region
      $region41: #{coupling_forward.1} parent=11 // pred_check
        %p678 = pneg %p254
      $region42: #{coupling_forward.1} parent=11 // pred_check_branch
        %680 = sbr.rel (%p678) target = $region44
      $region43: #{coupling_forward.1} parent=11 // pred_region
        _
      $region44: #{coupling_forward.1} parent=11 // pred_fallthru
        _
      // Predicated region
      $region45: #{coupling_forward.1} parent=11 // pred_check
        %p681 = pneg %p275
      $region46: #{coupling_forward.1} parent=11 // pred_check_branch
        %683 = sbr.rel (%p681) target = $region48
      $region47: #{coupling_forward.1} parent=11 // pred_region
        _
      $region48: #{coupling_forward.1} parent=11 // pred_fallthru
        _
      // Predicated region
      $region49: #{coupling_forward.1} parent=11 // pred_check
        %p684 = pneg %p296
      $region50: #{coupling_forward.1} parent=11 // pred_check_branch
        %686 = sbr.rel (%p684) target = $region52
      $region51: #{coupling_forward.1} parent=11 // pred_region
        _
      $region52: #{coupling_forward.1} parent=11 // pred_fallthru
        _
      // Predicated region
      $region53: #{coupling_forward.1} parent=11 // pred_check
        %p687 = pneg %p317
      $region54: #{coupling_forward.1} parent=11 // pred_check_branch
        %689 = sbr.rel (%p687) target = $region56
      $region55: #{coupling_forward.1} parent=11 // pred_region
        _
      $region56: #{coupling_forward.1} parent=11 // pred_fallthru
        _
      // Predicated region
      $region57: #{coupling_forward.1} parent=11 // pred_check
        %p690 = pneg %p338
      $region58: #{coupling_forward.1} parent=11 // pred_check_branch
        %692 = sbr.rel (%p690) target = $region60
      $region59: #{coupling_forward.1} parent=11 // pred_region
        _
      $region60: #{coupling_forward.1} parent=11 // pred_fallthru
        _
      // Predicated region
      $region61: #{coupling_forward.1} parent=11 // pred_check
        %p693 = pneg %p359
      $region62: #{coupling_forward.1} parent=11 // pred_check_branch
        %695 = sbr.rel (%p693) target = $region64
      $region63: #{coupling_forward.1} parent=11 // pred_region
        _
      $region64: #{coupling_forward.1} parent=11 // pred_fallthru
        _
      // Predicated region
      $region65: #{coupling_forward.1} parent=11 // pred_check
        %p696 = pneg %p380
      $region66: #{coupling_forward.1} parent=11 // pred_check_branch
        %698 = sbr.rel (%p696) target = $region68
      $region67: #{coupling_forward.1} parent=11 // pred_region
        _
      $region68: #{coupling_forward.1} parent=11 // pred_fallthru
        _
      // Predicated region
      $region69: #{coupling_forward.1} parent=11 // pred_check
        %p699 = pneg %p401
      $region70: #{coupling_forward.1} parent=11 // pred_check_branch
        %701 = sbr.rel (%p699) target = $region72
      $region71: #{coupling_forward.1} parent=11 // pred_region
        _
      $region72: #{coupling_forward.1} parent=11 // pred_fallthru
        _
      // Predicated region
      $region73: #{coupling_forward.1} parent=11 // pred_check
        %p702 = pneg %p422
      $region74: #{coupling_forward.1} parent=11 // pred_check_branch
        %704 = sbr.rel (%p702) target = $region76
      $region75: #{coupling_forward.1} parent=11 // pred_region
        _
      $region76: #{coupling_forward.1} parent=11 // pred_fallthru
        _
      // Predicated region
      $region77: #{coupling_forward.1} parent=11 // pred_check
        %p705 = pneg %p443
      $region78: #{coupling_forward.1} parent=11 // pred_check_branch
        %707 = sbr.rel (%p705) target = $region80
      $region79: #{coupling_forward.1} parent=11 // pred_region
        _
      $region80: #{coupling_forward.1} parent=11 // pred_fallthru
        _
      // Predicated region
      $region81: #{coupling_forward.1} parent=11 // pred_check
        %p708 = pneg %p464
      $region82: #{coupling_forward.1} parent=11 // pred_check_branch
        %710 = sbr.rel (%p708) target = $region84
      $region83: #{coupling_forward.1} parent=11 // pred_region
        _
      $region84: #{coupling_forward.1} parent=11 // pred_fallthru
        _
      // Predicated region
      $region85: #{coupling_forward.1} parent=11 // pred_check
        %p711 = pneg %p485
      $region86: #{coupling_forward.1} parent=11 // pred_check_branch
        %713 = sbr.rel (%p711) target = $region88
      $region87: #{coupling_forward.1} parent=11 // pred_region
        _
      $region88: #{coupling_forward.1} parent=11 // pred_fallthru
        _
      // Predicated region
      $region89: #{coupling_forward.1} parent=11 // pred_check
        %p714 = pneg %p506
      $region90: #{coupling_forward.1} parent=11 // pred_check_branch
        %716 = sbr.rel (%p714) target = $region92
      $region91: #{coupling_forward.1} parent=11 // pred_region
        _
      $region92: #{coupling_forward.1} parent=11 // pred_fallthru
        _
      // Predicated region
      $region93: #{coupling_forward.1} parent=11 // pred_check
        %p717 = pneg %p527
      $region94: #{coupling_forward.1} parent=11 // pred_check_branch
        %719 = sbr.rel (%p717) target = $region96
      $region95: #{coupling_forward.1} parent=11 // pred_region
        _
      $region96: #{coupling_forward.1} parent=11 // pred_fallthru
        _
      // Predicated region
      $region97: #{coupling_forward.1} parent=11 // pred_check
        %p720 = pneg %p548
      $region98: #{coupling_forward.1} parent=11 // pred_check_branch
        %722 = sbr.rel (%p720) target = $region100
      $region99: #{coupling_forward.1} parent=11 // pred_region
        _
      $region100: #{coupling_forward.1} parent=11 // pred_fallthru
        _
      // Predicated region
      $region101: #{coupling_forward.1} parent=11 // pred_check
        %p723 = pneg %p569
      $region102: #{coupling_forward.1} parent=11 // pred_check_branch
        %725 = sbr.rel (%p723) target = $region104
      $region103: #{coupling_forward.1} parent=11 // pred_region
        _
      $region104: #{coupling_forward.1} parent=11 // pred_fallthru
        _
      // Predicated region
      $region105: #{coupling_forward.1} parent=11 // pred_check
        %p726 = pneg %p590
      $region106: #{coupling_forward.1} parent=11 // pred_check_branch
        %728 = sbr.rel (%p726) target = $region108
      $region107: #{coupling_forward.1} parent=11 // pred_region
        _
      $region108: #{coupling_forward.1} parent=11 // pred_fallthru
        _
    $region12: #{coupling_forward.1} parent=5 // pred_fallthru
      _
    %p729 = scmp.lt.s32.totalorder %s34, 2
    // Predicated region
    $region109: #{coupling_forward.1} parent=5 // pred_check
      %p730 = pneg %p729
    $region110: #{coupling_forward.1} parent=5 // pred_check_branch
      %732 = sbr.rel (%p730) target = $region112
    $region111: #{coupling_forward.1} parent=5 // pred_region
      // Predicated region
      $region113: #{coupling_forward.1} parent=111 // pred_check
        %p733 = pneg %p54
      $region114: #{coupling_forward.1} parent=111 // pred_check_branch
        %735 = sbr.rel (%p733) target = $region116
      $region115: #{coupling_forward.1} parent=111 // pred_region
        %s736 = smul.u32 2, %s34
        %p737 = scmp.lt.s32.totalorder %s736, 3
        %s738 = scalar_select %p737, %s736, 3
        %s739 = smul.addr %s738, 4
        %s740 = scalar_lea.vmem %s0, %s739
        %s741 = smul.u32 2, %s34
      $region116: #{coupling_forward.1} parent=111 // pred_fallthru
        _
      // Predicated region
      $region117: #{coupling_forward.1} parent=111 // pred_check
        %p742 = pneg %p80
      $region118: #{coupling_forward.1} parent=111 // pred_check_branch
        %744 = sbr.rel (%p742) target = $region120
      $region119: #{coupling_forward.1} parent=111 // pred_region
        %p745 = scmp.lt.s32.totalorder %s34, 1
        %s746 = scalar_select %p745, %s34, 1
        %s747 = scalar_lea.vmem %s1, %s746
      $region120: #{coupling_forward.1} parent=111 // pred_fallthru
        _
    $region112: #{coupling_forward.1} parent=5 // pred_fallthru
      _
    %p748 = scmp.le.s32.totalorder 1, %s34
    %p749 = scmp.lt.s32.totalorder %s34, 3
    %p750 = pnand %p748, %p749
    %p751 = pneg %p750
    // Predicated region
    $region121: #{coupling_forward.1} parent=5 // pred_check
      _
    $region122: #{coupling_forward.1} parent=5 // pred_check_branch
      %753 = sbr.rel (%p750) target = $region124
    $region123: #{coupling_forward.1} parent=5 // pred_region
      %s754 = ssub.s32 %s34, 1
      %s755 = smul.u32 2, %s39
      %p756 = scmp.lt.s32.totalorder %s755, 3
      %s757 = scalar_select %p756, %s755, 3
      %s758 = smul.addr %s757, 4
      %s759 = scalar_lea.vmem %s0, %s758
      %p760 = pneg %p60
      %p761 = pneg %p57
      %p762 = scmp.lt.s32.totalorder %s39, 1
      %s763 = scalar_select %p762, %s39, 1
      %s764 = scalar_lea.vmem %s1, %s763
      %p765 = pneg %p86
      %p766 = pneg %p83
      %p767 = pneg %p107
      %p768 = pneg %p104
      %p769 = pneg %p128
      %p770 = pneg %p125
      %p771 = pneg %p149
      %p772 = pneg %p146
      %p773 = pneg %p170
      %p774 = pneg %p167
      %p775 = pneg %p191
      %p776 = pneg %p188
      %p777 = pneg %p212
      %p778 = pneg %p209
      %p779 = pneg %p233
      %p780 = pneg %p230
      %p781 = pneg %p254
      %p782 = pneg %p251
      %p783 = pneg %p275
      %p784 = pneg %p272
      %p785 = pneg %p296
      %p786 = pneg %p293
      %p787 = pneg %p317
      %p788 = pneg %p314
      %p789 = pneg %p338
      %p790 = pneg %p335
      %p791 = pneg %p359
      %p792 = pneg %p356
      %p793 = pneg %p380
      %p794 = pneg %p377
      %p795 = pneg %p401
      %p796 = pneg %p398
      %p797 = pneg %p422
      %p798 = pneg %p419
      %p799 = pneg %p443
      %p800 = pneg %p440
      %p801 = pneg %p464
      %p802 = pneg %p461
      %p803 = pneg %p485
      %p804 = pneg %p482
      %p805 = pneg %p506
      %p806 = pneg %p503
      %p807 = pneg %p527
      %p808 = pneg %p524
      %p809 = pneg %p548
      %p810 = pneg %p545
      %p811 = pneg %p569
      %p812 = pneg %p566
      %p813 = pneg %p590
      %p814 = pneg %p587
      %p815 = pneg %p616
      %p816 = pneg %p613
      %s817 = smul.u32 2, %s39
      %p818 = scmp.lt.s32.totalorder %s817, 3
      %s819 = scalar_select %p818, %s817, 3
      %s820 = smul.addr %s819, 4
      %s821 = scalar_lea.vmem %s26, %s820
      %p822 = pneg %p642
      %p823 = pneg %p639
      %p824 = scmp.lt.s32.totalorder %s39, 1
      %s825 = scalar_select %p824, %s39, 1
      %s826 = scalar_lea.vmem %s27, %s825
      %s827 = smul.u32 2, %s39
      %p828 = scmp.lt.s32.totalorder %s827, 3
      %s829 = scalar_select %p828, %s827, 3
      %s830 = smul.addr %s829, 4
      %s831 = scalar_lea.vmem %s0, %s830
      %s832 = smul.u32 2, %s39
      %p833 = scmp.lt.s32.totalorder %s39, 1
      %s834 = scalar_select %p833, %s39, 1
      %s835 = scalar_lea.vmem %s1, %s834
      %s836 = smul.u32 2, %s39
      %p837 = scmp.lt.s32.totalorder %s836, 3
      %s838 = scalar_select %p837, %s836, 3
      %s839 = smul.addr %s838, 4
      %s840 = scalar_lea.vmem %s26, %s839
      %s841 = smul.u32 2, %s39
      %p842 = scmp.lt.s32.totalorder %s39, 1
      %s843 = scalar_select %p842, %s39, 1
      %s844 = scalar_lea.vmem %s27, %s843
      %v846 = vld [vmem:[%s831] sm:$0xff]
      %v847 = vld [vmem:[%s3] sm:$0x3]
      %v849 = vlaneseq
      %v850 = vshrl.u32 %v849, 7
      %v851 = vsub.s32 0, %v850
      %v852 = vrot.slane %v847, %v851
      %v853 = vlaneseq
      %v854 = vshrl.u32 %v853, 7
      %v855 = vsub.s32 1, %v854
      %v856 = vrot.slane %v847, %v855
      %v857 = vcombine.low %v852, %v856
      %v859 = vmul.f32 %v846, %v857
      %v860 = vld [vmem:[%s4] sm:$0xf]
      %862 = vset.pattern.permute.xlu0 0
      %863 = vperm.xlu0 %862, %v860
      %v864 = vpop.permute.xlu0 %863
      %v866 = vunpack.c.l.s4 839922192
      %v867 = vunpack.c.0.s8 %v866
      %v868 = vlaneseq
      %v869 = vshrl.u32 %v868, 7
      %v870 = vsub.s32 %v867, %v869
      %v871 = vrot.slane %v864, %v870
      %v873 = vmul.f32 %v859, %v871
      %v874 = vld [vmem:[%s5] sm:$0xf]
      %876 = vset.pattern.permute.xlu0 0
      %877 = vperm.xlu0 %876, %v874
      %v878 = vpop.permute.xlu0 %877
      %v880 = vunpack.c.l.s4 839922192
      %v881 = vunpack.c.0.s8 %v880
      %v882 = vlaneseq
      %v883 = vshrl.u32 %v882, 7
      %v884 = vsub.s32 %v881, %v883
      %v885 = vrot.slane %v878, %v884
      %v887 = vadd.f32 %v873, %v885
      %v889 = vcombine.high %v887, %v887
      %891 = vrot.lane.b32.xlu0 %v887, 17
      %v892 = vpop.permute.xlu0 %891
      %893 = vrot.lane.b32.xlu0 %v889, 17
      %v894 = vpop.permute.xlu0 %893
      %v895 = vlaneseq
      %v896 = vand.u32 %v895, 127
      %vm897 = vcmp.lt.s32.totalorder %v896, 17
      %v898 = vsel %vm897, %v892, %v894
      %v899 = vsel %vm897, %v894, %v892
      %v900 = vld [vmem:[%s2] sm:$0x3]
      %v902 = vlaneseq
      %v903 = vshrl.u32 %v902, 7
      %v904 = vsub.s32 0, %v903
      %v905 = vrot.slane %v900, %v904
      %v906 = vlaneseq
      %v907 = vshrl.u32 %v906, 7
      %v908 = vsub.s32 1, %v907
      %v909 = vrot.slane %v900, %v908
      %v912 = vmul.f32 %v899, %v905
      %v913 = vmul.f32 %v898, %v909
      %v914 = vmax.f32 %v912, 0.0
      %v915 = vmax.f32 %v913, 0.0
      %v916 = vsub.f32 %v914, %v912
      %v917 = vsub.f32 %v915, %v913
      %918 = vst [vmem:[#allocation2] sm:$0xf] %v914
      %919 = vst [vmem:[#allocation2 + $0x8] sm:$0xf] %v915
      %v922 = vrot.slane %v916, 4
      %v923 = vrot.slane %v917, 4
      %926 = vst [vmem:[#allocation2] sm:$0xf0] %v922
      %927 = vst [vmem:[#allocation2 + $0x8] sm:$0xf0] %v923
      %928 = vrot.lane.b32.xlu0 %v887, 16
      %v929 = vpop.permute.xlu0 %928
      %930 = vrot.lane.b32.xlu0 %v889, 16
      %v931 = vpop.permute.xlu0 %930
      %vm932 = vcmp.lt.s32.totalorder %v896, 16
      %v933 = vsel %vm932, %v929, %v931
      %v934 = vsel %vm932, %v931, %v929
      %s935 = scalar_lea.vmem %s2, 2
      %v936 = vld [vmem:[%s935] sm:$0x3]
      %v938 = vlaneseq
      %v939 = vshrl.u32 %v938, 7
      %v940 = vsub.s32 0, %v939
      %v941 = vrot.slane %v936, %v940
      %v942 = vlaneseq
      %v943 = vshrl.u32 %v942, 7
      %v944 = vsub.s32 1, %v943
      %v945 = vrot.slane %v936, %v944
      %v948 = vmul.f32 %v934, %v941
      %v949 = vmul.f32 %v933, %v945
      %v950 = vmax.f32 %v948, 0.0
      %v951 = vmax.f32 %v949, 0.0
      %v952 = vsub.f32 %v950, %v948
      %v953 = vsub.f32 %v951, %v949
      %954 = vst [vmem:[#allocation2 + $0x10] sm:$0xf] %v950
      %955 = vst [vmem:[#allocation2 + $0x18] sm:$0xf] %v951
      %v958 = vrot.slane %v952, 4
      %v959 = vrot.slane %v953, 4
      %962 = vst [vmem:[#allocation2 + $0x10] sm:$0xf0] %v958
      %963 = vst [vmem:[#allocation2 + $0x18] sm:$0xf0] %v959
      %964 = vrot.lane.b32.xlu0 %v887, 15
      %v965 = vpop.permute.xlu0 %964
      %966 = vrot.lane.b32.xlu0 %v889, 15
      %v967 = vpop.permute.xlu0 %966
      %vm968 = vcmp.lt.s32.totalorder %v896, 15
      %v969 = vsel %vm968, %v965, %v967
      %v970 = vsel %vm968, %v967, %v965
      %s971 = scalar_lea.vmem %s2, 4
      %v972 = vld [vmem:[%s971] sm:$0x3]
      %v974 = vlaneseq
      %v975 = vshrl.u32 %v974, 7
      %v976 = vsub.s32 0, %v975
      %v977 = vrot.slane %v972, %v976
      %v978 = vlaneseq
      %v979 = vshrl.u32 %v978, 7
      %v980 = vsub.s32 1, %v979
      %v981 = vrot.slane %v972, %v980
      %v984 = vmul.f32 %v970, %v977
      %v985 = vmul.f32 %v969, %v981
      %v986 = vmax.f32 %v984, 0.0
      %v987 = vmax.f32 %v985, 0.0
      %v988 = vsub.f32 %v986, %v984
      %v989 = vsub.f32 %v987, %v985
      %990 = vst [vmem:[#allocation2 + $0x20] sm:$0xf] %v986
      %991 = vst [vmem:[#allocation2 + $0x28] sm:$0xf] %v987
      %v994 = vrot.slane %v988, 4
      %v995 = vrot.slane %v989, 4
      %998 = vst [vmem:[#allocation2 + $0x20] sm:$0xf0] %v994
      %999 = vst [vmem:[#allocation2 + $0x28] sm:$0xf0] %v995
      %1000 = vrot.lane.b32.xlu0 %v887, 1
      %v1001 = vpop.permute.xlu0 %1000
      %1002 = vrot.lane.b32.xlu0 %v889, 1
      %v1003 = vpop.permute.xlu0 %1002
      %vm1004 = vcmp.lt.s32.totalorder %v896, 1
      %v1005 = vsel %vm1004, %v1001, %v1003
      %v1006 = vsel %vm1004, %v1003, %v1001
      %s1007 = scalar_lea.vmem %s2, 6
      %v1008 = vld [vmem:[%s1007] sm:$0x3]
      %v1010 = vlaneseq
      %v1011 = vshrl.u32 %v1010, 7
      %v1012 = vsub.s32 0, %v1011
      %v1013 = vrot.slane %v1008, %v1012
      %v1014 = vlaneseq
      %v1015 = vshrl.u32 %v1014, 7
      %v1016 = vsub.s32 1, %v1015
      %v1017 = vrot.slane %v1008, %v1016
      %v1020 = vmul.f32 %v1006, %v1013
      %v1021 = vmul.f32 %v1005, %v1017
      %v1022 = vmax.f32 %v1020, 0.0
      %v1023 = vmax.f32 %v1021, 0.0
      %v1024 = vsub.f32 %v1022, %v1020
      %v1025 = vsub.f32 %v1023, %v1021
      %1026 = vst [vmem:[#allocation2 + $0x30] sm:$0xf] %v1022
      %1027 = vst [vmem:[#allocation2 + $0x38] sm:$0xf] %v1023
      %v1030 = vrot.slane %v1024, 4
      %v1031 = vrot.slane %v1025, 4
      %1034 = vst [vmem:[#allocation2 + $0x30] sm:$0xf0] %v1030
      %1035 = vst [vmem:[#allocation2 + $0x38] sm:$0xf0] %v1031
      %v1036 = vmax.f32 %v887, 0.0
      %v1037 = vsub.f32 %v1036, %v887
      %v1039 = vcombine.high %v1036, %v1036
      %1041 = vst [vmem:[#allocation2 + $0x40] sm:$0xf] %v1036
      %1042 = vst [vmem:[#allocation2 + $0x48] sm:$0xf] %v1039
      %v1044 = vcombine.low %v1037, %v1037
      %1046 = vst [vmem:[#allocation2 + $0x40] sm:$0xf0] %v1044
      %1047 = vst [vmem:[#allocation2 + $0x48] sm:$0xf0] %v1037
      %1048 = vrot.lane.b32.xlu0 %v887, 127
      %v1049 = vpop.permute.xlu0 %1048
      %1050 = vrot.lane.b32.xlu0 %v889, 127
      %v1051 = vpop.permute.xlu0 %1050
      %vm1052 = vcmp.lt.s32.totalorder %v896, 127
      %v1053 = vsel %vm1052, %v1049, %v1051
      %v1054 = vsel %vm1052, %v1051, %v1049
      %s1055 = scalar_lea.vmem %s2, 10
      %v1056 = vld [vmem:[%s1055] sm:$0x3]
      %v1058 = vlaneseq
      %v1059 = vshrl.u32 %v1058, 7
      %v1060 = vsub.s32 0, %v1059
      %v1061 = vrot.slane %v1056, %v1060
      %v1062 = vlaneseq
      %v1063 = vshrl.u32 %v1062, 7
      %v1064 = vsub.s32 1, %v1063
      %v1065 = vrot.slane %v1056, %v1064
      %v1068 = vmul.f32 %v1053, %v1061
      %v1069 = vmul.f32 %v1054, %v1065
      %v1070 = vmax.f32 %v1068, 0.0
      %v1071 = vmax.f32 %v1069, 0.0
      %v1072 = vsub.f32 %v1070, %v1068
      %v1073 = vsub.f32 %v1071, %v1069
      %1074 = vst [vmem:[#allocation2 + $0x50] sm:$0xf] %v1070
      %1075 = vst [vmem:[#allocation2 + $0x58] sm:$0xf] %v1071
      %v1078 = vrot.slane %v1072, 4
      %v1079 = vrot.slane %v1073, 4
      %1082 = vst [vmem:[#allocation2 + $0x50] sm:$0xf0] %v1078
      %1083 = vst [vmem:[#allocation2 + $0x58] sm:$0xf0] %v1079
      %1084 = vrot.lane.b32.xlu0 %v887, 113
      %v1085 = vpop.permute.xlu0 %1084
      %1086 = vrot.lane.b32.xlu0 %v889, 113
      %v1087 = vpop.permute.xlu0 %1086
      %vm1088 = vcmp.lt.s32.totalorder %v896, 113
      %v1089 = vsel %vm1088, %v1085, %v1087
      %v1090 = vsel %vm1088, %v1087, %v1085
      %s1091 = scalar_lea.vmem %s2, 12
      %v1092 = vld [vmem:[%s1091] sm:$0x3]
      %v1094 = vlaneseq
      %v1095 = vshrl.u32 %v1094, 7
      %v1096 = vsub.s32 0, %v1095
      %v1097 = vrot.slane %v1092, %v1096
      %v1098 = vlaneseq
      %v1099 = vshrl.u32 %v1098, 7
      %v1100 = vsub.s32 1, %v1099
      %v1101 = vrot.slane %v1092, %v1100
      %v1104 = vmul.f32 %v1089, %v1097
      %v1105 = vmul.f32 %v1090, %v1101
      %v1106 = vmax.f32 %v1104, 0.0
      %v1107 = vmax.f32 %v1105, 0.0
      %v1108 = vsub.f32 %v1106, %v1104
      %v1109 = vsub.f32 %v1107, %v1105
      %1110 = vst [vmem:[#allocation2 + $0x60] sm:$0xf] %v1106
      %1111 = vst [vmem:[#allocation2 + $0x68] sm:$0xf] %v1107
      %v1114 = vrot.slane %v1108, 4
      %v1115 = vrot.slane %v1109, 4
      %1118 = vst [vmem:[#allocation2 + $0x60] sm:$0xf0] %v1114
      %1119 = vst [vmem:[#allocation2 + $0x68] sm:$0xf0] %v1115
      %1120 = vrot.lane.b32.xlu0 %v887, 112
      %v1121 = vpop.permute.xlu0 %1120
      %1122 = vrot.lane.b32.xlu0 %v889, 112
      %v1123 = vpop.permute.xlu0 %1122
      %vm1124 = vcmp.lt.s32.totalorder %v896, 112
      %v1125 = vsel %vm1124, %v1121, %v1123
      %v1126 = vsel %vm1124, %v1123, %v1121
      %s1127 = scalar_lea.vmem %s2, 14
      %v1128 = vld [vmem:[%s1127] sm:$0x3]
      %v1130 = vlaneseq
      %v1131 = vshrl.u32 %v1130, 7
      %v1132 = vsub.s32 0, %v1131
      %v1133 = vrot.slane %v1128, %v1132
      %v1134 = vlaneseq
      %v1135 = vshrl.u32 %v1134, 7
      %v1136 = vsub.s32 1, %v1135
      %v1137 = vrot.slane %v1128, %v1136
      %v1140 = vmul.f32 %v1125, %v1133
      %v1141 = vmul.f32 %v1126, %v1137
      %v1142 = vmax.f32 %v1140, 0.0
      %v1143 = vmax.f32 %v1141, 0.0
      %v1144 = vsub.f32 %v1142, %v1140
      %v1145 = vsub.f32 %v1143, %v1141
      %1146 = vst [vmem:[#allocation2 + $0x70] sm:$0xf] %v1142
      %1147 = vst [vmem:[#allocation2 + $0x78] sm:$0xf] %v1143
      %v1150 = vrot.slane %v1144, 4
      %v1151 = vrot.slane %v1145, 4
      %1154 = vst [vmem:[#allocation2 + $0x70] sm:$0xf0] %v1150
      %1155 = vst [vmem:[#allocation2 + $0x78] sm:$0xf0] %v1151
      %1156 = vrot.lane.b32.xlu0 %v887, 111
      %v1157 = vpop.permute.xlu0 %1156
      %1158 = vrot.lane.b32.xlu0 %v889, 111
      %v1159 = vpop.permute.xlu0 %1158
      %vm1160 = vcmp.lt.s32.totalorder %v896, 111
      %v1161 = vsel %vm1160, %v1157, %v1159
      %v1162 = vsel %vm1160, %v1159, %v1157
      %s1163 = scalar_lea.vmem %s2, 16
      %v1164 = vld [vmem:[%s1163] sm:$0x3]
      %v1166 = vlaneseq
      %v1167 = vshrl.u32 %v1166, 7
      %v1168 = vsub.s32 0, %v1167
      %v1169 = vrot.slane %v1164, %v1168
      %v1170 = vlaneseq
      %v1171 = vshrl.u32 %v1170, 7
      %v1172 = vsub.s32 1, %v1171
      %v1173 = vrot.slane %v1164, %v1172
      %v1176 = vmul.f32 %v1161, %v1169
      %v1177 = vmul.f32 %v1162, %v1173
      %v1178 = vmax.f32 %v1176, 0.0
      %v1179 = vmax.f32 %v1177, 0.0
      %v1180 = vsub.f32 %v1178, %v1176
      %v1181 = vsub.f32 %v1179, %v1177
      %1182 = vst [vmem:[#allocation2 + $0x80] sm:$0xf] %v1178
      %1183 = vst [vmem:[#allocation2 + $0x88] sm:$0xf] %v1179
      %v1186 = vrot.slane %v1180, 4
      %v1187 = vrot.slane %v1181, 4
      %1190 = vst [vmem:[#allocation2 + $0x80] sm:$0xf0] %v1186
      %1191 = vst [vmem:[#allocation2 + $0x88] sm:$0xf0] %v1187
      %v1192 = vld [vmem:[#allocation2] sm:$0xff]
      %v1193 = vld [vmem:[#allocation2 + $0x8] sm:$0xff]
      %v1194 = vld [vmem:[#allocation2 + $0x10] sm:$0xff]
      %v1195 = vld [vmem:[#allocation2 + $0x18] sm:$0xff]
      %v1196 = vld [vmem:[#allocation2 + $0x20] sm:$0xff]
      %v1197 = vld [vmem:[#allocation2 + $0x28] sm:$0xff]
      %v1198 = vld [vmem:[#allocation2 + $0x30] sm:$0xff]
      %v1199 = vld [vmem:[#allocation2 + $0x38] sm:$0xff]
      %v1200 = vld [vmem:[#allocation2 + $0x40] sm:$0xff]
      %v1201 = vld [vmem:[#allocation2 + $0x48] sm:$0xff]
      %v1202 = vld [vmem:[#allocation2 + $0x50] sm:$0xff]
      %v1203 = vld [vmem:[#allocation2 + $0x58] sm:$0xff]
      %v1204 = vld [vmem:[#allocation2 + $0x60] sm:$0xff]
      %v1205 = vld [vmem:[#allocation2 + $0x68] sm:$0xff]
      %v1206 = vld [vmem:[#allocation2 + $0x70] sm:$0xff]
      %v1207 = vld [vmem:[#allocation2 + $0x78] sm:$0xff]
      %v1208 = vld [vmem:[#allocation2 + $0x80] sm:$0xff]
      %v1209 = vld [vmem:[#allocation2 + $0x88] sm:$0xff]
      %v1210 = vpack.c.bf16 %v1194, %v1192
      %v1211 = vpack.c.bf16 %v1195, %v1193
      %v1212 = vpack.c.bf16 %v1198, %v1196
      %v1213 = vpack.c.bf16 %v1199, %v1197
      %v1214 = vpack.c.bf16 %v1202, %v1200
      %v1215 = vpack.c.bf16 %v1203, %v1201
      %v1216 = vpack.c.bf16 %v1206, %v1204
      %v1217 = vpack.c.bf16 %v1207, %v1205
      %v1218 = vpack.c.bf16 %v1208, %v1208
      %v1219 = vpack.c.bf16 %v1209, %v1209
      %v1220 = vld [vmem:[%s6] sm:$0xf]
      %v1221 = vld [vmem:[%s6 + $0x4] sm:$0xf]
      %v1222 = vld [vmem:[%s6 + $0x8] sm:$0xf]
      %v1223 = vld [vmem:[%s6 + $0xc] sm:$0xf]
      %v1224 = vld [vmem:[%s7] sm:$0xff]
      %v1225 = vld [vmem:[%s7 + $0x8] sm:$0xff]
      %v1226 = vld [vmem:[%s7 + $0x10] sm:$0xff]
      %v1227 = vld [vmem:[%s7 + $0x18] sm:$0xff]
      %1229 = vset.pattern.permute.xlu0 0
      %1230 = vperm.xlu0 %1229, %v1224
      %v1231 = vpop.permute.xlu0 %1230
      %1234 = vset.pattern.permute.xlu0 0
      %1235 = vperm.xlu0 %1234, %v1225
      %v1236 = vpop.permute.xlu0 %1235
      %1239 = vset.pattern.permute.xlu0 0
      %1240 = vperm.xlu0 %1239, %v1226
      %v1241 = vpop.permute.xlu0 %1240
      %1244 = vset.pattern.permute.xlu0 0
      %1245 = vperm.xlu0 %1244, %v1227
      %v1246 = vpop.permute.xlu0 %1245
      %v1252 = vunpack.c.l.b16 %v1220
      %v1253 = vunpack.c.l.b16 %v1221
      %v1254 = vunpack.c.l.b16 %v1222
      %v1255 = vunpack.c.l.b16 %v1223
      %v1256 = vpack.c.b16 %v1253, %v1252
      %v1257 = vpack.c.b16 %v1255, %v1254
      %vm1258 = vcmask 588800
      %v1260 = vsel %vm1258, %v1256, 0
      %v1263 = vsel %vm1258, %v1257, 0
      %vm1265 = vcmask 1043456
      %v1267 = vsel %vm1265, %v1218, 0
      %v1270 = vsel %vm1265, %v1219, 0
      %1272 = vmatprep.subr.bf16.mxu0 %v1211
      %1273 = vmatpush1.bf16.msra.mxu0 %v1210
      %1274 = vmatprep.subr.bf16.mxu0 %v1213
      %1275 = vmatpush1.bf16.msra.mxu0 %v1212
      %1276 = vmatprep.subr.bf16.mxu0 %v1215
      %1277 = vmatpush1.bf16.msra.mxu0 %v1214
      %1278 = vmatprep.subr.bf16.mxu0 %v1217
      %1279 = vmatpush1.bf16.msra.mxu0 %v1216
      %1280 = vmatprep.subr.bf16.mxu0 %v1270
      %1281 = vmatpush1.bf16.msra.mxu0 %v1267
      %1282 = vmatprep.subr.bf16.mxu0 0
      %1283 = vmatpush1.bf16.msra.mxu0 0
      %1284 = vmatprep.subr.bf16.mxu0 0
      %1285 = vmatpush1.bf16.msra.mxu0 0
      %1286 = vmatprep.subr.bf16.mxu0 0
      %1287 = vmatpush1.bf16.msra.mxu0 0
      %1288 = vmatprep.subr.bf16.mxu0 0
      %1289 = vmatpush1.bf16.msra.mxu0 0
      %1290 = vmatprep.subr.bf16.mxu0 0
      %1291 = vmatpush1.bf16.msra.mxu0 0
      %1292 = vmatprep.subr.bf16.mxu0 0
      %1293 = vmatpush1.bf16.msra.mxu0 0
      %1294 = vmatprep.subr.bf16.mxu0 0
      %1295 = vmatpush1.bf16.msra.mxu0 0
      %1296 = vmatprep.subr.bf16.mxu0 0
      %1297 = vmatpush1.bf16.msra.mxu0 0
      %1298 = vmatprep.subr.bf16.mxu0 0
      %1299 = vmatpush1.bf16.msra.mxu0 0
      %1300 = vmatprep.subr.bf16.mxu0 0
      %1301 = vmatpush1.bf16.msra.mxu0 0
      %1302 = vmatprep.subr.bf16.mxu0 0
      %1303 = vmatpush1.bf16.msra.mxu0 0
      %1304 = vmatprep.mubr.bf16.mxu0 0
      %1305 = vmatmul.mubr.bf16.gmra.mrb[0].mxu0 %v1260
      %v1306 = vpop.f32.mrb[0].mxu0
      %v1307 = vadd.f32 %v1231, %v1306
      %v1308 = vpop.f32.mrb[0].mxu0
      %v1309 = vadd.f32 %v1231, %v1308
      %v1310 = vpop.f32.mrb[0].mxu0
      %v1311 = vadd.f32 %v1236, %v1310
      %v1312 = vpop.f32.mrb[0].mxu0
      %v1313 = vadd.f32 %v1236, %v1312
      %1314 = vmatprep.mubr.bf16.mxu0 0
      %1315 = vmatmul.mubr.bf16.gmra.mrb[0].mxu0 %v1263
      %v1316 = vpop.f32.mrb[0].mxu0
      %v1317 = vadd.f32 %v1241, %v1316
      %v1318 = vpop.f32.mrb[0].mxu0
      %v1319 = vadd.f32 %v1241, %v1318
      %v1320 = vpop.f32.mrb[0].mxu0
      %v1321 = vadd.f32 %v1246, %v1320
      %v1322 = vpop.f32.mrb[0].mxu0
      %v1323 = vadd.f32 %v1246, %v1322
      %1324 = vdwg.mxu0
      %v1325 = vld [vmem:[%s8] sm:$0xf]
      %v1326 = vld [vmem:[%s8 + $0x4] sm:$0xf]
      %v1327 = vld [vmem:[%s8 + $0x8] sm:$0xf]
      %v1328 = vld [vmem:[%s8 + $0xc] sm:$0xf]
      %v1329 = vpack.c.bf16 %v1311, %v1307
      %v1330 = vpack.c.bf16 %v1313, %v1309
      %v1331 = vpack.c.bf16 %v1321, %v1317
      %v1332 = vpack.c.bf16 %v1323, %v1319
      %v1333 = vld [vmem:[%s9] sm:$0xff]
      %v1334 = vld [vmem:[%s9 + $0x8] sm:$0xff]
      %v1335 = vld [vmem:[%s9 + $0x10] sm:$0xff]
      %v1336 = vld [vmem:[%s9 + $0x18] sm:$0xff]
      %1338 = vset.pattern.permute.xlu0 0
      %1339 = vperm.xlu0 %1338, %v1333
      %v1340 = vpop.permute.xlu0 %1339
      %1343 = vset.pattern.permute.xlu0 0
      %1344 = vperm.xlu0 %1343, %v1334
      %v1345 = vpop.permute.xlu0 %1344
      %1348 = vset.pattern.permute.xlu0 0
      %1349 = vperm.xlu0 %1348, %v1335
      %v1350 = vpop.permute.xlu0 %1349
      %1353 = vset.pattern.permute.xlu0 0
      %1354 = vperm.xlu0 %1353, %v1336
      %v1355 = vpop.permute.xlu0 %1354
      %v1361 = vunpack.c.l.b16 %v1325
      %v1362 = vunpack.c.l.b16 %v1326
      %v1363 = vunpack.c.l.b16 %v1327
      %v1364 = vunpack.c.l.b16 %v1328
      %v1365 = vpack.c.b16 %v1362, %v1361
      %v1366 = vpack.c.b16 %v1364, %v1363
      %vm1367 = vcmask 261120
      %v1369 = vsel %vm1367, %v1365, 0
      %v1372 = vsel %vm1367, %v1366, 0
      %1374 = vmatprep.subr.bf16.mxu0 %v1330
      %1375 = vmatpush1.bf16.msra.mxu0 %v1329
      %1376 = vmatprep.subr.bf16.mxu0 %v1332
      %1377 = vmatpush1.bf16.msra.mxu0 %v1331
      %1378 = vmatprep.subr.bf16.mxu0 0
      %1379 = vmatpush1.bf16.msra.mxu0 0
      %1380 = vmatprep.subr.bf16.mxu0 0
      %1381 = vmatpush1.bf16.msra.mxu0 0
      %1382 = vmatprep.subr.bf16.mxu0 0
      %1383 = vmatpush1.bf16.msra.mxu0 0
      %1384 = vmatprep.subr.bf16.mxu0 0
      %1385 = vmatpush1.bf16.msra.mxu0 0
      %1386 = vmatprep.subr.bf16.mxu0 0
      %1387 = vmatpush1.bf16.msra.mxu0 0
      %1388 = vmatprep.subr.bf16.mxu0 0
      %1389 = vmatpush1.bf16.msra.mxu0 0
      %1390 = vmatprep.subr.bf16.mxu0 0
      %1391 = vmatpush1.bf16.msra.mxu0 0
      %1392 = vmatprep.subr.bf16.mxu0 0
      %1393 = vmatpush1.bf16.msra.mxu0 0
      %1394 = vmatprep.subr.bf16.mxu0 0
      %1395 = vmatpush1.bf16.msra.mxu0 0
      %1396 = vmatprep.subr.bf16.mxu0 0
      %1397 = vmatpush1.bf16.msra.mxu0 0
      %1398 = vmatprep.subr.bf16.mxu0 0
      %1399 = vmatpush1.bf16.msra.mxu0 0
      %1400 = vmatprep.subr.bf16.mxu0 0
      %1401 = vmatpush1.bf16.msra.mxu0 0
      %1402 = vmatprep.subr.bf16.mxu0 0
      %1403 = vmatpush1.bf16.msra.mxu0 0
      %1404 = vmatprep.subr.bf16.mxu0 0
      %1405 = vmatpush1.bf16.msra.mxu0 0
      %1406 = vmatprep.mubr.bf16.mxu0 0
      %1407 = vmatmul.mubr.bf16.gmra.mrb[0].mxu0 %v1369
      %v1408 = vpop.f32.mrb[0].mxu0
      %v1409 = vadd.f32 %v1340, %v1408
      %v1410 = vpop.f32.mrb[0].mxu0
      %v1411 = vadd.f32 %v1340, %v1410
      %v1412 = vpop.f32.mrb[0].mxu0
      %v1413 = vadd.f32 %v1345, %v1412
      %v1414 = vpop.f32.mrb[0].mxu0
      %v1415 = vadd.f32 %v1345, %v1414
      %1416 = vmatprep.mubr.bf16.mxu0 0
      %1417 = vmatmul.mubr.bf16.gmra.mrb[0].mxu0 %v1372
      %v1418 = vpop.f32.mrb[0].mxu0
      %v1419 = vadd.f32 %v1350, %v1418
      %v1420 = vpop.f32.mrb[0].mxu0
      %v1421 = vadd.f32 %v1350, %v1420
      %v1422 = vpop.f32.mrb[0].mxu0
      %v1423 = vadd.f32 %v1355, %v1422
      %v1424 = vpop.f32.mrb[0].mxu0
      %v1425 = vadd.f32 %v1355, %v1424
      %1426 = vdwg.mxu0
      %v1427 = vld [vmem:[%s10] sm:$0xff]
      %v1428 = vld [vmem:[%s10 + $0x8] sm:$0xff]
      %v1429 = vld [vmem:[%s10 + $0x10] sm:$0xff]
      %v1430 = vld [vmem:[%s10 + $0x18] sm:$0xff]
      %1432 = vset.pattern.permute.xlu0 0
      %1433 = vperm.xlu0 %1432, %v1427
      %v1434 = vpop.permute.xlu0 %1433
      %1437 = vset.pattern.permute.xlu0 0
      %1438 = vperm.xlu0 %1437, %v1428
      %v1439 = vpop.permute.xlu0 %1438
      %1442 = vset.pattern.permute.xlu0 0
      %1443 = vperm.xlu0 %1442, %v1429
      %v1444 = vpop.permute.xlu0 %1443
      %1447 = vset.pattern.permute.xlu0 0
      %1448 = vperm.xlu0 %1447, %v1430
      %v1449 = vpop.permute.xlu0 %1448
      %v1451 = vmul.f32 %v1307, %v1434
      %v1452 = vmul.f32 %v1309, %v1434
      %v1453 = vmul.f32 %v1311, %v1439
      %v1454 = vmul.f32 %v1313, %v1439
      %v1455 = vmul.f32 %v1317, %v1444
      %v1456 = vmul.f32 %v1319, %v1444
      %v1457 = vmul.f32 %v1321, %v1449
      %v1458 = vmul.f32 %v1323, %v1449
      %v1459 = vld [vmem:[%s11] sm:$0xff]
      %v1460 = vld [vmem:[%s11 + $0x8] sm:$0xff]
      %v1461 = vld [vmem:[%s11 + $0x10] sm:$0xff]
      %v1462 = vld [vmem:[%s11 + $0x18] sm:$0xff]
      %1464 = vset.pattern.permute.xlu0 0
      %1465 = vperm.xlu0 %1464, %v1459
      %v1466 = vpop.permute.xlu0 %1465
      %1469 = vset.pattern.permute.xlu0 0
      %1470 = vperm.xlu0 %1469, %v1460
      %v1471 = vpop.permute.xlu0 %1470
      %1474 = vset.pattern.permute.xlu0 0
      %1475 = vperm.xlu0 %1474, %v1461
      %v1476 = vpop.permute.xlu0 %1475
      %1479 = vset.pattern.permute.xlu0 0
      %1480 = vperm.xlu0 %1479, %v1462
      %v1481 = vpop.permute.xlu0 %1480
      %v1483 = vadd.f32 %v1451, %v1466
      %v1484 = vadd.f32 %v1452, %v1466
      %v1485 = vadd.f32 %v1453, %v1471
      %v1486 = vadd.f32 %v1454, %v1471
      %v1487 = vadd.f32 %v1455, %v1476
      %v1488 = vadd.f32 %v1456, %v1476
      %v1489 = vadd.f32 %v1457, %v1481
      %v1490 = vadd.f32 %v1458, %v1481
      %v1491 = vmax.f32 %v1483, 0.0
      %v1492 = vmax.f32 %v1484, 0.0
      %v1493 = vmax.f32 %v1485, 0.0
      %v1494 = vmax.f32 %v1486, 0.0
      %v1495 = vmax.f32 %v1487, 0.0
      %v1496 = vmax.f32 %v1488, 0.0
      %v1497 = vmax.f32 %v1489, 0.0
      %v1498 = vmax.f32 %v1490, 0.0
      %v1499 = vld [vmem:[%s12] sm:$0xff]
      %v1500 = vld [vmem:[%s12 + $0x8] sm:$0xf]
      %v1501 = vld [vmem:[%s12 + $0xc] sm:$0xff]
      %v1502 = vld [vmem:[%s12 + $0x14] sm:$0xf]
      %v1503 = vld [vmem:[%s12 + $0x18] sm:$0xff]
      %v1504 = vld [vmem:[%s12 + $0x20] sm:$0xf]
      %v1505 = vld [vmem:[%s12 + $0x24] sm:$0xff]
      %v1506 = vld [vmem:[%s12 + $0x2c] sm:$0xf]
      %1507 = vrot.lane.b32.xlu0 %v1491, 17
      %v1508 = vpop.permute.xlu0 %1507
      %1509 = vrot.lane.b32.xlu0 %v1493, 17
      %v1510 = vpop.permute.xlu0 %1509
      %1511 = vrot.lane.b32.xlu0 %v1495, 17
      %v1512 = vpop.permute.xlu0 %1511
      %1513 = vrot.lane.b32.xlu0 %v1497, 17
      %v1514 = vpop.permute.xlu0 %1513
      %1515 = vrot.lane.b32.xlu0 %v1492, 17
      %v1516 = vpop.permute.xlu0 %1515
      %1517 = vrot.lane.b32.xlu0 %v1494, 17
      %v1518 = vpop.permute.xlu0 %1517
      %1519 = vrot.lane.b32.xlu0 %v1496, 17
      %v1520 = vpop.permute.xlu0 %1519
      %1521 = vrot.lane.b32.xlu0 %v1498, 17
      %v1522 = vpop.permute.xlu0 %1521
      %v1523 = vsel %vm897, %v1508, %v1516
      %v1524 = vsel %vm897, %v1510, %v1518
      %v1525 = vsel %vm897, %v1512, %v1520
      %v1526 = vsel %vm897, %v1514, %v1522
      %v1527 = vsel %vm897, %v1516, %v1508
      %v1528 = vsel %vm897, %v1518, %v1510
      %v1529 = vsel %vm897, %v1520, %v1512
      %v1530 = vsel %vm897, %v1522, %v1514
      %v1531 = vld [vmem:[%s2] sm:$0x3]
      %v1533 = vlaneseq
      %v1534 = vshrl.u32 %v1533, 7
      %v1535 = vsub.s32 0, %v1534
      %v1536 = vrot.slane %v1531, %v1535
      %v1537 = vlaneseq
      %v1538 = vshrl.u32 %v1537, 7
      %v1539 = vsub.s32 1, %v1538
      %v1540 = vrot.slane %v1531, %v1539
      %v1543 = vmul.f32 %v1527, %v1536
      %v1544 = vmul.f32 %v1523, %v1540
      %v1545 = vmul.f32 %v1528, %v1536
      %v1546 = vmul.f32 %v1524, %v1540
      %v1547 = vmul.f32 %v1529, %v1536
      %v1548 = vmul.f32 %v1525, %v1540
      %v1549 = vmul.f32 %v1530, %v1536
      %v1550 = vmul.f32 %v1526, %v1540
      %1551 = vst [vmem:[#allocation2] sm:$0xff] %v1543
      %1552 = vst [vmem:[#allocation2 + $0x8] sm:$0xff] %v1544
      %1553 = vst [vmem:[#allocation2 + $0x10] sm:$0xff] %v1545
      %1554 = vst [vmem:[#allocation2 + $0x18] sm:$0xff] %v1546
      %1555 = vst [vmem:[#allocation2 + $0x20] sm:$0xff] %v1547
      %1556 = vst [vmem:[#allocation2 + $0x28] sm:$0xff] %v1548
      %1557 = vst [vmem:[#allocation2 + $0x30] sm:$0xff] %v1549
      %1558 = vst [vmem:[#allocation2 + $0x38] sm:$0xff] %v1550
      %1559 = vrot.lane.b32.xlu0 %v1491, 16
      %v1560 = vpop.permute.xlu0 %1559
      %1561 = vrot.lane.b32.xlu0 %v1493, 16
      %v1562 = vpop.permute.xlu0 %1561
      %1563 = vrot.lane.b32.xlu0 %v1495, 16
      %v1564 = vpop.permute.xlu0 %1563
      %1565 = vrot.lane.b32.xlu0 %v1497, 16
      %v1566 = vpop.permute.xlu0 %1565
      %1567 = vrot.lane.b32.xlu0 %v1492, 16
      %v1568 = vpop.permute.xlu0 %1567
      %1569 = vrot.lane.b32.xlu0 %v1494, 16
      %v1570 = vpop.permute.xlu0 %1569
      %1571 = vrot.lane.b32.xlu0 %v1496, 16
      %v1572 = vpop.permute.xlu0 %1571
      %1573 = vrot.lane.b32.xlu0 %v1498, 16
      %v1574 = vpop.permute.xlu0 %1573
      %v1575 = vsel %vm932, %v1560, %v1568
      %v1576 = vsel %vm932, %v1562, %v1570
      %v1577 = vsel %vm932, %v1564, %v1572
      %v1578 = vsel %vm932, %v1566, %v1574
      %v1579 = vsel %vm932, %v1568, %v1560
      %v1580 = vsel %vm932, %v1570, %v1562
      %v1581 = vsel %vm932, %v1572, %v1564
      %v1582 = vsel %vm932, %v1574, %v1566
      %v1583 = vld [vmem:[%s935] sm:$0x3]
      %v1585 = vlaneseq
      %v1586 = vshrl.u32 %v1585, 7
      %v1587 = vsub.s32 0, %v1586
      %v1588 = vrot.slane %v1583, %v1587
      %v1589 = vlaneseq
      %v1590 = vshrl.u32 %v1589, 7
      %v1591 = vsub.s32 1, %v1590
      %v1592 = vrot.slane %v1583, %v1591
      %v1595 = vmul.f32 %v1579, %v1588
      %v1596 = vmul.f32 %v1575, %v1592
      %v1597 = vmul.f32 %v1580, %v1588
      %v1598 = vmul.f32 %v1576, %v1592
      %v1599 = vmul.f32 %v1581, %v1588
      %v1600 = vmul.f32 %v1577, %v1592
      %v1601 = vmul.f32 %v1582, %v1588
      %v1602 = vmul.f32 %v1578, %v1592
      %1603 = vst [vmem:[#allocation2 + $0x40] sm:$0xff] %v1595
      %1604 = vst [vmem:[#allocation2 + $0x48] sm:$0xff] %v1596
      %1605 = vst [vmem:[#allocation2 + $0x50] sm:$0xff] %v1597
      %1606 = vst [vmem:[#allocation2 + $0x58] sm:$0xff] %v1598
      %1607 = vst [vmem:[#allocation2 + $0x60] sm:$0xff] %v1599
      %1608 = vst [vmem:[#allocation2 + $0x68] sm:$0xff] %v1600
      %1609 = vst [vmem:[#allocation2 + $0x70] sm:$0xff] %v1601
      %1610 = vst [vmem:[#allocation2 + $0x78] sm:$0xff] %v1602
      %1611 = vrot.lane.b32.xlu0 %v1491, 15
      %v1612 = vpop.permute.xlu0 %1611
      %1613 = vrot.lane.b32.xlu0 %v1493, 15
      %v1614 = vpop.permute.xlu0 %1613
      %1615 = vrot.lane.b32.xlu0 %v1495, 15
      %v1616 = vpop.permute.xlu0 %1615
      %1617 = vrot.lane.b32.xlu0 %v1497, 15
      %v1618 = vpop.permute.xlu0 %1617
      %1619 = vrot.lane.b32.xlu0 %v1492, 15
      %v1620 = vpop.permute.xlu0 %1619
      %1621 = vrot.lane.b32.xlu0 %v1494, 15
      %v1622 = vpop.permute.xlu0 %1621
      %1623 = vrot.lane.b32.xlu0 %v1496, 15
      %v1624 = vpop.permute.xlu0 %1623
      %1625 = vrot.lane.b32.xlu0 %v1498, 15
      %v1626 = vpop.permute.xlu0 %1625
      %v1627 = vsel %vm968, %v1612, %v1620
      %v1628 = vsel %vm968, %v1614, %v1622
      %v1629 = vsel %vm968, %v1616, %v1624
      %v1630 = vsel %vm968, %v1618, %v1626
      %v1631 = vsel %vm968, %v1620, %v1612
      %v1632 = vsel %vm968, %v1622, %v1614
      %v1633 = vsel %vm968, %v1624, %v1616
      %v1634 = vsel %vm968, %v1626, %v1618
      %v1635 = vld [vmem:[%s971] sm:$0x3]
      %v1637 = vlaneseq
      %v1638 = vshrl.u32 %v1637, 7
      %v1639 = vsub.s32 0, %v1638
      %v1640 = vrot.slane %v1635, %v1639
      %v1641 = vlaneseq
      %v1642 = vshrl.u32 %v1641, 7
      %v1643 = vsub.s32 1, %v1642
      %v1644 = vrot.slane %v1635, %v1643
      %v1647 = vmul.f32 %v1631, %v1640
      %v1648 = vmul.f32 %v1627, %v1644
      %v1649 = vmul.f32 %v1632, %v1640
      %v1650 = vmul.f32 %v1628, %v1644
      %v1651 = vmul.f32 %v1633, %v1640
      %v1652 = vmul.f32 %v1629, %v1644
      %v1653 = vmul.f32 %v1634, %v1640
      %v1654 = vmul.f32 %v1630, %v1644
      %1655 = vst [vmem:[#allocation2 + $0x80] sm:$0xff] %v1647
      %1656 = vst [vmem:[#allocation2 + $0x88] sm:$0xff] %v1648
      %1657 = vst [vmem:[#allocation2 + $0x90] sm:$0xff] %v1649
      %1658 = vst [vmem:[#allocation2 + $0x98] sm:$0xff] %v1650
      %1659 = vst [vmem:[#allocation2 + $0xa0] sm:$0xff] %v1651
      %1660 = vst [vmem:[#allocation2 + $0xa8] sm:$0xff] %v1652
      %1661 = vst [vmem:[#allocation2 + $0xb0] sm:$0xff] %v1653
      %1662 = vst [vmem:[#allocation2 + $0xb8] sm:$0xff] %v1654
      %1663 = vrot.lane.b32.xlu0 %v1491, 1
      %v1664 = vpop.permute.xlu0 %1663
      %1665 = vrot.lane.b32.xlu0 %v1493, 1
      %v1666 = vpop.permute.xlu0 %1665
      %1667 = vrot.lane.b32.xlu0 %v1495, 1
      %v1668 = vpop.permute.xlu0 %1667
      %1669 = vrot.lane.b32.xlu0 %v1497, 1
      %v1670 = vpop.permute.xlu0 %1669
      %1671 = vrot.lane.b32.xlu0 %v1492, 1
      %v1672 = vpop.permute.xlu0 %1671
      %1673 = vrot.lane.b32.xlu0 %v1494, 1
      %v1674 = vpop.permute.xlu0 %1673
      %1675 = vrot.lane.b32.xlu0 %v1496, 1
      %v1676 = vpop.permute.xlu0 %1675
      %1677 = vrot.lane.b32.xlu0 %v1498, 1
      %v1678 = vpop.permute.xlu0 %1677
      %v1679 = vsel %vm1004, %v1664, %v1672
      %v1680 = vsel %vm1004, %v1666, %v1674
      %v1681 = vsel %vm1004, %v1668, %v1676
      %v1682 = vsel %vm1004, %v1670, %v1678
      %v1683 = vsel %vm1004, %v1672, %v1664
      %v1684 = vsel %vm1004, %v1674, %v1666
      %v1685 = vsel %vm1004, %v1676, %v1668
      %v1686 = vsel %vm1004, %v1678, %v1670
      %v1687 = vld [vmem:[%s1007] sm:$0x3]
      %v1689 = vlaneseq
      %v1690 = vshrl.u32 %v1689, 7
      %v1691 = vsub.s32 0, %v1690
      %v1692 = vrot.slane %v1687, %v1691
      %v1693 = vlaneseq
      %v1694 = vshrl.u32 %v1693, 7
      %v1695 = vsub.s32 1, %v1694
      %v1696 = vrot.slane %v1687, %v1695
      %v1699 = vmul.f32 %v1683, %v1692
      %v1700 = vmul.f32 %v1679, %v1696
      %v1701 = vmul.f32 %v1684, %v1692
      %v1702 = vmul.f32 %v1680, %v1696
      %v1703 = vmul.f32 %v1685, %v1692
      %v1704 = vmul.f32 %v1681, %v1696
      %v1705 = vmul.f32 %v1686, %v1692
      %v1706 = vmul.f32 %v1682, %v1696
      %1707 = vst [vmem:[#allocation2 + $0xc0] sm:$0xff] %v1699
      %1708 = vst [vmem:[#allocation2 + $0xc8] sm:$0xff] %v1700
      %1709 = vst [vmem:[#allocation2 + $0xd0] sm:$0xff] %v1701
      %1710 = vst [vmem:[#allocation2 + $0xd8] sm:$0xff] %v1702
      %1711 = vst [vmem:[#allocation2 + $0xe0] sm:$0xff] %v1703
      %1712 = vst [vmem:[#allocation2 + $0xe8] sm:$0xff] %v1704
      %1713 = vst [vmem:[#allocation2 + $0xf0] sm:$0xff] %v1705
      %1714 = vst [vmem:[#allocation2 + $0xf8] sm:$0xff] %v1706
      %1715 = vst [vmem:[#allocation2 + $0x100] sm:$0xff] %v1491
      %1716 = vst [vmem:[#allocation2 + $0x108] sm:$0xff] %v1492
      %1717 = vst [vmem:[#allocation2 + $0x110] sm:$0xff] %v1493
      %1718 = vst [vmem:[#allocation2 + $0x118] sm:$0xff] %v1494
      %1719 = vst [vmem:[#allocation2 + $0x120] sm:$0xff] %v1495
      %1720 = vst [vmem:[#allocation2 + $0x128] sm:$0xff] %v1496
      %1721 = vst [vmem:[#allocation2 + $0x130] sm:$0xff] %v1497
      %1722 = vst [vmem:[#allocation2 + $0x138] sm:$0xff] %v1498
      %1723 = vrot.lane.b32.xlu0 %v1491, 127
      %v1724 = vpop.permute.xlu0 %1723
      %1725 = vrot.lane.b32.xlu0 %v1493, 127
      %v1726 = vpop.permute.xlu0 %1725
      %1727 = vrot.lane.b32.xlu0 %v1495, 127
      %v1728 = vpop.permute.xlu0 %1727
      %1729 = vrot.lane.b32.xlu0 %v1497, 127
      %v1730 = vpop.permute.xlu0 %1729
      %1731 = vrot.lane.b32.xlu0 %v1492, 127
      %v1732 = vpop.permute.xlu0 %1731
      %1733 = vrot.lane.b32.xlu0 %v1494, 127
      %v1734 = vpop.permute.xlu0 %1733
      %1735 = vrot.lane.b32.xlu0 %v1496, 127
      %v1736 = vpop.permute.xlu0 %1735
      %1737 = vrot.lane.b32.xlu0 %v1498, 127
      %v1738 = vpop.permute.xlu0 %1737
      %v1739 = vsel %vm1052, %v1724, %v1732
      %v1740 = vsel %vm1052, %v1726, %v1734
      %v1741 = vsel %vm1052, %v1728, %v1736
      %v1742 = vsel %vm1052, %v1730, %v1738
      %v1743 = vsel %vm1052, %v1732, %v1724
      %v1744 = vsel %vm1052, %v1734, %v1726
      %v1745 = vsel %vm1052, %v1736, %v1728
      %v1746 = vsel %vm1052, %v1738, %v1730
      %v1747 = vld [vmem:[%s1055] sm:$0x3]
      %v1749 = vlaneseq
      %v1750 = vshrl.u32 %v1749, 7
      %v1751 = vsub.s32 0, %v1750
      %v1752 = vrot.slane %v1747, %v1751
      %v1753 = vlaneseq
      %v1754 = vshrl.u32 %v1753, 7
      %v1755 = vsub.s32 1, %v1754
      %v1756 = vrot.slane %v1747, %v1755
      %v1759 = vmul.f32 %v1739, %v1752
      %v1760 = vmul.f32 %v1743, %v1756
      %v1761 = vmul.f32 %v1740, %v1752
      %v1762 = vmul.f32 %v1744, %v1756
      %v1763 = vmul.f32 %v1741, %v1752
      %v1764 = vmul.f32 %v1745, %v1756
      %v1765 = vmul.f32 %v1742, %v1752
      %v1766 = vmul.f32 %v1746, %v1756
      %1767 = vst [vmem:[#allocation2 + $0x140] sm:$0xff] %v1759
      %1768 = vst [vmem:[#allocation2 + $0x148] sm:$0xff] %v1760
      %1769 = vst [vmem:[#allocation2 + $0x150] sm:$0xff] %v1761
      %1770 = vst [vmem:[#allocation2 + $0x158] sm:$0xff] %v1762
      %1771 = vst [vmem:[#allocation2 + $0x160] sm:$0xff] %v1763
      %1772 = vst [vmem:[#allocation2 + $0x168] sm:$0xff] %v1764
      %1773 = vst [vmem:[#allocation2 + $0x170] sm:$0xff] %v1765
      %1774 = vst [vmem:[#allocation2 + $0x178] sm:$0xff] %v1766
      %1775 = vrot.lane.b32.xlu0 %v1491, 113
      %v1776 = vpop.permute.xlu0 %1775
      %1777 = vrot.lane.b32.xlu0 %v1493, 113
      %v1778 = vpop.permute.xlu0 %1777
      %1779 = vrot.lane.b32.xlu0 %v1495, 113
      %v1780 = vpop.permute.xlu0 %1779
      %1781 = vrot.lane.b32.xlu0 %v1497, 113
      %v1782 = vpop.permute.xlu0 %1781
      %1783 = vrot.lane.b32.xlu0 %v1492, 113
      %v1784 = vpop.permute.xlu0 %1783
      %1785 = vrot.lane.b32.xlu0 %v1494, 113
      %v1786 = vpop.permute.xlu0 %1785
      %1787 = vrot.lane.b32.xlu0 %v1496, 113
      %v1788 = vpop.permute.xlu0 %1787
      %1789 = vrot.lane.b32.xlu0 %v1498, 113
      %v1790 = vpop.permute.xlu0 %1789
      %v1791 = vsel %vm1088, %v1776, %v1784
      %v1792 = vsel %vm1088, %v1778, %v1786
      %v1793 = vsel %vm1088, %v1780, %v1788
      %v1794 = vsel %vm1088, %v1782, %v1790
      %v1795 = vsel %vm1088, %v1784, %v1776
      %v1796 = vsel %vm1088, %v1786, %v1778
      %v1797 = vsel %vm1088, %v1788, %v1780
      %v1798 = vsel %vm1088, %v1790, %v1782
      %v1799 = vld [vmem:[%s1091] sm:$0x3]
      %v1801 = vlaneseq
      %v1802 = vshrl.u32 %v1801, 7
      %v1803 = vsub.s32 0, %v1802
      %v1804 = vrot.slane %v1799, %v1803
      %v1805 = vlaneseq
      %v1806 = vshrl.u32 %v1805, 7
      %v1807 = vsub.s32 1, %v1806
      %v1808 = vrot.slane %v1799, %v1807
      %v1811 = vmul.f32 %v1791, %v1804
      %v1812 = vmul.f32 %v1795, %v1808
      %v1813 = vmul.f32 %v1792, %v1804
      %v1814 = vmul.f32 %v1796, %v1808
      %v1815 = vmul.f32 %v1793, %v1804
      %v1816 = vmul.f32 %v1797, %v1808
      %v1817 = vmul.f32 %v1794, %v1804
      %v1818 = vmul.f32 %v1798, %v1808
      %1819 = vst [vmem:[#allocation2 + $0x180] sm:$0xff] %v1811
      %1820 = vst [vmem:[#allocation2 + $0x188] sm:$0xff] %v1812
      %1821 = vst [vmem:[#allocation2 + $0x190] sm:$0xff] %v1813
      %1822 = vst [vmem:[#allocation2 + $0x198] sm:$0xff] %v1814
      %1823 = vst [vmem:[#allocation2 + $0x1a0] sm:$0xff] %v1815
      %1824 = vst [vmem:[#allocation2 + $0x1a8] sm:$0xff] %v1816
      %1825 = vst [vmem:[#allocation2 + $0x1b0] sm:$0xff] %v1817
      %1826 = vst [vmem:[#allocation2 + $0x1b8] sm:$0xff] %v1818
      %1827 = vrot.lane.b32.xlu0 %v1491, 112
      %v1828 = vpop.permute.xlu0 %1827
      %1829 = vrot.lane.b32.xlu0 %v1493, 112
      %v1830 = vpop.permute.xlu0 %1829
      %1831 = vrot.lane.b32.xlu0 %v1495, 112
      %v1832 = vpop.permute.xlu0 %1831
      %1833 = vrot.lane.b32.xlu0 %v1497, 112
      %v1834 = vpop.permute.xlu0 %1833
      %1835 = vrot.lane.b32.xlu0 %v1492, 112
      %v1836 = vpop.permute.xlu0 %1835
      %1837 = vrot.lane.b32.xlu0 %v1494, 112
      %v1838 = vpop.permute.xlu0 %1837
      %1839 = vrot.lane.b32.xlu0 %v1496, 112
      %v1840 = vpop.permute.xlu0 %1839
      %1841 = vrot.lane.b32.xlu0 %v1498, 112
      %v1842 = vpop.permute.xlu0 %1841
      %v1843 = vsel %vm1124, %v1828, %v1836
      %v1844 = vsel %vm1124, %v1830, %v1838
      %v1845 = vsel %vm1124, %v1832, %v1840
      %v1846 = vsel %vm1124, %v1834, %v1842
      %v1847 = vsel %vm1124, %v1836, %v1828
      %v1848 = vsel %vm1124, %v1838, %v1830
      %v1849 = vsel %vm1124, %v1840, %v1832
      %v1850 = vsel %vm1124, %v1842, %v1834
      %v1851 = vld [vmem:[%s1127] sm:$0x3]
      %v1853 = vlaneseq
      %v1854 = vshrl.u32 %v1853, 7
      %v1855 = vsub.s32 0, %v1854
      %v1856 = vrot.slane %v1851, %v1855
      %v1857 = vlaneseq
      %v1858 = vshrl.u32 %v1857, 7
      %v1859 = vsub.s32 1, %v1858
      %v1860 = vrot.slane %v1851, %v1859
      %v1863 = vmul.f32 %v1843, %v1856
      %v1864 = vmul.f32 %v1847, %v1860
      %v1865 = vmul.f32 %v1844, %v1856
      %v1866 = vmul.f32 %v1848, %v1860
      %v1867 = vmul.f32 %v1845, %v1856
      %v1868 = vmul.f32 %v1849, %v1860
      %v1869 = vmul.f32 %v1846, %v1856
      %v1870 = vmul.f32 %v1850, %v1860
      %1871 = vst [vmem:[#allocation2 + $0x1c0] sm:$0xff] %v1863
      %1872 = vst [vmem:[#allocation2 + $0x1c8] sm:$0xff] %v1864
      %1873 = vst [vmem:[#allocation2 + $0x1d0] sm:$0xff] %v1865
      %1874 = vst [vmem:[#allocation2 + $0x1d8] sm:$0xff] %v1866
      %1875 = vst [vmem:[#allocation2 + $0x1e0] sm:$0xff] %v1867
      %1876 = vst [vmem:[#allocation2 + $0x1e8] sm:$0xff] %v1868
      %1877 = vst [vmem:[#allocation2 + $0x1f0] sm:$0xff] %v1869
      %1878 = vst [vmem:[#allocation2 + $0x1f8] sm:$0xff] %v1870
      %1879 = vrot.lane.b32.xlu0 %v1491, 111
      %v1880 = vpop.permute.xlu0 %1879
      %1881 = vrot.lane.b32.xlu0 %v1493, 111
      %v1882 = vpop.permute.xlu0 %1881
      %1883 = vrot.lane.b32.xlu0 %v1495, 111
      %v1884 = vpop.permute.xlu0 %1883
      %1885 = vrot.lane.b32.xlu0 %v1497, 111
      %v1886 = vpop.permute.xlu0 %1885
      %1887 = vrot.lane.b32.xlu0 %v1492, 111
      %v1888 = vpop.permute.xlu0 %1887
      %1889 = vrot.lane.b32.xlu0 %v1494, 111
      %v1890 = vpop.permute.xlu0 %1889
      %1891 = vrot.lane.b32.xlu0 %v1496, 111
      %v1892 = vpop.permute.xlu0 %1891
      %1893 = vrot.lane.b32.xlu0 %v1498, 111
      %v1894 = vpop.permute.xlu0 %1893
      %v1895 = vsel %vm1160, %v1880, %v1888
      %v1896 = vsel %vm1160, %v1882, %v1890
      %v1897 = vsel %vm1160, %v1884, %v1892
      %v1898 = vsel %vm1160, %v1886, %v1894
      %v1899 = vsel %vm1160, %v1888, %v1880
      %v1900 = vsel %vm1160, %v1890, %v1882
      %v1901 = vsel %vm1160, %v1892, %v1884
      %v1902 = vsel %vm1160, %v1894, %v1886
      %v1903 = vld [vmem:[%s1163] sm:$0x3]
      %v1905 = vlaneseq
      %v1906 = vshrl.u32 %v1905, 7
      %v1907 = vsub.s32 0, %v1906
      %v1908 = vrot.slane %v1903, %v1907
      %v1909 = vlaneseq
      %v1910 = vshrl.u32 %v1909, 7
      %v1911 = vsub.s32 1, %v1910
      %v1912 = vrot.slane %v1903, %v1911
      %v1915 = vmul.f32 %v1895, %v1908
      %v1916 = vmul.f32 %v1899, %v1912
      %v1917 = vmul.f32 %v1896, %v1908
      %v1918 = vmul.f32 %v1900, %v1912
      %v1919 = vmul.f32 %v1897, %v1908
      %v1920 = vmul.f32 %v1901, %v1912
      %v1921 = vmul.f32 %v1898, %v1908
      %v1922 = vmul.f32 %v1902, %v1912
      %1923 = vst [vmem:[#allocation2 + $0x200] sm:$0xff] %v1915
      %1924 = vst [vmem:[#allocation2 + $0x208] sm:$0xff] %v1916
      %1925 = vst [vmem:[#allocation2 + $0x210] sm:$0xff] %v1917
      %1926 = vst [vmem:[#allocation2 + $0x218] sm:$0xff] %v1918
      %1927 = vst [vmem:[#allocation2 + $0x220] sm:$0xff] %v1919
      %1928 = vst [vmem:[#allocation2 + $0x228] sm:$0xff] %v1920
      %1929 = vst [vmem:[#allocation2 + $0x230] sm:$0xff] %v1921
      %1930 = vst [vmem:[#allocation2 + $0x238] sm:$0xff] %v1922
      %v1931 = vld [vmem:[#allocation2] sm:$0xff]
      %v1932 = vld [vmem:[#allocation2 + $0x8] sm:$0xff]
      %v1933 = vld [vmem:[#allocation2 + $0x10] sm:$0xff]
      %v1934 = vld [vmem:[#allocation2 + $0x18] sm:$0xff]
      %v1935 = vld [vmem:[#allocation2 + $0x20] sm:$0xff]
      %v1936 = vld [vmem:[#allocation2 + $0x28] sm:$0xff]
      %v1937 = vld [vmem:[#allocation2 + $0x30] sm:$0xff]
      %v1938 = vld [vmem:[#allocation2 + $0x38] sm:$0xff]
      %v1939 = vld [vmem:[#allocation2 + $0x40] sm:$0xff]
      %v1940 = vld [vmem:[#allocation2 + $0x48] sm:$0xff]
      %v1941 = vld [vmem:[#allocation2 + $0x50] sm:$0xff]
      %v1942 = vld [vmem:[#allocation2 + $0x58] sm:$0xff]
      %v1943 = vld [vmem:[#allocation2 + $0x60] sm:$0xff]
      %v1944 = vld [vmem:[#allocation2 + $0x68] sm:$0xff]
      %v1945 = vld [vmem:[#allocation2 + $0x70] sm:$0xff]
      %v1946 = vld [vmem:[#allocation2 + $0x78] sm:$0xff]
      %v1947 = vld [vmem:[#allocation2 + $0x80] sm:$0xff]
      %v1948 = vld [vmem:[#allocation2 + $0x88] sm:$0xff]
      %v1949 = vld [vmem:[#allocation2 + $0x90] sm:$0xff]
      %v1950 = vld [vmem:[#allocation2 + $0x98] sm:$0xff]
      %v1951 = vld [vmem:[#allocation2 + $0xa0] sm:$0xff]
      %v1952 = vld [vmem:[#allocation2 + $0xa8] sm:$0xff]
      %v1953 = vld [vmem:[#allocation2 + $0xb0] sm:$0xff]
      %v1954 = vld [vmem:[#allocation2 + $0xb8] sm:$0xff]
      %v1955 = vld [vmem:[#allocation2 + $0xc0] sm:$0xff]
      %v1956 = vld [vmem:[#allocation2 + $0xc8] sm:$0xff]
      %v1957 = vld [vmem:[#allocation2 + $0xd0] sm:$0xff]
      %v1958 = vld [vmem:[#allocation2 + $0xd8] sm:$0xff]
      %v1959 = vld [vmem:[#allocation2 + $0xe0] sm:$0xff]
      %v1960 = vld [vmem:[#allocation2 + $0xe8] sm:$0xff]
      %v1961 = vld [vmem:[#allocation2 + $0xf0] sm:$0xff]
      %v1962 = vld [vmem:[#allocation2 + $0xf8] sm:$0xff]
      %v1963 = vld [vmem:[#allocation2 + $0x100] sm:$0xff]
      %v1964 = vld [vmem:[#allocation2 + $0x108] sm:$0xff]
      %v1965 = vld [vmem:[#allocation2 + $0x110] sm:$0xff]
      %v1966 = vld [vmem:[#allocation2 + $0x118] sm:$0xff]
      %v1967 = vld [vmem:[#allocation2 + $0x120] sm:$0xff]
      %v1968 = vld [vmem:[#allocation2 + $0x128] sm:$0xff]
      %v1969 = vld [vmem:[#allocation2 + $0x130] sm:$0xff]
      %v1970 = vld [vmem:[#allocation2 + $0x138] sm:$0xff]
      %v1971 = vld [vmem:[#allocation2 + $0x140] sm:$0xff]
      %v1972 = vld [vmem:[#allocation2 + $0x148] sm:$0xff]
      %v1973 = vld [vmem:[#allocation2 + $0x150] sm:$0xff]
      %v1974 = vld [vmem:[#allocation2 + $0x158] sm:$0xff]
      %v1975 = vld [vmem:[#allocation2 + $0x160] sm:$0xff]
      %v1976 = vld [vmem:[#allocation2 + $0x168] sm:$0xff]
      %v1977 = vld [vmem:[#allocation2 + $0x170] sm:$0xff]
      %v1978 = vld [vmem:[#allocation2 + $0x178] sm:$0xff]
      %v1979 = vld [vmem:[#allocation2 + $0x180] sm:$0xff]
      %v1980 = vld [vmem:[#allocation2 + $0x188] sm:$0xff]
      %v1981 = vld [vmem:[#allocation2 + $0x190] sm:$0xff]
      %v1982 = vld [vmem:[#allocation2 + $0x198] sm:$0xff]
      %v1983 = vld [vmem:[#allocation2 + $0x1a0] sm:$0xff]
      %v1984 = vld [vmem:[#allocation2 + $0x1a8] sm:$0xff]
      %v1985 = vld [vmem:[#allocation2 + $0x1b0] sm:$0xff]
      %v1986 = vld [vmem:[#allocation2 + $0x1b8] sm:$0xff]
      %v1987 = vld [vmem:[#allocation2 + $0x1c0] sm:$0xff]
      %v1988 = vld [vmem:[#allocation2 + $0x1c8] sm:$0xff]
      %v1989 = vld [vmem:[#allocation2 + $0x1d0] sm:$0xff]
      %v1990 = vld [vmem:[#allocation2 + $0x1d8] sm:$0xff]
      %v1991 = vld [vmem:[#allocation2 + $0x1e0] sm:$0xff]
      %v1992 = vld [vmem:[#allocation2 + $0x1e8] sm:$0xff]
      %v1993 = vld [vmem:[#allocation2 + $0x1f0] sm:$0xff]
      %v1994 = vld [vmem:[#allocation2 + $0x1f8] sm:$0xff]
      %v1995 = vld [vmem:[#allocation2 + $0x200] sm:$0xff]
      %v1996 = vld [vmem:[#allocation2 + $0x208] sm:$0xff]
      %v1997 = vld [vmem:[#allocation2 + $0x210] sm:$0xff]
      %v1998 = vld [vmem:[#allocation2 + $0x218] sm:$0xff]
      %v1999 = vld [vmem:[#allocation2 + $0x220] sm:$0xff]
      %v2000 = vld [vmem:[#allocation2 + $0x228] sm:$0xff]
      %v2001 = vld [vmem:[#allocation2 + $0x230] sm:$0xff]
      %v2002 = vld [vmem:[#allocation2 + $0x238] sm:$0xff]
      %v2003 = vpack.c.bf16 %v1933, %v1931
      %v2004 = vpack.c.bf16 %v1934, %v1932
      %v2005 = vpack.c.bf16 %v1937, %v1935
      %v2006 = vpack.c.bf16 %v1938, %v1936
      %v2007 = vpack.c.bf16 %v1941, %v1939
      %v2008 = vpack.c.bf16 %v1942, %v1940
      %v2009 = vpack.c.bf16 %v1945, %v1943
      %v2010 = vpack.c.bf16 %v1946, %v1944
      %v2011 = vpack.c.bf16 %v1949, %v1947
      %v2012 = vpack.c.bf16 %v1950, %v1948
      %v2013 = vpack.c.bf16 %v1953, %v1951
      %v2014 = vpack.c.bf16 %v1954, %v1952
      %v2015 = vpack.c.bf16 %v1957, %v1955
      %v2016 = vpack.c.bf16 %v1958, %v1956
      %v2017 = vpack.c.bf16 %v1961, %v1959
      %v2018 = vpack.c.bf16 %v1962, %v1960
      %v2019 = vpack.c.bf16 %v1965, %v1963
      %v2020 = vpack.c.bf16 %v1966, %v1964
      %v2021 = vpack.c.bf16 %v1969, %v1967
      %v2022 = vpack.c.bf16 %v1970, %v1968
      %v2023 = vpack.c.bf16 %v1973, %v1971
      %v2024 = vpack.c.bf16 %v1974, %v1972
      %v2025 = vpack.c.bf16 %v1977, %v1975
      %v2026 = vpack.c.bf16 %v1978, %v1976
      %v2027 = vpack.c.bf16 %v1981, %v1979
      %v2028 = vpack.c.bf16 %v1982, %v1980
      %v2029 = vpack.c.bf16 %v1985, %v1983
      %v2030 = vpack.c.bf16 %v1986, %v1984
      %v2031 = vpack.c.bf16 %v1989, %v1987
      %v2032 = vpack.c.bf16 %v1990, %v1988
      %v2033 = vpack.c.bf16 %v1993, %v1991
      %v2034 = vpack.c.bf16 %v1994, %v1992
      %v2035 = vpack.c.bf16 %v1997, %v1995
      %v2036 = vpack.c.bf16 %v1998, %v1996
      %v2037 = vpack.c.bf16 %v2001, %v1999
      %v2038 = vpack.c.bf16 %v2002, %v2000
      %v2047 = vunpack.c.l.b16 %v1499
      %v2048 = vunpack.c.h.b16 %v1499
      %v2049 = vunpack.c.l.b16 %v1500
      %v2050 = vunpack.c.l.b16 %v1501
      %v2051 = vunpack.c.h.b16 %v1501
      %v2052 = vunpack.c.l.b16 %v1502
      %v2053 = vunpack.c.l.b16 %v1503
      %v2054 = vunpack.c.h.b16 %v1503
      %v2055 = vunpack.c.l.b16 %v1504
      %v2056 = vunpack.c.l.b16 %v1505
      %v2057 = vunpack.c.h.b16 %v1505
      %v2058 = vunpack.c.l.b16 %v1506
      %v2059 = vpack.c.b16 %v2050, %v2047
      %v2060 = vpack.c.b16 %v2051, %v2048
      %v2061 = vpack.c.b16 %v2052, %v2049
      %v2062 = vpack.c.b16 %v2056, %v2053
      %v2063 = vpack.c.b16 %v2057, %v2054
      %v2064 = vpack.c.b16 %v2058, %v2055
      %v2070 = vsel %vm1367, %v2061, 0
      %v2073 = vsel %vm1367, %v2064, 0
      %2075 = vmatprep.subr.bf16.mxu0 %v2004
      %2076 = vmatpush1.bf16.msra.mxu0 %v2003
      %2077 = vmatprep.subr.bf16.mxu0 %v2006
      %2078 = vmatpush1.bf16.msra.mxu0 %v2005
      %2079 = vmatprep.subr.bf16.mxu0 %v2008
      %2080 = vmatpush1.bf16.msra.mxu0 %v2007
      %2081 = vmatprep.subr.bf16.mxu0 %v2010
      %2082 = vmatpush1.bf16.msra.mxu0 %v2009
      %2083 = vmatprep.subr.bf16.mxu0 %v2012
      %2084 = vmatpush1.bf16.msra.mxu0 %v2011
      %2085 = vmatprep.subr.bf16.mxu0 %v2014
      %2086 = vmatpush1.bf16.msra.mxu0 %v2013
      %2087 = vmatprep.subr.bf16.mxu0 %v2016
      %2088 = vmatpush1.bf16.msra.mxu0 %v2015
      %2089 = vmatprep.subr.bf16.mxu0 %v2018
      %2090 = vmatpush1.bf16.msra.mxu0 %v2017
      %2091 = vmatprep.subr.bf16.mxu0 %v2020
      %2092 = vmatpush1.bf16.msra.mxu0 %v2019
      %2093 = vmatprep.subr.bf16.mxu0 %v2022
      %2094 = vmatpush1.bf16.msra.mxu0 %v2021
      %2095 = vmatprep.subr.bf16.mxu0 %v2024
      %2096 = vmatpush1.bf16.msra.mxu0 %v2023
      %2097 = vmatprep.subr.bf16.mxu0 %v2026
      %2098 = vmatpush1.bf16.msra.mxu0 %v2025
      %2099 = vmatprep.subr.bf16.mxu0 %v2028
      %2100 = vmatpush1.bf16.msra.mxu0 %v2027
      %2101 = vmatprep.subr.bf16.mxu0 %v2030
      %2102 = vmatpush1.bf16.msra.mxu0 %v2029
      %2103 = vmatprep.subr.bf16.mxu0 %v2032
      %2104 = vmatpush1.bf16.msra.mxu0 %v2031
      %2105 = vmatprep.subr.bf16.mxu0 %v2034
      %2106 = vmatpush1.bf16.msra.mxu0 %v2033
      %2107 = vmatprep.mubr.bf16.mxu0 %v2060
      %2108 = vmatmul.mubr.bf16.gmra.mrb[0].mxu0 %v2059
      %v2109 = vpop.f32.mrb[0].mxu0
      %v2110 = vadd.f32 0.0, %v2109
      %v2111 = vpop.f32.mrb[0].mxu0
      %v2112 = vadd.f32 0.0, %v2111
      %v2113 = vpop.f32.mrb[0].mxu0
      %v2114 = vadd.f32 0.0, %v2113
      %v2115 = vpop.f32.mrb[0].mxu0
      %v2116 = vadd.f32 0.0, %v2115
      %2117 = vmatprep.mubr.bf16.mxu0 %v2063
      %2118 = vmatmul.mubr.bf16.gmra.mrb[0].mxu0 %v2062
      %v2119 = vpop.f32.mrb[0].mxu0
      %v2120 = vadd.f32 0.0, %v2119
      %v2121 = vpop.f32.mrb[0].mxu0
      %v2122 = vadd.f32 0.0, %v2121
      %v2123 = vpop.f32.mrb[0].mxu0
      %v2124 = vadd.f32 0.0, %v2123
      %v2125 = vpop.f32.mrb[0].mxu0
      %v2126 = vadd.f32 0.0, %v2125
      %2127 = vdwg.mxu0
      %2128 = vmatprep.subr.bf16.mxu0 %v2036
      %2129 = vmatpush1.bf16.msra.mxu0 %v2035
      %2130 = vmatprep.subr.bf16.mxu0 %v2038
      %2131 = vmatpush1.bf16.msra.mxu0 %v2037
      %2132 = vmatprep.subr.bf16.mxu0 0
      %2133 = vmatpush1.bf16.msra.mxu0 0
      %2134 = vmatprep.subr.bf16.mxu0 0
      %2135 = vmatpush1.bf16.msra.mxu0 0
      %2136 = vmatprep.subr.bf16.mxu0 0
      %2137 = vmatpush1.bf16.msra.mxu0 0
      %2138 = vmatprep.subr.bf16.mxu0 0
      %2139 = vmatpush1.bf16.msra.mxu0 0
      %2140 = vmatprep.subr.bf16.mxu0 0
      %2141 = vmatpush1.bf16.msra.mxu0 0
      %2142 = vmatprep.subr.bf16.mxu0 0
      %2143 = vmatpush1.bf16.msra.mxu0 0
      %2144 = vmatprep.subr.bf16.mxu0 0
      %2145 = vmatpush1.bf16.msra.mxu0 0
      %2146 = vmatprep.subr.bf16.mxu0 0
      %2147 = vmatpush1.bf16.msra.mxu0 0
      %2148 = vmatprep.subr.bf16.mxu0 0
      %2149 = vmatpush1.bf16.msra.mxu0 0
      %2150 = vmatprep.subr.bf16.mxu0 0
      %2151 = vmatpush1.bf16.msra.mxu0 0
      %2152 = vmatprep.subr.bf16.mxu0 0
      %2153 = vmatpush1.bf16.msra.mxu0 0
      %2154 = vmatprep.subr.bf16.mxu0 0
      %2155 = vmatpush1.bf16.msra.mxu0 0
      %2156 = vmatprep.subr.bf16.mxu0 0
      %2157 = vmatpush1.bf16.msra.mxu0 0
      %2158 = vmatprep.subr.bf16.mxu0 0
      %2159 = vmatpush1.bf16.msra.mxu0 0
      %2160 = vmatprep.mubr.bf16.mxu0 0
      %2161 = vmatmul.mubr.bf16.gmra.mrb[0].mxu0 %v2070
      %v2162 = vpop.f32.mrb[0].mxu0
      %v2163 = vadd.f32 %v2110, %v2162
      %v2164 = vpop.f32.mrb[0].mxu0
      %v2165 = vadd.f32 %v2112, %v2164
      %v2166 = vpop.f32.mrb[0].mxu0
      %v2167 = vadd.f32 %v2114, %v2166
      %v2168 = vpop.f32.mrb[0].mxu0
      %v2169 = vadd.f32 %v2116, %v2168
      %2170 = vmatprep.mubr.bf16.mxu0 0
      %2171 = vmatmul.mubr.bf16.gmra.mrb[0].mxu0 %v2073
      %v2172 = vpop.f32.mrb[0].mxu0
      %v2173 = vadd.f32 %v2120, %v2172
      %v2174 = vpop.f32.mrb[0].mxu0
      %v2175 = vadd.f32 %v2122, %v2174
      %v2176 = vpop.f32.mrb[0].mxu0
      %v2177 = vadd.f32 %v2124, %v2176
      %v2178 = vpop.f32.mrb[0].mxu0
      %v2179 = vadd.f32 %v2126, %v2178
      %2180 = vdwg.mxu0
      %v2181 = vld [vmem:[%s13] sm:$0xff]
      %v2182 = vld [vmem:[%s13 + $0x8] sm:$0xff]
      %v2183 = vld [vmem:[%s13 + $0x10] sm:$0xff]
      %v2184 = vld [vmem:[%s13 + $0x18] sm:$0xff]
      %2186 = vset.pattern.permute.xlu0 0
      %2187 = vperm.xlu0 %2186, %v2181
      %v2188 = vpop.permute.xlu0 %2187
      %2191 = vset.pattern.permute.xlu0 0
      %2192 = vperm.xlu0 %2191, %v2182
      %v2193 = vpop.permute.xlu0 %2192
      %2196 = vset.pattern.permute.xlu0 0
      %2197 = vperm.xlu0 %2196, %v2183
      %v2198 = vpop.permute.xlu0 %2197
      %2201 = vset.pattern.permute.xlu0 0
      %2202 = vperm.xlu0 %2201, %v2184
      %v2203 = vpop.permute.xlu0 %2202
      %v2205 = vmul.f32 %v2163, %v2188
      %v2206 = vmul.f32 %v2165, %v2188
      %v2207 = vmul.f32 %v2167, %v2193
      %v2208 = vmul.f32 %v2169, %v2193
      %v2209 = vmul.f32 %v2173, %v2198
      %v2210 = vmul.f32 %v2175, %v2198
      %v2211 = vmul.f32 %v2177, %v2203
      %v2212 = vmul.f32 %v2179, %v2203
      %v2213 = vld [vmem:[%s14] sm:$0xff]
      %v2214 = vld [vmem:[%s14 + $0x8] sm:$0xff]
      %v2215 = vld [vmem:[%s14 + $0x10] sm:$0xff]
      %v2216 = vld [vmem:[%s14 + $0x18] sm:$0xff]
      %2218 = vset.pattern.permute.xlu0 0
      %2219 = vperm.xlu0 %2218, %v2213
      %v2220 = vpop.permute.xlu0 %2219
      %2223 = vset.pattern.permute.xlu0 0
      %2224 = vperm.xlu0 %2223, %v2214
      %v2225 = vpop.permute.xlu0 %2224
      %2228 = vset.pattern.permute.xlu0 0
      %2229 = vperm.xlu0 %2228, %v2215
      %v2230 = vpop.permute.xlu0 %2229
      %2233 = vset.pattern.permute.xlu0 0
      %2234 = vperm.xlu0 %2233, %v2216
      %v2235 = vpop.permute.xlu0 %2234
      %v2237 = vadd.f32 %v2205, %v2220
      %v2238 = vadd.f32 %v2206, %v2220
      %v2239 = vadd.f32 %v2207, %v2225
      %v2240 = vadd.f32 %v2208, %v2225
      %v2241 = vadd.f32 %v2209, %v2230
      %v2242 = vadd.f32 %v2210, %v2230
      %v2243 = vadd.f32 %v2211, %v2235
      %v2244 = vadd.f32 %v2212, %v2235
      %v2245 = vmax.f32 %v2237, 0.0
      %v2246 = vmax.f32 %v2238, 0.0
      %v2247 = vmax.f32 %v2239, 0.0
      %v2248 = vmax.f32 %v2240, 0.0
      %v2249 = vmax.f32 %v2241, 0.0
      %v2250 = vmax.f32 %v2242, 0.0
      %v2251 = vmax.f32 %v2243, 0.0
      %v2252 = vmax.f32 %v2244, 0.0
      %v2253 = vld [vmem:[%s15] sm:$0xff]
      %v2254 = vld [vmem:[%s15 + $0x8] sm:$0xf]
      %v2255 = vld [vmem:[%s15 + $0xc] sm:$0xff]
      %v2256 = vld [vmem:[%s15 + $0x14] sm:$0xf]
      %v2257 = vld [vmem:[%s15 + $0x18] sm:$0xff]
      %v2258 = vld [vmem:[%s15 + $0x20] sm:$0xf]
      %v2259 = vld [vmem:[%s15 + $0x24] sm:$0xff]
      %v2260 = vld [vmem:[%s15 + $0x2c] sm:$0xf]
      %2261 = vrot.lane.b32.xlu0 %v2245, 17
      %v2262 = vpop.permute.xlu0 %2261
      %2263 = vrot.lane.b32.xlu0 %v2247, 17
      %v2264 = vpop.permute.xlu0 %2263
      %2265 = vrot.lane.b32.xlu0 %v2249, 17
      %v2266 = vpop.permute.xlu0 %2265
      %2267 = vrot.lane.b32.xlu0 %v2251, 17
      %v2268 = vpop.permute.xlu0 %2267
      %2269 = vrot.lane.b32.xlu0 %v2246, 17
      %v2270 = vpop.permute.xlu0 %2269
      %2271 = vrot.lane.b32.xlu0 %v2248, 17
      %v2272 = vpop.permute.xlu0 %2271
      %2273 = vrot.lane.b32.xlu0 %v2250, 17
      %v2274 = vpop.permute.xlu0 %2273
      %2275 = vrot.lane.b32.xlu0 %v2252, 17
      %v2276 = vpop.permute.xlu0 %2275
      %v2277 = vsel %vm897, %v2262, %v2270
      %v2278 = vsel %vm897, %v2264, %v2272
      %v2279 = vsel %vm897, %v2266, %v2274
      %v2280 = vsel %vm897, %v2268, %v2276
      %v2281 = vsel %vm897, %v2270, %v2262
      %v2282 = vsel %vm897, %v2272, %v2264
      %v2283 = vsel %vm897, %v2274, %v2266
      %v2284 = vsel %vm897, %v2276, %v2268
      %v2285 = vld [vmem:[%s2] sm:$0x3]
      %v2287 = vlaneseq
      %v2288 = vshrl.u32 %v2287, 7
      %v2289 = vsub.s32 0, %v2288
      %v2290 = vrot.slane %v2285, %v2289
      %v2291 = vlaneseq
      %v2292 = vshrl.u32 %v2291, 7
      %v2293 = vsub.s32 1, %v2292
      %v2294 = vrot.slane %v2285, %v2293
      %v2297 = vmul.f32 %v2281, %v2290
      %v2298 = vmul.f32 %v2277, %v2294
      %v2299 = vmul.f32 %v2282, %v2290
      %v2300 = vmul.f32 %v2278, %v2294
      %v2301 = vmul.f32 %v2283, %v2290
      %v2302 = vmul.f32 %v2279, %v2294
      %v2303 = vmul.f32 %v2284, %v2290
      %v2304 = vmul.f32 %v2280, %v2294
      %2305 = vst [vmem:[#allocation2] sm:$0xff] %v2297
      %2306 = vst [vmem:[#allocation2 + $0x8] sm:$0xff] %v2298
      %2307 = vst [vmem:[#allocation2 + $0x10] sm:$0xff] %v2299
      %2308 = vst [vmem:[#allocation2 + $0x18] sm:$0xff] %v2300
      %2309 = vst [vmem:[#allocation2 + $0x20] sm:$0xff] %v2301
      %2310 = vst [vmem:[#allocation2 + $0x28] sm:$0xff] %v2302
      %2311 = vst [vmem:[#allocation2 + $0x30] sm:$0xff] %v2303
      %2312 = vst [vmem:[#allocation2 + $0x38] sm:$0xff] %v2304
      %2313 = vrot.lane.b32.xlu0 %v2245, 16
      %v2314 = vpop.permute.xlu0 %2313
      %2315 = vrot.lane.b32.xlu0 %v2247, 16
      %v2316 = vpop.permute.xlu0 %2315
      %2317 = vrot.lane.b32.xlu0 %v2249, 16
      %v2318 = vpop.permute.xlu0 %2317
      %2319 = vrot.lane.b32.xlu0 %v2251, 16
      %v2320 = vpop.permute.xlu0 %2319
      %2321 = vrot.lane.b32.xlu0 %v2246, 16
      %v2322 = vpop.permute.xlu0 %2321
      %2323 = vrot.lane.b32.xlu0 %v2248, 16
      %v2324 = vpop.permute.xlu0 %2323
      %2325 = vrot.lane.b32.xlu0 %v2250, 16
      %v2326 = vpop.permute.xlu0 %2325
      %2327 = vrot.lane.b32.xlu0 %v2252, 16
      %v2328 = vpop.permute.xlu0 %2327
      %v2329 = vsel %vm932, %v2314, %v2322
      %v2330 = vsel %vm932, %v2316, %v2324
      %v2331 = vsel %vm932, %v2318, %v2326
      %v2332 = vsel %vm932, %v2320, %v2328
      %v2333 = vsel %vm932, %v2322, %v2314
      %v2334 = vsel %vm932, %v2324, %v2316
      %v2335 = vsel %vm932, %v2326, %v2318
      %v2336 = vsel %vm932, %v2328, %v2320
      %v2337 = vld [vmem:[%s935] sm:$0x3]
      %v2339 = vlaneseq
      %v2340 = vshrl.u32 %v2339, 7
      %v2341 = vsub.s32 0, %v2340
      %v2342 = vrot.slane %v2337, %v2341
      %v2343 = vlaneseq
      %v2344 = vshrl.u32 %v2343, 7
      %v2345 = vsub.s32 1, %v2344
      %v2346 = vrot.slane %v2337, %v2345
      %v2349 = vmul.f32 %v2333, %v2342
      %v2350 = vmul.f32 %v2329, %v2346
      %v2351 = vmul.f32 %v2334, %v2342
      %v2352 = vmul.f32 %v2330, %v2346
      %v2353 = vmul.f32 %v2335, %v2342
      %v2354 = vmul.f32 %v2331, %v2346
      %v2355 = vmul.f32 %v2336, %v2342
      %v2356 = vmul.f32 %v2332, %v2346
      %2357 = vst [vmem:[#allocation2 + $0x40] sm:$0xff] %v2349
      %2358 = vst [vmem:[#allocation2 + $0x48] sm:$0xff] %v2350
      %2359 = vst [vmem:[#allocation2 + $0x50] sm:$0xff] %v2351
      %2360 = vst [vmem:[#allocation2 + $0x58] sm:$0xff] %v2352
      %2361 = vst [vmem:[#allocation2 + $0x60] sm:$0xff] %v2353
      %2362 = vst [vmem:[#allocation2 + $0x68] sm:$0xff] %v2354
      %2363 = vst [vmem:[#allocation2 + $0x70] sm:$0xff] %v2355
      %2364 = vst [vmem:[#allocation2 + $0x78] sm:$0xff] %v2356
      %2365 = vrot.lane.b32.xlu0 %v2245, 15
      %v2366 = vpop.permute.xlu0 %2365
      %2367 = vrot.lane.b32.xlu0 %v2247, 15
      %v2368 = vpop.permute.xlu0 %2367
      %2369 = vrot.lane.b32.xlu0 %v2249, 15
      %v2370 = vpop.permute.xlu0 %2369
      %2371 = vrot.lane.b32.xlu0 %v2251, 15
      %v2372 = vpop.permute.xlu0 %2371
      %2373 = vrot.lane.b32.xlu0 %v2246, 15
      %v2374 = vpop.permute.xlu0 %2373
      %2375 = vrot.lane.b32.xlu0 %v2248, 15
      %v2376 = vpop.permute.xlu0 %2375
      %2377 = vrot.lane.b32.xlu0 %v2250, 15
      %v2378 = vpop.permute.xlu0 %2377
      %2379 = vrot.lane.b32.xlu0 %v2252, 15
      %v2380 = vpop.permute.xlu0 %2379
      %v2381 = vsel %vm968, %v2366, %v2374
      %v2382 = vsel %vm968, %v2368, %v2376
      %v2383 = vsel %vm968, %v2370, %v2378
      %v2384 = vsel %vm968, %v2372, %v2380
      %v2385 = vsel %vm968, %v2374, %v2366
      %v2386 = vsel %vm968, %v2376, %v2368
      %v2387 = vsel %vm968, %v2378, %v2370
      %v2388 = vsel %vm968, %v2380, %v2372
      %v2389 = vld [vmem:[%s971] sm:$0x3]
      %v2391 = vlaneseq
      %v2392 = vshrl.u32 %v2391, 7
      %v2393 = vsub.s32 0, %v2392
      %v2394 = vrot.slane %v2389, %v2393
      %v2395 = vlaneseq
      %v2396 = vshrl.u32 %v2395, 7
      %v2397 = vsub.s32 1, %v2396
      %v2398 = vrot.slane %v2389, %v2397
      %v2401 = vmul.f32 %v2385, %v2394
      %v2402 = vmul.f32 %v2381, %v2398
      %v2403 = vmul.f32 %v2386, %v2394
      %v2404 = vmul.f32 %v2382, %v2398
      %v2405 = vmul.f32 %v2387, %v2394
      %v2406 = vmul.f32 %v2383, %v2398
      %v2407 = vmul.f32 %v2388, %v2394
      %v2408 = vmul.f32 %v2384, %v2398
      %2409 = vst [vmem:[#allocation2 + $0x80] sm:$0xff] %v2401
      %2410 = vst [vmem:[#allocation2 + $0x88] sm:$0xff] %v2402
      %2411 = vst [vmem:[#allocation2 + $0x90] sm:$0xff] %v2403
      %2412 = vst [vmem:[#allocation2 + $0x98] sm:$0xff] %v2404
      %2413 = vst [vmem:[#allocation2 + $0xa0] sm:$0xff] %v2405
      %2414 = vst [vmem:[#allocation2 + $0xa8] sm:$0xff] %v2406
      %2415 = vst [vmem:[#allocation2 + $0xb0] sm:$0xff] %v2407
      %2416 = vst [vmem:[#allocation2 + $0xb8] sm:$0xff] %v2408
      %2417 = vrot.lane.b32.xlu0 %v2245, 1
      %v2418 = vpop.permute.xlu0 %2417
      %2419 = vrot.lane.b32.xlu0 %v2247, 1
      %v2420 = vpop.permute.xlu0 %2419
      %2421 = vrot.lane.b32.xlu0 %v2249, 1
      %v2422 = vpop.permute.xlu0 %2421
      %2423 = vrot.lane.b32.xlu0 %v2251, 1
      %v2424 = vpop.permute.xlu0 %2423
      %2425 = vrot.lane.b32.xlu0 %v2246, 1
      %v2426 = vpop.permute.xlu0 %2425
      %2427 = vrot.lane.b32.xlu0 %v2248, 1
      %v2428 = vpop.permute.xlu0 %2427
      %2429 = vrot.lane.b32.xlu0 %v2250, 1
      %v2430 = vpop.permute.xlu0 %2429
      %2431 = vrot.lane.b32.xlu0 %v2252, 1
      %v2432 = vpop.permute.xlu0 %2431
      %v2433 = vsel %vm1004, %v2418, %v2426
      %v2434 = vsel %vm1004, %v2420, %v2428
      %v2435 = vsel %vm1004, %v2422, %v2430
      %v2436 = vsel %vm1004, %v2424, %v2432
      %v2437 = vsel %vm1004, %v2426, %v2418
      %v2438 = vsel %vm1004, %v2428, %v2420
      %v2439 = vsel %vm1004, %v2430, %v2422
      %v2440 = vsel %vm1004, %v2432, %v2424
      %v2441 = vld [vmem:[%s1007] sm:$0x3]
      %v2443 = vlaneseq
      %v2444 = vshrl.u32 %v2443, 7
      %v2445 = vsub.s32 0, %v2444
      %v2446 = vrot.slane %v2441, %v2445
      %v2447 = vlaneseq
      %v2448 = vshrl.u32 %v2447, 7
      %v2449 = vsub.s32 1, %v2448
      %v2450 = vrot.slane %v2441, %v2449
      %v2453 = vmul.f32 %v2437, %v2446
      %v2454 = vmul.f32 %v2433, %v2450
      %v2455 = vmul.f32 %v2438, %v2446
      %v2456 = vmul.f32 %v2434, %v2450
      %v2457 = vmul.f32 %v2439, %v2446
      %v2458 = vmul.f32 %v2435, %v2450
      %v2459 = vmul.f32 %v2440, %v2446
      %v2460 = vmul.f32 %v2436, %v2450
      %2461 = vst [vmem:[#allocation2 + $0xc0] sm:$0xff] %v2453
      %2462 = vst [vmem:[#allocation2 + $0xc8] sm:$0xff] %v2454
      %2463 = vst [vmem:[#allocation2 + $0xd0] sm:$0xff] %v2455
      %2464 = vst [vmem:[#allocation2 + $0xd8] sm:$0xff] %v2456
      %2465 = vst [vmem:[#allocation2 + $0xe0] sm:$0xff] %v2457
      %2466 = vst [vmem:[#allocation2 + $0xe8] sm:$0xff] %v2458
      %2467 = vst [vmem:[#allocation2 + $0xf0] sm:$0xff] %v2459
      %2468 = vst [vmem:[#allocation2 + $0xf8] sm:$0xff] %v2460
      %2469 = vst [vmem:[#allocation2 + $0x100] sm:$0xff] %v2245
      %2470 = vst [vmem:[#allocation2 + $0x108] sm:$0xff] %v2246
      %2471 = vst [vmem:[#allocation2 + $0x110] sm:$0xff] %v2247
      %2472 = vst [vmem:[#allocation2 + $0x118] sm:$0xff] %v2248
      %2473 = vst [vmem:[#allocation2 + $0x120] sm:$0xff] %v2249
      %2474 = vst [vmem:[#allocation2 + $0x128] sm:$0xff] %v2250
      %2475 = vst [vmem:[#allocation2 + $0x130] sm:$0xff] %v2251
      %2476 = vst [vmem:[#allocation2 + $0x138] sm:$0xff] %v2252
      %2477 = vrot.lane.b32.xlu0 %v2245, 127
      %v2478 = vpop.permute.xlu0 %2477
      %2479 = vrot.lane.b32.xlu0 %v2247, 127
      %v2480 = vpop.permute.xlu0 %2479
      %2481 = vrot.lane.b32.xlu0 %v2249, 127
      %v2482 = vpop.permute.xlu0 %2481
      %2483 = vrot.lane.b32.xlu0 %v2251, 127
      %v2484 = vpop.permute.xlu0 %2483
      %2485 = vrot.lane.b32.xlu0 %v2246, 127
      %v2486 = vpop.permute.xlu0 %2485
      %2487 = vrot.lane.b32.xlu0 %v2248, 127
      %v2488 = vpop.permute.xlu0 %2487
      %2489 = vrot.lane.b32.xlu0 %v2250, 127
      %v2490 = vpop.permute.xlu0 %2489
      %2491 = vrot.lane.b32.xlu0 %v2252, 127
      %v2492 = vpop.permute.xlu0 %2491
      %v2493 = vsel %vm1052, %v2478, %v2486
      %v2494 = vsel %vm1052, %v2480, %v2488
      %v2495 = vsel %vm1052, %v2482, %v2490
      %v2496 = vsel %vm1052, %v2484, %v2492
      %v2497 = vsel %vm1052, %v2486, %v2478
      %v2498 = vsel %vm1052, %v2488, %v2480
      %v2499 = vsel %vm1052, %v2490, %v2482
      %v2500 = vsel %vm1052, %v2492, %v2484
      %v2501 = vld [vmem:[%s1055] sm:$0x3]
      %v2503 = vlaneseq
      %v2504 = vshrl.u32 %v2503, 7
      %v2505 = vsub.s32 0, %v2504
      %v2506 = vrot.slane %v2501, %v2505
      %v2507 = vlaneseq
      %v2508 = vshrl.u32 %v2507, 7
      %v2509 = vsub.s32 1, %v2508
      %v2510 = vrot.slane %v2501, %v2509
      %v2513 = vmul.f32 %v2493, %v2506
      %v2514 = vmul.f32 %v2497, %v2510
      %v2515 = vmul.f32 %v2494, %v2506
      %v2516 = vmul.f32 %v2498, %v2510
      %v2517 = vmul.f32 %v2495, %v2506
      %v2518 = vmul.f32 %v2499, %v2510
      %v2519 = vmul.f32 %v2496, %v2506
      %v2520 = vmul.f32 %v2500, %v2510
      %2521 = vst [vmem:[#allocation2 + $0x140] sm:$0xff] %v2513
      %2522 = vst [vmem:[#allocation2 + $0x148] sm:$0xff] %v2514
      %2523 = vst [vmem:[#allocation2 + $0x150] sm:$0xff] %v2515
      %2524 = vst [vmem:[#allocation2 + $0x158] sm:$0xff] %v2516
      %2525 = vst [vmem:[#allocation2 + $0x160] sm:$0xff] %v2517
      %2526 = vst [vmem:[#allocation2 + $0x168] sm:$0xff] %v2518
      %2527 = vst [vmem:[#allocation2 + $0x170] sm:$0xff] %v2519
      %2528 = vst [vmem:[#allocation2 + $0x178] sm:$0xff] %v2520
      %2529 = vrot.lane.b32.xlu0 %v2245, 113
      %v2530 = vpop.permute.xlu0 %2529
      %2531 = vrot.lane.b32.xlu0 %v2247, 113
      %v2532 = vpop.permute.xlu0 %2531
      %2533 = vrot.lane.b32.xlu0 %v2249, 113
      %v2534 = vpop.permute.xlu0 %2533
      %2535 = vrot.lane.b32.xlu0 %v2251, 113
      %v2536 = vpop.permute.xlu0 %2535
      %2537 = vrot.lane.b32.xlu0 %v2246, 113
      %v2538 = vpop.permute.xlu0 %2537
      %2539 = vrot.lane.b32.xlu0 %v2248, 113
      %v2540 = vpop.permute.xlu0 %2539
      %2541 = vrot.lane.b32.xlu0 %v2250, 113
      %v2542 = vpop.permute.xlu0 %2541
      %2543 = vrot.lane.b32.xlu0 %v2252, 113
      %v2544 = vpop.permute.xlu0 %2543
      %v2545 = vsel %vm1088, %v2530, %v2538
      %v2546 = vsel %vm1088, %v2532, %v2540
      %v2547 = vsel %vm1088, %v2534, %v2542
      %v2548 = vsel %vm1088, %v2536, %v2544
      %v2549 = vsel %vm1088, %v2538, %v2530
      %v2550 = vsel %vm1088, %v2540, %v2532
      %v2551 = vsel %vm1088, %v2542, %v2534
      %v2552 = vsel %vm1088, %v2544, %v2536
      %v2553 = vld [vmem:[%s1091] sm:$0x3]
      %v2555 = vlaneseq
      %v2556 = vshrl.u32 %v2555, 7
      %v2557 = vsub.s32 0, %v2556
      %v2558 = vrot.slane %v2553, %v2557
      %v2559 = vlaneseq
      %v2560 = vshrl.u32 %v2559, 7
      %v2561 = vsub.s32 1, %v2560
      %v2562 = vrot.slane %v2553, %v2561
      %v2565 = vmul.f32 %v2545, %v2558
      %v2566 = vmul.f32 %v2549, %v2562
      %v2567 = vmul.f32 %v2546, %v2558
      %v2568 = vmul.f32 %v2550, %v2562
      %v2569 = vmul.f32 %v2547, %v2558
      %v2570 = vmul.f32 %v2551, %v2562
      %v2571 = vmul.f32 %v2548, %v2558
      %v2572 = vmul.f32 %v2552, %v2562
      %2573 = vst [vmem:[#allocation2 + $0x180] sm:$0xff] %v2565
      %2574 = vst [vmem:[#allocation2 + $0x188] sm:$0xff] %v2566
      %2575 = vst [vmem:[#allocation2 + $0x190] sm:$0xff] %v2567
      %2576 = vst [vmem:[#allocation2 + $0x198] sm:$0xff] %v2568
      %2577 = vst [vmem:[#allocation2 + $0x1a0] sm:$0xff] %v2569
      %2578 = vst [vmem:[#allocation2 + $0x1a8] sm:$0xff] %v2570
      %2579 = vst [vmem:[#allocation2 + $0x1b0] sm:$0xff] %v2571
      %2580 = vst [vmem:[#allocation2 + $0x1b8] sm:$0xff] %v2572
      %2581 = vrot.lane.b32.xlu0 %v2245, 112
      %v2582 = vpop.permute.xlu0 %2581
      %2583 = vrot.lane.b32.xlu0 %v2247, 112
      %v2584 = vpop.permute.xlu0 %2583
      %2585 = vrot.lane.b32.xlu0 %v2249, 112
      %v2586 = vpop.permute.xlu0 %2585
      %2587 = vrot.lane.b32.xlu0 %v2251, 112
      %v2588 = vpop.permute.xlu0 %2587
      %2589 = vrot.lane.b32.xlu0 %v2246, 112
      %v2590 = vpop.permute.xlu0 %2589
      %2591 = vrot.lane.b32.xlu0 %v2248, 112
      %v2592 = vpop.permute.xlu0 %2591
      %2593 = vrot.lane.b32.xlu0 %v2250, 112
      %v2594 = vpop.permute.xlu0 %2593
      %2595 = vrot.lane.b32.xlu0 %v2252, 112
      %v2596 = vpop.permute.xlu0 %2595
      %v2597 = vsel %vm1124, %v2582, %v2590
      %v2598 = vsel %vm1124, %v2584, %v2592
      %v2599 = vsel %vm1124, %v2586, %v2594
      %v2600 = vsel %vm1124, %v2588, %v2596
      %v2601 = vsel %vm1124, %v2590, %v2582
      %v2602 = vsel %vm1124, %v2592, %v2584
      %v2603 = vsel %vm1124, %v2594, %v2586
      %v2604 = vsel %vm1124, %v2596, %v2588
      %v2605 = vld [vmem:[%s1127] sm:$0x3]
      %v2607 = vlaneseq
      %v2608 = vshrl.u32 %v2607, 7
      %v2609 = vsub.s32 0, %v2608
      %v2610 = vrot.slane %v2605, %v2609
      %v2611 = vlaneseq
      %v2612 = vshrl.u32 %v2611, 7
      %v2613 = vsub.s32 1, %v2612
      %v2614 = vrot.slane %v2605, %v2613
      %v2617 = vmul.f32 %v2597, %v2610
      %v2618 = vmul.f32 %v2601, %v2614
      %v2619 = vmul.f32 %v2598, %v2610
      %v2620 = vmul.f32 %v2602, %v2614
      %v2621 = vmul.f32 %v2599, %v2610
      %v2622 = vmul.f32 %v2603, %v2614
      %v2623 = vmul.f32 %v2600, %v2610
      %v2624 = vmul.f32 %v2604, %v2614
      %2625 = vst [vmem:[#allocation2 + $0x1c0] sm:$0xff] %v2617
      %2626 = vst [vmem:[#allocation2 + $0x1c8] sm:$0xff] %v2618
      %2627 = vst [vmem:[#allocation2 + $0x1d0] sm:$0xff] %v2619
      %2628 = vst [vmem:[#allocation2 + $0x1d8] sm:$0xff] %v2620
      %2629 = vst [vmem:[#allocation2 + $0x1e0] sm:$0xff] %v2621
      %2630 = vst [vmem:[#allocation2 + $0x1e8] sm:$0xff] %v2622
      %2631 = vst [vmem:[#allocation2 + $0x1f0] sm:$0xff] %v2623
      %2632 = vst [vmem:[#allocation2 + $0x1f8] sm:$0xff] %v2624
      %2633 = vrot.lane.b32.xlu0 %v2245, 111
      %v2634 = vpop.permute.xlu0 %2633
      %2635 = vrot.lane.b32.xlu0 %v2247, 111
      %v2636 = vpop.permute.xlu0 %2635
      %2637 = vrot.lane.b32.xlu0 %v2249, 111
      %v2638 = vpop.permute.xlu0 %2637
      %2639 = vrot.lane.b32.xlu0 %v2251, 111
      %v2640 = vpop.permute.xlu0 %2639
      %2641 = vrot.lane.b32.xlu0 %v2246, 111
      %v2642 = vpop.permute.xlu0 %2641
      %2643 = vrot.lane.b32.xlu0 %v2248, 111
      %v2644 = vpop.permute.xlu0 %2643
      %2645 = vrot.lane.b32.xlu0 %v2250, 111
      %v2646 = vpop.permute.xlu0 %2645
      %2647 = vrot.lane.b32.xlu0 %v2252, 111
      %v2648 = vpop.permute.xlu0 %2647
      %v2649 = vsel %vm1160, %v2634, %v2642
      %v2650 = vsel %vm1160, %v2636, %v2644
      %v2651 = vsel %vm1160, %v2638, %v2646
      %v2652 = vsel %vm1160, %v2640, %v2648
      %v2653 = vsel %vm1160, %v2642, %v2634
      %v2654 = vsel %vm1160, %v2644, %v2636
      %v2655 = vsel %vm1160, %v2646, %v2638
      %v2656 = vsel %vm1160, %v2648, %v2640
      %v2657 = vld [vmem:[%s1163] sm:$0x3]
      %v2659 = vlaneseq
      %v2660 = vshrl.u32 %v2659, 7
      %v2661 = vsub.s32 0, %v2660
      %v2662 = vrot.slane %v2657, %v2661
      %v2663 = vlaneseq
      %v2664 = vshrl.u32 %v2663, 7
      %v2665 = vsub.s32 1, %v2664
      %v2666 = vrot.slane %v2657, %v2665
      %v2669 = vmul.f32 %v2649, %v2662
      %v2670 = vmul.f32 %v2653, %v2666
      %v2671 = vmul.f32 %v2650, %v2662
      %v2672 = vmul.f32 %v2654, %v2666
      %v2673 = vmul.f32 %v2651, %v2662
      %v2674 = vmul.f32 %v2655, %v2666
      %v2675 = vmul.f32 %v2652, %v2662
      %v2676 = vmul.f32 %v2656, %v2666
      %2677 = vst [vmem:[#allocation2 + $0x200] sm:$0xff] %v2669
      %2678 = vst [vmem:[#allocation2 + $0x208] sm:$0xff] %v2670
      %2679 = vst [vmem:[#allocation2 + $0x210] sm:$0xff] %v2671
      %2680 = vst [vmem:[#allocation2 + $0x218] sm:$0xff] %v2672
      %2681 = vst [vmem:[#allocation2 + $0x220] sm:$0xff] %v2673
      %2682 = vst [vmem:[#allocation2 + $0x228] sm:$0xff] %v2674
      %2683 = vst [vmem:[#allocation2 + $0x230] sm:$0xff] %v2675
      %2684 = vst [vmem:[#allocation2 + $0x238] sm:$0xff] %v2676
      %v2685 = vld [vmem:[#allocation2] sm:$0xff]
      %v2686 = vld [vmem:[#allocation2 + $0x8] sm:$0xff]
      %v2687 = vld [vmem:[#allocation2 + $0x10] sm:$0xff]
      %v2688 = vld [vmem:[#allocation2 + $0x18] sm:$0xff]
      %v2689 = vld [vmem:[#allocation2 + $0x20] sm:$0xff]
      %v2690 = vld [vmem:[#allocation2 + $0x28] sm:$0xff]
      %v2691 = vld [vmem:[#allocation2 + $0x30] sm:$0xff]
      %v2692 = vld [vmem:[#allocation2 + $0x38] sm:$0xff]
      %v2693 = vld [vmem:[#allocation2 + $0x40] sm:$0xff]
      %v2694 = vld [vmem:[#allocation2 + $0x48] sm:$0xff]
      %v2695 = vld [vmem:[#allocation2 + $0x50] sm:$0xff]
      %v2696 = vld [vmem:[#allocation2 + $0x58] sm:$0xff]
      %v2697 = vld [vmem:[#allocation2 + $0x60] sm:$0xff]
      %v2698 = vld [vmem:[#allocation2 + $0x68] sm:$0xff]
      %v2699 = vld [vmem:[#allocation2 + $0x70] sm:$0xff]
      %v2700 = vld [vmem:[#allocation2 + $0x78] sm:$0xff]
      %v2701 = vld [vmem:[#allocation2 + $0x80] sm:$0xff]
      %v2702 = vld [vmem:[#allocation2 + $0x88] sm:$0xff]
      %v2703 = vld [vmem:[#allocation2 + $0x90] sm:$0xff]
      %v2704 = vld [vmem:[#allocation2 + $0x98] sm:$0xff]
      %v2705 = vld [vmem:[#allocation2 + $0xa0] sm:$0xff]
      %v2706 = vld [vmem:[#allocation2 + $0xa8] sm:$0xff]
      %v2707 = vld [vmem:[#allocation2 + $0xb0] sm:$0xff]
      %v2708 = vld [vmem:[#allocation2 + $0xb8] sm:$0xff]
      %v2709 = vld [vmem:[#allocation2 + $0xc0] sm:$0xff]
      %v2710 = vld [vmem:[#allocation2 + $0xc8] sm:$0xff]
      %v2711 = vld [vmem:[#allocation2 + $0xd0] sm:$0xff]
      %v2712 = vld [vmem:[#allocation2 + $0xd8] sm:$0xff]
      %v2713 = vld [vmem:[#allocation2 + $0xe0] sm:$0xff]
      %v2714 = vld [vmem:[#allocation2 + $0xe8] sm:$0xff]
      %v2715 = vld [vmem:[#allocation2 + $0xf0] sm:$0xff]
      %v2716 = vld [vmem:[#allocation2 + $0xf8] sm:$0xff]
      %v2717 = vld [vmem:[#allocation2 + $0x100] sm:$0xff]
      %v2718 = vld [vmem:[#allocation2 + $0x108] sm:$0xff]
      %v2719 = vld [vmem:[#allocation2 + $0x110] sm:$0xff]
      %v2720 = vld [vmem:[#allocation2 + $0x118] sm:$0xff]
      %v2721 = vld [vmem:[#allocation2 + $0x120] sm:$0xff]
      %v2722 = vld [vmem:[#allocation2 + $0x128] sm:$0xff]
      %v2723 = vld [vmem:[#allocation2 + $0x130] sm:$0xff]
      %v2724 = vld [vmem:[#allocation2 + $0x138] sm:$0xff]
      %v2725 = vld [vmem:[#allocation2 + $0x140] sm:$0xff]
      %v2726 = vld [vmem:[#allocation2 + $0x148] sm:$0xff]
      %v2727 = vld [vmem:[#allocation2 + $0x150] sm:$0xff]
      %v2728 = vld [vmem:[#allocation2 + $0x158] sm:$0xff]
      %v2729 = vld [vmem:[#allocation2 + $0x160] sm:$0xff]
      %v2730 = vld [vmem:[#allocation2 + $0x168] sm:$0xff]
      %v2731 = vld [vmem:[#allocation2 + $0x170] sm:$0xff]
      %v2732 = vld [vmem:[#allocation2 + $0x178] sm:$0xff]
      %v2733 = vld [vmem:[#allocation2 + $0x180] sm:$0xff]
      %v2734 = vld [vmem:[#allocation2 + $0x188] sm:$0xff]
      %v2735 = vld [vmem:[#allocation2 + $0x190] sm:$0xff]
      %v2736 = vld [vmem:[#allocation2 + $0x198] sm:$0xff]
      %v2737 = vld [vmem:[#allocation2 + $0x1a0] sm:$0xff]
      %v2738 = vld [vmem:[#allocation2 + $0x1a8] sm:$0xff]
      %v2739 = vld [vmem:[#allocation2 + $0x1b0] sm:$0xff]
      %v2740 = vld [vmem:[#allocation2 + $0x1b8] sm:$0xff]
      %v2741 = vld [vmem:[#allocation2 + $0x1c0] sm:$0xff]
      %v2742 = vld [vmem:[#allocation2 + $0x1c8] sm:$0xff]
      %v2743 = vld [vmem:[#allocation2 + $0x1d0] sm:$0xff]
      %v2744 = vld [vmem:[#allocation2 + $0x1d8] sm:$0xff]
      %v2745 = vld [vmem:[#allocation2 + $0x1e0] sm:$0xff]
      %v2746 = vld [vmem:[#allocation2 + $0x1e8] sm:$0xff]
      %v2747 = vld [vmem:[#allocation2 + $0x1f0] sm:$0xff]
      %v2748 = vld [vmem:[#allocation2 + $0x1f8] sm:$0xff]
      %v2749 = vld [vmem:[#allocation2 + $0x200] sm:$0xff]
      %v2750 = vld [vmem:[#allocation2 + $0x208] sm:$0xff]
      %v2751 = vld [vmem:[#allocation2 + $0x210] sm:$0xff]
      %v2752 = vld [vmem:[#allocation2 + $0x218] sm:$0xff]
      %v2753 = vld [vmem:[#allocation2 + $0x220] sm:$0xff]
      %v2754 = vld [vmem:[#allocation2 + $0x228] sm:$0xff]
      %v2755 = vld [vmem:[#allocation2 + $0x230] sm:$0xff]
      %v2756 = vld [vmem:[#allocation2 + $0x238] sm:$0xff]
      %v2757 = vpack.c.bf16 %v2687, %v2685
      %v2758 = vpack.c.bf16 %v2688, %v2686
      %v2759 = vpack.c.bf16 %v2691, %v2689
      %v2760 = vpack.c.bf16 %v2692, %v2690
      %v2761 = vpack.c.bf16 %v2695, %v2693
      %v2762 = vpack.c.bf16 %v2696, %v2694
      %v2763 = vpack.c.bf16 %v2699, %v2697
      %v2764 = vpack.c.bf16 %v2700, %v2698
      %v2765 = vpack.c.bf16 %v2703, %v2701
      %v2766 = vpack.c.bf16 %v2704, %v2702
      %v2767 = vpack.c.bf16 %v2707, %v2705
      %v2768 = vpack.c.bf16 %v2708, %v2706
      %v2769 = vpack.c.bf16 %v2711, %v2709
      %v2770 = vpack.c.bf16 %v2712, %v2710
      %v2771 = vpack.c.bf16 %v2715, %v2713
      %v2772 = vpack.c.bf16 %v2716, %v2714
      %v2773 = vpack.c.bf16 %v2719, %v2717
      %v2774 = vpack.c.bf16 %v2720, %v2718
      %v2775 = vpack.c.bf16 %v2723, %v2721
      %v2776 = vpack.c.bf16 %v2724, %v2722
      %v2777 = vpack.c.bf16 %v2727, %v2725
      %v2778 = vpack.c.bf16 %v2728, %v2726
      %v2779 = vpack.c.bf16 %v2731, %v2729
      %v2780 = vpack.c.bf16 %v2732, %v2730
      %v2781 = vpack.c.bf16 %v2735, %v2733
      %v2782 = vpack.c.bf16 %v2736, %v2734
      %v2783 = vpack.c.bf16 %v2739, %v2737
      %v2784 = vpack.c.bf16 %v2740, %v2738
      %v2785 = vpack.c.bf16 %v2743, %v2741
      %v2786 = vpack.c.bf16 %v2744, %v2742
      %v2787 = vpack.c.bf16 %v2747, %v2745
      %v2788 = vpack.c.bf16 %v2748, %v2746
      %v2789 = vpack.c.bf16 %v2751, %v2749
      %v2790 = vpack.c.bf16 %v2752, %v2750
      %v2791 = vpack.c.bf16 %v2755, %v2753
      %v2792 = vpack.c.bf16 %v2756, %v2754
      %v2793 = vld [vmem:[%s16] sm:$0xff]
      %v2794 = vld [vmem:[%s16 + $0x8] sm:$0xff]
      %v2795 = vld [vmem:[%s16 + $0x10] sm:$0xff]
      %v2796 = vld [vmem:[%s16 + $0x18] sm:$0xff]
      %2798 = vset.pattern.permute.xlu0 0
      %2799 = vperm.xlu0 %2798, %v2793
      %v2800 = vpop.permute.xlu0 %2799
      %2803 = vset.pattern.permute.xlu0 0
      %2804 = vperm.xlu0 %2803, %v2794
      %v2805 = vpop.permute.xlu0 %2804
      %2808 = vset.pattern.permute.xlu0 0
      %2809 = vperm.xlu0 %2808, %v2795
      %v2810 = vpop.permute.xlu0 %2809
      %2813 = vset.pattern.permute.xlu0 0
      %2814 = vperm.xlu0 %2813, %v2796
      %v2815 = vpop.permute.xlu0 %2814
      %v2825 = vunpack.c.l.b16 %v2253
      %v2826 = vunpack.c.h.b16 %v2253
      %v2827 = vunpack.c.l.b16 %v2254
      %v2828 = vunpack.c.l.b16 %v2255
      %v2829 = vunpack.c.h.b16 %v2255
      %v2830 = vunpack.c.l.b16 %v2256
      %v2831 = vunpack.c.l.b16 %v2257
      %v2832 = vunpack.c.h.b16 %v2257
      %v2833 = vunpack.c.l.b16 %v2258
      %v2834 = vunpack.c.l.b16 %v2259
      %v2835 = vunpack.c.h.b16 %v2259
      %v2836 = vunpack.c.l.b16 %v2260
      %v2837 = vpack.c.b16 %v2828, %v2825
      %v2838 = vpack.c.b16 %v2829, %v2826
      %v2839 = vpack.c.b16 %v2830, %v2827
      %v2840 = vpack.c.b16 %v2834, %v2831
      %v2841 = vpack.c.b16 %v2835, %v2832
      %v2842 = vpack.c.b16 %v2836, %v2833
      %v2848 = vsel %vm1367, %v2839, 0
      %v2851 = vsel %vm1367, %v2842, 0
      %2853 = vmatprep.subr.bf16.mxu0 %v2758
      %2854 = vmatpush1.bf16.msra.mxu0 %v2757
      %2855 = vmatprep.subr.bf16.mxu0 %v2760
      %2856 = vmatpush1.bf16.msra.mxu0 %v2759
      %2857 = vmatprep.subr.bf16.mxu0 %v2762
      %2858 = vmatpush1.bf16.msra.mxu0 %v2761
      %2859 = vmatprep.subr.bf16.mxu0 %v2764
      %2860 = vmatpush1.bf16.msra.mxu0 %v2763
      %2861 = vmatprep.subr.bf16.mxu0 %v2766
      %2862 = vmatpush1.bf16.msra.mxu0 %v2765
      %2863 = vmatprep.subr.bf16.mxu0 %v2768
      %2864 = vmatpush1.bf16.msra.mxu0 %v2767
      %2865 = vmatprep.subr.bf16.mxu0 %v2770
      %2866 = vmatpush1.bf16.msra.mxu0 %v2769
      %2867 = vmatprep.subr.bf16.mxu0 %v2772
      %2868 = vmatpush1.bf16.msra.mxu0 %v2771
      %2869 = vmatprep.subr.bf16.mxu0 %v2774
      %2870 = vmatpush1.bf16.msra.mxu0 %v2773
      %2871 = vmatprep.subr.bf16.mxu0 %v2776
      %2872 = vmatpush1.bf16.msra.mxu0 %v2775
      %2873 = vmatprep.subr.bf16.mxu0 %v2778
      %2874 = vmatpush1.bf16.msra.mxu0 %v2777
      %2875 = vmatprep.subr.bf16.mxu0 %v2780
      %2876 = vmatpush1.bf16.msra.mxu0 %v2779
      %2877 = vmatprep.subr.bf16.mxu0 %v2782
      %2878 = vmatpush1.bf16.msra.mxu0 %v2781
      %2879 = vmatprep.subr.bf16.mxu0 %v2784
      %2880 = vmatpush1.bf16.msra.mxu0 %v2783
      %2881 = vmatprep.subr.bf16.mxu0 %v2786
      %2882 = vmatpush1.bf16.msra.mxu0 %v2785
      %2883 = vmatprep.subr.bf16.mxu0 %v2788
      %2884 = vmatpush1.bf16.msra.mxu0 %v2787
      %2885 = vmatprep.mubr.bf16.mxu0 %v2838
      %2886 = vmatmul.mubr.bf16.gmra.mrb[0].mxu0 %v2837
      %v2887 = vpop.f32.mrb[0].mxu0
      %v2888 = vadd.f32 %v2800, %v2887
      %v2889 = vpop.f32.mrb[0].mxu0
      %v2890 = vadd.f32 %v2800, %v2889
      %v2891 = vpop.f32.mrb[0].mxu0
      %v2892 = vadd.f32 %v2805, %v2891
      %v2893 = vpop.f32.mrb[0].mxu0
      %v2894 = vadd.f32 %v2805, %v2893
      %2895 = vmatprep.mubr.bf16.mxu0 %v2841
      %2896 = vmatmul.mubr.bf16.gmra.mrb[0].mxu0 %v2840
      %v2897 = vpop.f32.mrb[0].mxu0
      %v2898 = vadd.f32 %v2810, %v2897
      %v2899 = vpop.f32.mrb[0].mxu0
      %v2900 = vadd.f32 %v2810, %v2899
      %v2901 = vpop.f32.mrb[0].mxu0
      %v2902 = vadd.f32 %v2815, %v2901
      %v2903 = vpop.f32.mrb[0].mxu0
      %v2904 = vadd.f32 %v2815, %v2903
      %2905 = vdwg.mxu0
      %2906 = vmatprep.subr.bf16.mxu0 %v2790
      %2907 = vmatpush1.bf16.msra.mxu0 %v2789
      %2908 = vmatprep.subr.bf16.mxu0 %v2792
      %2909 = vmatpush1.bf16.msra.mxu0 %v2791
      %2910 = vmatprep.subr.bf16.mxu0 0
      %2911 = vmatpush1.bf16.msra.mxu0 0
      %2912 = vmatprep.subr.bf16.mxu0 0
      %2913 = vmatpush1.bf16.msra.mxu0 0
      %2914 = vmatprep.subr.bf16.mxu0 0
      %2915 = vmatpush1.bf16.msra.mxu0 0
      %2916 = vmatprep.subr.bf16.mxu0 0
      %2917 = vmatpush1.bf16.msra.mxu0 0
      %2918 = vmatprep.subr.bf16.mxu0 0
      %2919 = vmatpush1.bf16.msra.mxu0 0
      %2920 = vmatprep.subr.bf16.mxu0 0
      %2921 = vmatpush1.bf16.msra.mxu0 0
      %2922 = vmatprep.subr.bf16.mxu0 0
      %2923 = vmatpush1.bf16.msra.mxu0 0
      %2924 = vmatprep.subr.bf16.mxu0 0
      %2925 = vmatpush1.bf16.msra.mxu0 0
      %2926 = vmatprep.subr.bf16.mxu0 0
      %2927 = vmatpush1.bf16.msra.mxu0 0
      %2928 = vmatprep.subr.bf16.mxu0 0
      %2929 = vmatpush1.bf16.msra.mxu0 0
      %2930 = vmatprep.subr.bf16.mxu0 0
      %2931 = vmatpush1.bf16.msra.mxu0 0
      %2932 = vmatprep.subr.bf16.mxu0 0
      %2933 = vmatpush1.bf16.msra.mxu0 0
      %2934 = vmatprep.subr.bf16.mxu0 0
      %2935 = vmatpush1.bf16.msra.mxu0 0
      %2936 = vmatprep.subr.bf16.mxu0 0
      %2937 = vmatpush1.bf16.msra.mxu0 0
      %2938 = vmatprep.mubr.bf16.mxu0 0
      %2939 = vmatmul.mubr.bf16.gmra.mrb[0].mxu0 %v2848
      %v2940 = vpop.f32.mrb[0].mxu0
      %v2941 = vadd.f32 %v2888, %v2940
      %v2942 = vpop.f32.mrb[0].mxu0
      %v2943 = vadd.f32 %v2890, %v2942
      %v2944 = vpop.f32.mrb[0].mxu0
      %v2945 = vadd.f32 %v2892, %v2944
      %v2946 = vpop.f32.mrb[0].mxu0
      %v2947 = vadd.f32 %v2894, %v2946
      %2948 = vmatprep.mubr.bf16.mxu0 0
      %2949 = vmatmul.mubr.bf16.gmra.mrb[0].mxu0 %v2851
      %v2950 = vpop.f32.mrb[0].mxu0
      %v2951 = vadd.f32 %v2898, %v2950
      %v2952 = vpop.f32.mrb[0].mxu0
      %v2953 = vadd.f32 %v2900, %v2952
      %v2954 = vpop.f32.mrb[0].mxu0
      %v2955 = vadd.f32 %v2902, %v2954
      %v2956 = vpop.f32.mrb[0].mxu0
      %v2957 = vadd.f32 %v2904, %v2956
      %2958 = vdwg.mxu0
      %v2959 = vadd.f32 %v1307, %v2941
      %v2960 = vadd.f32 %v1309, %v2943
      %v2961 = vadd.f32 %v1311, %v2945
      %v2962 = vadd.f32 %v1313, %v2947
      %v2963 = vadd.f32 %v1317, %v2951
      %v2964 = vadd.f32 %v1319, %v2953
      %v2965 = vadd.f32 %v1321, %v2955
      %v2966 = vadd.f32 %v1323, %v2957
      %v2967 = vld [vmem:[%s17] sm:$0xf]
      %v2968 = vld [vmem:[%s17 + $0x4] sm:$0xf]
      %v2969 = vld [vmem:[%s17 + $0x8] sm:$0xf]
      %v2970 = vld [vmem:[%s17 + $0xc] sm:$0xf]
      %v2971 = vpack.c.bf16 %v2961, %v2959
      %v2972 = vpack.c.bf16 %v2962, %v2960
      %v2973 = vpack.c.bf16 %v2965, %v2963
      %v2974 = vpack.c.bf16 %v2966, %v2964
      %v2975 = vld [vmem:[%s18] sm:$0xff]
      %v2976 = vld [vmem:[%s18 + $0x8] sm:$0xff]
      %v2977 = vld [vmem:[%s18 + $0x10] sm:$0xff]
      %v2978 = vld [vmem:[%s18 + $0x18] sm:$0xff]
      %2980 = vset.pattern.permute.xlu0 0
      %2981 = vperm.xlu0 %2980, %v2975
      %v2982 = vpop.permute.xlu0 %2981
      %2985 = vset.pattern.permute.xlu0 0
      %2986 = vperm.xlu0 %2985, %v2976
      %v2987 = vpop.permute.xlu0 %2986
      %2990 = vset.pattern.permute.xlu0 0
      %2991 = vperm.xlu0 %2990, %v2977
      %v2992 = vpop.permute.xlu0 %2991
      %2995 = vset.pattern.permute.xlu0 0
      %2996 = vperm.xlu0 %2995, %v2978
      %v2997 = vpop.permute.xlu0 %2996
      %v3003 = vunpack.c.l.b16 %v2967
      %v3004 = vunpack.c.l.b16 %v2968
      %v3005 = vunpack.c.l.b16 %v2969
      %v3006 = vunpack.c.l.b16 %v2970
      %v3007 = vpack.c.b16 %v3004, %v3003
      %v3008 = vpack.c.b16 %v3006, %v3005
      %v3010 = vsel %vm1367, %v3007, 0
      %v3013 = vsel %vm1367, %v3008, 0
      %3015 = vmatprep.subr.bf16.mxu0 %v2972
      %3016 = vmatpush1.bf16.msra.mxu0 %v2971
      %3017 = vmatprep.subr.bf16.mxu0 %v2974
      %3018 = vmatpush1.bf16.msra.mxu0 %v2973
      %3019 = vmatprep.subr.bf16.mxu0 0
      %3020 = vmatpush1.bf16.msra.mxu0 0
      %3021 = vmatprep.subr.bf16.mxu0 0
      %3022 = vmatpush1.bf16.msra.mxu0 0
      %3023 = vmatprep.subr.bf16.mxu0 0
      %3024 = vmatpush1.bf16.msra.mxu0 0
      %3025 = vmatprep.subr.bf16.mxu0 0
      %3026 = vmatpush1.bf16.msra.mxu0 0
      %3027 = vmatprep.subr.bf16.mxu0 0
      %3028 = vmatpush1.bf16.msra.mxu0 0
      %3029 = vmatprep.subr.bf16.mxu0 0
      %3030 = vmatpush1.bf16.msra.mxu0 0
      %3031 = vmatprep.subr.bf16.mxu0 0
      %3032 = vmatpush1.bf16.msra.mxu0 0
      %3033 = vmatprep.subr.bf16.mxu0 0
      %3034 = vmatpush1.bf16.msra.mxu0 0
      %3035 = vmatprep.subr.bf16.mxu0 0
      %3036 = vmatpush1.bf16.msra.mxu0 0
      %3037 = vmatprep.subr.bf16.mxu0 0
      %3038 = vmatpush1.bf16.msra.mxu0 0
      %3039 = vmatprep.subr.bf16.mxu0 0
      %3040 = vmatpush1.bf16.msra.mxu0 0
      %3041 = vmatprep.subr.bf16.mxu0 0
      %3042 = vmatpush1.bf16.msra.mxu0 0
      %3043 = vmatprep.subr.bf16.mxu0 0
      %3044 = vmatpush1.bf16.msra.mxu0 0
      %3045 = vmatprep.subr.bf16.mxu0 0
      %3046 = vmatpush1.bf16.msra.mxu0 0
      %3047 = vmatprep.mubr.bf16.mxu0 0
      %3048 = vmatmul.mubr.bf16.gmra.mrb[0].mxu0 %v3010
      %v3049 = vpop.f32.mrb[0].mxu0
      %v3050 = vadd.f32 %v2982, %v3049
      %v3051 = vpop.f32.mrb[0].mxu0
      %v3052 = vadd.f32 %v2982, %v3051
      %v3053 = vpop.f32.mrb[0].mxu0
      %v3054 = vadd.f32 %v2987, %v3053
      %v3055 = vpop.f32.mrb[0].mxu0
      %v3056 = vadd.f32 %v2987, %v3055
      %3057 = vmatprep.mubr.bf16.mxu0 0
      %3058 = vmatmul.mubr.bf16.gmra.mrb[0].mxu0 %v3013
      %v3059 = vpop.f32.mrb[0].mxu0
      %v3060 = vadd.f32 %v2992, %v3059
      %v3061 = vpop.f32.mrb[0].mxu0
      %v3062 = vadd.f32 %v2992, %v3061
      %v3063 = vpop.f32.mrb[0].mxu0
      %v3064 = vadd.f32 %v2997, %v3063
      %v3065 = vpop.f32.mrb[0].mxu0
      %v3066 = vadd.f32 %v2997, %v3065
      %3067 = vdwg.mxu0
      %v3068 = vadd.f32 %v1409, %v3050
      %v3069 = vadd.f32 %v1411, %v3052
      %v3070 = vadd.f32 %v1413, %v3054
      %v3071 = vadd.f32 %v1415, %v3056
      %v3072 = vadd.f32 %v1419, %v3060
      %v3073 = vadd.f32 %v1421, %v3062
      %v3074 = vadd.f32 %v1423, %v3064
      %v3075 = vadd.f32 %v1425, %v3066
      %s3076 = scalar_lea.vmem %s10, 32
      %v3077 = vld [vmem:[%s3076] sm:$0xff]
      %v3078 = vld [vmem:[%s3076 + $0x8] sm:$0xff]
      %v3079 = vld [vmem:[%s3076 + $0x10] sm:$0xff]
      %v3080 = vld [vmem:[%s3076 + $0x18] sm:$0xff]
      %3082 = vset.pattern.permute.xlu0 0
      %3083 = vperm.xlu0 %3082, %v3077
      %v3084 = vpop.permute.xlu0 %3083
      %3087 = vset.pattern.permute.xlu0 0
      %3088 = vperm.xlu0 %3087, %v3078
      %v3089 = vpop.permute.xlu0 %3088
      %3092 = vset.pattern.permute.xlu0 0
      %3093 = vperm.xlu0 %3092, %v3079
      %v3094 = vpop.permute.xlu0 %3093
      %3097 = vset.pattern.permute.xlu0 0
      %3098 = vperm.xlu0 %3097, %v3080
      %v3099 = vpop.permute.xlu0 %3098
      %v3101 = vmul.f32 %v2959, %v3084
      %v3102 = vmul.f32 %v2960, %v3084
      %v3103 = vmul.f32 %v2961, %v3089
      %v3104 = vmul.f32 %v2962, %v3089
      %v3105 = vmul.f32 %v2963, %v3094
      %v3106 = vmul.f32 %v2964, %v3094
      %v3107 = vmul.f32 %v2965, %v3099
      %v3108 = vmul.f32 %v2966, %v3099
      %s3109 = scalar_lea.vmem %s11, 32
      %v3110 = vld [vmem:[%s3109] sm:$0xff]
      %v3111 = vld [vmem:[%s3109 + $0x8] sm:$0xff]
      %v3112 = vld [vmem:[%s3109 + $0x10] sm:$0xff]
      %v3113 = vld [vmem:[%s3109 + $0x18] sm:$0xff]
      %3115 = vset.pattern.permute.xlu0 0
      %3116 = vperm.xlu0 %3115, %v3110
      %v3117 = vpop.permute.xlu0 %3116
      %3120 = vset.pattern.permute.xlu0 0
      %3121 = vperm.xlu0 %3120, %v3111
      %v3122 = vpop.permute.xlu0 %3121
      %3125 = vset.pattern.permute.xlu0 0
      %3126 = vperm.xlu0 %3125, %v3112
      %v3127 = vpop.permute.xlu0 %3126
      %3130 = vset.pattern.permute.xlu0 0
      %3131 = vperm.xlu0 %3130, %v3113
      %v3132 = vpop.permute.xlu0 %3131
      %v3134 = vadd.f32 %v3101, %v3117
      %v3135 = vadd.f32 %v3102, %v3117
      %v3136 = vadd.f32 %v3103, %v3122
      %v3137 = vadd.f32 %v3104, %v3122
      %v3138 = vadd.f32 %v3105, %v3127
      %v3139 = vadd.f32 %v3106, %v3127
      %v3140 = vadd.f32 %v3107, %v3132
      %v3141 = vadd.f32 %v3108, %v3132
      %v3142 = vmax.f32 %v3134, 0.0
      %v3143 = vmax.f32 %v3135, 0.0
      %v3144 = vmax.f32 %v3136, 0.0
      %v3145 = vmax.f32 %v3137, 0.0
      %v3146 = vmax.f32 %v3138, 0.0
      %v3147 = vmax.f32 %v3139, 0.0
      %v3148 = vmax.f32 %v3140, 0.0
      %v3149 = vmax.f32 %v3141, 0.0
      %s3150 = scalar_lea.vmem %s12, 48
      %v3151 = vld [vmem:[%s3150] sm:$0xff]
      %v3152 = vld [vmem:[%s3150 + $0x8] sm:$0xf]
      %v3153 = vld [vmem:[%s3150 + $0xc] sm:$0xff]
      %v3154 = vld [vmem:[%s3150 + $0x14] sm:$0xf]
      %v3155 = vld [vmem:[%s3150 + $0x18] sm:$0xff]
      %v3156 = vld [vmem:[%s3150 + $0x20] sm:$0xf]
      %v3157 = vld [vmem:[%s3150 + $0x24] sm:$0xff]
      %v3158 = vld [vmem:[%s3150 + $0x2c] sm:$0xf]
      %3159 = vrot.lane.b32.xlu0 %v3142, 17
      %v3160 = vpop.permute.xlu0 %3159
      %3161 = vrot.lane.b32.xlu0 %v3144, 17
      %v3162 = vpop.permute.xlu0 %3161
      %3163 = vrot.lane.b32.xlu0 %v3146, 17
      %v3164 = vpop.permute.xlu0 %3163
      %3165 = vrot.lane.b32.xlu0 %v3148, 17
      %v3166 = vpop.permute.xlu0 %3165
      %3167 = vrot.lane.b32.xlu0 %v3143, 17
      %v3168 = vpop.permute.xlu0 %3167
      %3169 = vrot.lane.b32.xlu0 %v3145, 17
      %v3170 = vpop.permute.xlu0 %3169
      %3171 = vrot.lane.b32.xlu0 %v3147, 17
      %v3172 = vpop.permute.xlu0 %3171
      %3173 = vrot.lane.b32.xlu0 %v3149, 17
      %v3174 = vpop.permute.xlu0 %3173
      %v3175 = vsel %vm897, %v3160, %v3168
      %v3176 = vsel %vm897, %v3162, %v3170
      %v3177 = vsel %vm897, %v3164, %v3172
      %v3178 = vsel %vm897, %v3166, %v3174
      %v3179 = vsel %vm897, %v3168, %v3160
      %v3180 = vsel %vm897, %v3170, %v3162
      %v3181 = vsel %vm897, %v3172, %v3164
      %v3182 = vsel %vm897, %v3174, %v3166
      %v3183 = vld [vmem:[%s2] sm:$0x3]
      %v3185 = vlaneseq
      %v3186 = vshrl.u32 %v3185, 7
      %v3187 = vsub.s32 0, %v3186
      %v3188 = vrot.slane %v3183, %v3187
      %v3189 = vlaneseq
      %v3190 = vshrl.u32 %v3189, 7
      %v3191 = vsub.s32 1, %v3190
      %v3192 = vrot.slane %v3183, %v3191
      %v3195 = vmul.f32 %v3179, %v3188
      %v3196 = vmul.f32 %v3175, %v3192
      %v3197 = vmul.f32 %v3180, %v3188
      %v3198 = vmul.f32 %v3176, %v3192
      %v3199 = vmul.f32 %v3181, %v3188
      %v3200 = vmul.f32 %v3177, %v3192
      %v3201 = vmul.f32 %v3182, %v3188
      %v3202 = vmul.f32 %v3178, %v3192
      %3203 = vst [vmem:[#allocation2] sm:$0xff] %v3195
      %3204 = vst [vmem:[#allocation2 + $0x8] sm:$0xff] %v3196
      %3205 = vst [vmem:[#allocation2 + $0x10] sm:$0xff] %v3197
      %3206 = vst [vmem:[#allocation2 + $0x18] sm:$0xff] %v3198
      %3207 = vst [vmem:[#allocation2 + $0x20] sm:$0xff] %v3199
      %3208 = vst [vmem:[#allocation2 + $0x28] sm:$0xff] %v3200
      %3209 = vst [vmem:[#allocation2 + $0x30] sm:$0xff] %v3201
      %3210 = vst [vmem:[#allocation2 + $0x38] sm:$0xff] %v3202
      %3211 = vrot.lane.b32.xlu0 %v3142, 16
      %v3212 = vpop.permute.xlu0 %3211
      %3213 = vrot.lane.b32.xlu0 %v3144, 16
      %v3214 = vpop.permute.xlu0 %3213
      %3215 = vrot.lane.b32.xlu0 %v3146, 16
      %v3216 = vpop.permute.xlu0 %3215
      %3217 = vrot.lane.b32.xlu0 %v3148, 16
      %v3218 = vpop.permute.xlu0 %3217
      %3219 = vrot.lane.b32.xlu0 %v3143, 16
      %v3220 = vpop.permute.xlu0 %3219
      %3221 = vrot.lane.b32.xlu0 %v3145, 16
      %v3222 = vpop.permute.xlu0 %3221
      %3223 = vrot.lane.b32.xlu0 %v3147, 16
      %v3224 = vpop.permute.xlu0 %3223
      %3225 = vrot.lane.b32.xlu0 %v3149, 16
      %v3226 = vpop.permute.xlu0 %3225
      %v3227 = vsel %vm932, %v3212, %v3220
      %v3228 = vsel %vm932, %v3214, %v3222
      %v3229 = vsel %vm932, %v3216, %v3224
      %v3230 = vsel %vm932, %v3218, %v3226
      %v3231 = vsel %vm932, %v3220, %v3212
      %v3232 = vsel %vm932, %v3222, %v3214
      %v3233 = vsel %vm932, %v3224, %v3216
      %v3234 = vsel %vm932, %v3226, %v3218
      %v3235 = vld [vmem:[%s935] sm:$0x3]
      %v3237 = vlaneseq
      %v3238 = vshrl.u32 %v3237, 7
      %v3239 = vsub.s32 0, %v3238
      %v3240 = vrot.slane %v3235, %v3239
      %v3241 = vlaneseq
      %v3242 = vshrl.u32 %v3241, 7
      %v3243 = vsub.s32 1, %v3242
      %v3244 = vrot.slane %v3235, %v3243
      %v3247 = vmul.f32 %v3231, %v3240
      %v3248 = vmul.f32 %v3227, %v3244
      %v3249 = vmul.f32 %v3232, %v3240
      %v3250 = vmul.f32 %v3228, %v3244
      %v3251 = vmul.f32 %v3233, %v3240
      %v3252 = vmul.f32 %v3229, %v3244
      %v3253 = vmul.f32 %v3234, %v3240
      %v3254 = vmul.f32 %v3230, %v3244
      %3255 = vst [vmem:[#allocation2 + $0x40] sm:$0xff] %v3247
      %3256 = vst [vmem:[#allocation2 + $0x48] sm:$0xff] %v3248
      %3257 = vst [vmem:[#allocation2 + $0x50] sm:$0xff] %v3249
      %3258 = vst [vmem:[#allocation2 + $0x58] sm:$0xff] %v3250
      %3259 = vst [vmem:[#allocation2 + $0x60] sm:$0xff] %v3251
      %3260 = vst [vmem:[#allocation2 + $0x68] sm:$0xff] %v3252
      %3261 = vst [vmem:[#allocation2 + $0x70] sm:$0xff] %v3253
      %3262 = vst [vmem:[#allocation2 + $0x78] sm:$0xff] %v3254
      %3263 = vrot.lane.b32.xlu0 %v3142, 15
      %v3264 = vpop.permute.xlu0 %3263
      %3265 = vrot.lane.b32.xlu0 %v3144, 15
      %v3266 = vpop.permute.xlu0 %3265
      %3267 = vrot.lane.b32.xlu0 %v3146, 15
      %v3268 = vpop.permute.xlu0 %3267
      %3269 = vrot.lane.b32.xlu0 %v3148, 15
      %v3270 = vpop.permute.xlu0 %3269
      %3271 = vrot.lane.b32.xlu0 %v3143, 15
      %v3272 = vpop.permute.xlu0 %3271
      %3273 = vrot.lane.b32.xlu0 %v3145, 15
      %v3274 = vpop.permute.xlu0 %3273
      %3275 = vrot.lane.b32.xlu0 %v3147, 15
      %v3276 = vpop.permute.xlu0 %3275
      %3277 = vrot.lane.b32.xlu0 %v3149, 15
      %v3278 = vpop.permute.xlu0 %3277
      %v3279 = vsel %vm968, %v3264, %v3272
      %v3280 = vsel %vm968, %v3266, %v3274
      %v3281 = vsel %vm968, %v3268, %v3276
      %v3282 = vsel %vm968, %v3270, %v3278
      %v3283 = vsel %vm968, %v3272, %v3264
      %v3284 = vsel %vm968, %v3274, %v3266
      %v3285 = vsel %vm968, %v3276, %v3268
      %v3286 = vsel %vm968, %v3278, %v3270
      %v3287 = vld [vmem:[%s971] sm:$0x3]
      %v3289 = vlaneseq
      %v3290 = vshrl.u32 %v3289, 7
      %v3291 = vsub.s32 0, %v3290
      %v3292 = vrot.slane %v3287, %v3291
      %v3293 = vlaneseq
      %v3294 = vshrl.u32 %v3293, 7
      %v3295 = vsub.s32 1, %v3294
      %v3296 = vrot.slane %v3287, %v3295
      %v3299 = vmul.f32 %v3283, %v3292
      %v3300 = vmul.f32 %v3279, %v3296
      %v3301 = vmul.f32 %v3284, %v3292
      %v3302 = vmul.f32 %v3280, %v3296
      %v3303 = vmul.f32 %v3285, %v3292
      %v3304 = vmul.f32 %v3281, %v3296
      %v3305 = vmul.f32 %v3286, %v3292
      %v3306 = vmul.f32 %v3282, %v3296
      %3307 = vst [vmem:[#allocation2 + $0x80] sm:$0xff] %v3299
      %3308 = vst [vmem:[#allocation2 + $0x88] sm:$0xff] %v3300
      %3309 = vst [vmem:[#allocation2 + $0x90] sm:$0xff] %v3301
      %3310 = vst [vmem:[#allocation2 + $0x98] sm:$0xff] %v3302
      %3311 = vst [vmem:[#allocation2 + $0xa0] sm:$0xff] %v3303
      %3312 = vst [vmem:[#allocation2 + $0xa8] sm:$0xff] %v3304
      %3313 = vst [vmem:[#allocation2 + $0xb0] sm:$0xff] %v3305
      %3314 = vst [vmem:[#allocation2 + $0xb8] sm:$0xff] %v3306
      %3315 = vrot.lane.b32.xlu0 %v3142, 1
      %v3316 = vpop.permute.xlu0 %3315
      %3317 = vrot.lane.b32.xlu0 %v3144, 1
      %v3318 = vpop.permute.xlu0 %3317
      %3319 = vrot.lane.b32.xlu0 %v3146, 1
      %v3320 = vpop.permute.xlu0 %3319
      %3321 = vrot.lane.b32.xlu0 %v3148, 1
      %v3322 = vpop.permute.xlu0 %3321
      %3323 = vrot.lane.b32.xlu0 %v3143, 1
      %v3324 = vpop.permute.xlu0 %3323
      %3325 = vrot.lane.b32.xlu0 %v3145, 1
      %v3326 = vpop.permute.xlu0 %3325
      %3327 = vrot.lane.b32.xlu0 %v3147, 1
      %v3328 = vpop.permute.xlu0 %3327
      %3329 = vrot.lane.b32.xlu0 %v3149, 1
      %v3330 = vpop.permute.xlu0 %3329
      %v3331 = vsel %vm1004, %v3316, %v3324
      %v3332 = vsel %vm1004, %v3318, %v3326
      %v3333 = vsel %vm1004, %v3320, %v3328
      %v3334 = vsel %vm1004, %v3322, %v3330
      %v3335 = vsel %vm1004, %v3324, %v3316
      %v3336 = vsel %vm1004, %v3326, %v3318
      %v3337 = vsel %vm1004, %v3328, %v3320
      %v3338 = vsel %vm1004, %v3330, %v3322
      %v3339 = vld [vmem:[%s1007] sm:$0x3]
      %v3341 = vlaneseq
      %v3342 = vshrl.u32 %v3341, 7
      %v3343 = vsub.s32 0, %v3342
      %v3344 = vrot.slane %v3339, %v3343
      %v3345 = vlaneseq
      %v3346 = vshrl.u32 %v3345, 7
      %v3347 = vsub.s32 1, %v3346
      %v3348 = vrot.slane %v3339, %v3347
      %v3351 = vmul.f32 %v3335, %v3344
      %v3352 = vmul.f32 %v3331, %v3348
      %v3353 = vmul.f32 %v3336, %v3344
      %v3354 = vmul.f32 %v3332, %v3348
      %v3355 = vmul.f32 %v3337, %v3344
      %v3356 = vmul.f32 %v3333, %v3348
      %v3357 = vmul.f32 %v3338, %v3344
      %v3358 = vmul.f32 %v3334, %v3348
      %3359 = vst [vmem:[#allocation2 + $0xc0] sm:$0xff] %v3351
      %3360 = vst [vmem:[#allocation2 + $0xc8] sm:$0xff] %v3352
      %3361 = vst [vmem:[#allocation2 + $0xd0] sm:$0xff] %v3353
      %3362 = vst [vmem:[#allocation2 + $0xd8] sm:$0xff] %v3354
      %3363 = vst [vmem:[#allocation2 + $0xe0] sm:$0xff] %v3355
      %3364 = vst [vmem:[#allocation2 + $0xe8] sm:$0xff] %v3356
      %3365 = vst [vmem:[#allocation2 + $0xf0] sm:$0xff] %v3357
      %3366 = vst [vmem:[#allocation2 + $0xf8] sm:$0xff] %v3358
      %3367 = vst [vmem:[#allocation2 + $0x100] sm:$0xff] %v3142
      %3368 = vst [vmem:[#allocation2 + $0x108] sm:$0xff] %v3143
      %3369 = vst [vmem:[#allocation2 + $0x110] sm:$0xff] %v3144
      %3370 = vst [vmem:[#allocation2 + $0x118] sm:$0xff] %v3145
      %3371 = vst [vmem:[#allocation2 + $0x120] sm:$0xff] %v3146
      %3372 = vst [vmem:[#allocation2 + $0x128] sm:$0xff] %v3147
      %3373 = vst [vmem:[#allocation2 + $0x130] sm:$0xff] %v3148
      %3374 = vst [vmem:[#allocation2 + $0x138] sm:$0xff] %v3149
      %3375 = vrot.lane.b32.xlu0 %v3142, 127
      %v3376 = vpop.permute.xlu0 %3375
      %3377 = vrot.lane.b32.xlu0 %v3144, 127
      %v3378 = vpop.permute.xlu0 %3377
      %3379 = vrot.lane.b32.xlu0 %v3146, 127
      %v3380 = vpop.permute.xlu0 %3379
      %3381 = vrot.lane.b32.xlu0 %v3148, 127
      %v3382 = vpop.permute.xlu0 %3381
      %3383 = vrot.lane.b32.xlu0 %v3143, 127
      %v3384 = vpop.permute.xlu0 %3383
      %3385 = vrot.lane.b32.xlu0 %v3145, 127
      %v3386 = vpop.permute.xlu0 %3385
      %3387 = vrot.lane.b32.xlu0 %v3147, 127
      %v3388 = vpop.permute.xlu0 %3387
      %3389 = vrot.lane.b32.xlu0 %v3149, 127
      %v3390 = vpop.permute.xlu0 %3389
      %v3391 = vsel %vm1052, %v3376, %v3384
      %v3392 = vsel %vm1052, %v3378, %v3386
      %v3393 = vsel %vm1052, %v3380, %v3388
      %v3394 = vsel %vm1052, %v3382, %v3390
      %v3395 = vsel %vm1052, %v3384, %v3376
      %v3396 = vsel %vm1052, %v3386, %v3378
      %v3397 = vsel %vm1052, %v3388, %v3380
      %v3398 = vsel %vm1052, %v3390, %v3382
      %v3399 = vld [vmem:[%s1055] sm:$0x3]
      %v3401 = vlaneseq
      %v3402 = vshrl.u32 %v3401, 7
      %v3403 = vsub.s32 0, %v3402
      %v3404 = vrot.slane %v3399, %v3403
      %v3405 = vlaneseq
      %v3406 = vshrl.u32 %v3405, 7
      %v3407 = vsub.s32 1, %v3406
      %v3408 = vrot.slane %v3399, %v3407
      %v3411 = vmul.f32 %v3391, %v3404
      %v3412 = vmul.f32 %v3395, %v3408
      %v3413 = vmul.f32 %v3392, %v3404
      %v3414 = vmul.f32 %v3396, %v3408
      %v3415 = vmul.f32 %v3393, %v3404
      %v3416 = vmul.f32 %v3397, %v3408
      %v3417 = vmul.f32 %v3394, %v3404
      %v3418 = vmul.f32 %v3398, %v3408
      %3419 = vst [vmem:[#allocation2 + $0x140] sm:$0xff] %v3411
      %3420 = vst [vmem:[#allocation2 + $0x148] sm:$0xff] %v3412
      %3421 = vst [vmem:[#allocation2 + $0x150] sm:$0xff] %v3413
      %3422 = vst [vmem:[#allocation2 + $0x158] sm:$0xff] %v3414
      %3423 = vst [vmem:[#allocation2 + $0x160] sm:$0xff] %v3415
      %3424 = vst [vmem:[#allocation2 + $0x168] sm:$0xff] %v3416
      %3425 = vst [vmem:[#allocation2 + $0x170] sm:$0xff] %v3417
      %3426 = vst [vmem:[#allocation2 + $0x178] sm:$0xff] %v3418
      %3427 = vrot.lane.b32.xlu0 %v3142, 113
      %v3428 = vpop.permute.xlu0 %3427
      %3429 = vrot.lane.b32.xlu0 %v3144, 113
      %v3430 = vpop.permute.xlu0 %3429
      %3431 = vrot.lane.b32.xlu0 %v3146, 113
      %v3432 = vpop.permute.xlu0 %3431
      %3433 = vrot.lane.b32.xlu0 %v3148, 113
      %v3434 = vpop.permute.xlu0 %3433
      %3435 = vrot.lane.b32.xlu0 %v3143, 113
      %v3436 = vpop.permute.xlu0 %3435
      %3437 = vrot.lane.b32.xlu0 %v3145, 113
      %v3438 = vpop.permute.xlu0 %3437
      %3439 = vrot.lane.b32.xlu0 %v3147, 113
      %v3440 = vpop.permute.xlu0 %3439
      %3441 = vrot.lane.b32.xlu0 %v3149, 113
      %v3442 = vpop.permute.xlu0 %3441
      %v3443 = vsel %vm1088, %v3428, %v3436
      %v3444 = vsel %vm1088, %v3430, %v3438
      %v3445 = vsel %vm1088, %v3432, %v3440
      %v3446 = vsel %vm1088, %v3434, %v3442
      %v3447 = vsel %vm1088, %v3436, %v3428
      %v3448 = vsel %vm1088, %v3438, %v3430
      %v3449 = vsel %vm1088, %v3440, %v3432
      %v3450 = vsel %vm1088, %v3442, %v3434
      %v3451 = vld [vmem:[%s1091] sm:$0x3]
      %v3453 = vlaneseq
      %v3454 = vshrl.u32 %v3453, 7
      %v3455 = vsub.s32 0, %v3454
      %v3456 = vrot.slane %v3451, %v3455
      %v3457 = vlaneseq
      %v3458 = vshrl.u32 %v3457, 7
      %v3459 = vsub.s32 1, %v3458
      %v3460 = vrot.slane %v3451, %v3459
      %v3463 = vmul.f32 %v3443, %v3456
      %v3464 = vmul.f32 %v3447, %v3460
      %v3465 = vmul.f32 %v3444, %v3456
      %v3466 = vmul.f32 %v3448, %v3460
      %v3467 = vmul.f32 %v3445, %v3456
      %v3468 = vmul.f32 %v3449, %v3460
      %v3469 = vmul.f32 %v3446, %v3456
      %v3470 = vmul.f32 %v3450, %v3460
      %3471 = vst [vmem:[#allocation2 + $0x180] sm:$0xff] %v3463
      %3472 = vst [vmem:[#allocation2 + $0x188] sm:$0xff] %v3464
      %3473 = vst [vmem:[#allocation2 + $0x190] sm:$0xff] %v3465
      %3474 = vst [vmem:[#allocation2 + $0x198] sm:$0xff] %v3466
      %3475 = vst [vmem:[#allocation2 + $0x1a0] sm:$0xff] %v3467
      %3476 = vst [vmem:[#allocation2 + $0x1a8] sm:$0xff] %v3468
      %3477 = vst [vmem:[#allocation2 + $0x1b0] sm:$0xff] %v3469
      %3478 = vst [vmem:[#allocation2 + $0x1b8] sm:$0xff] %v3470
      %3479 = vrot.lane.b32.xlu0 %v3142, 112
      %v3480 = vpop.permute.xlu0 %3479
      %3481 = vrot.lane.b32.xlu0 %v3144, 112
      %v3482 = vpop.permute.xlu0 %3481
      %3483 = vrot.lane.b32.xlu0 %v3146, 112
      %v3484 = vpop.permute.xlu0 %3483
      %3485 = vrot.lane.b32.xlu0 %v3148, 112
      %v3486 = vpop.permute.xlu0 %3485
      %3487 = vrot.lane.b32.xlu0 %v3143, 112
      %v3488 = vpop.permute.xlu0 %3487
      %3489 = vrot.lane.b32.xlu0 %v3145, 112
      %v3490 = vpop.permute.xlu0 %3489
      %3491 = vrot.lane.b32.xlu0 %v3147, 112
      %v3492 = vpop.permute.xlu0 %3491
      %3493 = vrot.lane.b32.xlu0 %v3149, 112
      %v3494 = vpop.permute.xlu0 %3493
      %v3495 = vsel %vm1124, %v3480, %v3488
      %v3496 = vsel %vm1124, %v3482, %v3490
      %v3497 = vsel %vm1124, %v3484, %v3492
      %v3498 = vsel %vm1124, %v3486, %v3494
      %v3499 = vsel %vm1124, %v3488, %v3480
      %v3500 = vsel %vm1124, %v3490, %v3482
      %v3501 = vsel %vm1124, %v3492, %v3484
      %v3502 = vsel %vm1124, %v3494, %v3486
      %v3503 = vld [vmem:[%s1127] sm:$0x3]
      %v3505 = vlaneseq
      %v3506 = vshrl.u32 %v3505, 7
      %v3507 = vsub.s32 0, %v3506
      %v3508 = vrot.slane %v3503, %v3507
      %v3509 = vlaneseq
      %v3510 = vshrl.u32 %v3509, 7
      %v3511 = vsub.s32 1, %v3510
      %v3512 = vrot.slane %v3503, %v3511
      %v3515 = vmul.f32 %v3495, %v3508
      %v3516 = vmul.f32 %v3499, %v3512
      %v3517 = vmul.f32 %v3496, %v3508
      %v3518 = vmul.f32 %v3500, %v3512
      %v3519 = vmul.f32 %v3497, %v3508
      %v3520 = vmul.f32 %v3501, %v3512
      %v3521 = vmul.f32 %v3498, %v3508
      %v3522 = vmul.f32 %v3502, %v3512
      %3523 = vst [vmem:[#allocation2 + $0x1c0] sm:$0xff] %v3515
      %3524 = vst [vmem:[#allocation2 + $0x1c8] sm:$0xff] %v3516
      %3525 = vst [vmem:[#allocation2 + $0x1d0] sm:$0xff] %v3517
      %3526 = vst [vmem:[#allocation2 + $0x1d8] sm:$0xff] %v3518
      %3527 = vst [vmem:[#allocation2 + $0x1e0] sm:$0xff] %v3519
      %3528 = vst [vmem:[#allocation2 + $0x1e8] sm:$0xff] %v3520
      %3529 = vst [vmem:[#allocation2 + $0x1f0] sm:$0xff] %v3521
      %3530 = vst [vmem:[#allocation2 + $0x1f8] sm:$0xff] %v3522
      %3531 = vrot.lane.b32.xlu0 %v3142, 111
      %v3532 = vpop.permute.xlu0 %3531
      %3533 = vrot.lane.b32.xlu0 %v3144, 111
      %v3534 = vpop.permute.xlu0 %3533
      %3535 = vrot.lane.b32.xlu0 %v3146, 111
      %v3536 = vpop.permute.xlu0 %3535
      %3537 = vrot.lane.b32.xlu0 %v3148, 111
      %v3538 = vpop.permute.xlu0 %3537
      %3539 = vrot.lane.b32.xlu0 %v3143, 111
      %v3540 = vpop.permute.xlu0 %3539
      %3541 = vrot.lane.b32.xlu0 %v3145, 111
      %v3542 = vpop.permute.xlu0 %3541
      %3543 = vrot.lane.b32.xlu0 %v3147, 111
      %v3544 = vpop.permute.xlu0 %3543
      %3545 = vrot.lane.b32.xlu0 %v3149, 111
      %v3546 = vpop.permute.xlu0 %3545
      %v3547 = vsel %vm1160, %v3532, %v3540
      %v3548 = vsel %vm1160, %v3534, %v3542
      %v3549 = vsel %vm1160, %v3536, %v3544
      %v3550 = vsel %vm1160, %v3538, %v3546
      %v3551 = vsel %vm1160, %v3540, %v3532
      %v3552 = vsel %vm1160, %v3542, %v3534
      %v3553 = vsel %vm1160, %v3544, %v3536
      %v3554 = vsel %vm1160, %v3546, %v3538
      %v3555 = vld [vmem:[%s1163] sm:$0x3]
      %v3557 = vlaneseq
      %v3558 = vshrl.u32 %v3557, 7
      %v3559 = vsub.s32 0, %v3558
      %v3560 = vrot.slane %v3555, %v3559
      %v3561 = vlaneseq
      %v3562 = vshrl.u32 %v3561, 7
      %v3563 = vsub.s32 1, %v3562
      %v3564 = vrot.slane %v3555, %v3563
      %v3567 = vmul.f32 %v3547, %v3560
      %v3568 = vmul.f32 %v3551, %v3564
      %v3569 = vmul.f32 %v3548, %v3560
      %v3570 = vmul.f32 %v3552, %v3564
      %v3571 = vmul.f32 %v3549, %v3560
      %v3572 = vmul.f32 %v3553, %v3564
      %v3573 = vmul.f32 %v3550, %v3560
      %v3574 = vmul.f32 %v3554, %v3564
      %3575 = vst [vmem:[#allocation2 + $0x200] sm:$0xff] %v3567
      %3576 = vst [vmem:[#allocation2 + $0x208] sm:$0xff] %v3568
      %3577 = vst [vmem:[#allocation2 + $0x210] sm:$0xff] %v3569
      %3578 = vst [vmem:[#allocation2 + $0x218] sm:$0xff] %v3570
      %3579 = vst [vmem:[#allocation2 + $0x220] sm:$0xff] %v3571
      %3580 = vst [vmem:[#allocation2 + $0x228] sm:$0xff] %v3572
      %3581 = vst [vmem:[#allocation2 + $0x230] sm:$0xff] %v3573
      %3582 = vst [vmem:[#allocation2 + $0x238] sm:$0xff] %v3574
      %v3583 = vld [vmem:[#allocation2] sm:$0xff]
      %v3584 = vld [vmem:[#allocation2 + $0x8] sm:$0xff]
      %v3585 = vld [vmem:[#allocation2 + $0x10] sm:$0xff]
      %v3586 = vld [vmem:[#allocation2 + $0x18] sm:$0xff]
      %v3587 = vld [vmem:[#allocation2 + $0x20] sm:$0xff]
      %v3588 = vld [vmem:[#allocation2 + $0x28] sm:$0xff]
      %v3589 = vld [vmem:[#allocation2 + $0x30] sm:$0xff]
      %v3590 = vld [vmem:[#allocation2 + $0x38] sm:$0xff]
      %v3591 = vld [vmem:[#allocation2 + $0x40] sm:$0xff]
      %v3592 = vld [vmem:[#allocation2 + $0x48] sm:$0xff]
      %v3593 = vld [vmem:[#allocation2 + $0x50] sm:$0xff]
      %v3594 = vld [vmem:[#allocation2 + $0x58] sm:$0xff]
      %v3595 = vld [vmem:[#allocation2 + $0x60] sm:$0xff]
      %v3596 = vld [vmem:[#allocation2 + $0x68] sm:$0xff]
      %v3597 = vld [vmem:[#allocation2 + $0x70] sm:$0xff]
      %v3598 = vld [vmem:[#allocation2 + $0x78] sm:$0xff]
      %v3599 = vld [vmem:[#allocation2 + $0x80] sm:$0xff]
      %v3600 = vld [vmem:[#allocation2 + $0x88] sm:$0xff]
      %v3601 = vld [vmem:[#allocation2 + $0x90] sm:$0xff]
      %v3602 = vld [vmem:[#allocation2 + $0x98] sm:$0xff]
      %v3603 = vld [vmem:[#allocation2 + $0xa0] sm:$0xff]
      %v3604 = vld [vmem:[#allocation2 + $0xa8] sm:$0xff]
      %v3605 = vld [vmem:[#allocation2 + $0xb0] sm:$0xff]
      %v3606 = vld [vmem:[#allocation2 + $0xb8] sm:$0xff]
      %v3607 = vld [vmem:[#allocation2 + $0xc0] sm:$0xff]
      %v3608 = vld [vmem:[#allocation2 + $0xc8] sm:$0xff]
      %v3609 = vld [vmem:[#allocation2 + $0xd0] sm:$0xff]
      %v3610 = vld [vmem:[#allocation2 + $0xd8] sm:$0xff]
      %v3611 = vld [vmem:[#allocation2 + $0xe0] sm:$0xff]
      %v3612 = vld [vmem:[#allocation2 + $0xe8] sm:$0xff]
      %v3613 = vld [vmem:[#allocation2 + $0xf0] sm:$0xff]
      %v3614 = vld [vmem:[#allocation2 + $0xf8] sm:$0xff]
      %v3615 = vld [vmem:[#allocation2 + $0x100] sm:$0xff]
      %v3616 = vld [vmem:[#allocation2 + $0x108] sm:$0xff]
      %v3617 = vld [vmem:[#allocation2 + $0x110] sm:$0xff]
      %v3618 = vld [vmem:[#allocation2 + $0x118] sm:$0xff]
      %v3619 = vld [vmem:[#allocation2 + $0x120] sm:$0xff]
      %v3620 = vld [vmem:[#allocation2 + $0x128] sm:$0xff]
      %v3621 = vld [vmem:[#allocation2 + $0x130] sm:$0xff]
      %v3622 = vld [vmem:[#allocation2 + $0x138] sm:$0xff]
      %v3623 = vld [vmem:[#allocation2 + $0x140] sm:$0xff]
      %v3624 = vld [vmem:[#allocation2 + $0x148] sm:$0xff]
      %v3625 = vld [vmem:[#allocation2 + $0x150] sm:$0xff]
      %v3626 = vld [vmem:[#allocation2 + $0x158] sm:$0xff]
      %v3627 = vld [vmem:[#allocation2 + $0x160] sm:$0xff]
      %v3628 = vld [vmem:[#allocation2 + $0x168] sm:$0xff]
      %v3629 = vld [vmem:[#allocation2 + $0x170] sm:$0xff]
      %v3630 = vld [vmem:[#allocation2 + $0x178] sm:$0xff]
      %v3631 = vld [vmem:[#allocation2 + $0x180] sm:$0xff]
      %v3632 = vld [vmem:[#allocation2 + $0x188] sm:$0xff]
      %v3633 = vld [vmem:[#allocation2 + $0x190] sm:$0xff]
      %v3634 = vld [vmem:[#allocation2 + $0x198] sm:$0xff]
      %v3635 = vld [vmem:[#allocation2 + $0x1a0] sm:$0xff]
      %v3636 = vld [vmem:[#allocation2 + $0x1a8] sm:$0xff]
      %v3637 = vld [vmem:[#allocation2 + $0x1b0] sm:$0xff]
      %v3638 = vld [vmem:[#allocation2 + $0x1b8] sm:$0xff]
      %v3639 = vld [vmem:[#allocation2 + $0x1c0] sm:$0xff]
      %v3640 = vld [vmem:[#allocation2 + $0x1c8] sm:$0xff]
      %v3641 = vld [vmem:[#allocation2 + $0x1d0] sm:$0xff]
      %v3642 = vld [vmem:[#allocation2 + $0x1d8] sm:$0xff]
      %v3643 = vld [vmem:[#allocation2 + $0x1e0] sm:$0xff]
      %v3644 = vld [vmem:[#allocation2 + $0x1e8] sm:$0xff]
      %v3645 = vld [vmem:[#allocation2 + $0x1f0] sm:$0xff]
      %v3646 = vld [vmem:[#allocation2 + $0x1f8] sm:$0xff]
      %v3647 = vld [vmem:[#allocation2 + $0x200] sm:$0xff]
      %v3648 = vld [vmem:[#allocation2 + $0x208] sm:$0xff]
      %v3649 = vld [vmem:[#allocation2 + $0x210] sm:$0xff]
      %v3650 = vld [vmem:[#allocation2 + $0x218] sm:$0xff]
      %v3651 = vld [vmem:[#allocation2 + $0x220] sm:$0xff]
      %v3652 = vld [vmem:[#allocation2 + $0x228] sm:$0xff]
      %v3653 = vld [vmem:[#allocation2 + $0x230] sm:$0xff]
      %v3654 = vld [vmem:[#allocation2 + $0x238] sm:$0xff]
      %v3655 = vpack.c.bf16 %v3585, %v3583
      %v3656 = vpack.c.bf16 %v3586, %v3584
      %v3657 = vpack.c.bf16 %v3589, %v3587
      %v3658 = vpack.c.bf16 %v3590, %v3588
      %v3659 = vpack.c.bf16 %v3593, %v3591
      %v3660 = vpack.c.bf16 %v3594, %v3592
      %v3661 = vpack.c.bf16 %v3597, %v3595
      %v3662 = vpack.c.bf16 %v3598, %v3596
      %v3663 = vpack.c.bf16 %v3601, %v3599
      %v3664 = vpack.c.bf16 %v3602, %v3600
      %v3665 = vpack.c.bf16 %v3605, %v3603
      %v3666 = vpack.c.bf16 %v3606, %v3604
      %v3667 = vpack.c.bf16 %v3609, %v3607
      %v3668 = vpack.c.bf16 %v3610, %v3608
      %v3669 = vpack.c.bf16 %v3613, %v3611
      %v3670 = vpack.c.bf16 %v3614, %v3612
      %v3671 = vpack.c.bf16 %v3617, %v3615
      %v3672 = vpack.c.bf16 %v3618, %v3616
      %v3673 = vpack.c.bf16 %v3621, %v3619
      %v3674 = vpack.c.bf16 %v3622, %v3620
      %v3675 = vpack.c.bf16 %v3625, %v3623
      %v3676 = vpack.c.bf16 %v3626, %v3624
      %v3677 = vpack.c.bf16 %v3629, %v3627
      %v3678 = vpack.c.bf16 %v3630, %v3628
      %v3679 = vpack.c.bf16 %v3633, %v3631
      %v3680 = vpack.c.bf16 %v3634, %v3632
      %v3681 = vpack.c.bf16 %v3637, %v3635
      %v3682 = vpack.c.bf16 %v3638, %v3636
      %v3683 = vpack.c.bf16 %v3641, %v3639
      %v3684 = vpack.c.bf16 %v3642, %v3640
      %v3685 = vpack.c.bf16 %v3645, %v3643
      %v3686 = vpack.c.bf16 %v3646, %v3644
      %v3687 = vpack.c.bf16 %v3649, %v3647
      %v3688 = vpack.c.bf16 %v3650, %v3648
      %v3689 = vpack.c.bf16 %v3653, %v3651
      %v3690 = vpack.c.bf16 %v3654, %v3652
      %v3699 = vunpack.c.l.b16 %v3151
      %v3700 = vunpack.c.h.b16 %v3151
      %v3701 = vunpack.c.l.b16 %v3152
      %v3702 = vunpack.c.l.b16 %v3153
      %v3703 = vunpack.c.h.b16 %v3153
      %v3704 = vunpack.c.l.b16 %v3154
      %v3705 = vunpack.c.l.b16 %v3155
      %v3706 = vunpack.c.h.b16 %v3155
      %v3707 = vunpack.c.l.b16 %v3156
      %v3708 = vunpack.c.l.b16 %v3157
      %v3709 = vunpack.c.h.b16 %v3157
      %v3710 = vunpack.c.l.b16 %v3158
      %v3711 = vpack.c.b16 %v3702, %v3699
      %v3712 = vpack.c.b16 %v3703, %v3700
      %v3713 = vpack.c.b16 %v3704, %v3701
      %v3714 = vpack.c.b16 %v3708, %v3705
      %v3715 = vpack.c.b16 %v3709, %v3706
      %v3716 = vpack.c.b16 %v3710, %v3707
      %v3722 = vsel %vm1367, %v3713, 0
      %v3725 = vsel %vm1367, %v3716, 0
      %3727 = vmatprep.subr.bf16.mxu0 %v3656
      %3728 = vmatpush1.bf16.msra.mxu0 %v3655
      %3729 = vmatprep.subr.bf16.mxu0 %v3658
      %3730 = vmatpush1.bf16.msra.mxu0 %v3657
      %3731 = vmatprep.subr.bf16.mxu0 %v3660
      %3732 = vmatpush1.bf16.msra.mxu0 %v3659
      %3733 = vmatprep.subr.bf16.mxu0 %v3662
      %3734 = vmatpush1.bf16.msra.mxu0 %v3661
      %3735 = vmatprep.subr.bf16.mxu0 %v3664
      %3736 = vmatpush1.bf16.msra.mxu0 %v3663
      %3737 = vmatprep.subr.bf16.mxu0 %v3666
      %3738 = vmatpush1.bf16.msra.mxu0 %v3665
      %3739 = vmatprep.subr.bf16.mxu0 %v3668
      %3740 = vmatpush1.bf16.msra.mxu0 %v3667
      %3741 = vmatprep.subr.bf16.mxu0 %v3670
      %3742 = vmatpush1.bf16.msra.mxu0 %v3669
      %3743 = vmatprep.subr.bf16.mxu0 %v3672
      %3744 = vmatpush1.bf16.msra.mxu0 %v3671
      %3745 = vmatprep.subr.bf16.mxu0 %v3674
      %3746 = vmatpush1.bf16.msra.mxu0 %v3673
      %3747 = vmatprep.subr.bf16.mxu0 %v3676
      %3748 = vmatpush1.bf16.msra.mxu0 %v3675
      %3749 = vmatprep.subr.bf16.mxu0 %v3678
      %3750 = vmatpush1.bf16.msra.mxu0 %v3677
      %3751 = vmatprep.subr.bf16.mxu0 %v3680
      %3752 = vmatpush1.bf16.msra.mxu0 %v3679
      %3753 = vmatprep.subr.bf16.mxu0 %v3682
      %3754 = vmatpush1.bf16.msra.mxu0 %v3681
      %3755 = vmatprep.subr.bf16.mxu0 %v3684
      %3756 = vmatpush1.bf16.msra.mxu0 %v3683
      %3757 = vmatprep.subr.bf16.mxu0 %v3686
      %3758 = vmatpush1.bf16.msra.mxu0 %v3685
      %3759 = vmatprep.mubr.bf16.mxu0 %v3712
      %3760 = vmatmul.mubr.bf16.gmra.mrb[0].mxu0 %v3711
      %v3761 = vpop.f32.mrb[0].mxu0
      %v3762 = vadd.f32 0.0, %v3761
      %v3763 = vpop.f32.mrb[0].mxu0
      %v3764 = vadd.f32 0.0, %v3763
      %v3765 = vpop.f32.mrb[0].mxu0
      %v3766 = vadd.f32 0.0, %v3765
      %v3767 = vpop.f32.mrb[0].mxu0
      %v3768 = vadd.f32 0.0, %v3767
      %3769 = vmatprep.mubr.bf16.mxu0 %v3715
      %3770 = vmatmul.mubr.bf16.gmra.mrb[0].mxu0 %v3714
      %v3771 = vpop.f32.mrb[0].mxu0
      %v3772 = vadd.f32 0.0, %v3771
      %v3773 = vpop.f32.mrb[0].mxu0
      %v3774 = vadd.f32 0.0, %v3773
      %v3775 = vpop.f32.mrb[0].mxu0
      %v3776 = vadd.f32 0.0, %v3775
      %v3777 = vpop.f32.mrb[0].mxu0
      %v3778 = vadd.f32 0.0, %v3777
      %3779 = vdwg.mxu0
      %3780 = vmatprep.subr.bf16.mxu0 %v3688
      %3781 = vmatpush1.bf16.msra.mxu0 %v3687
      %3782 = vmatprep.subr.bf16.mxu0 %v3690
      %3783 = vmatpush1.bf16.msra.mxu0 %v3689
      %3784 = vmatprep.subr.bf16.mxu0 0
      %3785 = vmatpush1.bf16.msra.mxu0 0
      %3786 = vmatprep.subr.bf16.mxu0 0
      %3787 = vmatpush1.bf16.msra.mxu0 0
      %3788 = vmatprep.subr.bf16.mxu0 0
      %3789 = vmatpush1.bf16.msra.mxu0 0
      %3790 = vmatprep.subr.bf16.mxu0 0
      %3791 = vmatpush1.bf16.msra.mxu0 0
      %3792 = vmatprep.subr.bf16.mxu0 0
      %3793 = vmatpush1.bf16.msra.mxu0 0
      %3794 = vmatprep.subr.bf16.mxu0 0
      %3795 = vmatpush1.bf16.msra.mxu0 0
      %3796 = vmatprep.subr.bf16.mxu0 0
      %3797 = vmatpush1.bf16.msra.mxu0 0
      %3798 = vmatprep.subr.bf16.mxu0 0
      %3799 = vmatpush1.bf16.msra.mxu0 0
      %3800 = vmatprep.subr.bf16.mxu0 0
      %3801 = vmatpush1.bf16.msra.mxu0 0
      %3802 = vmatprep.subr.bf16.mxu0 0
      %3803 = vmatpush1.bf16.msra.mxu0 0
      %3804 = vmatprep.subr.bf16.mxu0 0
      %3805 = vmatpush1.bf16.msra.mxu0 0
      %3806 = vmatprep.subr.bf16.mxu0 0
      %3807 = vmatpush1.bf16.msra.mxu0 0
      %3808 = vmatprep.subr.bf16.mxu0 0
      %3809 = vmatpush1.bf16.msra.mxu0 0
      %3810 = vmatprep.subr.bf16.mxu0 0
      %3811 = vmatpush1.bf16.msra.mxu0 0
      %3812 = vmatprep.mubr.bf16.mxu0 0
      %3813 = vmatmul.mubr.bf16.gmra.mrb[0].mxu0 %v3722
      %v3814 = vpop.f32.mrb[0].mxu0
      %v3815 = vadd.f32 %v3762, %v3814
      %v3816 = vpop.f32.mrb[0].mxu0
      %v3817 = vadd.f32 %v3764, %v3816
      %v3818 = vpop.f32.mrb[0].mxu0
      %v3819 = vadd.f32 %v3766, %v3818
      %v3820 = vpop.f32.mrb[0].mxu0
      %v3821 = vadd.f32 %v3768, %v3820
      %3822 = vmatprep.mubr.bf16.mxu0 0
      %3823 = vmatmul.mubr.bf16.gmra.mrb[0].mxu0 %v3725
      %v3824 = vpop.f32.mrb[0].mxu0
      %v3825 = vadd.f32 %v3772, %v3824
      %v3826 = vpop.f32.mrb[0].mxu0
      %v3827 = vadd.f32 %v3774, %v3826
      %v3828 = vpop.f32.mrb[0].mxu0
      %v3829 = vadd.f32 %v3776, %v3828
      %v3830 = vpop.f32.mrb[0].mxu0
      %v3831 = vadd.f32 %v3778, %v3830
      %3832 = vdwg.mxu0
      %s3833 = scalar_lea.vmem %s13, 32
      %v3834 = vld [vmem:[%s3833] sm:$0xff]
      %v3835 = vld [vmem:[%s3833 + $0x8] sm:$0xff]
      %v3836 = vld [vmem:[%s3833 + $0x10] sm:$0xff]
      %v3837 = vld [vmem:[%s3833 + $0x18] sm:$0xff]
      %3839 = vset.pattern.permute.xlu0 0
      %3840 = vperm.xlu0 %3839, %v3834
      %v3841 = vpop.permute.xlu0 %3840
      %3844 = vset.pattern.permute.xlu0 0
      %3845 = vperm.xlu0 %3844, %v3835
      %v3846 = vpop.permute.xlu0 %3845
      %3849 = vset.pattern.permute.xlu0 0
      %3850 = vperm.xlu0 %3849, %v3836
      %v3851 = vpop.permute.xlu0 %3850
      %3854 = vset.pattern.permute.xlu0 0
      %3855 = vperm.xlu0 %3854, %v3837
      %v3856 = vpop.permute.xlu0 %3855
      %v3858 = vmul.f32 %v3815, %v3841
      %v3859 = vmul.f32 %v3817, %v3841
      %v3860 = vmul.f32 %v3819, %v3846
      %v3861 = vmul.f32 %v3821, %v3846
      %v3862 = vmul.f32 %v3825, %v3851
      %v3863 = vmul.f32 %v3827, %v3851
      %v3864 = vmul.f32 %v3829, %v3856
      %v3865 = vmul.f32 %v3831, %v3856
      %s3866 = scalar_lea.vmem %s14, 32
      %v3867 = vld [vmem:[%s3866] sm:$0xff]
      %v3868 = vld [vmem:[%s3866 + $0x8] sm:$0xff]
      %v3869 = vld [vmem:[%s3866 + $0x10] sm:$0xff]
      %v3870 = vld [vmem:[%s3866 + $0x18] sm:$0xff]
      %3872 = vset.pattern.permute.xlu0 0
      %3873 = vperm.xlu0 %3872, %v3867
      %v3874 = vpop.permute.xlu0 %3873
      %3877 = vset.pattern.permute.xlu0 0
      %3878 = vperm.xlu0 %3877, %v3868
      %v3879 = vpop.permute.xlu0 %3878
      %3882 = vset.pattern.permute.xlu0 0
      %3883 = vperm.xlu0 %3882, %v3869
      %v3884 = vpop.permute.xlu0 %3883
      %3887 = vset.pattern.permute.xlu0 0
      %3888 = vperm.xlu0 %3887, %v3870
      %v3889 = vpop.permute.xlu0 %3888
      %v3891 = vadd.f32 %v3858, %v3874
      %v3892 = vadd.f32 %v3859, %v3874
      %v3893 = vadd.f32 %v3860, %v3879
      %v3894 = vadd.f32 %v3861, %v3879
      %v3895 = vadd.f32 %v3862, %v3884
      %v3896 = vadd.f32 %v3863, %v3884
      %v3897 = vadd.f32 %v3864, %v3889
      %v3898 = vadd.f32 %v3865, %v3889
      %v3899 = vmax.f32 %v3891, 0.0
      %v3900 = vmax.f32 %v3892, 0.0
      %v3901 = vmax.f32 %v3893, 0.0
      %v3902 = vmax.f32 %v3894, 0.0
      %v3903 = vmax.f32 %v3895, 0.0
      %v3904 = vmax.f32 %v3896, 0.0
      %v3905 = vmax.f32 %v3897, 0.0
      %v3906 = vmax.f32 %v3898, 0.0
      %s3907 = scalar_lea.vmem %s15, 48
      %v3908 = vld [vmem:[%s3907] sm:$0xff]
      %v3909 = vld [vmem:[%s3907 + $0x8] sm:$0xf]
      %v3910 = vld [vmem:[%s3907 + $0xc] sm:$0xff]
      %v3911 = vld [vmem:[%s3907 + $0x14] sm:$0xf]
      %v3912 = vld [vmem:[%s3907 + $0x18] sm:$0xff]
      %v3913 = vld [vmem:[%s3907 + $0x20] sm:$0xf]
      %v3914 = vld [vmem:[%s3907 + $0x24] sm:$0xff]
      %v3915 = vld [vmem:[%s3907 + $0x2c] sm:$0xf]
      %3916 = vrot.lane.b32.xlu0 %v3899, 17
      %v3917 = vpop.permute.xlu0 %3916
      %3918 = vrot.lane.b32.xlu0 %v3901, 17
      %v3919 = vpop.permute.xlu0 %3918
      %3920 = vrot.lane.b32.xlu0 %v3903, 17
      %v3921 = vpop.permute.xlu0 %3920
      %3922 = vrot.lane.b32.xlu0 %v3905, 17
      %v3923 = vpop.permute.xlu0 %3922
      %3924 = vrot.lane.b32.xlu0 %v3900, 17
      %v3925 = vpop.permute.xlu0 %3924
      %3926 = vrot.lane.b32.xlu0 %v3902, 17
      %v3927 = vpop.permute.xlu0 %3926
      %3928 = vrot.lane.b32.xlu0 %v3904, 17
      %v3929 = vpop.permute.xlu0 %3928
      %3930 = vrot.lane.b32.xlu0 %v3906, 17
      %v3931 = vpop.permute.xlu0 %3930
      %v3932 = vsel %vm897, %v3917, %v3925
      %v3933 = vsel %vm897, %v3919, %v3927
      %v3934 = vsel %vm897, %v3921, %v3929
      %v3935 = vsel %vm897, %v3923, %v3931
      %v3936 = vsel %vm897, %v3925, %v3917
      %v3937 = vsel %vm897, %v3927, %v3919
      %v3938 = vsel %vm897, %v3929, %v3921
      %v3939 = vsel %vm897, %v3931, %v3923
      %v3940 = vld [vmem:[%s2] sm:$0x3]
      %v3942 = vlaneseq
      %v3943 = vshrl.u32 %v3942, 7
      %v3944 = vsub.s32 0, %v3943
      %v3945 = vrot.slane %v3940, %v3944
      %v3946 = vlaneseq
      %v3947 = vshrl.u32 %v3946, 7
      %v3948 = vsub.s32 1, %v3947
      %v3949 = vrot.slane %v3940, %v3948
      %v3952 = vmul.f32 %v3936, %v3945
      %v3953 = vmul.f32 %v3932, %v3949
      %v3954 = vmul.f32 %v3937, %v3945
      %v3955 = vmul.f32 %v3933, %v3949
      %v3956 = vmul.f32 %v3938, %v3945
      %v3957 = vmul.f32 %v3934, %v3949
      %v3958 = vmul.f32 %v3939, %v3945
      %v3959 = vmul.f32 %v3935, %v3949
      %3960 = vst [vmem:[#allocation2] sm:$0xff] %v3952
      %3961 = vst [vmem:[#allocation2 + $0x8] sm:$0xff] %v3953
      %3962 = vst [vmem:[#allocation2 + $0x10] sm:$0xff] %v3954
      %3963 = vst [vmem:[#allocation2 + $0x18] sm:$0xff] %v3955
      %3964 = vst [vmem:[#allocation2 + $0x20] sm:$0xff] %v3956
      %3965 = vst [vmem:[#allocation2 + $0x28] sm:$0xff] %v3957
      %3966 = vst [vmem:[#allocation2 + $0x30] sm:$0xff] %v3958
      %3967 = vst [vmem:[#allocation2 + $0x38] sm:$0xff] %v3959
      %3968 = vrot.lane.b32.xlu0 %v3899, 16
      %v3969 = vpop.permute.xlu0 %3968
      %3970 = vrot.lane.b32.xlu0 %v3901, 16
      %v3971 = vpop.permute.xlu0 %3970
      %3972 = vrot.lane.b32.xlu0 %v3903, 16
      %v3973 = vpop.permute.xlu0 %3972
      %3974 = vrot.lane.b32.xlu0 %v3905, 16
      %v3975 = vpop.permute.xlu0 %3974
      %3976 = vrot.lane.b32.xlu0 %v3900, 16
      %v3977 = vpop.permute.xlu0 %3976
      %3978 = vrot.lane.b32.xlu0 %v3902, 16
      %v3979 = vpop.permute.xlu0 %3978
      %3980 = vrot.lane.b32.xlu0 %v3904, 16
      %v3981 = vpop.permute.xlu0 %3980
      %3982 = vrot.lane.b32.xlu0 %v3906, 16
      %v3983 = vpop.permute.xlu0 %3982
      %v3984 = vsel %vm932, %v3969, %v3977
      %v3985 = vsel %vm932, %v3971, %v3979
      %v3986 = vsel %vm932, %v3973, %v3981
      %v3987 = vsel %vm932, %v3975, %v3983
      %v3988 = vsel %vm932, %v3977, %v3969
      %v3989 = vsel %vm932, %v3979, %v3971
      %v3990 = vsel %vm932, %v3981, %v3973
      %v3991 = vsel %vm932, %v3983, %v3975
      %v3992 = vld [vmem:[%s935] sm:$0x3]
      %v3994 = vlaneseq
      %v3995 = vshrl.u32 %v3994, 7
      %v3996 = vsub.s32 0, %v3995
      %v3997 = vrot.slane %v3992, %v3996
      %v3998 = vlaneseq
      %v3999 = vshrl.u32 %v3998, 7
      %v4000 = vsub.s32 1, %v3999
      %v4001 = vrot.slane %v3992, %v4000
      %v4004 = vmul.f32 %v3988, %v3997
      %v4005 = vmul.f32 %v3984, %v4001
      %v4006 = vmul.f32 %v3989, %v3997
      %v4007 = vmul.f32 %v3985, %v4001
      %v4008 = vmul.f32 %v3990, %v3997
      %v4009 = vmul.f32 %v3986, %v4001
      %v4010 = vmul.f32 %v3991, %v3997
      %v4011 = vmul.f32 %v3987, %v4001
      %4012 = vst [vmem:[#allocation2 + $0x40] sm:$0xff] %v4004
      %4013 = vst [vmem:[#allocation2 + $0x48] sm:$0xff] %v4005
      %4014 = vst [vmem:[#allocation2 + $0x50] sm:$0xff] %v4006
      %4015 = vst [vmem:[#allocation2 + $0x58] sm:$0xff] %v4007
      %4016 = vst [vmem:[#allocation2 + $0x60] sm:$0xff] %v4008
      %4017 = vst [vmem:[#allocation2 + $0x68] sm:$0xff] %v4009
      %4018 = vst [vmem:[#allocation2 + $0x70] sm:$0xff] %v4010
      %4019 = vst [vmem:[#allocation2 + $0x78] sm:$0xff] %v4011
      %4020 = vrot.lane.b32.xlu0 %v3899, 15
      %v4021 = vpop.permute.xlu0 %4020
      %4022 = vrot.lane.b32.xlu0 %v3901, 15
      %v4023 = vpop.permute.xlu0 %4022
      %4024 = vrot.lane.b32.xlu0 %v3903, 15
      %v4025 = vpop.permute.xlu0 %4024
      %4026 = vrot.lane.b32.xlu0 %v3905, 15
      %v4027 = vpop.permute.xlu0 %4026
      %4028 = vrot.lane.b32.xlu0 %v3900, 15
      %v4029 = vpop.permute.xlu0 %4028
      %4030 = vrot.lane.b32.xlu0 %v3902, 15
      %v4031 = vpop.permute.xlu0 %4030
      %4032 = vrot.lane.b32.xlu0 %v3904, 15
      %v4033 = vpop.permute.xlu0 %4032
      %4034 = vrot.lane.b32.xlu0 %v3906, 15
      %v4035 = vpop.permute.xlu0 %4034
      %v4036 = vsel %vm968, %v4021, %v4029
      %v4037 = vsel %vm968, %v4023, %v4031
      %v4038 = vsel %vm968, %v4025, %v4033
      %v4039 = vsel %vm968, %v4027, %v4035
      %v4040 = vsel %vm968, %v4029, %v4021
      %v4041 = vsel %vm968, %v4031, %v4023
      %v4042 = vsel %vm968, %v4033, %v4025
      %v4043 = vsel %vm968, %v4035, %v4027
      %v4044 = vld [vmem:[%s971] sm:$0x3]
      %v4046 = vlaneseq
      %v4047 = vshrl.u32 %v4046, 7
      %v4048 = vsub.s32 0, %v4047
      %v4049 = vrot.slane %v4044, %v4048
      %v4050 = vlaneseq
      %v4051 = vshrl.u32 %v4050, 7
      %v4052 = vsub.s32 1, %v4051
      %v4053 = vrot.slane %v4044, %v4052
      %v4056 = vmul.f32 %v4040, %v4049
      %v4057 = vmul.f32 %v4036, %v4053
      %v4058 = vmul.f32 %v4041, %v4049
      %v4059 = vmul.f32 %v4037, %v4053
      %v4060 = vmul.f32 %v4042, %v4049
      %v4061 = vmul.f32 %v4038, %v4053
      %v4062 = vmul.f32 %v4043, %v4049
      %v4063 = vmul.f32 %v4039, %v4053
      %4064 = vst [vmem:[#allocation2 + $0x80] sm:$0xff] %v4056
      %4065 = vst [vmem:[#allocation2 + $0x88] sm:$0xff] %v4057
      %4066 = vst [vmem:[#allocation2 + $0x90] sm:$0xff] %v4058
      %4067 = vst [vmem:[#allocation2 + $0x98] sm:$0xff] %v4059
      %4068 = vst [vmem:[#allocation2 + $0xa0] sm:$0xff] %v4060
      %4069 = vst [vmem:[#allocation2 + $0xa8] sm:$0xff] %v4061
      %4070 = vst [vmem:[#allocation2 + $0xb0] sm:$0xff] %v4062
      %4071 = vst [vmem:[#allocation2 + $0xb8] sm:$0xff] %v4063
      %4072 = vrot.lane.b32.xlu0 %v3899, 1
      %v4073 = vpop.permute.xlu0 %4072
      %4074 = vrot.lane.b32.xlu0 %v3901, 1
      %v4075 = vpop.permute.xlu0 %4074
      %4076 = vrot.lane.b32.xlu0 %v3903, 1
      %v4077 = vpop.permute.xlu0 %4076
      %4078 = vrot.lane.b32.xlu0 %v3905, 1
      %v4079 = vpop.permute.xlu0 %4078
      %4080 = vrot.lane.b32.xlu0 %v3900, 1
      %v4081 = vpop.permute.xlu0 %4080
      %4082 = vrot.lane.b32.xlu0 %v3902, 1
      %v4083 = vpop.permute.xlu0 %4082
      %4084 = vrot.lane.b32.xlu0 %v3904, 1
      %v4085 = vpop.permute.xlu0 %4084
      %4086 = vrot.lane.b32.xlu0 %v3906, 1
      %v4087 = vpop.permute.xlu0 %4086
      %v4088 = vsel %vm1004, %v4073, %v4081
      %v4089 = vsel %vm1004, %v4075, %v4083
      %v4090 = vsel %vm1004, %v4077, %v4085
      %v4091 = vsel %vm1004, %v4079, %v4087
      %v4092 = vsel %vm1004, %v4081, %v4073
      %v4093 = vsel %vm1004, %v4083, %v4075
      %v4094 = vsel %vm1004, %v4085, %v4077
      %v4095 = vsel %vm1004, %v4087, %v4079
      %v4096 = vld [vmem:[%s1007] sm:$0x3]
      %v4098 = vlaneseq
      %v4099 = vshrl.u32 %v4098, 7
      %v4100 = vsub.s32 0, %v4099
      %v4101 = vrot.slane %v4096, %v4100
      %v4102 = vlaneseq
      %v4103 = vshrl.u32 %v4102, 7
      %v4104 = vsub.s32 1, %v4103
      %v4105 = vrot.slane %v4096, %v4104
      %v4108 = vmul.f32 %v4092, %v4101
      %v4109 = vmul.f32 %v4088, %v4105
      %v4110 = vmul.f32 %v4093, %v4101
      %v4111 = vmul.f32 %v4089, %v4105
      %v4112 = vmul.f32 %v4094, %v4101
      %v4113 = vmul.f32 %v4090, %v4105
      %v4114 = vmul.f32 %v4095, %v4101
      %v4115 = vmul.f32 %v4091, %v4105
      %4116 = vst [vmem:[#allocation2 + $0xc0] sm:$0xff] %v4108
      %4117 = vst [vmem:[#allocation2 + $0xc8] sm:$0xff] %v4109
      %4118 = vst [vmem:[#allocation2 + $0xd0] sm:$0xff] %v4110
      %4119 = vst [vmem:[#allocation2 + $0xd8] sm:$0xff] %v4111
      %4120 = vst [vmem:[#allocation2 + $0xe0] sm:$0xff] %v4112
      %4121 = vst [vmem:[#allocation2 + $0xe8] sm:$0xff] %v4113
      %4122 = vst [vmem:[#allocation2 + $0xf0] sm:$0xff] %v4114
      %4123 = vst [vmem:[#allocation2 + $0xf8] sm:$0xff] %v4115
      %4124 = vst [vmem:[#allocation2 + $0x100] sm:$0xff] %v3899
      %4125 = vst [vmem:[#allocation2 + $0x108] sm:$0xff] %v3900
      %4126 = vst [vmem:[#allocation2 + $0x110] sm:$0xff] %v3901
      %4127 = vst [vmem:[#allocation2 + $0x118] sm:$0xff] %v3902
      %4128 = vst [vmem:[#allocation2 + $0x120] sm:$0xff] %v3903
      %4129 = vst [vmem:[#allocation2 + $0x128] sm:$0xff] %v3904
      %4130 = vst [vmem:[#allocation2 + $0x130] sm:$0xff] %v3905
      %4131 = vst [vmem:[#allocation2 + $0x138] sm:$0xff] %v3906
      %4132 = vrot.lane.b32.xlu0 %v3899, 127
      %v4133 = vpop.permute.xlu0 %4132
      %4134 = vrot.lane.b32.xlu0 %v3901, 127
      %v4135 = vpop.permute.xlu0 %4134
      %4136 = vrot.lane.b32.xlu0 %v3903, 127
      %v4137 = vpop.permute.xlu0 %4136
      %4138 = vrot.lane.b32.xlu0 %v3905, 127
      %v4139 = vpop.permute.xlu0 %4138
      %4140 = vrot.lane.b32.xlu0 %v3900, 127
      %v4141 = vpop.permute.xlu0 %4140
      %4142 = vrot.lane.b32.xlu0 %v3902, 127
      %v4143 = vpop.permute.xlu0 %4142
      %4144 = vrot.lane.b32.xlu0 %v3904, 127
      %v4145 = vpop.permute.xlu0 %4144
      %4146 = vrot.lane.b32.xlu0 %v3906, 127
      %v4147 = vpop.permute.xlu0 %4146
      %v4148 = vsel %vm1052, %v4133, %v4141
      %v4149 = vsel %vm1052, %v4135, %v4143
      %v4150 = vsel %vm1052, %v4137, %v4145
      %v4151 = vsel %vm1052, %v4139, %v4147
      %v4152 = vsel %vm1052, %v4141, %v4133
      %v4153 = vsel %vm1052, %v4143, %v4135
      %v4154 = vsel %vm1052, %v4145, %v4137
      %v4155 = vsel %vm1052, %v4147, %v4139
      %v4156 = vld [vmem:[%s1055] sm:$0x3]
      %v4158 = vlaneseq
      %v4159 = vshrl.u32 %v4158, 7
      %v4160 = vsub.s32 0, %v4159
      %v4161 = vrot.slane %v4156, %v4160
      %v4162 = vlaneseq
      %v4163 = vshrl.u32 %v4162, 7
      %v4164 = vsub.s32 1, %v4163
      %v4165 = vrot.slane %v4156, %v4164
      %v4168 = vmul.f32 %v4148, %v4161
      %v4169 = vmul.f32 %v4152, %v4165
      %v4170 = vmul.f32 %v4149, %v4161
      %v4171 = vmul.f32 %v4153, %v4165
      %v4172 = vmul.f32 %v4150, %v4161
      %v4173 = vmul.f32 %v4154, %v4165
      %v4174 = vmul.f32 %v4151, %v4161
      %v4175 = vmul.f32 %v4155, %v4165
      %4176 = vst [vmem:[#allocation2 + $0x140] sm:$0xff] %v4168
      %4177 = vst [vmem:[#allocation2 + $0x148] sm:$0xff] %v4169
      %4178 = vst [vmem:[#allocation2 + $0x150] sm:$0xff] %v4170
      %4179 = vst [vmem:[#allocation2 + $0x158] sm:$0xff] %v4171
      %4180 = vst [vmem:[#allocation2 + $0x160] sm:$0xff] %v4172
      %4181 = vst [vmem:[#allocation2 + $0x168] sm:$0xff] %v4173
      %4182 = vst [vmem:[#allocation2 + $0x170] sm:$0xff] %v4174
      %4183 = vst [vmem:[#allocation2 + $0x178] sm:$0xff] %v4175
      %4184 = vrot.lane.b32.xlu0 %v3899, 113
      %v4185 = vpop.permute.xlu0 %4184
      %4186 = vrot.lane.b32.xlu0 %v3901, 113
      %v4187 = vpop.permute.xlu0 %4186
      %4188 = vrot.lane.b32.xlu0 %v3903, 113
      %v4189 = vpop.permute.xlu0 %4188
      %4190 = vrot.lane.b32.xlu0 %v3905, 113
      %v4191 = vpop.permute.xlu0 %4190
      %4192 = vrot.lane.b32.xlu0 %v3900, 113
      %v4193 = vpop.permute.xlu0 %4192
      %4194 = vrot.lane.b32.xlu0 %v3902, 113
      %v4195 = vpop.permute.xlu0 %4194
      %4196 = vrot.lane.b32.xlu0 %v3904, 113
      %v4197 = vpop.permute.xlu0 %4196
      %4198 = vrot.lane.b32.xlu0 %v3906, 113
      %v4199 = vpop.permute.xlu0 %4198
      %v4200 = vsel %vm1088, %v4185, %v4193
      %v4201 = vsel %vm1088, %v4187, %v4195
      %v4202 = vsel %vm1088, %v4189, %v4197
      %v4203 = vsel %vm1088, %v4191, %v4199
      %v4204 = vsel %vm1088, %v4193, %v4185
      %v4205 = vsel %vm1088, %v4195, %v4187
      %v4206 = vsel %vm1088, %v4197, %v4189
      %v4207 = vsel %vm1088, %v4199, %v4191
      %v4208 = vld [vmem:[%s1091] sm:$0x3]
      %v4210 = vlaneseq
      %v4211 = vshrl.u32 %v4210, 7
      %v4212 = vsub.s32 0, %v4211
      %v4213 = vrot.slane %v4208, %v4212
      %v4214 = vlaneseq
      %v4215 = vshrl.u32 %v4214, 7
      %v4216 = vsub.s32 1, %v4215
      %v4217 = vrot.slane %v4208, %v4216
      %v4220 = vmul.f32 %v4200, %v4213
      %v4221 = vmul.f32 %v4204, %v4217
      %v4222 = vmul.f32 %v4201, %v4213
      %v4223 = vmul.f32 %v4205, %v4217
      %v4224 = vmul.f32 %v4202, %v4213
      %v4225 = vmul.f32 %v4206, %v4217
      %v4226 = vmul.f32 %v4203, %v4213
      %v4227 = vmul.f32 %v4207, %v4217
      %4228 = vst [vmem:[#allocation2 + $0x180] sm:$0xff] %v4220
      %4229 = vst [vmem:[#allocation2 + $0x188] sm:$0xff] %v4221
      %4230 = vst [vmem:[#allocation2 + $0x190] sm:$0xff] %v4222
      %4231 = vst [vmem:[#allocation2 + $0x198] sm:$0xff] %v4223
      %4232 = vst [vmem:[#allocation2 + $0x1a0] sm:$0xff] %v4224
      %4233 = vst [vmem:[#allocation2 + $0x1a8] sm:$0xff] %v4225
      %4234 = vst [vmem:[#allocation2 + $0x1b0] sm:$0xff] %v4226
      %4235 = vst [vmem:[#allocation2 + $0x1b8] sm:$0xff] %v4227
      %4236 = vrot.lane.b32.xlu0 %v3899, 112
      %v4237 = vpop.permute.xlu0 %4236
      %4238 = vrot.lane.b32.xlu0 %v3901, 112
      %v4239 = vpop.permute.xlu0 %4238
      %4240 = vrot.lane.b32.xlu0 %v3903, 112
      %v4241 = vpop.permute.xlu0 %4240
      %4242 = vrot.lane.b32.xlu0 %v3905, 112
      %v4243 = vpop.permute.xlu0 %4242
      %4244 = vrot.lane.b32.xlu0 %v3900, 112
      %v4245 = vpop.permute.xlu0 %4244
      %4246 = vrot.lane.b32.xlu0 %v3902, 112
      %v4247 = vpop.permute.xlu0 %4246
      %4248 = vrot.lane.b32.xlu0 %v3904, 112
      %v4249 = vpop.permute.xlu0 %4248
      %4250 = vrot.lane.b32.xlu0 %v3906, 112
      %v4251 = vpop.permute.xlu0 %4250
      %v4252 = vsel %vm1124, %v4237, %v4245
      %v4253 = vsel %vm1124, %v4239, %v4247
      %v4254 = vsel %vm1124, %v4241, %v4249
      %v4255 = vsel %vm1124, %v4243, %v4251
      %v4256 = vsel %vm1124, %v4245, %v4237
      %v4257 = vsel %vm1124, %v4247, %v4239
      %v4258 = vsel %vm1124, %v4249, %v4241
      %v4259 = vsel %vm1124, %v4251, %v4243
      %v4260 = vld [vmem:[%s1127] sm:$0x3]
      %v4262 = vlaneseq
      %v4263 = vshrl.u32 %v4262, 7
      %v4264 = vsub.s32 0, %v4263
      %v4265 = vrot.slane %v4260, %v4264
      %v4266 = vlaneseq
      %v4267 = vshrl.u32 %v4266, 7
      %v4268 = vsub.s32 1, %v4267
      %v4269 = vrot.slane %v4260, %v4268
      %v4272 = vmul.f32 %v4252, %v4265
      %v4273 = vmul.f32 %v4256, %v4269
      %v4274 = vmul.f32 %v4253, %v4265
      %v4275 = vmul.f32 %v4257, %v4269
      %v4276 = vmul.f32 %v4254, %v4265
      %v4277 = vmul.f32 %v4258, %v4269
      %v4278 = vmul.f32 %v4255, %v4265
      %v4279 = vmul.f32 %v4259, %v4269
      %4280 = vst [vmem:[#allocation2 + $0x1c0] sm:$0xff] %v4272
      %4281 = vst [vmem:[#allocation2 + $0x1c8] sm:$0xff] %v4273
      %4282 = vst [vmem:[#allocation2 + $0x1d0] sm:$0xff] %v4274
      %4283 = vst [vmem:[#allocation2 + $0x1d8] sm:$0xff] %v4275
      %4284 = vst [vmem:[#allocation2 + $0x1e0] sm:$0xff] %v4276
      %4285 = vst [vmem:[#allocation2 + $0x1e8] sm:$0xff] %v4277
      %4286 = vst [vmem:[#allocation2 + $0x1f0] sm:$0xff] %v4278
      %4287 = vst [vmem:[#allocation2 + $0x1f8] sm:$0xff] %v4279
      %4288 = vrot.lane.b32.xlu0 %v3899, 111
      %v4289 = vpop.permute.xlu0 %4288
      %4290 = vrot.lane.b32.xlu0 %v3901, 111
      %v4291 = vpop.permute.xlu0 %4290
      %4292 = vrot.lane.b32.xlu0 %v3903, 111
      %v4293 = vpop.permute.xlu0 %4292
      %4294 = vrot.lane.b32.xlu0 %v3905, 111
      %v4295 = vpop.permute.xlu0 %4294
      %4296 = vrot.lane.b32.xlu0 %v3900, 111
      %v4297 = vpop.permute.xlu0 %4296
      %4298 = vrot.lane.b32.xlu0 %v3902, 111
      %v4299 = vpop.permute.xlu0 %4298
      %4300 = vrot.lane.b32.xlu0 %v3904, 111
      %v4301 = vpop.permute.xlu0 %4300
      %4302 = vrot.lane.b32.xlu0 %v3906, 111
      %v4303 = vpop.permute.xlu0 %4302
      %v4304 = vsel %vm1160, %v4289, %v4297
      %v4305 = vsel %vm1160, %v4291, %v4299
      %v4306 = vsel %vm1160, %v4293, %v4301
      %v4307 = vsel %vm1160, %v4295, %v4303
      %v4308 = vsel %vm1160, %v4297, %v4289
      %v4309 = vsel %vm1160, %v4299, %v4291
      %v4310 = vsel %vm1160, %v4301, %v4293
      %v4311 = vsel %vm1160, %v4303, %v4295
      %v4312 = vld [vmem:[%s1163] sm:$0x3]
      %v4314 = vlaneseq
      %v4315 = vshrl.u32 %v4314, 7
      %v4316 = vsub.s32 0, %v4315
      %v4317 = vrot.slane %v4312, %v4316
      %v4318 = vlaneseq
      %v4319 = vshrl.u32 %v4318, 7
      %v4320 = vsub.s32 1, %v4319
      %v4321 = vrot.slane %v4312, %v4320
      %v4324 = vmul.f32 %v4304, %v4317
      %v4325 = vmul.f32 %v4308, %v4321
      %v4326 = vmul.f32 %v4305, %v4317
      %v4327 = vmul.f32 %v4309, %v4321
      %v4328 = vmul.f32 %v4306, %v4317
      %v4329 = vmul.f32 %v4310, %v4321
      %v4330 = vmul.f32 %v4307, %v4317
      %v4331 = vmul.f32 %v4311, %v4321
      %4332 = vst [vmem:[#allocation2 + $0x200] sm:$0xff] %v4324
      %4333 = vst [vmem:[#allocation2 + $0x208] sm:$0xff] %v4325
      %4334 = vst [vmem:[#allocation2 + $0x210] sm:$0xff] %v4326
      %4335 = vst [vmem:[#allocation2 + $0x218] sm:$0xff] %v4327
      %4336 = vst [vmem:[#allocation2 + $0x220] sm:$0xff] %v4328
      %4337 = vst [vmem:[#allocation2 + $0x228] sm:$0xff] %v4329
      %4338 = vst [vmem:[#allocation2 + $0x230] sm:$0xff] %v4330
      %4339 = vst [vmem:[#allocation2 + $0x238] sm:$0xff] %v4331
      %v4340 = vld [vmem:[#allocation2] sm:$0xff]
      %v4341 = vld [vmem:[#allocation2 + $0x8] sm:$0xff]
      %v4342 = vld [vmem:[#allocation2 + $0x10] sm:$0xff]
      %v4343 = vld [vmem:[#allocation2 + $0x18] sm:$0xff]
      %v4344 = vld [vmem:[#allocation2 + $0x20] sm:$0xff]
      %v4345 = vld [vmem:[#allocation2 + $0x28] sm:$0xff]
      %v4346 = vld [vmem:[#allocation2 + $0x30] sm:$0xff]
      %v4347 = vld [vmem:[#allocation2 + $0x38] sm:$0xff]
      %v4348 = vld [vmem:[#allocation2 + $0x40] sm:$0xff]
      %v4349 = vld [vmem:[#allocation2 + $0x48] sm:$0xff]
      %v4350 = vld [vmem:[#allocation2 + $0x50] sm:$0xff]
      %v4351 = vld [vmem:[#allocation2 + $0x58] sm:$0xff]
      %v4352 = vld [vmem:[#allocation2 + $0x60] sm:$0xff]
      %v4353 = vld [vmem:[#allocation2 + $0x68] sm:$0xff]
      %v4354 = vld [vmem:[#allocation2 + $0x70] sm:$0xff]
      %v4355 = vld [vmem:[#allocation2 + $0x78] sm:$0xff]
      %v4356 = vld [vmem:[#allocation2 + $0x80] sm:$0xff]
      %v4357 = vld [vmem:[#allocation2 + $0x88] sm:$0xff]
      %v4358 = vld [vmem:[#allocation2 + $0x90] sm:$0xff]
      %v4359 = vld [vmem:[#allocation2 + $0x98] sm:$0xff]
      %v4360 = vld [vmem:[#allocation2 + $0xa0] sm:$0xff]
      %v4361 = vld [vmem:[#allocation2 + $0xa8] sm:$0xff]
      %v4362 = vld [vmem:[#allocation2 + $0xb0] sm:$0xff]
      %v4363 = vld [vmem:[#allocation2 + $0xb8] sm:$0xff]
      %v4364 = vld [vmem:[#allocation2 + $0xc0] sm:$0xff]
      %v4365 = vld [vmem:[#allocation2 + $0xc8] sm:$0xff]
      %v4366 = vld [vmem:[#allocation2 + $0xd0] sm:$0xff]
      %v4367 = vld [vmem:[#allocation2 + $0xd8] sm:$0xff]
      %v4368 = vld [vmem:[#allocation2 + $0xe0] sm:$0xff]
      %v4369 = vld [vmem:[#allocation2 + $0xe8] sm:$0xff]
      %v4370 = vld [vmem:[#allocation2 + $0xf0] sm:$0xff]
      %v4371 = vld [vmem:[#allocation2 + $0xf8] sm:$0xff]
      %v4372 = vld [vmem:[#allocation2 + $0x100] sm:$0xff]
      %v4373 = vld [vmem:[#allocation2 + $0x108] sm:$0xff]
      %v4374 = vld [vmem:[#allocation2 + $0x110] sm:$0xff]
      %v4375 = vld [vmem:[#allocation2 + $0x118] sm:$0xff]
      %v4376 = vld [vmem:[#allocation2 + $0x120] sm:$0xff]
      %v4377 = vld [vmem:[#allocation2 + $0x128] sm:$0xff]
      %v4378 = vld [vmem:[#allocation2 + $0x130] sm:$0xff]
      %v4379 = vld [vmem:[#allocation2 + $0x138] sm:$0xff]
      %v4380 = vld [vmem:[#allocation2 + $0x140] sm:$0xff]
      %v4381 = vld [vmem:[#allocation2 + $0x148] sm:$0xff]
      %v4382 = vld [vmem:[#allocation2 + $0x150] sm:$0xff]
      %v4383 = vld [vmem:[#allocation2 + $0x158] sm:$0xff]
      %v4384 = vld [vmem:[#allocation2 + $0x160] sm:$0xff]
      %v4385 = vld [vmem:[#allocation2 + $0x168] sm:$0xff]
      %v4386 = vld [vmem:[#allocation2 + $0x170] sm:$0xff]
      %v4387 = vld [vmem:[#allocation2 + $0x178] sm:$0xff]
      %v4388 = vld [vmem:[#allocation2 + $0x180] sm:$0xff]
      %v4389 = vld [vmem:[#allocation2 + $0x188] sm:$0xff]
      %v4390 = vld [vmem:[#allocation2 + $0x190] sm:$0xff]
      %v4391 = vld [vmem:[#allocation2 + $0x198] sm:$0xff]
      %v4392 = vld [vmem:[#allocation2 + $0x1a0] sm:$0xff]
      %v4393 = vld [vmem:[#allocation2 + $0x1a8] sm:$0xff]
      %v4394 = vld [vmem:[#allocation2 + $0x1b0] sm:$0xff]
      %v4395 = vld [vmem:[#allocation2 + $0x1b8] sm:$0xff]
      %v4396 = vld [vmem:[#allocation2 + $0x1c0] sm:$0xff]
      %v4397 = vld [vmem:[#allocation2 + $0x1c8] sm:$0xff]
      %v4398 = vld [vmem:[#allocation2 + $0x1d0] sm:$0xff]
      %v4399 = vld [vmem:[#allocation2 + $0x1d8] sm:$0xff]
      %v4400 = vld [vmem:[#allocation2 + $0x1e0] sm:$0xff]
      %v4401 = vld [vmem:[#allocation2 + $0x1e8] sm:$0xff]
      %v4402 = vld [vmem:[#allocation2 + $0x1f0] sm:$0xff]
      %v4403 = vld [vmem:[#allocation2 + $0x1f8] sm:$0xff]
      %v4404 = vld [vmem:[#allocation2 + $0x200] sm:$0xff]
      %v4405 = vld [vmem:[#allocation2 + $0x208] sm:$0xff]
      %v4406 = vld [vmem:[#allocation2 + $0x210] sm:$0xff]
      %v4407 = vld [vmem:[#allocation2 + $0x218] sm:$0xff]
      %v4408 = vld [vmem:[#allocation2 + $0x220] sm:$0xff]
      %v4409 = vld [vmem:[#allocation2 + $0x228] sm:$0xff]
      %v4410 = vld [vmem:[#allocation2 + $0x230] sm:$0xff]
      %v4411 = vld [vmem:[#allocation2 + $0x238] sm:$0xff]
      %v4412 = vpack.c.bf16 %v4342, %v4340
      %v4413 = vpack.c.bf16 %v4343, %v4341
      %v4414 = vpack.c.bf16 %v4346, %v4344
      %v4415 = vpack.c.bf16 %v4347, %v4345
      %v4416 = vpack.c.bf16 %v4350, %v4348
      %v4417 = vpack.c.bf16 %v4351, %v4349
      %v4418 = vpack.c.bf16 %v4354, %v4352
      %v4419 = vpack.c.bf16 %v4355, %v4353
      %v4420 = vpack.c.bf16 %v4358, %v4356
      %v4421 = vpack.c.bf16 %v4359, %v4357
      %v4422 = vpack.c.bf16 %v4362, %v4360
      %v4423 = vpack.c.bf16 %v4363, %v4361
      %v4424 = vpack.c.bf16 %v4366, %v4364
      %v4425 = vpack.c.bf16 %v4367, %v4365
      %v4426 = vpack.c.bf16 %v4370, %v4368
      %v4427 = vpack.c.bf16 %v4371, %v4369
      %v4428 = vpack.c.bf16 %v4374, %v4372
      %v4429 = vpack.c.bf16 %v4375, %v4373
      %v4430 = vpack.c.bf16 %v4378, %v4376
      %v4431 = vpack.c.bf16 %v4379, %v4377
      %v4432 = vpack.c.bf16 %v4382, %v4380
      %v4433 = vpack.c.bf16 %v4383, %v4381
      %v4434 = vpack.c.bf16 %v4386, %v4384
      %v4435 = vpack.c.bf16 %v4387, %v4385
      %v4436 = vpack.c.bf16 %v4390, %v4388
      %v4437 = vpack.c.bf16 %v4391, %v4389
      %v4438 = vpack.c.bf16 %v4394, %v4392
      %v4439 = vpack.c.bf16 %v4395, %v4393
      %v4440 = vpack.c.bf16 %v4398, %v4396
      %v4441 = vpack.c.bf16 %v4399, %v4397
      %v4442 = vpack.c.bf16 %v4402, %v4400
      %v4443 = vpack.c.bf16 %v4403, %v4401
      %v4444 = vpack.c.bf16 %v4406, %v4404
      %v4445 = vpack.c.bf16 %v4407, %v4405
      %v4446 = vpack.c.bf16 %v4410, %v4408
      %v4447 = vpack.c.bf16 %v4411, %v4409
      %s4448 = scalar_lea.vmem %s16, 32
      %v4449 = vld [vmem:[%s4448] sm:$0xff]
      %v4450 = vld [vmem:[%s4448 + $0x8] sm:$0xff]
      %v4451 = vld [vmem:[%s4448 + $0x10] sm:$0xff]
      %v4452 = vld [vmem:[%s4448 + $0x18] sm:$0xff]
      %4454 = vset.pattern.permute.xlu0 0
      %4455 = vperm.xlu0 %4454, %v4449
      %v4456 = vpop.permute.xlu0 %4455
      %4459 = vset.pattern.permute.xlu0 0
      %4460 = vperm.xlu0 %4459, %v4450
      %v4461 = vpop.permute.xlu0 %4460
      %4464 = vset.pattern.permute.xlu0 0
      %4465 = vperm.xlu0 %4464, %v4451
      %v4466 = vpop.permute.xlu0 %4465
      %4469 = vset.pattern.permute.xlu0 0
      %4470 = vperm.xlu0 %4469, %v4452
      %v4471 = vpop.permute.xlu0 %4470
      %v4481 = vunpack.c.l.b16 %v3908
      %v4482 = vunpack.c.h.b16 %v3908
      %v4483 = vunpack.c.l.b16 %v3909
      %v4484 = vunpack.c.l.b16 %v3910
      %v4485 = vunpack.c.h.b16 %v3910
      %v4486 = vunpack.c.l.b16 %v3911
      %v4487 = vunpack.c.l.b16 %v3912
      %v4488 = vunpack.c.h.b16 %v3912
      %v4489 = vunpack.c.l.b16 %v3913
      %v4490 = vunpack.c.l.b16 %v3914
      %v4491 = vunpack.c.h.b16 %v3914
      %v4492 = vunpack.c.l.b16 %v3915
      %v4493 = vpack.c.b16 %v4484, %v4481
      %v4494 = vpack.c.b16 %v4485, %v4482
      %v4495 = vpack.c.b16 %v4486, %v4483
      %v4496 = vpack.c.b16 %v4490, %v4487
      %v4497 = vpack.c.b16 %v4491, %v4488
      %v4498 = vpack.c.b16 %v4492, %v4489
      %v4504 = vsel %vm1367, %v4495, 0
      %v4507 = vsel %vm1367, %v4498, 0
      %4509 = vmatprep.subr.bf16.mxu0 %v4413
      %4510 = vmatpush1.bf16.msra.mxu0 %v4412
      %4511 = vmatprep.subr.bf16.mxu0 %v4415
      %4512 = vmatpush1.bf16.msra.mxu0 %v4414
      %4513 = vmatprep.subr.bf16.mxu0 %v4417
      %4514 = vmatpush1.bf16.msra.mxu0 %v4416
      %4515 = vmatprep.subr.bf16.mxu0 %v4419
      %4516 = vmatpush1.bf16.msra.mxu0 %v4418
      %4517 = vmatprep.subr.bf16.mxu0 %v4421
      %4518 = vmatpush1.bf16.msra.mxu0 %v4420
      %4519 = vmatprep.subr.bf16.mxu0 %v4423
      %4520 = vmatpush1.bf16.msra.mxu0 %v4422
      %4521 = vmatprep.subr.bf16.mxu0 %v4425
      %4522 = vmatpush1.bf16.msra.mxu0 %v4424
      %4523 = vmatprep.subr.bf16.mxu0 %v4427
      %4524 = vmatpush1.bf16.msra.mxu0 %v4426
      %4525 = vmatprep.subr.bf16.mxu0 %v4429
      %4526 = vmatpush1.bf16.msra.mxu0 %v4428
      %4527 = vmatprep.subr.bf16.mxu0 %v4431
      %4528 = vmatpush1.bf16.msra.mxu0 %v4430
      %4529 = vmatprep.subr.bf16.mxu0 %v4433
      %4530 = vmatpush1.bf16.msra.mxu0 %v4432
      %4531 = vmatprep.subr.bf16.mxu0 %v4435
      %4532 = vmatpush1.bf16.msra.mxu0 %v4434
      %4533 = vmatprep.subr.bf16.mxu0 %v4437
      %4534 = vmatpush1.bf16.msra.mxu0 %v4436
      %4535 = vmatprep.subr.bf16.mxu0 %v4439
      %4536 = vmatpush1.bf16.msra.mxu0 %v4438
      %4537 = vmatprep.subr.bf16.mxu0 %v4441
      %4538 = vmatpush1.bf16.msra.mxu0 %v4440
      %4539 = vmatprep.subr.bf16.mxu0 %v4443
      %4540 = vmatpush1.bf16.msra.mxu0 %v4442
      %4541 = vmatprep.mubr.bf16.mxu0 %v4494
      %4542 = vmatmul.mubr.bf16.gmra.mrb[0].mxu0 %v4493
      %v4543 = vpop.f32.mrb[0].mxu0
      %v4544 = vadd.f32 %v4456, %v4543
      %v4545 = vpop.f32.mrb[0].mxu0
      %v4546 = vadd.f32 %v4456, %v4545
      %v4547 = vpop.f32.mrb[0].mxu0
      %v4548 = vadd.f32 %v4461, %v4547
      %v4549 = vpop.f32.mrb[0].mxu0
      %v4550 = vadd.f32 %v4461, %v4549
      %4551 = vmatprep.mubr.bf16.mxu0 %v4497
      %4552 = vmatmul.mubr.bf16.gmra.mrb[0].mxu0 %v4496
      %v4553 = vpop.f32.mrb[0].mxu0
      %v4554 = vadd.f32 %v4466, %v4553
      %v4555 = vpop.f32.mrb[0].mxu0
      %v4556 = vadd.f32 %v4466, %v4555
      %v4557 = vpop.f32.mrb[0].mxu0
      %v4558 = vadd.f32 %v4471, %v4557
      %v4559 = vpop.f32.mrb[0].mxu0
      %v4560 = vadd.f32 %v4471, %v4559
      %4561 = vdwg.mxu0
      %4562 = vmatprep.subr.bf16.mxu0 %v4445
      %4563 = vmatpush1.bf16.msra.mxu0 %v4444
      %4564 = vmatprep.subr.bf16.mxu0 %v4447
      %4565 = vmatpush1.bf16.msra.mxu0 %v4446
      %4566 = vmatprep.subr.bf16.mxu0 0
      %4567 = vmatpush1.bf16.msra.mxu0 0
      %4568 = vmatprep.subr.bf16.mxu0 0
      %4569 = vmatpush1.bf16.msra.mxu0 0
      %4570 = vmatprep.subr.bf16.mxu0 0
      %4571 = vmatpush1.bf16.msra.mxu0 0
      %4572 = vmatprep.subr.bf16.mxu0 0
      %4573 = vmatpush1.bf16.msra.mxu0 0
      %4574 = vmatprep.subr.bf16.mxu0 0
      %4575 = vmatpush1.bf16.msra.mxu0 0
      %4576 = vmatprep.subr.bf16.mxu0 0
      %4577 = vmatpush1.bf16.msra.mxu0 0
      %4578 = vmatprep.subr.bf16.mxu0 0
      %4579 = vmatpush1.bf16.msra.mxu0 0
      %4580 = vmatprep.subr.bf16.mxu0 0
      %4581 = vmatpush1.bf16.msra.mxu0 0
      %4582 = vmatprep.subr.bf16.mxu0 0
      %4583 = vmatpush1.bf16.msra.mxu0 0
      %4584 = vmatprep.subr.bf16.mxu0 0
      %4585 = vmatpush1.bf16.msra.mxu0 0
      %4586 = vmatprep.subr.bf16.mxu0 0
      %4587 = vmatpush1.bf16.msra.mxu0 0
      %4588 = vmatprep.subr.bf16.mxu0 0
      %4589 = vmatpush1.bf16.msra.mxu0 0
      %4590 = vmatprep.subr.bf16.mxu0 0
      %4591 = vmatpush1.bf16.msra.mxu0 0
      %4592 = vmatprep.subr.bf16.mxu0 0
      %4593 = vmatpush1.bf16.msra.mxu0 0
      %4594 = vmatprep.mubr.bf16.mxu0 0
      %4595 = vmatmul.mubr.bf16.gmra.mrb[0].mxu0 %v4504
      %v4596 = vpop.f32.mrb[0].mxu0
      %v4597 = vadd.f32 %v4544, %v4596
      %v4598 = vpop.f32.mrb[0].mxu0
      %v4599 = vadd.f32 %v4546, %v4598
      %v4600 = vpop.f32.mrb[0].mxu0
      %v4601 = vadd.f32 %v4548, %v4600
      %v4602 = vpop.f32.mrb[0].mxu0
      %v4603 = vadd.f32 %v4550, %v4602
      %4604 = vmatprep.mubr.bf16.mxu0 0
      %4605 = vmatmul.mubr.bf16.gmra.mrb[0].mxu0 %v4507
      %v4606 = vpop.f32.mrb[0].mxu0
      %v4607 = vadd.f32 %v4554, %v4606
      %v4608 = vpop.f32.mrb[0].mxu0
      %v4609 = vadd.f32 %v4556, %v4608
      %v4610 = vpop.f32.mrb[0].mxu0
      %v4611 = vadd.f32 %v4558, %v4610
      %v4612 = vpop.f32.mrb[0].mxu0
      %v4613 = vadd.f32 %v4560, %v4612
      %4614 = vdwg.mxu0
      %v4615 = vadd.f32 %v2959, %v4597
      %v4616 = vadd.f32 %v2960, %v4599
      %v4617 = vadd.f32 %v2961, %v4601
      %v4618 = vadd.f32 %v2962, %v4603
      %v4619 = vadd.f32 %v2963, %v4607
      %v4620 = vadd.f32 %v2964, %v4609
      %v4621 = vadd.f32 %v2965, %v4611
      %v4622 = vadd.f32 %v2966, %v4613
      %s4623 = scalar_lea.vmem %s17, 16
      %v4624 = vld [vmem:[%s4623] sm:$0xf]
      %v4625 = vld [vmem:[%s4623 + $0x4] sm:$0xf]
      %v4626 = vld [vmem:[%s4623 + $0x8] sm:$0xf]
      %v4627 = vld [vmem:[%s4623 + $0xc] sm:$0xf]
      %v4628 = vpack.c.bf16 %v4617, %v4615
      %v4629 = vpack.c.bf16 %v4618, %v4616
      %v4630 = vpack.c.bf16 %v4621, %v4619
      %v4631 = vpack.c.bf16 %v4622, %v4620
      %s4632 = scalar_lea.vmem %s18, 32
      %v4633 = vld [vmem:[%s4632] sm:$0xff]
      %v4634 = vld [vmem:[%s4632 + $0x8] sm:$0xff]
      %v4635 = vld [vmem:[%s4632 + $0x10] sm:$0xff]
      %v4636 = vld [vmem:[%s4632 + $0x18] sm:$0xff]
      %4638 = vset.pattern.permute.xlu0 0
      %4639 = vperm.xlu0 %4638, %v4633
      %v4640 = vpop.permute.xlu0 %4639
      %4643 = vset.pattern.permute.xlu0 0
      %4644 = vperm.xlu0 %4643, %v4634
      %v4645 = vpop.permute.xlu0 %4644
      %4648 = vset.pattern.permute.xlu0 0
      %4649 = vperm.xlu0 %4648, %v4635
      %v4650 = vpop.permute.xlu0 %4649
      %4653 = vset.pattern.permute.xlu0 0
      %4654 = vperm.xlu0 %4653, %v4636
      %v4655 = vpop.permute.xlu0 %4654
      %v4661 = vunpack.c.l.b16 %v4624
      %v4662 = vunpack.c.l.b16 %v4625
      %v4663 = vunpack.c.l.b16 %v4626
      %v4664 = vunpack.c.l.b16 %v4627
      %v4665 = vpack.c.b16 %v4662, %v4661
      %v4666 = vpack.c.b16 %v4664, %v4663
      %v4668 = vsel %vm1367, %v4665, 0
      %v4671 = vsel %vm1367, %v4666, 0
      %4673 = vmatprep.subr.bf16.mxu0 %v4629
      %4674 = vmatpush1.bf16.msra.mxu0 %v4628
      %4675 = vmatprep.subr.bf16.mxu0 %v4631
      %4676 = vmatpush1.bf16.msra.mxu0 %v4630
      %4677 = vmatprep.subr.bf16.mxu0 0
      %4678 = vmatpush1.bf16.msra.mxu0 0
      %4679 = vmatprep.subr.bf16.mxu0 0
      %4680 = vmatpush1.bf16.msra.mxu0 0
      %4681 = vmatprep.subr.bf16.mxu0 0
      %4682 = vmatpush1.bf16.msra.mxu0 0
      %4683 = vmatprep.subr.bf16.mxu0 0
      %4684 = vmatpush1.bf16.msra.mxu0 0
      %4685 = vmatprep.subr.bf16.mxu0 0
      %4686 = vmatpush1.bf16.msra.mxu0 0
      %4687 = vmatprep.subr.bf16.mxu0 0
      %4688 = vmatpush1.bf16.msra.mxu0 0
      %4689 = vmatprep.subr.bf16.mxu0 0
      %4690 = vmatpush1.bf16.msra.mxu0 0
      %4691 = vmatprep.subr.bf16.mxu0 0
      %4692 = vmatpush1.bf16.msra.mxu0 0
      %4693 = vmatprep.subr.bf16.mxu0 0
      %4694 = vmatpush1.bf16.msra.mxu0 0
      %4695 = vmatprep.subr.bf16.mxu0 0
      %4696 = vmatpush1.bf16.msra.mxu0 0
      %4697 = vmatprep.subr.bf16.mxu0 0
      %4698 = vmatpush1.bf16.msra.mxu0 0
      %4699 = vmatprep.subr.bf16.mxu0 0
      %4700 = vmatpush1.bf16.msra.mxu0 0
      %4701 = vmatprep.subr.bf16.mxu0 0
      %4702 = vmatpush1.bf16.msra.mxu0 0
      %4703 = vmatprep.subr.bf16.mxu0 0
      %4704 = vmatpush1.bf16.msra.mxu0 0
      %4705 = vmatprep.mubr.bf16.mxu0 0
      %4706 = vmatmul.mubr.bf16.gmra.mrb[0].mxu0 %v4668
      %v4707 = vpop.f32.mrb[0].mxu0
      %v4708 = vadd.f32 %v4640, %v4707
      %v4709 = vpop.f32.mrb[0].mxu0
      %v4710 = vadd.f32 %v4640, %v4709
      %v4711 = vpop.f32.mrb[0].mxu0
      %v4712 = vadd.f32 %v4645, %v4711
      %v4713 = vpop.f32.mrb[0].mxu0
      %v4714 = vadd.f32 %v4645, %v4713
      %4715 = vmatprep.mubr.bf16.mxu0 0
      %4716 = vmatmul.mubr.bf16.gmra.mrb[0].mxu0 %v4671
      %v4717 = vpop.f32.mrb[0].mxu0
      %v4718 = vadd.f32 %v4650, %v4717
      %v4719 = vpop.f32.mrb[0].mxu0
      %v4720 = vadd.f32 %v4650, %v4719
      %v4721 = vpop.f32.mrb[0].mxu0
      %v4722 = vadd.f32 %v4655, %v4721
      %v4723 = vpop.f32.mrb[0].mxu0
      %v4724 = vadd.f32 %v4655, %v4723
      %4725 = vdwg.mxu0
      %v4726 = vadd.f32 %v3068, %v4708
      %v4727 = vadd.f32 %v3069, %v4710
      %v4728 = vadd.f32 %v3070, %v4712
      %v4729 = vadd.f32 %v3071, %v4714
      %v4730 = vadd.f32 %v3072, %v4718
      %v4731 = vadd.f32 %v3073, %v4720
      %v4732 = vadd.f32 %v3074, %v4722
      %v4733 = vadd.f32 %v3075, %v4724
      %v4734 = vld [vmem:[%s19] sm:$0xff]
      %v4735 = vld [vmem:[%s19 + $0x8] sm:$0xff]
      %v4736 = vld [vmem:[%s19 + $0x10] sm:$0xff]
      %v4737 = vld [vmem:[%s19 + $0x18] sm:$0xff]
      %4739 = vset.pattern.permute.xlu0 0
      %4740 = vperm.xlu0 %4739, %v4734
      %v4741 = vpop.permute.xlu0 %4740
      %4744 = vset.pattern.permute.xlu0 0
      %4745 = vperm.xlu0 %4744, %v4735
      %v4746 = vpop.permute.xlu0 %4745
      %4749 = vset.pattern.permute.xlu0 0
      %4750 = vperm.xlu0 %4749, %v4736
      %v4751 = vpop.permute.xlu0 %4750
      %4754 = vset.pattern.permute.xlu0 0
      %4755 = vperm.xlu0 %4754, %v4737
      %v4756 = vpop.permute.xlu0 %4755
      %v4758 = vmul.f32 %v4726, %v4741
      %v4759 = vmul.f32 %v4727, %v4741
      %v4760 = vmul.f32 %v4728, %v4746
      %v4761 = vmul.f32 %v4729, %v4746
      %v4762 = vmul.f32 %v4730, %v4751
      %v4763 = vmul.f32 %v4731, %v4751
      %v4764 = vmul.f32 %v4732, %v4756
      %v4765 = vmul.f32 %v4733, %v4756
      %v4766 = vld [vmem:[%s20] sm:$0xff]
      %v4767 = vld [vmem:[%s20 + $0x8] sm:$0xff]
      %v4768 = vld [vmem:[%s20 + $0x10] sm:$0xff]
      %v4769 = vld [vmem:[%s20 + $0x18] sm:$0xff]
      %4771 = vset.pattern.permute.xlu0 0
      %4772 = vperm.xlu0 %4771, %v4766
      %v4773 = vpop.permute.xlu0 %4772
      %4776 = vset.pattern.permute.xlu0 0
      %4777 = vperm.xlu0 %4776, %v4767
      %v4778 = vpop.permute.xlu0 %4777
      %4781 = vset.pattern.permute.xlu0 0
      %4782 = vperm.xlu0 %4781, %v4768
      %v4783 = vpop.permute.xlu0 %4782
      %4786 = vset.pattern.permute.xlu0 0
      %4787 = vperm.xlu0 %4786, %v4769
      %v4788 = vpop.permute.xlu0 %4787
      %v4790 = vadd.f32 %v4758, %v4773
      %v4791 = vadd.f32 %v4759, %v4773
      %v4792 = vadd.f32 %v4760, %v4778
      %v4793 = vadd.f32 %v4761, %v4778
      %v4794 = vadd.f32 %v4762, %v4783
      %v4795 = vadd.f32 %v4763, %v4783
      %v4796 = vadd.f32 %v4764, %v4788
      %v4797 = vadd.f32 %v4765, %v4788
      %v4798 = vmax.f32 %v4790, 0.0
      %v4799 = vmax.f32 %v4791, 0.0
      %v4800 = vmax.f32 %v4792, 0.0
      %v4801 = vmax.f32 %v4793, 0.0
      %v4802 = vmax.f32 %v4794, 0.0
      %v4803 = vmax.f32 %v4795, 0.0
      %v4804 = vmax.f32 %v4796, 0.0
      %v4805 = vmax.f32 %v4797, 0.0
      %v4806 = vpack.c.bf16 %v4800, %v4798
      %v4807 = vpack.c.bf16 %v4801, %v4799
      %v4808 = vpack.c.bf16 %v4804, %v4802
      %v4809 = vpack.c.bf16 %v4805, %v4803
      %v4810 = vld [vmem:[%s21] sm:$0x3]
      %v4811 = vld [vmem:[%s22] sm:$0xf]
      %4813 = vset.pattern.permute.xlu0 0
      %4814 = vperm.xlu0 %4813, %v4811
      %v4815 = vpop.permute.xlu0 %4814
      %v4818 = vsel %vm1367, %v4810, 0
      %4820 = vmatprep.subr.bf16.mxu0 %v4807
      %4821 = vmatpush1.bf16.msra.mxu0 %v4806
      %4822 = vmatprep.subr.bf16.mxu0 %v4809
      %4823 = vmatpush1.bf16.msra.mxu0 %v4808
      %4824 = vmatprep.subr.bf16.mxu0 0
      %4825 = vmatpush1.bf16.msra.mxu0 0
      %4826 = vmatprep.subr.bf16.mxu0 0
      %4827 = vmatpush1.bf16.msra.mxu0 0
      %4828 = vmatprep.subr.bf16.mxu0 0
      %4829 = vmatpush1.bf16.msra.mxu0 0
      %4830 = vmatprep.subr.bf16.mxu0 0
      %4831 = vmatpush1.bf16.msra.mxu0 0
      %4832 = vmatprep.subr.bf16.mxu0 0
      %4833 = vmatpush1.bf16.msra.mxu0 0
      %4834 = vmatprep.subr.bf16.mxu0 0
      %4835 = vmatpush1.bf16.msra.mxu0 0
      %4836 = vmatprep.subr.bf16.mxu0 0
      %4837 = vmatpush1.bf16.msra.mxu0 0
      %4838 = vmatprep.subr.bf16.mxu0 0
      %4839 = vmatpush1.bf16.msra.mxu0 0
      %4840 = vmatprep.subr.bf16.mxu0 0
      %4841 = vmatpush1.bf16.msra.mxu0 0
      %4842 = vmatprep.subr.bf16.mxu0 0
      %4843 = vmatpush1.bf16.msra.mxu0 0
      %4844 = vmatprep.subr.bf16.mxu0 0
      %4845 = vmatpush1.bf16.msra.mxu0 0
      %4846 = vmatprep.subr.bf16.mxu0 0
      %4847 = vmatpush1.bf16.msra.mxu0 0
      %4848 = vmatprep.subr.bf16.mxu0 0
      %4849 = vmatpush1.bf16.msra.mxu0 0
      %4850 = vmatprep.subr.bf16.mxu0 0
      %4851 = vmatpush1.bf16.msra.mxu0 0
      %4852 = vmatprep.mubr.bf16.mxu0 0
      %4853 = vmatmul.mubr.bf16.gmra.mrb[0].mxu0 %v4818
      %v4854 = vpop.f32.mrb[0].mxu0
      %v4855 = vadd.f32 %v4815, %v4854
      %v4856 = vpop.f32.mrb[0].mxu0
      %v4857 = vadd.f32 %v4815, %v4856
      %v4858 = vpop.f32.mrb[0].mxu0
      %v4859 = vpop.f32.mrb[0].mxu0
      %4860 = vdwg.mxu0
      %v4861 = vld [vmem:[%s23] sm:$0x3]
      %v4862 = vld [vmem:[%s24] sm:$0xf]
      %4864 = vset.pattern.permute.xlu0 0
      %4865 = vperm.xlu0 %4864, %v4862
      %v4866 = vpop.permute.xlu0 %4865
      %v4869 = vsel %vm1367, %v4861, 0
      %4871 = vmatprep.subr.bf16.mxu0 %v4807
      %4872 = vmatpush1.bf16.msra.mxu0 %v4806
      %4873 = vmatprep.subr.bf16.mxu0 %v4809
      %4874 = vmatpush1.bf16.msra.mxu0 %v4808
      %4875 = vmatprep.subr.bf16.mxu0 0
      %4876 = vmatpush1.bf16.msra.mxu0 0
      %4877 = vmatprep.subr.bf16.mxu0 0
      %4878 = vmatpush1.bf16.msra.mxu0 0
      %4879 = vmatprep.subr.bf16.mxu0 0
      %4880 = vmatpush1.bf16.msra.mxu0 0
      %4881 = vmatprep.subr.bf16.mxu0 0
      %4882 = vmatpush1.bf16.msra.mxu0 0
      %4883 = vmatprep.subr.bf16.mxu0 0
      %4884 = vmatpush1.bf16.msra.mxu0 0
      %4885 = vmatprep.subr.bf16.mxu0 0
      %4886 = vmatpush1.bf16.msra.mxu0 0
      %4887 = vmatprep.subr.bf16.mxu0 0
      %4888 = vmatpush1.bf16.msra.mxu0 0
      %4889 = vmatprep.subr.bf16.mxu0 0
      %4890 = vmatpush1.bf16.msra.mxu0 0
      %4891 = vmatprep.subr.bf16.mxu0 0
      %4892 = vmatpush1.bf16.msra.mxu0 0
      %4893 = vmatprep.subr.bf16.mxu0 0
      %4894 = vmatpush1.bf16.msra.mxu0 0
      %4895 = vmatprep.subr.bf16.mxu0 0
      %4896 = vmatpush1.bf16.msra.mxu0 0
      %4897 = vmatprep.subr.bf16.mxu0 0
      %4898 = vmatpush1.bf16.msra.mxu0 0
      %4899 = vmatprep.subr.bf16.mxu0 0
      %4900 = vmatpush1.bf16.msra.mxu0 0
      %4901 = vmatprep.subr.bf16.mxu0 0
      %4902 = vmatpush1.bf16.msra.mxu0 0
      %4903 = vmatprep.mubr.bf16.mxu0 0
      %4904 = vmatmul.mubr.bf16.gmra.mrb[0].mxu0 %v4869
      %v4905 = vpop.f32.mrb[0].mxu0
      %v4906 = vadd.f32 %v4866, %v4905
      %v4907 = vpop.f32.mrb[0].mxu0
      %v4908 = vadd.f32 %v4866, %v4907
      %v4909 = vpop.f32.mrb[0].mxu0
      %v4910 = vpop.f32.mrb[0].mxu0
      %4911 = vdwg.mxu0
      %v4912 = vld [vmem:[%s25] sm:$0xf]
      %v4913 = vtanh.pop %v4855
      %v4914 = vtanh.pop %v4857
      %4916 = vset.pattern.permute.xlu0 0
      %4917 = vperm.xlu0 %4916, %v4912
      %v4918 = vpop.permute.xlu0 %4917
      %v4920 = vmul.f32 %v4918, %v4913
      %v4921 = vmul.f32 %v4918, %v4914
      %v4922 = vld [vmem:[%s3] sm:$0x3]
      %v4923 = vsub.f32 1.0, %v4922
      %v4925 = vlaneseq
      %v4926 = vshrl.u32 %v4925, 7
      %v4927 = vsub.s32 0, %v4926
      %v4928 = vrot.slane %v4923, %v4927
      %v4929 = vlaneseq
      %v4930 = vshrl.u32 %v4929, 7
      %v4931 = vsub.s32 1, %v4930
      %v4932 = vrot.slane %v4923, %v4931
      %v4935 = vmul.f32 %v4920, %v4928
      %v4936 = vmul.f32 %v4921, %v4932
      %v4937 = vmul.f32 %v4906, %v4928
      %v4938 = vmul.f32 %v4908, %v4932
      %v4939 = vld [vmem:[%s831] sm:$0xff]
      %v4940 = vsub.f32 0.0, %v4935
      %v4941 = vsub.f32 0.0, %v4936
      %v4942 = vmul.f32 %v4940, 1.442695
      %v4943 = vpow.pop %v4942
      %v4944 = vmul.f32 %v4941, 1.442695
      %v4945 = vpow.pop %v4944
      %v4948 = vcombine.low %v4943, %v4945
      %v4950 = vmul.f32 %v4939, %v4948
      %v4953 = vcombine.low %v4937, %v4938
      %v4955 = vsub.f32 %v4950, %v4953
      %4956 = vst [vmem:[%s840] sm:$0xff] %v4955
      %v4957 = vld [vmem:[%s835] sm:$0x1]
      %vm4958 = vcmask 0
      %4959 = vst.msk [vmem:[%s844] sm:$0x1] %vm4958, %v4957
      %s4960 = smul.u32 2, %s39
      %p4961 = scmp.lt.s32.totalorder %s4960, 3
      %s4962 = scalar_select %p4961, %s4960, 3
      %s4963 = smul.addr %s4962, 4
      %s4964 = scalar_lea.vmem %s26, %s4963
      %p4965 = scmp.lt.s32.totalorder %s39, 1
      %s4966 = scalar_select %p4965, %s39, 1
      %s4967 = scalar_lea.vmem %s27, %s4966
      // Predicated region
      $region125: #{coupling_forward.1} parent=123 // pred_check
        %p4968 = pneg %p613
      $region126: #{coupling_forward.1} parent=123 // pred_check_branch
        %4970 = sbr.rel (%p4968) target = $region128
      $region127: #{coupling_forward.1} parent=123 // pred_region
        %s4971 = smul.u32 2, %s39
      $region128: #{coupling_forward.1} parent=123 // pred_fallthru
        _
      // Predicated region
      $region129: #{coupling_forward.1} parent=123 // pred_check
        %p4972 = pneg %p639
      $region130: #{coupling_forward.1} parent=123 // pred_check_branch
        %4974 = sbr.rel (%p4972) target = $region132
      $region131: #{coupling_forward.1} parent=123 // pred_region
        _
      $region132: #{coupling_forward.1} parent=123 // pred_fallthru
        _
    $region124: #{coupling_forward.1} parent=5 // pred_fallthru
      _
    %p4975 = scmp.le.s32.totalorder 2, %s34
    // Predicated region
    $region133: #{coupling_forward.1} parent=5 // pred_check
      %p4976 = pneg %p4975
    $region134: #{coupling_forward.1} parent=5 // pred_check_branch
      %4978 = sbr.rel (%p4976) target = $region136
    $region135: #{coupling_forward.1} parent=5 // pred_region
      %s4979 = ssub.s32 %s34, 2
      // Predicated region
      $region137: #{coupling_forward.1} parent=135 // pred_check
        %p4980 = pneg %p619
      $region138: #{coupling_forward.1} parent=135 // pred_check_branch
        %4982 = sbr.rel (%p4980) target = $region140
      $region139: #{coupling_forward.1} parent=135 // pred_region
        %s4983 = smul.u32 2, %s40
        %p4984 = scmp.lt.s32.totalorder %s4983, 3
        %s4985 = scalar_select %p4984, %s4983, 3
        %s4986 = smul.addr %s4985, 4
        %s4987 = scalar_lea.vmem %s26, %s4986
      $region140: #{coupling_forward.1} parent=135 // pred_fallthru
        _
      // Predicated region
      $region141: #{coupling_forward.1} parent=135 // pred_check
        %p4988 = pneg %p645
      $region142: #{coupling_forward.1} parent=135 // pred_check_branch
        %4990 = sbr.rel (%p4988) target = $region144
      $region143: #{coupling_forward.1} parent=135 // pred_region
        %p4991 = scmp.lt.s32.totalorder %s40, 1
        %s4992 = scalar_select %p4991, %s40, 1
        %s4993 = scalar_lea.vmem %s27, %s4992
      $region144: #{coupling_forward.1} parent=135 // pred_fallthru
        _
    $region136: #{coupling_forward.1} parent=5 // pred_fallthru
      _
  $region6: #{coupling_forward.1} parent=0 // loop_footer
    %s38 = sadd.s32 1, %s34
  $region7: #{coupling_forward.1} parent=0 // loop_footer_branch
    %33 = sbr.rel target = $region3
  $region8: #{coupling_forward.1} parent=0 // loop_exit
    _

</llo_original>
